<compile_context>
chip_gen: v7x
topology: tpu7x:2x2x1
jax: 0.10.0
libtpu: 0.0.40
codegen_flags: <defaults>
</compile_context>

<pallas_src>
import functools
import math

import jax
import jax.numpy as jnp
from jax import lax
from jax.experimental import pallas as pl
from jax.experimental.pallas import tpu as pltpu

LANE = 128


def _round_up(x, m):
    return ((x + m - 1) // m) * m


def _sigmoid(x):
    # Single tanh on the EUP instead of exp + divide.
    return 0.5 * jnp.tanh(0.5 * x) + 0.5


def _lstm_cell(gates, c_prev, hp):
    # gates: (tb, 4*hp), 128-lane-aligned slices since hp % 128 == 0.
    i_g = _sigmoid(gates[:, 0 * hp:1 * hp])
    f_g = _sigmoid(gates[:, 1 * hp:2 * hp])
    g_g = jnp.tanh(gates[:, 2 * hp:3 * hp])
    o_g = _sigmoid(gates[:, 3 * hp:4 * hp])
    c_new = f_g * c_prev + i_g * g_g
    h_new = o_g * jnp.tanh(c_new)
    return h_new, c_new


# -----------------------------------------------------------------------------
# Kernel 1: fused (input projection + recurrence), full-sequence output.
# Used for every layer except the last.
# -----------------------------------------------------------------------------
def _lstm_seq_kernel(x_ref, wih_ref, whh_ref, b_ref, out_ref,
                     gx_scr, h_scr, c_scr, *, hidden_p, tt_block):
    tc = pl.program_id(1)                      # time-chunk index (arbitrary)

    @pl.when(tc == 0)
    def _():
        h_scr[...] = jnp.zeros_like(h_scr)
        c_scr[...] = jnp.zeros_like(c_scr)

    wih = wih_ref[...]                         # (D, 4Hp)   resident weights
    whh = whh_ref[...]                         # (Hp, 4Hp)
    bias = b_ref[...]                          # (1, 4Hp)

    # --- input projection for the whole chunk (off the serial chain) --------
    # gx never round-trips HBM; it lives in VMEM scratch for this chunk only.
    def proj(tt, carry):
        gx_scr[tt] = jnp.dot(x_ref[tt], wih,
                             preferred_element_type=jnp.float32) + bias
        return carry

    lax.fori_loop(0, tt_block, proj, 0, unroll=True)

    # --- serial recurrence over the chunk ------------------------------------
    def step(tt, carry):
        gates = gx_scr[tt] + jnp.dot(h_scr[...], whh,
                                     preferred_element_type=jnp.float32)
        h_new, c_new = _lstm_cell(gates, c_scr[...], hidden_p)
        h_scr[...] = h_new
        c_scr[...] = c_new
        out_ref[tt] = h_new.astype(out_ref.dtype)
        return carry

    lax.fori_loop(0, tt_block, step, 0, unroll=True)


def lstm_layer_seq(x_tm, wih_t, whh_t, bias, *, tb, tt_block, hidden_p):
    """x_tm: (T_pad, B_pad, D) -> (T_pad, B_pad, Hp)."""
    T_pad, B_pad, D = x_tm.shape
    Hp = hidden_p
    G = 4 * Hp
    nb = B_pad // tb
    nt = T_pad // tt_block
    kernel = functools.partial(_lstm_seq_kernel, hidden_p=Hp, tt_block=tt_block)
    return pl.pallas_call(
        kernel,
        out_shape=jax.ShapeDtypeStruct((T_pad, B_pad, Hp), jnp.float32),
        grid_spec=pltpu.PrefetchScalarGridSpec(
            num_scalar_prefetch=0,
            grid=(nb, nt),
            in_specs=[
                pl.BlockSpec((tt_block, tb, D), lambda b, t: (t, b, 0)),
                pl.BlockSpec((D, G), lambda b, t: (0, 0)),      # resident
                pl.BlockSpec((Hp, G), lambda b, t: (0, 0)),     # resident
                pl.BlockSpec((1, G), lambda b, t: (0, 0)),      # resident
            ],
            out_specs=pl.BlockSpec((tt_block, tb, Hp), lambda b, t: (t, b, 0)),
            scratch_shapes=[
                pltpu.VMEM((tt_block, tb, G), jnp.float32),     # gx chunk
                pltpu.VMEM((tb, Hp), jnp.float32),              # h carry
                pltpu.VMEM((tb, Hp), jnp.float32),              # c carry
            ],
        ),
        compiler_params=pltpu.CompilerParams(
            dimension_semantics=("parallel", "arbitrary"),
            vmem_limit_bytes=32 * 1024 * 1024,
        ),
    )(x_tm, wih_t, whh_t, bias)


# -----------------------------------------------------------------------------
# Kernel 2: last LSTM layer.  Only the final hidden state matters; the fc
# Linear is fused in, computed ONCE after the step loop of the last chunk.
# -----------------------------------------------------------------------------
def _lstm_last_kernel(x_ref, wih_ref, whh_ref, b_ref, fcw_ref, fcb_ref,
                      out_ref, gx_scr, h_scr, c_scr,
                      *, hidden_p, tt_block, seq_len):
    tc = pl.program_id(1)

    @pl.when(tc == 0)
    def _():
        h_scr[...] = jnp.zeros_like(h_scr)
        c_scr[...] = jnp.zeros_like(c_scr)

    wih = wih_ref[...]
    whh = whh_ref[...]
    bias = b_ref[...]

    def proj(tt, carry):
        gx_scr[tt] = jnp.dot(x_ref[tt], wih,
                             preferred_element_type=jnp.float32) + bias
        return carry

    lax.fori_loop(0, tt_block, proj, 0, unroll=True)

    def step(tt, carry):
        # Skip padded timesteps so h_scr stops exactly at h_{T-1}.
        @pl.when(tc * tt_block + tt < seq_len)
        def _():
            gates = gx_scr[tt] + jnp.dot(h_scr[...], whh,
                                         preferred_element_type=jnp.float32)
            h_new, c_new = _lstm_cell(gates, c_scr[...], hidden_p)
            h_scr[...] = h_new
            c_scr[...] = c_new
        return carry

    lax.fori_loop(0, tt_block, step, 0, unroll=True)

    # fc hoisted out of the unrolled step loop; only the chunk that contains
    # t = seq_len - 1 writes the resident output block.
    @pl.when(tc == (seq_len - 1) // tt_block)
    def _():
        out_ref[...] = (
            jnp.dot(h_scr[...], fcw_ref[...], preferred_element_type=jnp.float32)
            + fcb_ref[...]
        ).astype(out_ref.dtype)


def lstm_layer_last_fused(x_tm, wih_t, whh_t, bias, fc_w_t, fc_b,
                          *, tb, tt_block, hidden_p, seq_len):
    T_pad, B_pad, D = x_tm.shape
    Hp = hidden_p
    G = 4 * Hp
    Op = fc_w_t.shape[1]
    nb = B_pad // tb
    nt = T_pad // tt_block
    kernel = functools.partial(_lstm_last_kernel, hidden_p=Hp,
                               tt_block=tt_block, seq_len=seq_len)
    return pl.pallas_call(
        kernel,
        out_shape=jax.ShapeDtypeStruct((B_pad, Op), jnp.float32),
        grid_spec=pltpu.PrefetchScalarGridSpec(
            num_scalar_prefetch=0,
            grid=(nb, nt),
            in_specs=[
                pl.BlockSpec((tt_block, tb, D), lambda b, t: (t, b, 0)),
                pl.BlockSpec((D, G), lambda b, t: (0, 0)),
                pl.BlockSpec((Hp, G), lambda b, t: (0, 0)),
                pl.BlockSpec((1, G), lambda b, t: (0, 0)),
                pl.BlockSpec((Hp, Op), lambda b, t: (0, 0)),
                pl.BlockSpec((1, Op), lambda b, t: (0, 0)),
            ],
            out_specs=pl.BlockSpec((tb, Op), lambda b, t: (b, 0)),  # resident
            scratch_shapes=[
                pltpu.VMEM((tt_block, tb, G), jnp.float32),
                pltpu.VMEM((tb, Hp), jnp.float32),
                pltpu.VMEM((tb, Hp), jnp.float32),
            ],
        ),
        compiler_params=pltpu.CompilerParams(
            dimension_semantics=("parallel", "arbitrary"),
            vmem_limit_bytes=32 * 1024 * 1024,
        ),
    )(x_tm, wih_t, whh_t, bias, fc_w_t, fc_b)


# -----------------------------------------------------------------------------
# One-time weight packing: pad H -> Hp (mult of 128), O -> Op (mult of 128),
# transpose to (in, 4Hp) / (Hp, Op) kernel layout.  Padded rows/cols are zero,
# so padded hidden lanes stay exactly zero through the recurrence.
# -----------------------------------------------------------------------------
def _pack_gate_matrix(w, H, Hp, in_rows_p):
    in_d = w.shape[1]
    out = jnp.zeros((in_rows_p, 4 * Hp), jnp.float32)
    for g in range(4):
        out = out.at[:in_d, g * Hp:g * Hp + H].set(w[g * H:(g + 1) * H, :].T)
    return out


def _pack_gate_bias(b, H, Hp):
    out = jnp.zeros((4 * Hp,), jnp.float32)
    for g in range(4):
        out = out.at[g * Hp:g * Hp + H].set(b[g * H:(g + 1) * H])
    return out


def pack_params(params):
    H = params["layers"][0][1].shape[1]          # w_hh: (4H, H)
    Hp = _round_up(H, LANE)
    packed_layers = []
    for li, (w_ih, w_hh, b_ih, b_hh) in enumerate(params["layers"]):
        in_d = w_ih.shape[1]
        in_p = in_d if li == 0 else Hp           # later layers consume padded h
        wih_t = _pack_gate_matrix(w_ih, H, Hp, in_p)
        whh_t = _pack_gate_matrix(w_hh, H, Hp, Hp)
        bias = _pack_gate_bias(b_ih + b_hh, H, Hp).reshape(1, 4 * Hp)
        packed_layers.append((wih_t, whh_t, bias))
    O = params["fc_w"].shape[0]
    Op = _round_up(O, LANE)
    fc_w_t = jnp.zeros((Hp, Op), jnp.float32).at[:H, :O].set(params["fc_w"].T)
    fc_b = jnp.zeros((1, Op), jnp.float32).at[0, :O].set(params["fc_b"])
    return {"layers": packed_layers, "fc_w_t": fc_w_t, "fc_b": fc_b}


# -----------------------------------------------------------------------------
# Top-level forward (mirrors the PyTorch module: batch_first LSTM + fc on
# out[:, -1, :]).  Padded batch rows / timesteps never contaminate real rows.
# -----------------------------------------------------------------------------
def _pick_tt_block(T, tb, Hp, d_max, cap=32, budget_bytes=6 * 1024 * 1024):
    # f32 bytes per timestep resident in VMEM: gx scratch + double-buffered
    # x and out blocks.
    per_step = tb * (4 * Hp + 2 * (d_max + Hp)) * 4
    tt = budget_bytes // max(per_step, 1)
    tt = min(int(tt), cap, _round_up(T, 8))
    tt = max(8, (tt // 8) * 8)
    return tt


def lstm_model_forward(x, packed, *, out_dim):
    B0, T, D = x.shape
    fc_w_t = packed["fc_w_t"]
    Hp = fc_w_t.shape[0]

    # Batch tiling: full (padded) batch per tile for small B, 128-row tiles
    # otherwise -> parallel grid axis feeds both v7x TensorCores.
    if B0 <= 128:
        tb = _round_up(max(B0, 8), 8)
        B_pad = tb
    else:
        tb = 128
        B_pad = _round_up(B0, 128)

    tt_block = _pick_tt_block(T, tb, Hp, max(D, Hp))
    T_pad = _round_up(T, tt_block)

    x_tm = jnp.transpose(x, (1, 0, 2)).astype(jnp.float32)        # (T, B0, D)
    x_tm = jnp.pad(x_tm, ((0, T_pad - T), (0, B_pad - B0), (0, 0)))

    n_layers = len(packed["layers"])
    out = None
    for li, (wih_t, whh_t, bias) in enumerate(packed["layers"]):
        if li < n_layers - 1:
            x_tm = lstm_layer_seq(x_tm, wih_t, whh_t, bias,
                                  tb=tb, tt_block=tt_block, hidden_p=Hp)
        else:
            out = lstm_layer_last_fused(x_tm, wih_t, whh_t, bias,
                                        fc_w_t, packed["fc_b"],
                                        tb=tb, tt_block=tt_block,
                                        hidden_p=Hp, seq_len=T)
    return out[:B0, :out_dim]


# -----------------------------------------------------------------------------
# Deterministic PyTorch-style init: uniform(-1/sqrt(H), 1/sqrt(H))
# -----------------------------------------------------------------------------
def init_params(key, input_dim, hidden_dim, num_layers, output_dim):
    k = 1.0 / math.sqrt(hidden_dim)
    layers = []
    for layer in range(num_layers):
        in_d = input_dim if layer == 0 else hidden_dim
        key, k1, k2, k3, k4 = jax.random.split(key, 5)
        w_ih = jax.random.uniform(k1, (4 * hidden_dim, in_d), jnp.float32, -k, k)
        w_hh = jax.random.uniform(k2, (4 * hidden_dim, hidden_dim), jnp.float32, -k, k)
        b_ih = jax.random.uniform(k3, (4 * hidden_dim,), jnp.float32, -k, k)
        b_hh = jax.random.uniform(k4, (4 * hidden_dim,), jnp.float32, -k, k)
        layers.append((w_ih, w_hh, b_ih, b_hh))
    key, k5, k6 = jax.random.split(key, 3)
    fc_w = jax.random.uniform(k5, (output_dim, hidden_dim), jnp.float32, -k, k)
    fc_b = jax.random.uniform(k6, (output_dim,), jnp.float32, -k, k)
    return {"layers": layers, "fc_w": fc_w, "fc_b": fc_b}


# -----------------------------------------------------------------------------
# Pure-JAX reference for the correctness check
# -----------------------------------------------------------------------------
def reference_forward(x, params):
    B = x.shape[0]
    inp = x
    for (w_ih, w_hh, b_ih, b_hh) in params["layers"]:
        H = w_hh.shape[1]
        h = jnp.zeros((B, H), jnp.float32)
        c = jnp.zeros((B, H), jnp.float32)
        outs = []
        for t in range(inp.shape[1]):
            g = inp[:, t, :] @ w_ih.T + b_ih + h @ w_hh.T + b_hh
            i = jax.nn.sigmoid(g[:, 0 * H:1 * H])
            f = jax.nn.sigmoid(g[:, 1 * H:2 * H])
            gg = jnp.tanh(g[:, 2 * H:3 * H])
            o = jax.nn.sigmoid(g[:, 3 * H:4 * H])
            c = f * c + i * gg
            h = o * jnp.tanh(c)
            outs.append(h)
        inp = jnp.stack(outs, axis=1)
    return inp[:, -1, :] @ params["fc_w"].T + params["fc_b"]


if __name__ == "__main__":
    batch, seq, input_dim, hidden_dim, num_layers, output_dim = 2, 8, 16, 32, 2, 4

    key = jax.random.PRNGKey(0)
    key, kx = jax.random.split(key)
    x = jax.random.normal(kx, (batch, seq, input_dim), jnp.float32)
    params = init_params(key, input_dim, hidden_dim, num_layers, output_dim)

    packed = pack_params(params)          # one-time pad/transpose (no per-call .T)
    fwd = jax.jit(lstm_model_forward, static_argnames=("out_dim",))

    out = jax.block_until_ready(fwd(x, packed, out_dim=output_dim))
    ref = reference_forward(x, params)
    assert out.shape == (batch, output_dim)
    assert jnp.allclose(out, ref, atol=1e-4, rtol=1e-4), (out, ref)
    print("KERNEL_OK")
</pallas_src>

<mosaic_0001>
module attributes {stable_mosaic.version = 11 : i64} {
  func.func @_lstm_last_kernel(%arg0: i32, %arg1: i32, %arg2: memref<8x8x128xf32, #tpu.memory_space<vmem>>, %arg3: memref<128x512xf32, #tpu.memory_space<vmem>>, %arg4: memref<128x512xf32, #tpu.memory_space<vmem>>, %arg5: memref<1x512xf32, #tpu.memory_space<vmem>>, %arg6: memref<128x128xf32, #tpu.memory_space<vmem>>, %arg7: memref<1x128xf32, #tpu.memory_space<vmem>>, %arg8: memref<8x128xf32, #tpu.memory_space<vmem>>, %arg9: memref<8x8x512xf32, #tpu.memory_space<vmem>>, %arg10: memref<8x128xf32, #tpu.memory_space<vmem>>, %arg11: memref<8x128xf32, #tpu.memory_space<vmem>>) attributes {dimension_semantics = [#tpu.dimension_semantics<parallel>, #tpu.dimension_semantics<arbitrary>], iteration_bounds = array<i64: 1, 1>, scalar_prefetch = 0 : i64, scratch_operands = 3 : i64, tpu.core_type = #tpu.core_type<tc>, window_params = [{transform_indices = @transform_0, window_bounds = array<i64: 8, 8, 128>}, {pipeline_mode = #tpu.pipeline_mode<synchronous>, transform_indices = @transform_1, window_bounds = array<i64: 128, 512>}, {pipeline_mode = #tpu.pipeline_mode<synchronous>, transform_indices = @transform_2, window_bounds = array<i64: 128, 512>}, {pipeline_mode = #tpu.pipeline_mode<synchronous>, transform_indices = @transform_3, window_bounds = array<i64: 1, 512>}, {pipeline_mode = #tpu.pipeline_mode<synchronous>, transform_indices = @transform_4, window_bounds = array<i64: 128, 128>}, {pipeline_mode = #tpu.pipeline_mode<synchronous>, transform_indices = @transform_5, window_bounds = array<i64: 1, 128>}, {transform_indices = @transform_6, window_bounds = array<i64: 8, 128>}]} {
    %c0_i32 = arith.constant 0 : i32
    %0 = arith.cmpi eq, %arg1, %c0_i32 : i32
    %1 = arith.extui %0 : i1 to i32
    %c0_i32_0 = arith.constant 0 : i32
    %2 = arith.cmpi ne, %1, %c0_i32_0 : i32
    scf.if %2 {
      %cst_81 = arith.constant 0.000000e+00 : f32
      %129 = vector.broadcast %cst_81 : f32 to vector<8x128xf32>
      %c0_82 = arith.constant 0 : index
      %c0_83 = arith.constant 0 : index
      %130 = vector.load %arg10[%c0_82, %c0_83] : memref<8x128xf32, #tpu.memory_space<vmem>>, vector<8x128xf32>
      tpu.vector_store %arg10[%c0_82, %c0_83], %129 {strides = array<i32>} : memref<8x128xf32, #tpu.memory_space<vmem>>, vector<8x128xf32>,
      %cst_84 = arith.constant 0.000000e+00 : f32
      %131 = vector.broadcast %cst_84 : f32 to vector<8x128xf32>
      %c0_85 = arith.constant 0 : index
      %c0_86 = arith.constant 0 : index
      %132 = vector.load %arg11[%c0_85, %c0_86] : memref<8x128xf32, #tpu.memory_space<vmem>>, vector<8x128xf32>
      tpu.vector_store %arg11[%c0_85, %c0_86], %131 {strides = array<i32>} : memref<8x128xf32, #tpu.memory_space<vmem>>, vector<8x128xf32>,
    } else {
    }
    %c0 = arith.constant 0 : index
    %c0_1 = arith.constant 0 : index
    %3 = vector.load %arg3[%c0, %c0_1] : memref<128x512xf32, #tpu.memory_space<vmem>>, vector<128x512xf32>
    %c0_2 = arith.constant 0 : index
    %c0_3 = arith.constant 0 : index
    %4 = vector.load %arg4[%c0_2, %c0_3] : memref<128x512xf32, #tpu.memory_space<vmem>>, vector<128x512xf32>
    %c0_4 = arith.constant 0 : index
    %c0_5 = arith.constant 0 : index
    %5 = vector.load %arg5[%c0_4, %c0_5] : memref<1x512xf32, #tpu.memory_space<vmem>>, vector<1x512xf32>
    %c0_i32_6 = arith.constant 0 : i32
    %6 = arith.index_cast %c0_i32_6 : i32 to index
    %c0_7 = arith.constant 0 : index
    %c0_8 = arith.constant 0 : index
    %7 = vector.load %arg2[%6, %c0_7, %c0_8] : memref<8x8x128xf32, #tpu.memory_space<vmem>>, vector<1x8x128xf32>
    %8 = vector.shape_cast %7 : vector<1x8x128xf32> to vector<8x128xf32>
    %cst = arith.constant dense<0.000000e+00> : vector<8x512xf32>
    %9 = tpu.matmul %8, %3, %cst {dimension_numbers = #tpu.dot_dimension_numbers<[1], [0], [0], [1], [0, 0, 1, 1], [], []>} : vector<8x128xf32>, vector<128x512xf32>, vector<8x512xf32> -> vector<8x512xf32>
    %10 = vector.broadcast %5 : vector<1x512xf32> to vector<8x512xf32>
    %11 = arith.addf %9, %10 : vector<8x512xf32>
    %12 = arith.index_cast %c0_i32_6 : i32 to index
    %c0_9 = arith.constant 0 : index
    %c0_10 = arith.constant 0 : index
    %13 = vector.load %arg9[%12, %c0_9, %c0_10] : memref<8x8x512xf32, #tpu.memory_space<vmem>>, vector<1x8x512xf32>
    %14 = vector.shape_cast %13 : vector<1x8x512xf32> to vector<8x512xf32>
    %15 = vector.shape_cast %11 : vector<8x512xf32> to vector<1x8x512xf32>
    tpu.vector_store %arg9[%12, %c0_9, %c0_10], %15 {strides = array<i32>} : memref<8x8x512xf32, #tpu.memory_space<vmem>>, vector<1x8x512xf32>,
    %c1_i32 = arith.constant 1 : i32
    %16 = arith.index_cast %c1_i32 : i32 to index
    %c0_11 = arith.constant 0 : index
    %c0_12 = arith.constant 0 : index
    %17 = vector.load %arg2[%16, %c0_11, %c0_12] : memref<8x8x128xf32, #tpu.memory_space<vmem>>, vector<1x8x128xf32>
    %18 = vector.shape_cast %17 : vector<1x8x128xf32> to vector<8x128xf32>
    %cst_13 = arith.constant dense<0.000000e+00> : vector<8x512xf32>
    %19 = tpu.matmul %18, %3, %cst_13 {dimension_numbers = #tpu.dot_dimension_numbers<[1], [0], [0], [1], [0, 0, 1, 1], [], []>} : vector<8x128xf32>, vector<128x512xf32>, vector<8x512xf32> -> vector<8x512xf32>
    %20 = vector.broadcast %5 : vector<1x512xf32> to vector<8x512xf32>
    %21 = arith.addf %19, %20 : vector<8x512xf32>
    %22 = arith.index_cast %c1_i32 : i32 to index
    %c0_14 = arith.constant 0 : index
    %c0_15 = arith.constant 0 : index
    %23 = vector.load %arg9[%22, %c0_14, %c0_15] : memref<8x8x512xf32, #tpu.memory_space<vmem>>, vector<1x8x512xf32>
    %24 = vector.shape_cast %23 : vector<1x8x512xf32> to vector<8x512xf32>
    %25 = vector.shape_cast %21 : vector<8x512xf32> to vector<1x8x512xf32>
    tpu.vector_store %arg9[%22, %c0_14, %c0_15], %25 {strides = array<i32>} : memref<8x8x512xf32, #tpu.memory_space<vmem>>, vector<1x8x512xf32>,
    %c2_i32 = arith.constant 2 : i32
    %26 = arith.index_cast %c2_i32 : i32 to index
    %c0_16 = arith.constant 0 : index
    %c0_17 = arith.constant 0 : index
    %27 = vector.load %arg2[%26, %c0_16, %c0_17] : memref<8x8x128xf32, #tpu.memory_space<vmem>>, vector<1x8x128xf32>
    %28 = vector.shape_cast %27 : vector<1x8x128xf32> to vector<8x128xf32>
    %cst_18 = arith.constant dense<0.000000e+00> : vector<8x512xf32>
    %29 = tpu.matmul %28, %3, %cst_18 {dimension_numbers = #tpu.dot_dimension_numbers<[1], [0], [0], [1], [0, 0, 1, 1], [], []>} : vector<8x128xf32>, vector<128x512xf32>, vector<8x512xf32> -> vector<8x512xf32>
    %30 = vector.broadcast %5 : vector<1x512xf32> to vector<8x512xf32>
    %31 = arith.addf %29, %30 : vector<8x512xf32>
    %32 = arith.index_cast %c2_i32 : i32 to index
    %c0_19 = arith.constant 0 : index
    %c0_20 = arith.constant 0 : index
    %33 = vector.load %arg9[%32, %c0_19, %c0_20] : memref<8x8x512xf32, #tpu.memory_space<vmem>>, vector<1x8x512xf32>
    %34 = vector.shape_cast %33 : vector<1x8x512xf32> to vector<8x512xf32>
    %35 = vector.shape_cast %31 : vector<8x512xf32> to vector<1x8x512xf32>
    tpu.vector_store %arg9[%32, %c0_19, %c0_20], %35 {strides = array<i32>} : memref<8x8x512xf32, #tpu.memory_space<vmem>>, vector<1x8x512xf32>,
    %c3_i32 = arith.constant 3 : i32
    %36 = arith.index_cast %c3_i32 : i32 to index
    %c0_21 = arith.constant 0 : index
    %c0_22 = arith.constant 0 : index
    %37 = vector.load %arg2[%36, %c0_21, %c0_22] : memref<8x8x128xf32, #tpu.memory_space<vmem>>, vector<1x8x128xf32>
    %38 = vector.shape_cast %37 : vector<1x8x128xf32> to vector<8x128xf32>
    %cst_23 = arith.constant dense<0.000000e+00> : vector<8x512xf32>
    %39 = tpu.matmul %38, %3, %cst_23 {dimension_numbers = #tpu.dot_dimension_numbers<[1], [0], [0], [1], [0, 0, 1, 1], [], []>} : vector<8x128xf32>, vector<128x512xf32>, vector<8x512xf32> -> vector<8x512xf32>
    %40 = vector.broadcast %5 : vector<1x512xf32> to vector<8x512xf32>
    %41 = arith.addf %39, %40 : vector<8x512xf32>
    %42 = arith.index_cast %c3_i32 : i32 to index
    %c0_24 = arith.constant 0 : index
    %c0_25 = arith.constant 0 : index
    %43 = vector.load %arg9[%42, %c0_24, %c0_25] : memref<8x8x512xf32, #tpu.memory_space<vmem>>, vector<1x8x512xf32>
    %44 = vector.shape_cast %43 : vector<1x8x512xf32> to vector<8x512xf32>
    %45 = vector.shape_cast %41 : vector<8x512xf32> to vector<1x8x512xf32>
    tpu.vector_store %arg9[%42, %c0_24, %c0_25], %45 {strides = array<i32>} : memref<8x8x512xf32, #tpu.memory_space<vmem>>, vector<1x8x512xf32>,
    %c4_i32 = arith.constant 4 : i32
    %46 = arith.index_cast %c4_i32 : i32 to index
    %c0_26 = arith.constant 0 : index
    %c0_27 = arith.constant 0 : index
    %47 = vector.load %arg2[%46, %c0_26, %c0_27] : memref<8x8x128xf32, #tpu.memory_space<vmem>>, vector<1x8x128xf32>
    %48 = vector.shape_cast %47 : vector<1x8x128xf32> to vector<8x128xf32>
    %cst_28 = arith.constant dense<0.000000e+00> : vector<8x512xf32>
    %49 = tpu.matmul %48, %3, %cst_28 {dimension_numbers = #tpu.dot_dimension_numbers<[1], [0], [0], [1], [0, 0, 1, 1], [], []>} : vector<8x128xf32>, vector<128x512xf32>, vector<8x512xf32> -> vector<8x512xf32>
    %50 = vector.broadcast %5 : vector<1x512xf32> to vector<8x512xf32>
    %51 = arith.addf %49, %50 : vector<8x512xf32>
    %52 = arith.index_cast %c4_i32 : i32 to index
    %c0_29 = arith.constant 0 : index
    %c0_30 = arith.constant 0 : index
    %53 = vector.load %arg9[%52, %c0_29, %c0_30] : memref<8x8x512xf32, #tpu.memory_space<vmem>>, vector<1x8x512xf32>
    %54 = vector.shape_cast %53 : vector<1x8x512xf32> to vector<8x512xf32>
    %55 = vector.shape_cast %51 : vector<8x512xf32> to vector<1x8x512xf32>
    tpu.vector_store %arg9[%52, %c0_29, %c0_30], %55 {strides = array<i32>} : memref<8x8x512xf32, #tpu.memory_space<vmem>>, vector<1x8x512xf32>,
    %c5_i32 = arith.constant 5 : i32
    %56 = arith.index_cast %c5_i32 : i32 to index
    %c0_31 = arith.constant 0 : index
    %c0_32 = arith.constant 0 : index
    %57 = vector.load %arg2[%56, %c0_31, %c0_32] : memref<8x8x128xf32, #tpu.memory_space<vmem>>, vector<1x8x128xf32>
    %58 = vector.shape_cast %57 : vector<1x8x128xf32> to vector<8x128xf32>
    %cst_33 = arith.constant dense<0.000000e+00> : vector<8x512xf32>
    %59 = tpu.matmul %58, %3, %cst_33 {dimension_numbers = #tpu.dot_dimension_numbers<[1], [0], [0], [1], [0, 0, 1, 1], [], []>} : vector<8x128xf32>, vector<128x512xf32>, vector<8x512xf32> -> vector<8x512xf32>
    %60 = vector.broadcast %5 : vector<1x512xf32> to vector<8x512xf32>
    %61 = arith.addf %59, %60 : vector<8x512xf32>
    %62 = arith.index_cast %c5_i32 : i32 to index
    %c0_34 = arith.constant 0 : index
    %c0_35 = arith.constant 0 : index
    %63 = vector.load %arg9[%62, %c0_34, %c0_35] : memref<8x8x512xf32, #tpu.memory_space<vmem>>, vector<1x8x512xf32>
    %64 = vector.shape_cast %63 : vector<1x8x512xf32> to vector<8x512xf32>
    %65 = vector.shape_cast %61 : vector<8x512xf32> to vector<1x8x512xf32>
    tpu.vector_store %arg9[%62, %c0_34, %c0_35], %65 {strides = array<i32>} : memref<8x8x512xf32, #tpu.memory_space<vmem>>, vector<1x8x512xf32>,
    %c6_i32 = arith.constant 6 : i32
    %66 = arith.index_cast %c6_i32 : i32 to index
    %c0_36 = arith.constant 0 : index
    %c0_37 = arith.constant 0 : index
    %67 = vector.load %arg2[%66, %c0_36, %c0_37] : memref<8x8x128xf32, #tpu.memory_space<vmem>>, vector<1x8x128xf32>
    %68 = vector.shape_cast %67 : vector<1x8x128xf32> to vector<8x128xf32>
    %cst_38 = arith.constant dense<0.000000e+00> : vector<8x512xf32>
    %69 = tpu.matmul %68, %3, %cst_38 {dimension_numbers = #tpu.dot_dimension_numbers<[1], [0], [0], [1], [0, 0, 1, 1], [], []>} : vector<8x128xf32>, vector<128x512xf32>, vector<8x512xf32> -> vector<8x512xf32>
    %70 = vector.broadcast %5 : vector<1x512xf32> to vector<8x512xf32>
    %71 = arith.addf %69, %70 : vector<8x512xf32>
    %72 = arith.index_cast %c6_i32 : i32 to index
    %c0_39 = arith.constant 0 : index
    %c0_40 = arith.constant 0 : index
    %73 = vector.load %arg9[%72, %c0_39, %c0_40] : memref<8x8x512xf32, #tpu.memory_space<vmem>>, vector<1x8x512xf32>
    %74 = vector.shape_cast %73 : vector<1x8x512xf32> to vector<8x512xf32>
    %75 = vector.shape_cast %71 : vector<8x512xf32> to vector<1x8x512xf32>
    tpu.vector_store %arg9[%72, %c0_39, %c0_40], %75 {strides = array<i32>} : memref<8x8x512xf32, #tpu.memory_space<vmem>>, vector<1x8x512xf32>,
    %c7_i32 = arith.constant 7 : i32
    %76 = arith.index_cast %c7_i32 : i32 to index
    %c0_41 = arith.constant 0 : index
    %c0_42 = arith.constant 0 : index
    %77 = vector.load %arg2[%76, %c0_41, %c0_42] : memref<8x8x128xf32, #tpu.memory_space<vmem>>, vector<1x8x128xf32>
    %78 = vector.shape_cast %77 : vector<1x8x128xf32> to vector<8x128xf32>
    %cst_43 = arith.constant dense<0.000000e+00> : vector<8x512xf32>
    %79 = tpu.matmul %78, %3, %cst_43 {dimension_numbers = #tpu.dot_dimension_numbers<[1], [0], [0], [1], [0, 0, 1, 1], [], []>} : vector<8x128xf32>, vector<128x512xf32>, vector<8x512xf32> -> vector<8x512xf32>
    %80 = vector.broadcast %5 : vector<1x512xf32> to vector<8x512xf32>
    %81 = arith.addf %79, %80 : vector<8x512xf32>
    %82 = arith.index_cast %c7_i32 : i32 to index
    %c0_44 = arith.constant 0 : index
    %c0_45 = arith.constant 0 : index
    %83 = vector.load %arg9[%82, %c0_44, %c0_45] : memref<8x8x512xf32, #tpu.memory_space<vmem>>, vector<1x8x512xf32>
    %84 = vector.shape_cast %83 : vector<1x8x512xf32> to vector<8x512xf32>
    %85 = vector.shape_cast %81 : vector<8x512xf32> to vector<1x8x512xf32>
    tpu.vector_store %arg9[%82, %c0_44, %c0_45], %85 {strides = array<i32>} : memref<8x8x512xf32, #tpu.memory_space<vmem>>, vector<1x8x512xf32>,
    %c8_i32 = arith.constant 8 : i32
    %c0_i32_46 = arith.constant 0 : i32
    %c8_i32_47 = arith.constant 8 : i32
    %86 = arith.muli %arg1, %c8_i32_47 : i32
    %87 = arith.addi %86, %c0_i32_46 : i32
    %c8_i32_48 = arith.constant 8 : i32
    %88 = arith.cmpi slt, %87, %c8_i32_48 : i32
    %89 = arith.extui %88 : i1 to i32
    %c0_i32_49 = arith.constant 0 : i32
    %90 = arith.cmpi ne, %89, %c0_i32_49 : i32
    scf.if %90 {
      %129 = arith.index_cast %c0_i32_46 : i32 to index
      %c0_81 = arith.constant 0 : index
      %c0_82 = arith.constant 0 : index
      %130 = vector.load %arg9[%129, %c0_81, %c0_82] : memref<8x8x512xf32, #tpu.memory_space<vmem>>, vector<1x8x512xf32>
      %131 = vector.shape_cast %130 : vector<1x8x512xf32> to vector<8x512xf32>
      %c0_83 = arith.constant 0 : index
      %c0_84 = arith.constant 0 : index
      %132 = vector.load %arg10[%c0_83, %c0_84] : memref<8x128xf32, #tpu.memory_space<vmem>>, vector<8x128xf32>
      %cst_85 = arith.constant dense<0.000000e+00> : vector<8x512xf32>
      %133 = tpu.matmul %132, %4, %cst_85 {dimension_numbers = #tpu.dot_dimension_numbers<[1], [0], [0], [1], [0, 0, 1, 1], [], []>} : vector<8x128xf32>, vector<128x512xf32>, vector<8x512xf32> -> vector<8x512xf32>
      %134 = arith.addf %131, %133 : vector<8x512xf32>
      %c0_86 = arith.constant 0 : index
      %c0_87 = arith.constant 0 : index
      %135 = vector.load %arg11[%c0_86, %c0_87] : memref<8x128xf32, #tpu.memory_space<vmem>>, vector<8x128xf32>
      %136 = vector.extract_strided_slice %134 {offsets = [0, 0], sizes = [8, 128], strides = [1, 1]} : vector<8x512xf32> to vector<8x128xf32>
      %cst_88 = arith.constant 5.000000e-01 : f32
      %137 = vector.broadcast %cst_88 : f32 to vector<8x128xf32>
      %138 = arith.mulf %137, %136 : vector<8x128xf32>
      %139 = math.tanh %138 : vector<8x128xf32>
      %cst_89 = arith.constant 5.000000e-01 : f32
      %140 = vector.broadcast %cst_89 : f32 to vector<8x128xf32>
      %141 = arith.mulf %140, %139 : vector<8x128xf32>
      %cst_90 = arith.constant 5.000000e-01 : f32
      %142 = vector.broadcast %cst_90 : f32 to vector<8x128xf32>
      %143 = arith.addf %141, %142 : vector<8x128xf32>
      %144 = vector.extract_strided_slice %134 {offsets = [0, 128], sizes = [8, 128], strides = [1, 1]} : vector<8x512xf32> to vector<8x128xf32>
      %cst_91 = arith.constant 5.000000e-01 : f32
      %145 = vector.broadcast %cst_91 : f32 to vector<8x128xf32>
      %146 = arith.mulf %145, %144 : vector<8x128xf32>
      %147 = math.tanh %146 : vector<8x128xf32>
      %cst_92 = arith.constant 5.000000e-01 : f32
      %148 = vector.broadcast %cst_92 : f32 to vector<8x128xf32>
      %149 = arith.mulf %148, %147 : vector<8x128xf32>
      %cst_93 = arith.constant 5.000000e-01 : f32
      %150 = vector.broadcast %cst_93 : f32 to vector<8x128xf32>
      %151 = arith.addf %149, %150 : vector<8x128xf32>
      %152 = vector.extract_strided_slice %134 {offsets = [0, 256], sizes = [8, 128], strides = [1, 1]} : vector<8x512xf32> to vector<8x128xf32>
      %153 = math.tanh %152 : vector<8x128xf32>
      %154 = vector.extract_strided_slice %134 {offsets = [0, 384], sizes = [8, 128], strides = [1, 1]} : vector<8x512xf32> to vector<8x128xf32>
      %cst_94 = arith.constant 5.000000e-01 : f32
      %155 = vector.broadcast %cst_94 : f32 to vector<8x128xf32>
      %156 = arith.mulf %155, %154 : vector<8x128xf32>
      %157 = math.tanh %156 : vector<8x128xf32>
      %cst_95 = arith.constant 5.000000e-01 : f32
      %158 = vector.broadcast %cst_95 : f32 to vector<8x128xf32>
      %159 = arith.mulf %158, %157 : vector<8x128xf32>
      %cst_96 = arith.constant 5.000000e-01 : f32
      %160 = vector.broadcast %cst_96 : f32 to vector<8x128xf32>
      %161 = arith.addf %159, %160 : vector<8x128xf32>
      %162 = arith.mulf %151, %135 : vector<8x128xf32>
      %163 = arith.mulf %143, %153 : vector<8x128xf32>
      %164 = arith.addf %162, %163 : vector<8x128xf32>
      %165 = math.tanh %164 : vector<8x128xf32>
      %166 = arith.mulf %161, %165 : vector<8x128xf32>
      %c0_97 = arith.constant 0 : index
      %c0_98 = arith.constant 0 : index
      %167 = vector.load %arg10[%c0_97, %c0_98] : memref<8x128xf32, #tpu.memory_space<vmem>>, vector<8x128xf32>
      tpu.vector_store %arg10[%c0_97, %c0_98], %166 {strides = array<i32>} : memref<8x128xf32, #tpu.memory_space<vmem>>, vector<8x128xf32>,
      %c0_99 = arith.constant 0 : index
      %c0_100 = arith.constant 0 : index
      %168 = vector.load %arg11[%c0_99, %c0_100] : memref<8x128xf32, #tpu.memory_space<vmem>>, vector<8x128xf32>
      tpu.vector_store %arg11[%c0_99, %c0_100], %164 {strides = array<i32>} : memref<8x128xf32, #tpu.memory_space<vmem>>, vector<8x128xf32>,
    } else {
    }
    %c1_i32_50 = arith.constant 1 : i32
    %c8_i32_51 = arith.constant 8 : i32
    %91 = arith.muli %arg1, %c8_i32_51 : i32
    %92 = arith.addi %91, %c1_i32_50 : i32
    %c8_i32_52 = arith.constant 8 : i32
    %93 = arith.cmpi slt, %92, %c8_i32_52 : i32
    %94 = arith.extui %93 : i1 to i32
    %c0_i32_53 = arith.constant 0 : i32
    %95 = arith.cmpi ne, %94, %c0_i32_53 : i32
    scf.if %95 {
      %129 = arith.index_cast %c1_i32_50 : i32 to index
      %c0_81 = arith.constant 0 : index
      %c0_82 = arith.constant 0 : index
      %130 = vector.load %arg9[%129, %c0_81, %c0_82] : memref<8x8x512xf32, #tpu.memory_space<vmem>>, vector<1x8x512xf32>
      %131 = vector.shape_cast %130 : vector<1x8x512xf32> to vector<8x512xf32>
      %c0_83 = arith.constant 0 : index
      %c0_84 = arith.constant 0 : index
      %132 = vector.load %arg10[%c0_83, %c0_84] : memref<8x128xf32, #tpu.memory_space<vmem>>, vector<8x128xf32>
      %cst_85 = arith.constant dense<0.000000e+00> : vector<8x512xf32>
      %133 = tpu.matmul %132, %4, %cst_85 {dimension_numbers = #tpu.dot_dimension_numbers<[1], [0], [0], [1], [0, 0, 1, 1], [], []>} : vector<8x128xf32>, vector<128x512xf32>, vector<8x512xf32> -> vector<8x512xf32>
      %134 = arith.addf %131, %133 : vector<8x512xf32>
      %c0_86 = arith.constant 0 : index
      %c0_87 = arith.constant 0 : index
      %135 = vector.load %arg11[%c0_86, %c0_87] : memref<8x128xf32, #tpu.memory_space<vmem>>, vector<8x128xf32>
      %136 = vector.extract_strided_slice %134 {offsets = [0, 0], sizes = [8, 128], strides = [1, 1]} : vector<8x512xf32> to vector<8x128xf32>
      %cst_88 = arith.constant 5.000000e-01 : f32
      %137 = vector.broadcast %cst_88 : f32 to vector<8x128xf32>
      %138 = arith.mulf %137, %136 : vector<8x128xf32>
      %139 = math.tanh %138 : vector<8x128xf32>
      %cst_89 = arith.constant 5.000000e-01 : f32
      %140 = vector.broadcast %cst_89 : f32 to vector<8x128xf32>
      %141 = arith.mulf %140, %139 : vector<8x128xf32>
      %cst_90 = arith.constant 5.000000e-01 : f32
      %142 = vector.broadcast %cst_90 : f32 to vector<8x128xf32>
      %143 = arith.addf %141, %142 : vector<8x128xf32>
      %144 = vector.extract_strided_slice %134 {offsets = [0, 128], sizes = [8, 128], strides = [1, 1]} : vector<8x512xf32> to vector<8x128xf32>
      %cst_91 = arith.constant 5.000000e-01 : f32
      %145 = vector.broadcast %cst_91 : f32 to vector<8x128xf32>
      %146 = arith.mulf %145, %144 : vector<8x128xf32>
      %147 = math.tanh %146 : vector<8x128xf32>
      %cst_92 = arith.constant 5.000000e-01 : f32
      %148 = vector.broadcast %cst_92 : f32 to vector<8x128xf32>
      %149 = arith.mulf %148, %147 : vector<8x128xf32>
      %cst_93 = arith.constant 5.000000e-01 : f32
      %150 = vector.broadcast %cst_93 : f32 to vector<8x128xf32>
      %151 = arith.addf %149, %150 : vector<8x128xf32>
      %152 = vector.extract_strided_slice %134 {offsets = [0, 256], sizes = [8, 128], strides = [1, 1]} : vector<8x512xf32> to vector<8x128xf32>
      %153 = math.tanh %152 : vector<8x128xf32>
      %154 = vector.extract_strided_slice %134 {offsets = [0, 384], sizes = [8, 128], strides = [1, 1]} : vector<8x512xf32> to vector<8x128xf32>
      %cst_94 = arith.constant 5.000000e-01 : f32
      %155 = vector.broadcast %cst_94 : f32 to vector<8x128xf32>
      %156 = arith.mulf %155, %154 : vector<8x128xf32>
      %157 = math.tanh %156 : vector<8x128xf32>
      %cst_95 = arith.constant 5.000000e-01 : f32
      %158 = vector.broadcast %cst_95 : f32 to vector<8x128xf32>
      %159 = arith.mulf %158, %157 : vector<8x128xf32>
      %cst_96 = arith.constant 5.000000e-01 : f32
      %160 = vector.broadcast %cst_96 : f32 to vector<8x128xf32>
      %161 = arith.addf %159, %160 : vector<8x128xf32>
      %162 = arith.mulf %151, %135 : vector<8x128xf32>
      %163 = arith.mulf %143, %153 : vector<8x128xf32>
      %164 = arith.addf %162, %163 : vector<8x128xf32>
      %165 = math.tanh %164 : vector<8x128xf32>
      %166 = arith.mulf %161, %165 : vector<8x128xf32>
      %c0_97 = arith.constant 0 : index
      %c0_98 = arith.constant 0 : index
      %167 = vector.load %arg10[%c0_97, %c0_98] : memref<8x128xf32, #tpu.memory_space<vmem>>, vector<8x128xf32>
      tpu.vector_store %arg10[%c0_97, %c0_98], %166 {strides = array<i32>} : memref<8x128xf32, #tpu.memory_space<vmem>>, vector<8x128xf32>,
      %c0_99 = arith.constant 0 : index
      %c0_100 = arith.constant 0 : index
      %168 = vector.load %arg11[%c0_99, %c0_100] : memref<8x128xf32, #tpu.memory_space<vmem>>, vector<8x128xf32>
      tpu.vector_store %arg11[%c0_99, %c0_100], %164 {strides = array<i32>} : memref<8x128xf32, #tpu.memory_space<vmem>>, vector<8x128xf32>,
    } else {
    }
    %c2_i32_54 = arith.constant 2 : i32
    %c8_i32_55 = arith.constant 8 : i32
    %96 = arith.muli %arg1, %c8_i32_55 : i32
    %97 = arith.addi %96, %c2_i32_54 : i32
    %c8_i32_56 = arith.constant 8 : i32
    %98 = arith.cmpi slt, %97, %c8_i32_56 : i32
    %99 = arith.extui %98 : i1 to i32
    %c0_i32_57 = arith.constant 0 : i32
    %100 = arith.cmpi ne, %99, %c0_i32_57 : i32
    scf.if %100 {
      %129 = arith.index_cast %c2_i32_54 : i32 to index
      %c0_81 = arith.constant 0 : index
      %c0_82 = arith.constant 0 : index
      %130 = vector.load %arg9[%129, %c0_81, %c0_82] : memref<8x8x512xf32, #tpu.memory_space<vmem>>, vector<1x8x512xf32>
      %131 = vector.shape_cast %130 : vector<1x8x512xf32> to vector<8x512xf32>
      %c0_83 = arith.constant 0 : index
      %c0_84 = arith.constant 0 : index
      %132 = vector.load %arg10[%c0_83, %c0_84] : memref<8x128xf32, #tpu.memory_space<vmem>>, vector<8x128xf32>
      %cst_85 = arith.constant dense<0.000000e+00> : vector<8x512xf32>
      %133 = tpu.matmul %132, %4, %cst_85 {dimension_numbers = #tpu.dot_dimension_numbers<[1], [0], [0], [1], [0, 0, 1, 1], [], []>} : vector<8x128xf32>, vector<128x512xf32>, vector<8x512xf32> -> vector<8x512xf32>
      %134 = arith.addf %131, %133 : vector<8x512xf32>
      %c0_86 = arith.constant 0 : index
      %c0_87 = arith.constant 0 : index
      %135 = vector.load %arg11[%c0_86, %c0_87] : memref<8x128xf32, #tpu.memory_space<vmem>>, vector<8x128xf32>
      %136 = vector.extract_strided_slice %134 {offsets = [0, 0], sizes = [8, 128], strides = [1, 1]} : vector<8x512xf32> to vector<8x128xf32>
      %cst_88 = arith.constant 5.000000e-01 : f32
      %137 = vector.broadcast %cst_88 : f32 to vector<8x128xf32>
      %138 = arith.mulf %137, %136 : vector<8x128xf32>
      %139 = math.tanh %138 : vector<8x128xf32>
      %cst_89 = arith.constant 5.000000e-01 : f32
      %140 = vector.broadcast %cst_89 : f32 to vector<8x128xf32>
      %141 = arith.mulf %140, %139 : vector<8x128xf32>
      %cst_90 = arith.constant 5.000000e-01 : f32
      %142 = vector.broadcast %cst_90 : f32 to vector<8x128xf32>
      %143 = arith.addf %141, %142 : vector<8x128xf32>
      %144 = vector.extract_strided_slice %134 {offsets = [0, 128], sizes = [8, 128], strides = [1, 1]} : vector<8x512xf32> to vector<8x128xf32>
      %cst_91 = arith.constant 5.000000e-01 : f32
      %145 = vector.broadcast %cst_91 : f32 to vector<8x128xf32>
      %146 = arith.mulf %145, %144 : vector<8x128xf32>
      %147 = math.tanh %146 : vector<8x128xf32>
      %cst_92 = arith.constant 5.000000e-01 : f32
      %148 = vector.broadcast %cst_92 : f32 to vector<8x128xf32>
      %149 = arith.mulf %148, %147 : vector<8x128xf32>
      %cst_93 = arith.constant 5.000000e-01 : f32
      %150 = vector.broadcast %cst_93 : f32 to vector<8x128xf32>
      %151 = arith.addf %149, %150 : vector<8x128xf32>
      %152 = vector.extract_strided_slice %134 {offsets = [0, 256], sizes = [8, 128], strides = [1, 1]} : vector<8x512xf32> to vector<8x128xf32>
      %153 = math.tanh %152 : vector<8x128xf32>
      %154 = vector.extract_strided_slice %134 {offsets = [0, 384], sizes = [8, 128], strides = [1, 1]} : vector<8x512xf32> to vector<8x128xf32>
      %cst_94 = arith.constant 5.000000e-01 : f32
      %155 = vector.broadcast %cst_94 : f32 to vector<8x128xf32>
      %156 = arith.mulf %155, %154 : vector<8x128xf32>
      %157 = math.tanh %156 : vector<8x128xf32>
      %cst_95 = arith.constant 5.000000e-01 : f32
      %158 = vector.broadcast %cst_95 : f32 to vector<8x128xf32>
      %159 = arith.mulf %158, %157 : vector<8x128xf32>
      %cst_96 = arith.constant 5.000000e-01 : f32
      %160 = vector.broadcast %cst_96 : f32 to vector<8x128xf32>
      %161 = arith.addf %159, %160 : vector<8x128xf32>
      %162 = arith.mulf %151, %135 : vector<8x128xf32>
      %163 = arith.mulf %143, %153 : vector<8x128xf32>
      %164 = arith.addf %162, %163 : vector<8x128xf32>
      %165 = math.tanh %164 : vector<8x128xf32>
      %166 = arith.mulf %161, %165 : vector<8x128xf32>
      %c0_97 = arith.constant 0 : index
      %c0_98 = arith.constant 0 : index
      %167 = vector.load %arg10[%c0_97, %c0_98] : memref<8x128xf32, #tpu.memory_space<vmem>>, vector<8x128xf32>
      tpu.vector_store %arg10[%c0_97, %c0_98], %166 {strides = array<i32>} : memref<8x128xf32, #tpu.memory_space<vmem>>, vector<8x128xf32>,
      %c0_99 = arith.constant 0 : index
      %c0_100 = arith.constant 0 : index
      %168 = vector.load %arg11[%c0_99, %c0_100] : memref<8x128xf32, #tpu.memory_space<vmem>>, vector<8x128xf32>
      tpu.vector_store %arg11[%c0_99, %c0_100], %164 {strides = array<i32>} : memref<8x128xf32, #tpu.memory_space<vmem>>, vector<8x128xf32>,
    } else {
    }
    %c3_i32_58 = arith.constant 3 : i32
    %c8_i32_59 = arith.constant 8 : i32
    %101 = arith.muli %arg1, %c8_i32_59 : i32
    %102 = arith.addi %101, %c3_i32_58 : i32
    %c8_i32_60 = arith.constant 8 : i32
    %103 = arith.cmpi slt, %102, %c8_i32_60 : i32
    %104 = arith.extui %103 : i1 to i32
    %c0_i32_61 = arith.constant 0 : i32
    %105 = arith.cmpi ne, %104, %c0_i32_61 : i32
    scf.if %105 {
      %129 = arith.index_cast %c3_i32_58 : i32 to index
      %c0_81 = arith.constant 0 : index
      %c0_82 = arith.constant 0 : index
      %130 = vector.load %arg9[%129, %c0_81, %c0_82] : memref<8x8x512xf32, #tpu.memory_space<vmem>>, vector<1x8x512xf32>
      %131 = vector.shape_cast %130 : vector<1x8x512xf32> to vector<8x512xf32>
      %c0_83 = arith.constant 0 : index
      %c0_84 = arith.constant 0 : index
      %132 = vector.load %arg10[%c0_83, %c0_84] : memref<8x128xf32, #tpu.memory_space<vmem>>, vector<8x128xf32>
      %cst_85 = arith.constant dense<0.000000e+00> : vector<8x512xf32>
      %133 = tpu.matmul %132, %4, %cst_85 {dimension_numbers = #tpu.dot_dimension_numbers<[1], [0], [0], [1], [0, 0, 1, 1], [], []>} : vector<8x128xf32>, vector<128x512xf32>, vector<8x512xf32> -> vector<8x512xf32>
      %134 = arith.addf %131, %133 : vector<8x512xf32>
      %c0_86 = arith.constant 0 : index
      %c0_87 = arith.constant 0 : index
      %135 = vector.load %arg11[%c0_86, %c0_87] : memref<8x128xf32, #tpu.memory_space<vmem>>, vector<8x128xf32>
      %136 = vector.extract_strided_slice %134 {offsets = [0, 0], sizes = [8, 128], strides = [1, 1]} : vector<8x512xf32> to vector<8x128xf32>
      %cst_88 = arith.constant 5.000000e-01 : f32
      %137 = vector.broadcast %cst_88 : f32 to vector<8x128xf32>
      %138 = arith.mulf %137, %136 : vector<8x128xf32>
      %139 = math.tanh %138 : vector<8x128xf32>
      %cst_89 = arith.constant 5.000000e-01 : f32
      %140 = vector.broadcast %cst_89 : f32 to vector<8x128xf32>
      %141 = arith.mulf %140, %139 : vector<8x128xf32>
      %cst_90 = arith.constant 5.000000e-01 : f32
      %142 = vector.broadcast %cst_90 : f32 to vector<8x128xf32>
      %143 = arith.addf %141, %142 : vector<8x128xf32>
      %144 = vector.extract_strided_slice %134 {offsets = [0, 128], sizes = [8, 128], strides = [1, 1]} : vector<8x512xf32> to vector<8x128xf32>
      %cst_91 = arith.constant 5.000000e-01 : f32
      %145 = vector.broadcast %cst_91 : f32 to vector<8x128xf32>
      %146 = arith.mulf %145, %144 : vector<8x128xf32>
      %147 = math.tanh %146 : vector<8x128xf32>
      %cst_92 = arith.constant 5.000000e-01 : f32
      %148 = vector.broadcast %cst_92 : f32 to vector<8x128xf32>
      %149 = arith.mulf %148, %147 : vector<8x128xf32>
      %cst_93 = arith.constant 5.000000e-01 : f32
      %150 = vector.broadcast %cst_93 : f32 to vector<8x128xf32>
      %151 = arith.addf %149, %150 : vector<8x128xf32>
      %152 = vector.extract_strided_slice %134 {offsets = [0, 256], sizes = [8, 128], strides = [1, 1]} : vector<8x512xf32> to vector<8x128xf32>
      %153 = math.tanh %152 : vector<8x128xf32>
      %154 = vector.extract_strided_slice %134 {offsets = [0, 384], sizes = [8, 128], strides = [1, 1]} : vector<8x512xf32> to vector<8x128xf32>
      %cst_94 = arith.constant 5.000000e-01 : f32
      %155 = vector.broadcast %cst_94 : f32 to vector<8x128xf32>
      %156 = arith.mulf %155, %154 : vector<8x128xf32>
      %157 = math.tanh %156 : vector<8x128xf32>
      %cst_95 = arith.constant 5.000000e-01 : f32
      %158 = vector.broadcast %cst_95 : f32 to vector<8x128xf32>
      %159 = arith.mulf %158, %157 : vector<8x128xf32>
      %cst_96 = arith.constant 5.000000e-01 : f32
      %160 = vector.broadcast %cst_96 : f32 to vector<8x128xf32>
      %161 = arith.addf %159, %160 : vector<8x128xf32>
      %162 = arith.mulf %151, %135 : vector<8x128xf32>
      %163 = arith.mulf %143, %153 : vector<8x128xf32>
      %164 = arith.addf %162, %163 : vector<8x128xf32>
      %165 = math.tanh %164 : vector<8x128xf32>
      %166 = arith.mulf %161, %165 : vector<8x128xf32>
      %c0_97 = arith.constant 0 : index
      %c0_98 = arith.constant 0 : index
      %167 = vector.load %arg10[%c0_97, %c0_98] : memref<8x128xf32, #tpu.memory_space<vmem>>, vector<8x128xf32>
      tpu.vector_store %arg10[%c0_97, %c0_98], %166 {strides = array<i32>} : memref<8x128xf32, #tpu.memory_space<vmem>>, vector<8x128xf32>,
      %c0_99 = arith.constant 0 : index
      %c0_100 = arith.constant 0 : index
      %168 = vector.load %arg11[%c0_99, %c0_100] : memref<8x128xf32, #tpu.memory_space<vmem>>, vector<8x128xf32>
      tpu.vector_store %arg11[%c0_99, %c0_100], %164 {strides = array<i32>} : memref<8x128xf32, #tpu.memory_space<vmem>>, vector<8x128xf32>,
    } else {
    }
    %c4_i32_62 = arith.constant 4 : i32
    %c8_i32_63 = arith.constant 8 : i32
    %106 = arith.muli %arg1, %c8_i32_63 : i32
    %107 = arith.addi %106, %c4_i32_62 : i32
    %c8_i32_64 = arith.constant 8 : i32
    %108 = arith.cmpi slt, %107, %c8_i32_64 : i32
    %109 = arith.extui %108 : i1 to i32
    %c0_i32_65 = arith.constant 0 : i32
    %110 = arith.cmpi ne, %109, %c0_i32_65 : i32
    scf.if %110 {
      %129 = arith.index_cast %c4_i32_62 : i32 to index
      %c0_81 = arith.constant 0 : index
      %c0_82 = arith.constant 0 : index
      %130 = vector.load %arg9[%129, %c0_81, %c0_82] : memref<8x8x512xf32, #tpu.memory_space<vmem>>, vector<1x8x512xf32>
      %131 = vector.shape_cast %130 : vector<1x8x512xf32> to vector<8x512xf32>
      %c0_83 = arith.constant 0 : index
      %c0_84 = arith.constant 0 : index
      %132 = vector.load %arg10[%c0_83, %c0_84] : memref<8x128xf32, #tpu.memory_space<vmem>>, vector<8x128xf32>
      %cst_85 = arith.constant dense<0.000000e+00> : vector<8x512xf32>
      %133 = tpu.matmul %132, %4, %cst_85 {dimension_numbers = #tpu.dot_dimension_numbers<[1], [0], [0], [1], [0, 0, 1, 1], [], []>} : vector<8x128xf32>, vector<128x512xf32>, vector<8x512xf32> -> vector<8x512xf32>
      %134 = arith.addf %131, %133 : vector<8x512xf32>
      %c0_86 = arith.constant 0 : index
      %c0_87 = arith.constant 0 : index
      %135 = vector.load %arg11[%c0_86, %c0_87] : memref<8x128xf32, #tpu.memory_space<vmem>>, vector<8x128xf32>
      %136 = vector.extract_strided_slice %134 {offsets = [0, 0], sizes = [8, 128], strides = [1, 1]} : vector<8x512xf32> to vector<8x128xf32>
      %cst_88 = arith.constant 5.000000e-01 : f32
      %137 = vector.broadcast %cst_88 : f32 to vector<8x128xf32>
      %138 = arith.mulf %137, %136 : vector<8x128xf32>
      %139 = math.tanh %138 : vector<8x128xf32>
      %cst_89 = arith.constant 5.000000e-01 : f32
      %140 = vector.broadcast %cst_89 : f32 to vector<8x128xf32>
      %141 = arith.mulf %140, %139 : vector<8x128xf32>
      %cst_90 = arith.constant 5.000000e-01 : f32
      %142 = vector.broadcast %cst_90 : f32 to vector<8x128xf32>
      %143 = arith.addf %141, %142 : vector<8x128xf32>
      %144 = vector.extract_strided_slice %134 {offsets = [0, 128], sizes = [8, 128], strides = [1, 1]} : vector<8x512xf32> to vector<8x128xf32>
      %cst_91 = arith.constant 5.000000e-01 : f32
      %145 = vector.broadcast %cst_91 : f32 to vector<8x128xf32>
      %146 = arith.mulf %145, %144 : vector<8x128xf32>
      %147 = math.tanh %146 : vector<8x128xf32>
      %cst_92 = arith.constant 5.000000e-01 : f32
      %148 = vector.broadcast %cst_92 : f32 to vector<8x128xf32>
      %149 = arith.mulf %148, %147 : vector<8x128xf32>
      %cst_93 = arith.constant 5.000000e-01 : f32
      %150 = vector.broadcast %cst_93 : f32 to vector<8x128xf32>
      %151 = arith.addf %149, %150 : vector<8x128xf32>
      %152 = vector.extract_strided_slice %134 {offsets = [0, 256], sizes = [8, 128], strides = [1, 1]} : vector<8x512xf32> to vector<8x128xf32>
      %153 = math.tanh %152 : vector<8x128xf32>
      %154 = vector.extract_strided_slice %134 {offsets = [0, 384], sizes = [8, 128], strides = [1, 1]} : vector<8x512xf32> to vector<8x128xf32>
      %cst_94 = arith.constant 5.000000e-01 : f32
      %155 = vector.broadcast %cst_94 : f32 to vector<8x128xf32>
      %156 = arith.mulf %155, %154 : vector<8x128xf32>
      %157 = math.tanh %156 : vector<8x128xf32>
      %cst_95 = arith.constant 5.000000e-01 : f32
      %158 = vector.broadcast %cst_95 : f32 to vector<8x128xf32>
      %159 = arith.mulf %158, %157 : vector<8x128xf32>
      %cst_96 = arith.constant 5.000000e-01 : f32
      %160 = vector.broadcast %cst_96 : f32 to vector<8x128xf32>
      %161 = arith.addf %159, %160 : vector<8x128xf32>
      %162 = arith.mulf %151, %135 : vector<8x128xf32>
      %163 = arith.mulf %143, %153 : vector<8x128xf32>
      %164 = arith.addf %162, %163 : vector<8x128xf32>
      %165 = math.tanh %164 : vector<8x128xf32>
      %166 = arith.mulf %161, %165 : vector<8x128xf32>
      %c0_97 = arith.constant 0 : index
      %c0_98 = arith.constant 0 : index
      %167 = vector.load %arg10[%c0_97, %c0_98] : memref<8x128xf32, #tpu.memory_space<vmem>>, vector<8x128xf32>
      tpu.vector_store %arg10[%c0_97, %c0_98], %166 {strides = array<i32>} : memref<8x128xf32, #tpu.memory_space<vmem>>, vector<8x128xf32>,
      %c0_99 = arith.constant 0 : index
      %c0_100 = arith.constant 0 : index
      %168 = vector.load %arg11[%c0_99, %c0_100] : memref<8x128xf32, #tpu.memory_space<vmem>>, vector<8x128xf32>
      tpu.vector_store %arg11[%c0_99, %c0_100], %164 {strides = array<i32>} : memref<8x128xf32, #tpu.memory_space<vmem>>, vector<8x128xf32>,
    } else {
    }
    %c5_i32_66 = arith.constant 5 : i32
    %c8_i32_67 = arith.constant 8 : i32
    %111 = arith.muli %arg1, %c8_i32_67 : i32
    %112 = arith.addi %111, %c5_i32_66 : i32
    %c8_i32_68 = arith.constant 8 : i32
    %113 = arith.cmpi slt, %112, %c8_i32_68 : i32
    %114 = arith.extui %113 : i1 to i32
    %c0_i32_69 = arith.constant 0 : i32
    %115 = arith.cmpi ne, %114, %c0_i32_69 : i32
    scf.if %115 {
      %129 = arith.index_cast %c5_i32_66 : i32 to index
      %c0_81 = arith.constant 0 : index
      %c0_82 = arith.constant 0 : index
      %130 = vector.load %arg9[%129, %c0_81, %c0_82] : memref<8x8x512xf32, #tpu.memory_space<vmem>>, vector<1x8x512xf32>
      %131 = vector.shape_cast %130 : vector<1x8x512xf32> to vector<8x512xf32>
      %c0_83 = arith.constant 0 : index
      %c0_84 = arith.constant 0 : index
      %132 = vector.load %arg10[%c0_83, %c0_84] : memref<8x128xf32, #tpu.memory_space<vmem>>, vector<8x128xf32>
      %cst_85 = arith.constant dense<0.000000e+00> : vector<8x512xf32>
      %133 = tpu.matmul %132, %4, %cst_85 {dimension_numbers = #tpu.dot_dimension_numbers<[1], [0], [0], [1], [0, 0, 1, 1], [], []>} : vector<8x128xf32>, vector<128x512xf32>, vector<8x512xf32> -> vector<8x512xf32>
      %134 = arith.addf %131, %133 : vector<8x512xf32>
      %c0_86 = arith.constant 0 : index
      %c0_87 = arith.constant 0 : index
      %135 = vector.load %arg11[%c0_86, %c0_87] : memref<8x128xf32, #tpu.memory_space<vmem>>, vector<8x128xf32>
      %136 = vector.extract_strided_slice %134 {offsets = [0, 0], sizes = [8, 128], strides = [1, 1]} : vector<8x512xf32> to vector<8x128xf32>
      %cst_88 = arith.constant 5.000000e-01 : f32
      %137 = vector.broadcast %cst_88 : f32 to vector<8x128xf32>
      %138 = arith.mulf %137, %136 : vector<8x128xf32>
      %139 = math.tanh %138 : vector<8x128xf32>
      %cst_89 = arith.constant 5.000000e-01 : f32
      %140 = vector.broadcast %cst_89 : f32 to vector<8x128xf32>
      %141 = arith.mulf %140, %139 : vector<8x128xf32>
      %cst_90 = arith.constant 5.000000e-01 : f32
      %142 = vector.broadcast %cst_90 : f32 to vector<8x128xf32>
      %143 = arith.addf %141, %142 : vector<8x128xf32>
      %144 = vector.extract_strided_slice %134 {offsets = [0, 128], sizes = [8, 128], strides = [1, 1]} : vector<8x512xf32> to vector<8x128xf32>
      %cst_91 = arith.constant 5.000000e-01 : f32
      %145 = vector.broadcast %cst_91 : f32 to vector<8x128xf32>
      %146 = arith.mulf %145, %144 : vector<8x128xf32>
      %147 = math.tanh %146 : vector<8x128xf32>
      %cst_92 = arith.constant 5.000000e-01 : f32
      %148 = vector.broadcast %cst_92 : f32 to vector<8x128xf32>
      %149 = arith.mulf %148, %147 : vector<8x128xf32>
      %cst_93 = arith.constant 5.000000e-01 : f32
      %150 = vector.broadcast %cst_93 : f32 to vector<8x128xf32>
      %151 = arith.addf %149, %150 : vector<8x128xf32>
      %152 = vector.extract_strided_slice %134 {offsets = [0, 256], sizes = [8, 128], strides = [1, 1]} : vector<8x512xf32> to vector<8x128xf32>
      %153 = math.tanh %152 : vector<8x128xf32>
      %154 = vector.extract_strided_slice %134 {offsets = [0, 384], sizes = [8, 128], strides = [1, 1]} : vector<8x512xf32> to vector<8x128xf32>
      %cst_94 = arith.constant 5.000000e-01 : f32
      %155 = vector.broadcast %cst_94 : f32 to vector<8x128xf32>
      %156 = arith.mulf %155, %154 : vector<8x128xf32>
      %157 = math.tanh %156 : vector<8x128xf32>
      %cst_95 = arith.constant 5.000000e-01 : f32
      %158 = vector.broadcast %cst_95 : f32 to vector<8x128xf32>
      %159 = arith.mulf %158, %157 : vector<8x128xf32>
      %cst_96 = arith.constant 5.000000e-01 : f32
      %160 = vector.broadcast %cst_96 : f32 to vector<8x128xf32>
      %161 = arith.addf %159, %160 : vector<8x128xf32>
      %162 = arith.mulf %151, %135 : vector<8x128xf32>
      %163 = arith.mulf %143, %153 : vector<8x128xf32>
      %164 = arith.addf %162, %163 : vector<8x128xf32>
      %165 = math.tanh %164 : vector<8x128xf32>
      %166 = arith.mulf %161, %165 : vector<8x128xf32>
      %c0_97 = arith.constant 0 : index
      %c0_98 = arith.constant 0 : index
      %167 = vector.load %arg10[%c0_97, %c0_98] : memref<8x128xf32, #tpu.memory_space<vmem>>, vector<8x128xf32>
      tpu.vector_store %arg10[%c0_97, %c0_98], %166 {strides = array<i32>} : memref<8x128xf32, #tpu.memory_space<vmem>>, vector<8x128xf32>,
      %c0_99 = arith.constant 0 : index
      %c0_100 = arith.constant 0 : index
      %168 = vector.load %arg11[%c0_99, %c0_100] : memref<8x128xf32, #tpu.memory_space<vmem>>, vector<8x128xf32>
      tpu.vector_store %arg11[%c0_99, %c0_100], %164 {strides = array<i32>} : memref<8x128xf32, #tpu.memory_space<vmem>>, vector<8x128xf32>,
    } else {
    }
    %c6_i32_70 = arith.constant 6 : i32
    %c8_i32_71 = arith.constant 8 : i32
    %116 = arith.muli %arg1, %c8_i32_71 : i32
    %117 = arith.addi %116, %c6_i32_70 : i32
    %c8_i32_72 = arith.constant 8 : i32
    %118 = arith.cmpi slt, %117, %c8_i32_72 : i32
    %119 = arith.extui %118 : i1 to i32
    %c0_i32_73 = arith.constant 0 : i32
    %120 = arith.cmpi ne, %119, %c0_i32_73 : i32
    scf.if %120 {
      %129 = arith.index_cast %c6_i32_70 : i32 to index
      %c0_81 = arith.constant 0 : index
      %c0_82 = arith.constant 0 : index
      %130 = vector.load %arg9[%129, %c0_81, %c0_82] : memref<8x8x512xf32, #tpu.memory_space<vmem>>, vector<1x8x512xf32>
      %131 = vector.shape_cast %130 : vector<1x8x512xf32> to vector<8x512xf32>
      %c0_83 = arith.constant 0 : index
      %c0_84 = arith.constant 0 : index
      %132 = vector.load %arg10[%c0_83, %c0_84] : memref<8x128xf32, #tpu.memory_space<vmem>>, vector<8x128xf32>
      %cst_85 = arith.constant dense<0.000000e+00> : vector<8x512xf32>
      %133 = tpu.matmul %132, %4, %cst_85 {dimension_numbers = #tpu.dot_dimension_numbers<[1], [0], [0], [1], [0, 0, 1, 1], [], []>} : vector<8x128xf32>, vector<128x512xf32>, vector<8x512xf32> -> vector<8x512xf32>
      %134 = arith.addf %131, %133 : vector<8x512xf32>
      %c0_86 = arith.constant 0 : index
      %c0_87 = arith.constant 0 : index
      %135 = vector.load %arg11[%c0_86, %c0_87] : memref<8x128xf32, #tpu.memory_space<vmem>>, vector<8x128xf32>
      %136 = vector.extract_strided_slice %134 {offsets = [0, 0], sizes = [8, 128], strides = [1, 1]} : vector<8x512xf32> to vector<8x128xf32>
      %cst_88 = arith.constant 5.000000e-01 : f32
      %137 = vector.broadcast %cst_88 : f32 to vector<8x128xf32>
      %138 = arith.mulf %137, %136 : vector<8x128xf32>
      %139 = math.tanh %138 : vector<8x128xf32>
      %cst_89 = arith.constant 5.000000e-01 : f32
      %140 = vector.broadcast %cst_89 : f32 to vector<8x128xf32>
      %141 = arith.mulf %140, %139 : vector<8x128xf32>
      %cst_90 = arith.constant 5.000000e-01 : f32
      %142 = vector.broadcast %cst_90 : f32 to vector<8x128xf32>
      %143 = arith.addf %141, %142 : vector<8x128xf32>
      %144 = vector.extract_strided_slice %134 {offsets = [0, 128], sizes = [8, 128], strides = [1, 1]} : vector<8x512xf32> to vector<8x128xf32>
      %cst_91 = arith.constant 5.000000e-01 : f32
      %145 = vector.broadcast %cst_91 : f32 to vector<8x128xf32>
      %146 = arith.mulf %145, %144 : vector<8x128xf32>
      %147 = math.tanh %146 : vector<8x128xf32>
      %cst_92 = arith.constant 5.000000e-01 : f32
      %148 = vector.broadcast %cst_92 : f32 to vector<8x128xf32>
      %149 = arith.mulf %148, %147 : vector<8x128xf32>
      %cst_93 = arith.constant 5.000000e-01 : f32
      %150 = vector.broadcast %cst_93 : f32 to vector<8x128xf32>
      %151 = arith.addf %149, %150 : vector<8x128xf32>
      %152 = vector.extract_strided_slice %134 {offsets = [0, 256], sizes = [8, 128], strides = [1, 1]} : vector<8x512xf32> to vector<8x128xf32>
      %153 = math.tanh %152 : vector<8x128xf32>
      %154 = vector.extract_strided_slice %134 {offsets = [0, 384], sizes = [8, 128], strides = [1, 1]} : vector<8x512xf32> to vector<8x128xf32>
      %cst_94 = arith.constant 5.000000e-01 : f32
      %155 = vector.broadcast %cst_94 : f32 to vector<8x128xf32>
      %156 = arith.mulf %155, %154 : vector<8x128xf32>
      %157 = math.tanh %156 : vector<8x128xf32>
      %cst_95 = arith.constant 5.000000e-01 : f32
      %158 = vector.broadcast %cst_95 : f32 to vector<8x128xf32>
      %159 = arith.mulf %158, %157 : vector<8x128xf32>
      %cst_96 = arith.constant 5.000000e-01 : f32
      %160 = vector.broadcast %cst_96 : f32 to vector<8x128xf32>
      %161 = arith.addf %159, %160 : vector<8x128xf32>
      %162 = arith.mulf %151, %135 : vector<8x128xf32>
      %163 = arith.mulf %143, %153 : vector<8x128xf32>
      %164 = arith.addf %162, %163 : vector<8x128xf32>
      %165 = math.tanh %164 : vector<8x128xf32>
      %166 = arith.mulf %161, %165 : vector<8x128xf32>
      %c0_97 = arith.constant 0 : index
      %c0_98 = arith.constant 0 : index
      %167 = vector.load %arg10[%c0_97, %c0_98] : memref<8x128xf32, #tpu.memory_space<vmem>>, vector<8x128xf32>
      tpu.vector_store %arg10[%c0_97, %c0_98], %166 {strides = array<i32>} : memref<8x128xf32, #tpu.memory_space<vmem>>, vector<8x128xf32>,
      %c0_99 = arith.constant 0 : index
      %c0_100 = arith.constant 0 : index
      %168 = vector.load %arg11[%c0_99, %c0_100] : memref<8x128xf32, #tpu.memory_space<vmem>>, vector<8x128xf32>
      tpu.vector_store %arg11[%c0_99, %c0_100], %164 {strides = array<i32>} : memref<8x128xf32, #tpu.memory_space<vmem>>, vector<8x128xf32>,
    } else {
    }
    %c7_i32_74 = arith.constant 7 : i32
    %c8_i32_75 = arith.constant 8 : i32
    %121 = arith.muli %arg1, %c8_i32_75 : i32
    %122 = arith.addi %121, %c7_i32_74 : i32
    %c8_i32_76 = arith.constant 8 : i32
    %123 = arith.cmpi slt, %122, %c8_i32_76 : i32
    %124 = arith.extui %123 : i1 to i32
    %c0_i32_77 = arith.constant 0 : i32
    %125 = arith.cmpi ne, %124, %c0_i32_77 : i32
    scf.if %125 {
      %129 = arith.index_cast %c7_i32_74 : i32 to index
      %c0_81 = arith.constant 0 : index
      %c0_82 = arith.constant 0 : index
      %130 = vector.load %arg9[%129, %c0_81, %c0_82] : memref<8x8x512xf32, #tpu.memory_space<vmem>>, vector<1x8x512xf32>
      %131 = vector.shape_cast %130 : vector<1x8x512xf32> to vector<8x512xf32>
      %c0_83 = arith.constant 0 : index
      %c0_84 = arith.constant 0 : index
      %132 = vector.load %arg10[%c0_83, %c0_84] : memref<8x128xf32, #tpu.memory_space<vmem>>, vector<8x128xf32>
      %cst_85 = arith.constant dense<0.000000e+00> : vector<8x512xf32>
      %133 = tpu.matmul %132, %4, %cst_85 {dimension_numbers = #tpu.dot_dimension_numbers<[1], [0], [0], [1], [0, 0, 1, 1], [], []>} : vector<8x128xf32>, vector<128x512xf32>, vector<8x512xf32> -> vector<8x512xf32>
      %134 = arith.addf %131, %133 : vector<8x512xf32>
      %c0_86 = arith.constant 0 : index
      %c0_87 = arith.constant 0 : index
      %135 = vector.load %arg11[%c0_86, %c0_87] : memref<8x128xf32, #tpu.memory_space<vmem>>, vector<8x128xf32>
      %136 = vector.extract_strided_slice %134 {offsets = [0, 0], sizes = [8, 128], strides = [1, 1]} : vector<8x512xf32> to vector<8x128xf32>
      %cst_88 = arith.constant 5.000000e-01 : f32
      %137 = vector.broadcast %cst_88 : f32 to vector<8x128xf32>
      %138 = arith.mulf %137, %136 : vector<8x128xf32>
      %139 = math.tanh %138 : vector<8x128xf32>
      %cst_89 = arith.constant 5.000000e-01 : f32
      %140 = vector.broadcast %cst_89 : f32 to vector<8x128xf32>
      %141 = arith.mulf %140, %139 : vector<8x128xf32>
      %cst_90 = arith.constant 5.000000e-01 : f32
      %142 = vector.broadcast %cst_90 : f32 to vector<8x128xf32>
      %143 = arith.addf %141, %142 : vector<8x128xf32>
      %144 = vector.extract_strided_slice %134 {offsets = [0, 128], sizes = [8, 128], strides = [1, 1]} : vector<8x512xf32> to vector<8x128xf32>
      %cst_91 = arith.constant 5.000000e-01 : f32
      %145 = vector.broadcast %cst_91 : f32 to vector<8x128xf32>
      %146 = arith.mulf %145, %144 : vector<8x128xf32>
      %147 = math.tanh %146 : vector<8x128xf32>
      %cst_92 = arith.constant 5.000000e-01 : f32
      %148 = vector.broadcast %cst_92 : f32 to vector<8x128xf32>
      %149 = arith.mulf %148, %147 : vector<8x128xf32>
      %cst_93 = arith.constant 5.000000e-01 : f32
      %150 = vector.broadcast %cst_93 : f32 to vector<8x128xf32>
      %151 = arith.addf %149, %150 : vector<8x128xf32>
      %152 = vector.extract_strided_slice %134 {offsets = [0, 256], sizes = [8, 128], strides = [1, 1]} : vector<8x512xf32> to vector<8x128xf32>
      %153 = math.tanh %152 : vector<8x128xf32>
      %154 = vector.extract_strided_slice %134 {offsets = [0, 384], sizes = [8, 128], strides = [1, 1]} : vector<8x512xf32> to vector<8x128xf32>
      %cst_94 = arith.constant 5.000000e-01 : f32
      %155 = vector.broadcast %cst_94 : f32 to vector<8x128xf32>
      %156 = arith.mulf %155, %154 : vector<8x128xf32>
      %157 = math.tanh %156 : vector<8x128xf32>
      %cst_95 = arith.constant 5.000000e-01 : f32
      %158 = vector.broadcast %cst_95 : f32 to vector<8x128xf32>
      %159 = arith.mulf %158, %157 : vector<8x128xf32>
      %cst_96 = arith.constant 5.000000e-01 : f32
      %160 = vector.broadcast %cst_96 : f32 to vector<8x128xf32>
      %161 = arith.addf %159, %160 : vector<8x128xf32>
      %162 = arith.mulf %151, %135 : vector<8x128xf32>
      %163 = arith.mulf %143, %153 : vector<8x128xf32>
      %164 = arith.addf %162, %163 : vector<8x128xf32>
      %165 = math.tanh %164 : vector<8x128xf32>
      %166 = arith.mulf %161, %165 : vector<8x128xf32>
      %c0_97 = arith.constant 0 : index
      %c0_98 = arith.constant 0 : index
      %167 = vector.load %arg10[%c0_97, %c0_98] : memref<8x128xf32, #tpu.memory_space<vmem>>, vector<8x128xf32>
      tpu.vector_store %arg10[%c0_97, %c0_98], %166 {strides = array<i32>} : memref<8x128xf32, #tpu.memory_space<vmem>>, vector<8x128xf32>,
      %c0_99 = arith.constant 0 : index
      %c0_100 = arith.constant 0 : index
      %168 = vector.load %arg11[%c0_99, %c0_100] : memref<8x128xf32, #tpu.memory_space<vmem>>, vector<8x128xf32>
      tpu.vector_store %arg11[%c0_99, %c0_100], %164 {strides = array<i32>} : memref<8x128xf32, #tpu.memory_space<vmem>>, vector<8x128xf32>,
    } else {
    }
    %c8_i32_78 = arith.constant 8 : i32
    %c0_i32_79 = arith.constant 0 : i32
    %126 = arith.cmpi eq, %arg1, %c0_i32_79 : i32
    %127 = arith.extui %126 : i1 to i32
    %c0_i32_80 = arith.constant 0 : i32
    %128 = arith.cmpi ne, %127, %c0_i32_80 : i32
    scf.if %128 {
      %c0_81 = arith.constant 0 : index
      %c0_82 = arith.constant 0 : index
      %129 = vector.load %arg10[%c0_81, %c0_82] : memref<8x128xf32, #tpu.memory_space<vmem>>, vector<8x128xf32>
      %c0_83 = arith.constant 0 : index
      %c0_84 = arith.constant 0 : index
      %130 = vector.load %arg6[%c0_83, %c0_84] : memref<128x128xf32, #tpu.memory_space<vmem>>, vector<128x128xf32>
      %cst_85 = arith.constant dense<0.000000e+00> : vector<8x128xf32>
      %131 = tpu.matmul %129, %130, %cst_85 {dimension_numbers = #tpu.dot_dimension_numbers<[1], [0], [0], [1], [0, 0, 1, 1], [], []>} : vector<8x128xf32>, vector<128x128xf32>, vector<8x128xf32> -> vector<8x128xf32>
      %c0_86 = arith.constant 0 : index
      %c0_87 = arith.constant 0 : index
      %132 = vector.load %arg7[%c0_86, %c0_87] : memref<1x128xf32, #tpu.memory_space<vmem>>, vector<1x128xf32>
      %133 = vector.broadcast %132 : vector<1x128xf32> to vector<8x128xf32>
      %134 = arith.addf %131, %133 : vector<8x128xf32>
      %c0_88 = arith.constant 0 : index
      %c0_89 = arith.constant 0 : index
      %135 = vector.load %arg8[%c0_88, %c0_89] : memref<8x128xf32, #tpu.memory_space<vmem>>, vector<8x128xf32>
      tpu.vector_store %arg8[%c0_88, %c0_89], %134 {strides = array<i32>} : memref<8x128xf32, #tpu.memory_space<vmem>>, vector<8x128xf32>,
    } else {
    }
    return
  }
  func.func @transform_0(%arg0: i32, %arg1: i32) -> (i32, i32, i32) {
    %c0_i32 = arith.constant 0 : i32
    %c0_i32_0 = arith.constant 0 : i32
    return %arg1, %arg0, %c0_i32 : i32, i32, i32
  }
  func.func @transform_1(%arg0: i32, %arg1: i32) -> (i32, i32) {
    %c0_i32 = arith.constant 0 : i32
    %c0_i32_0 = arith.constant 0 : i32
    %c0_i32_1 = arith.constant 0 : i32
    return %c0_i32, %c0_i32_0 : i32, i32
  }
  func.func @transform_2(%arg0: i32, %arg1: i32) -> (i32, i32) {
    %c0_i32 = arith.constant 0 : i32
    %c0_i32_0 = arith.constant 0 : i32
    %c0_i32_1 = arith.constant 0 : i32
    return %c0_i32, %c0_i32_0 : i32, i32
  }
  func.func @transform_3(%arg0: i32, %arg1: i32) -> (i32, i32) {
    %c0_i32 = arith.constant 0 : i32
    %c0_i32_0 = arith.constant 0 : i32
    %c0_i32_1 = arith.constant 0 : i32
    return %c0_i32, %c0_i32_0 : i32, i32
  }
  func.func @transform_4(%arg0: i32, %arg1: i32) -> (i32, i32) {
    %c0_i32 = arith.constant 0 : i32
    %c0_i32_0 = arith.constant 0 : i32
    %c0_i32_1 = arith.constant 0 : i32
    return %c0_i32, %c0_i32_0 : i32, i32
  }
  func.func @transform_5(%arg0: i32, %arg1: i32) -> (i32, i32) {
    %c0_i32 = arith.constant 0 : i32
    %c0_i32_0 = arith.constant 0 : i32
    %c0_i32_1 = arith.constant 0 : i32
    return %c0_i32, %c0_i32_0 : i32, i32
  }
  func.func @transform_6(%arg0: i32, %arg1: i32) -> (i32, i32) {
    %c0_i32 = arith.constant 0 : i32
    %c0_i32_0 = arith.constant 0 : i32
    return %arg0, %c0_i32 : i32, i32
  }
}

module attributes {stable_mosaic.version = 11 : i64} {
  func.func @_lstm_seq_kernel(%arg0: i32, %arg1: i32, %arg2: memref<8x8x16xf32, #tpu.memory_space<vmem>>, %arg3: memref<16x512xf32, #tpu.memory_space<vmem>>, %arg4: memref<128x512xf32, #tpu.memory_space<vmem>>, %arg5: memref<1x512xf32, #tpu.memory_space<vmem>>, %arg6: memref<8x8x128xf32, #tpu.memory_space<vmem>>, %arg7: memref<8x8x512xf32, #tpu.memory_space<vmem>>, %arg8: memref<8x128xf32, #tpu.memory_space<vmem>>, %arg9: memref<8x128xf32, #tpu.memory_space<vmem>>) attributes {dimension_semantics = [#tpu.dimension_semantics<parallel>, #tpu.dimension_semantics<arbitrary>], iteration_bounds = array<i64: 1, 1>, scalar_prefetch = 0 : i64, scratch_operands = 3 : i64, tpu.core_type = #tpu.core_type<tc>, window_params = [{transform_indices = @transform_0, window_bounds = array<i64: 8, 8, 16>}, {pipeline_mode = #tpu.pipeline_mode<synchronous>, transform_indices = @transform_1, window_bounds = array<i64: 16, 512>}, {pipeline_mode = #tpu.pipeline_mode<synchronous>, transform_indices = @transform_2, window_bounds = array<i64: 128, 512>}, {pipeline_mode = #tpu.pipeline_mode<synchronous>, transform_indices = @transform_3, window_bounds = array<i64: 1, 512>}, {transform_indices = @transform_4, window_bounds = array<i64: 8, 8, 128>}]} {
    %c0_i32 = arith.constant 0 : i32
    %0 = arith.cmpi eq, %arg1, %c0_i32 : i32
    %1 = arith.extui %0 : i1 to i32
    %c0_i32_0 = arith.constant 0 : i32
    %2 = arith.cmpi ne, %1, %c0_i32_0 : i32
    scf.if %2 {
      %cst_231 = arith.constant 0.000000e+00 : f32
      %438 = vector.broadcast %cst_231 : f32 to vector<8x128xf32>
      %c0_232 = arith.constant 0 : index
      %c0_233 = arith.constant 0 : index
      %439 = vector.load %arg8[%c0_232, %c0_233] : memref<8x128xf32, #tpu.memory_space<vmem>>, vector<8x128xf32>
      tpu.vector_store %arg8[%c0_232, %c0_233], %438 {strides = array<i32>} : memref<8x128xf32, #tpu.memory_space<vmem>>, vector<8x128xf32>,
      %cst_234 = arith.constant 0.000000e+00 : f32
      %440 = vector.broadcast %cst_234 : f32 to vector<8x128xf32>
      %c0_235 = arith.constant 0 : index
      %c0_236 = arith.constant 0 : index
      %441 = vector.load %arg9[%c0_235, %c0_236] : memref<8x128xf32, #tpu.memory_space<vmem>>, vector<8x128xf32>
      tpu.vector_store %arg9[%c0_235, %c0_236], %440 {strides = array<i32>} : memref<8x128xf32, #tpu.memory_space<vmem>>, vector<8x128xf32>,
    } else {
    }
    %c0 = arith.constant 0 : index
    %c0_1 = arith.constant 0 : index
    %3 = vector.load %arg3[%c0, %c0_1] : memref<16x512xf32, #tpu.memory_space<vmem>>, vector<16x512xf32>
    %c0_2 = arith.constant 0 : index
    %c0_3 = arith.constant 0 : index
    %4 = vector.load %arg4[%c0_2, %c0_3] : memref<128x512xf32, #tpu.memory_space<vmem>>, vector<128x512xf32>
    %c0_4 = arith.constant 0 : index
    %c0_5 = arith.constant 0 : index
    %5 = vector.load %arg5[%c0_4, %c0_5] : memref<1x512xf32, #tpu.memory_space<vmem>>, vector<1x512xf32>
    %c0_i32_6 = arith.constant 0 : i32
    %6 = arith.index_cast %c0_i32_6 : i32 to index
    %c0_7 = arith.constant 0 : index
    %c0_8 = arith.constant 0 : index
    %7 = vector.load %arg2[%6, %c0_7, %c0_8] : memref<8x8x16xf32, #tpu.memory_space<vmem>>, vector<1x8x16xf32>
    %8 = vector.shape_cast %7 : vector<1x8x16xf32> to vector<8x16xf32>
    %cst = arith.constant dense<0.000000e+00> : vector<8x512xf32>
    %9 = tpu.matmul %8, %3, %cst {dimension_numbers = #tpu.dot_dimension_numbers<[1], [0], [0], [1], [0, 0, 1, 1], [], []>} : vector<8x16xf32>, vector<16x512xf32>, vector<8x512xf32> -> vector<8x512xf32>
    %10 = vector.broadcast %5 : vector<1x512xf32> to vector<8x512xf32>
    %11 = arith.addf %9, %10 : vector<8x512xf32>
    %12 = arith.index_cast %c0_i32_6 : i32 to index
    %c0_9 = arith.constant 0 : index
    %c0_10 = arith.constant 0 : index
    %13 = vector.load %arg7[%12, %c0_9, %c0_10] : memref<8x8x512xf32, #tpu.memory_space<vmem>>, vector<1x8x512xf32>
    %14 = vector.shape_cast %13 : vector<1x8x512xf32> to vector<8x512xf32>
    %15 = vector.shape_cast %11 : vector<8x512xf32> to vector<1x8x512xf32>
    tpu.vector_store %arg7[%12, %c0_9, %c0_10], %15 {strides = array<i32>} : memref<8x8x512xf32, #tpu.memory_space<vmem>>, vector<1x8x512xf32>,
    %c1_i32 = arith.constant 1 : i32
    %16 = arith.index_cast %c1_i32 : i32 to index
    %c0_11 = arith.constant 0 : index
    %c0_12 = arith.constant 0 : index
    %17 = vector.load %arg2[%16, %c0_11, %c0_12] : memref<8x8x16xf32, #tpu.memory_space<vmem>>, vector<1x8x16xf32>
    %18 = vector.shape_cast %17 : vector<1x8x16xf32> to vector<8x16xf32>
    %cst_13 = arith.constant dense<0.000000e+00> : vector<8x512xf32>
    %19 = tpu.matmul %18, %3, %cst_13 {dimension_numbers = #tpu.dot_dimension_numbers<[1], [0], [0], [1], [0, 0, 1, 1], [], []>} : vector<8x16xf32>, vector<16x512xf32>, vector<8x512xf32> -> vector<8x512xf32>
    %20 = vector.broadcast %5 : vector<1x512xf32> to vector<8x512xf32>
    %21 = arith.addf %19, %20 : vector<8x512xf32>
    %22 = arith.index_cast %c1_i32 : i32 to index
    %c0_14 = arith.constant 0 : index
    %c0_15 = arith.constant 0 : index
    %23 = vector.load %arg7[%22, %c0_14, %c0_15] : memref<8x8x512xf32, #tpu.memory_space<vmem>>, vector<1x8x512xf32>
    %24 = vector.shape_cast %23 : vector<1x8x512xf32> to vector<8x512xf32>
    %25 = vector.shape_cast %21 : vector<8x512xf32> to vector<1x8x512xf32>
    tpu.vector_store %arg7[%22, %c0_14, %c0_15], %25 {strides = array<i32>} : memref<8x8x512xf32, #tpu.memory_space<vmem>>, vector<1x8x512xf32>,
    %c2_i32 = arith.constant 2 : i32
    %26 = arith.index_cast %c2_i32 : i32 to index
    %c0_16 = arith.constant 0 : index
    %c0_17 = arith.constant 0 : index
    %27 = vector.load %arg2[%26, %c0_16, %c0_17] : memref<8x8x16xf32, #tpu.memory_space<vmem>>, vector<1x8x16xf32>
    %28 = vector.shape_cast %27 : vector<1x8x16xf32> to vector<8x16xf32>
    %cst_18 = arith.constant dense<0.000000e+00> : vector<8x512xf32>
    %29 = tpu.matmul %28, %3, %cst_18 {dimension_numbers = #tpu.dot_dimension_numbers<[1], [0], [0], [1], [0, 0, 1, 1], [], []>} : vector<8x16xf32>, vector<16x512xf32>, vector<8x512xf32> -> vector<8x512xf32>
    %30 = vector.broadcast %5 : vector<1x512xf32> to vector<8x512xf32>
    %31 = arith.addf %29, %30 : vector<8x512xf32>
    %32 = arith.index_cast %c2_i32 : i32 to index
    %c0_19 = arith.constant 0 : index
    %c0_20 = arith.constant 0 : index
    %33 = vector.load %arg7[%32, %c0_19, %c0_20] : memref<8x8x512xf32, #tpu.memory_space<vmem>>, vector<1x8x512xf32>
    %34 = vector.shape_cast %33 : vector<1x8x512xf32> to vector<8x512xf32>
    %35 = vector.shape_cast %31 : vector<8x512xf32> to vector<1x8x512xf32>
    tpu.vector_store %arg7[%32, %c0_19, %c0_20], %35 {strides = array<i32>} : memref<8x8x512xf32, #tpu.memory_space<vmem>>, vector<1x8x512xf32>,
    %c3_i32 = arith.constant 3 : i32
    %36 = arith.index_cast %c3_i32 : i32 to index
    %c0_21 = arith.constant 0 : index
    %c0_22 = arith.constant 0 : index
    %37 = vector.load %arg2[%36, %c0_21, %c0_22] : memref<8x8x16xf32, #tpu.memory_space<vmem>>, vector<1x8x16xf32>
    %38 = vector.shape_cast %37 : vector<1x8x16xf32> to vector<8x16xf32>
    %cst_23 = arith.constant dense<0.000000e+00> : vector<8x512xf32>
    %39 = tpu.matmul %38, %3, %cst_23 {dimension_numbers = #tpu.dot_dimension_numbers<[1], [0], [0], [1], [0, 0, 1, 1], [], []>} : vector<8x16xf32>, vector<16x512xf32>, vector<8x512xf32> -> vector<8x512xf32>
    %40 = vector.broadcast %5 : vector<1x512xf32> to vector<8x512xf32>
    %41 = arith.addf %39, %40 : vector<8x512xf32>
    %42 = arith.index_cast %c3_i32 : i32 to index
    %c0_24 = arith.constant 0 : index
    %c0_25 = arith.constant 0 : index
    %43 = vector.load %arg7[%42, %c0_24, %c0_25] : memref<8x8x512xf32, #tpu.memory_space<vmem>>, vector<1x8x512xf32>
    %44 = vector.shape_cast %43 : vector<1x8x512xf32> to vector<8x512xf32>
    %45 = vector.shape_cast %41 : vector<8x512xf32> to vector<1x8x512xf32>
    tpu.vector_store %arg7[%42, %c0_24, %c0_25], %45 {strides = array<i32>} : memref<8x8x512xf32, #tpu.memory_space<vmem>>, vector<1x8x512xf32>,
    %c4_i32 = arith.constant 4 : i32
    %46 = arith.index_cast %c4_i32 : i32 to index
    %c0_26 = arith.constant 0 : index
    %c0_27 = arith.constant 0 : index
    %47 = vector.load %arg2[%46, %c0_26, %c0_27] : memref<8x8x16xf32, #tpu.memory_space<vmem>>, vector<1x8x16xf32>
    %48 = vector.shape_cast %47 : vector<1x8x16xf32> to vector<8x16xf32>
    %cst_28 = arith.constant dense<0.000000e+00> : vector<8x512xf32>
    %49 = tpu.matmul %48, %3, %cst_28 {dimension_numbers = #tpu.dot_dimension_numbers<[1], [0], [0], [1], [0, 0, 1, 1], [], []>} : vector<8x16xf32>, vector<16x512xf32>, vector<8x512xf32> -> vector<8x512xf32>
    %50 = vector.broadcast %5 : vector<1x512xf32> to vector<8x512xf32>
    %51 = arith.addf %49, %50 : vector<8x512xf32>
    %52 = arith.index_cast %c4_i32 : i32 to index
    %c0_29 = arith.constant 0 : index
    %c0_30 = arith.constant 0 : index
    %53 = vector.load %arg7[%52, %c0_29, %c0_30] : memref<8x8x512xf32, #tpu.memory_space<vmem>>, vector<1x8x512xf32>
    %54 = vector.shape_cast %53 : vector<1x8x512xf32> to vector<8x512xf32>
    %55 = vector.shape_cast %51 : vector<8x512xf32> to vector<1x8x512xf32>
    tpu.vector_store %arg7[%52, %c0_29, %c0_30], %55 {strides = array<i32>} : memref<8x8x512xf32, #tpu.memory_space<vmem>>, vector<1x8x512xf32>,
    %c5_i32 = arith.constant 5 : i32
    %56 = arith.index_cast %c5_i32 : i32 to index
    %c0_31 = arith.constant 0 : index
    %c0_32 = arith.constant 0 : index
    %57 = vector.load %arg2[%56, %c0_31, %c0_32] : memref<8x8x16xf32, #tpu.memory_space<vmem>>, vector<1x8x16xf32>
    %58 = vector.shape_cast %57 : vector<1x8x16xf32> to vector<8x16xf32>
    %cst_33 = arith.constant dense<0.000000e+00> : vector<8x512xf32>
    %59 = tpu.matmul %58, %3, %cst_33 {dimension_numbers = #tpu.dot_dimension_numbers<[1], [0], [0], [1], [0, 0, 1, 1], [], []>} : vector<8x16xf32>, vector<16x512xf32>, vector<8x512xf32> -> vector<8x512xf32>
    %60 = vector.broadcast %5 : vector<1x512xf32> to vector<8x512xf32>
    %61 = arith.addf %59, %60 : vector<8x512xf32>
    %62 = arith.index_cast %c5_i32 : i32 to index
    %c0_34 = arith.constant 0 : index
    %c0_35 = arith.constant 0 : index
    %63 = vector.load %arg7[%62, %c0_34, %c0_35] : memref<8x8x512xf32, #tpu.memory_space<vmem>>, vector<1x8x512xf32>
    %64 = vector.shape_cast %63 : vector<1x8x512xf32> to vector<8x512xf32>
    %65 = vector.shape_cast %61 : vector<8x512xf32> to vector<1x8x512xf32>
    tpu.vector_store %arg7[%62, %c0_34, %c0_35], %65 {strides = array<i32>} : memref<8x8x512xf32, #tpu.memory_space<vmem>>, vector<1x8x512xf32>,
    %c6_i32 = arith.constant 6 : i32
    %66 = arith.index_cast %c6_i32 : i32 to index
    %c0_36 = arith.constant 0 : index
    %c0_37 = arith.constant 0 : index
    %67 = vector.load %arg2[%66, %c0_36, %c0_37] : memref<8x8x16xf32, #tpu.memory_space<vmem>>, vector<1x8x16xf32>
    %68 = vector.shape_cast %67 : vector<1x8x16xf32> to vector<8x16xf32>
    %cst_38 = arith.constant dense<0.000000e+00> : vector<8x512xf32>
    %69 = tpu.matmul %68, %3, %cst_38 {dimension_numbers = #tpu.dot_dimension_numbers<[1], [0], [0], [1], [0, 0, 1, 1], [], []>} : vector<8x16xf32>, vector<16x512xf32>, vector<8x512xf32> -> vector<8x512xf32>
    %70 = vector.broadcast %5 : vector<1x512xf32> to vector<8x512xf32>
    %71 = arith.addf %69, %70 : vector<8x512xf32>
    %72 = arith.index_cast %c6_i32 : i32 to index
    %c0_39 = arith.constant 0 : index
    %c0_40 = arith.constant 0 : index
    %73 = vector.load %arg7[%72, %c0_39, %c0_40] : memref<8x8x512xf32, #tpu.memory_space<vmem>>, vector<1x8x512xf32>
    %74 = vector.shape_cast %73 : vector<1x8x512xf32> to vector<8x512xf32>
    %75 = vector.shape_cast %71 : vector<8x512xf32> to vector<1x8x512xf32>
    tpu.vector_store %arg7[%72, %c0_39, %c0_40], %75 {strides = array<i32>} : memref<8x8x512xf32, #tpu.memory_space<vmem>>, vector<1x8x512xf32>,
    %c7_i32 = arith.constant 7 : i32
    %76 = arith.index_cast %c7_i32 : i32 to index
    %c0_41 = arith.constant 0 : index
    %c0_42 = arith.constant 0 : index
    %77 = vector.load %arg2[%76, %c0_41, %c0_42] : memref<8x8x16xf32, #tpu.memory_space<vmem>>, vector<1x8x16xf32>
    %78 = vector.shape_cast %77 : vector<1x8x16xf32> to vector<8x16xf32>
    %cst_43 = arith.constant dense<0.000000e+00> : vector<8x512xf32>
    %79 = tpu.matmul %78, %3, %cst_43 {dimension_numbers = #tpu.dot_dimension_numbers<[1], [0], [0], [1], [0, 0, 1, 1], [], []>} : vector<8x16xf32>, vector<16x512xf32>, vector<8x512xf32> -> vector<8x512xf32>
    %80 = vector.broadcast %5 : vector<1x512xf32> to vector<8x512xf32>
    %81 = arith.addf %79, %80 : vector<8x512xf32>
    %82 = arith.index_cast %c7_i32 : i32 to index
    %c0_44 = arith.constant 0 : index
    %c0_45 = arith.constant 0 : index
    %83 = vector.load %arg7[%82, %c0_44, %c0_45] : memref<8x8x512xf32, #tpu.memory_space<vmem>>, vector<1x8x512xf32>
    %84 = vector.shape_cast %83 : vector<1x8x512xf32> to vector<8x512xf32>
    %85 = vector.shape_cast %81 : vector<8x512xf32> to vector<1x8x512xf32>
    tpu.vector_store %arg7[%82, %c0_44, %c0_45], %85 {strides = array<i32>} : memref<8x8x512xf32, #tpu.memory_space<vmem>>, vector<1x8x512xf32>,
    %c8_i32 = arith.constant 8 : i32
    %c0_i32_46 = arith.constant 0 : i32
    %86 = arith.index_cast %c0_i32_46 : i32 to index
    %c0_47 = arith.constant 0 : index
    %c0_48 = arith.constant 0 : index
    %87 = vector.load %arg7[%86, %c0_47, %c0_48] : memref<8x8x512xf32, #tpu.memory_space<vmem>>, vector<1x8x512xf32>
    %88 = vector.shape_cast %87 : vector<1x8x512xf32> to vector<8x512xf32>
    %c0_49 = arith.constant 0 : index
    %c0_50 = arith.constant 0 : index
    %89 = vector.load %arg8[%c0_49, %c0_50] : memref<8x128xf32, #tpu.memory_space<vmem>>, vector<8x128xf32>
    %cst_51 = arith.constant dense<0.000000e+00> : vector<8x512xf32>
    %90 = tpu.matmul %89, %4, %cst_51 {dimension_numbers = #tpu.dot_dimension_numbers<[1], [0], [0], [1], [0, 0, 1, 1], [], []>} : vector<8x128xf32>, vector<128x512xf32>, vector<8x512xf32> -> vector<8x512xf32>
    %91 = arith.addf %88, %90 : vector<8x512xf32>
    %c0_52 = arith.constant 0 : index
    %c0_53 = arith.constant 0 : index
    %92 = vector.load %arg9[%c0_52, %c0_53] : memref<8x128xf32, #tpu.memory_space<vmem>>, vector<8x128xf32>
    %93 = vector.extract_strided_slice %91 {offsets = [0, 0], sizes = [8, 128], strides = [1, 1]} : vector<8x512xf32> to vector<8x128xf32>
    %cst_54 = arith.constant 5.000000e-01 : f32
    %94 = vector.broadcast %cst_54 : f32 to vector<8x128xf32>
    %95 = arith.mulf %94, %93 : vector<8x128xf32>
    %96 = math.tanh %95 : vector<8x128xf32>
    %cst_55 = arith.constant 5.000000e-01 : f32
    %97 = vector.broadcast %cst_55 : f32 to vector<8x128xf32>
    %98 = arith.mulf %97, %96 : vector<8x128xf32>
    %cst_56 = arith.constant 5.000000e-01 : f32
    %99 = vector.broadcast %cst_56 : f32 to vector<8x128xf32>
    %100 = arith.addf %98, %99 : vector<8x128xf32>
    %101 = vector.extract_strided_slice %91 {offsets = [0, 128], sizes = [8, 128], strides = [1, 1]} : vector<8x512xf32> to vector<8x128xf32>
    %cst_57 = arith.constant 5.000000e-01 : f32
    %102 = vector.broadcast %cst_57 : f32 to vector<8x128xf32>
    %103 = arith.mulf %102, %101 : vector<8x128xf32>
    %104 = math.tanh %103 : vector<8x128xf32>
    %cst_58 = arith.constant 5.000000e-01 : f32
    %105 = vector.broadcast %cst_58 : f32 to vector<8x128xf32>
    %106 = arith.mulf %105, %104 : vector<8x128xf32>
    %cst_59 = arith.constant 5.000000e-01 : f32
    %107 = vector.broadcast %cst_59 : f32 to vector<8x128xf32>
    %108 = arith.addf %106, %107 : vector<8x128xf32>
    %109 = vector.extract_strided_slice %91 {offsets = [0, 256], sizes = [8, 128], strides = [1, 1]} : vector<8x512xf32> to vector<8x128xf32>
    %110 = math.tanh %109 : vector<8x128xf32>
    %111 = vector.extract_strided_slice %91 {offsets = [0, 384], sizes = [8, 128], strides = [1, 1]} : vector<8x512xf32> to vector<8x128xf32>
    %cst_60 = arith.constant 5.000000e-01 : f32
    %112 = vector.broadcast %cst_60 : f32 to vector<8x128xf32>
    %113 = arith.mulf %112, %111 : vector<8x128xf32>
    %114 = math.tanh %113 : vector<8x128xf32>
    %cst_61 = arith.constant 5.000000e-01 : f32
    %115 = vector.broadcast %cst_61 : f32 to vector<8x128xf32>
    %116 = arith.mulf %115, %114 : vector<8x128xf32>
    %cst_62 = arith.constant 5.000000e-01 : f32
    %117 = vector.broadcast %cst_62 : f32 to vector<8x128xf32>
    %118 = arith.addf %116, %117 : vector<8x128xf32>
    %119 = arith.mulf %108, %92 : vector<8x128xf32>
    %120 = arith.mulf %100, %110 : vector<8x128xf32>
    %121 = arith.addf %119, %120 : vector<8x128xf32>
    %122 = math.tanh %121 : vector<8x128xf32>
    %123 = arith.mulf %118, %122 : vector<8x128xf32>
    %c0_63 = arith.constant 0 : index
    %c0_64 = arith.constant 0 : index
    %124 = vector.load %arg8[%c0_63, %c0_64] : memref<8x128xf32, #tpu.memory_space<vmem>>, vector<8x128xf32>
    tpu.vector_store %arg8[%c0_63, %c0_64], %123 {strides = array<i32>} : memref<8x128xf32, #tpu.memory_space<vmem>>, vector<8x128xf32>,
    %c0_65 = arith.constant 0 : index
    %c0_66 = arith.constant 0 : index
    %125 = vector.load %arg9[%c0_65, %c0_66] : memref<8x128xf32, #tpu.memory_space<vmem>>, vector<8x128xf32>
    tpu.vector_store %arg9[%c0_65, %c0_66], %121 {strides = array<i32>} : memref<8x128xf32, #tpu.memory_space<vmem>>, vector<8x128xf32>,
    %126 = arith.index_cast %c0_i32_46 : i32 to index
    %c0_67 = arith.constant 0 : index
    %c0_68 = arith.constant 0 : index
    %127 = vector.load %arg6[%126, %c0_67, %c0_68] : memref<8x8x128xf32, #tpu.memory_space<vmem>>, vector<1x8x128xf32>
    %128 = vector.shape_cast %127 : vector<1x8x128xf32> to vector<8x128xf32>
    %129 = vector.shape_cast %123 : vector<8x128xf32> to vector<1x8x128xf32>
    tpu.vector_store %arg6[%126, %c0_67, %c0_68], %129 {strides = array<i32>} : memref<8x8x128xf32, #tpu.memory_space<vmem>>, vector<1x8x128xf32>,
    %c1_i32_69 = arith.constant 1 : i32
    %130 = arith.index_cast %c1_i32_69 : i32 to index
    %c0_70 = arith.constant 0 : index
    %c0_71 = arith.constant 0 : index
    %131 = vector.load %arg7[%130, %c0_70, %c0_71] : memref<8x8x512xf32, #tpu.memory_space<vmem>>, vector<1x8x512xf32>
    %132 = vector.shape_cast %131 : vector<1x8x512xf32> to vector<8x512xf32>
    %c0_72 = arith.constant 0 : index
    %c0_73 = arith.constant 0 : index
    %133 = vector.load %arg8[%c0_72, %c0_73] : memref<8x128xf32, #tpu.memory_space<vmem>>, vector<8x128xf32>
    %cst_74 = arith.constant dense<0.000000e+00> : vector<8x512xf32>
    %134 = tpu.matmul %133, %4, %cst_74 {dimension_numbers = #tpu.dot_dimension_numbers<[1], [0], [0], [1], [0, 0, 1, 1], [], []>} : vector<8x128xf32>, vector<128x512xf32>, vector<8x512xf32> -> vector<8x512xf32>
    %135 = arith.addf %132, %134 : vector<8x512xf32>
    %c0_75 = arith.constant 0 : index
    %c0_76 = arith.constant 0 : index
    %136 = vector.load %arg9[%c0_75, %c0_76] : memref<8x128xf32, #tpu.memory_space<vmem>>, vector<8x128xf32>
    %137 = vector.extract_strided_slice %135 {offsets = [0, 0], sizes = [8, 128], strides = [1, 1]} : vector<8x512xf32> to vector<8x128xf32>
    %cst_77 = arith.constant 5.000000e-01 : f32
    %138 = vector.broadcast %cst_77 : f32 to vector<8x128xf32>
    %139 = arith.mulf %138, %137 : vector<8x128xf32>
    %140 = math.tanh %139 : vector<8x128xf32>
    %cst_78 = arith.constant 5.000000e-01 : f32
    %141 = vector.broadcast %cst_78 : f32 to vector<8x128xf32>
    %142 = arith.mulf %141, %140 : vector<8x128xf32>
    %cst_79 = arith.constant 5.000000e-01 : f32
    %143 = vector.broadcast %cst_79 : f32 to vector<8x128xf32>
    %144 = arith.addf %142, %143 : vector<8x128xf32>
    %145 = vector.extract_strided_slice %135 {offsets = [0, 128], sizes = [8, 128], strides = [1, 1]} : vector<8x512xf32> to vector<8x128xf32>
    %cst_80 = arith.constant 5.000000e-01 : f32
    %146 = vector.broadcast %cst_80 : f32 to vector<8x128xf32>
    %147 = arith.mulf %146, %145 : vector<8x128xf32>
    %148 = math.tanh %147 : vector<8x128xf32>
    %cst_81 = arith.constant 5.000000e-01 : f32
    %149 = vector.broadcast %cst_81 : f32 to vector<8x128xf32>
    %150 = arith.mulf %149, %148 : vector<8x128xf32>
    %cst_82 = arith.constant 5.000000e-01 : f32
    %151 = vector.broadcast %cst_82 : f32 to vector<8x128xf32>
    %152 = arith.addf %150, %151 : vector<8x128xf32>
    %153 = vector.extract_strided_slice %135 {offsets = [0, 256], sizes = [8, 128], strides = [1, 1]} : vector<8x512xf32> to vector<8x128xf32>
    %154 = math.tanh %153 : vector<8x128xf32>
    %155 = vector.extract_strided_slice %135 {offsets = [0, 384], sizes = [8, 128], strides = [1, 1]} : vector<8x512xf32> to vector<8x128xf32>
    %cst_83 = arith.constant 5.000000e-01 : f32
    %156 = vector.broadcast %cst_83 : f32 to vector<8x128xf32>
    %157 = arith.mulf %156, %155 : vector<8x128xf32>
    %158 = math.tanh %157 : vector<8x128xf32>
    %cst_84 = arith.constant 5.000000e-01 : f32
    %159 = vector.broadcast %cst_84 : f32 to vector<8x128xf32>
    %160 = arith.mulf %159, %158 : vector<8x128xf32>
    %cst_85 = arith.constant 5.000000e-01 : f32
    %161 = vector.broadcast %cst_85 : f32 to vector<8x128xf32>
    %162 = arith.addf %160, %161 : vector<8x128xf32>
    %163 = arith.mulf %152, %136 : vector<8x128xf32>
    %164 = arith.mulf %144, %154 : vector<8x128xf32>
    %165 = arith.addf %163, %164 : vector<8x128xf32>
    %166 = math.tanh %165 : vector<8x128xf32>
    %167 = arith.mulf %162, %166 : vector<8x128xf32>
    %c0_86 = arith.constant 0 : index
    %c0_87 = arith.constant 0 : index
    %168 = vector.load %arg8[%c0_86, %c0_87] : memref<8x128xf32, #tpu.memory_space<vmem>>, vector<8x128xf32>
    tpu.vector_store %arg8[%c0_86, %c0_87], %167 {strides = array<i32>} : memref<8x128xf32, #tpu.memory_space<vmem>>, vector<8x128xf32>,
    %c0_88 = arith.constant 0 : index
    %c0_89 = arith.constant 0 : index
    %169 = vector.load %arg9[%c0_88, %c0_89] : memref<8x128xf32, #tpu.memory_space<vmem>>, vector<8x128xf32>
    tpu.vector_store %arg9[%c0_88, %c0_89], %165 {strides = array<i32>} : memref<8x128xf32, #tpu.memory_space<vmem>>, vector<8x128xf32>,
    %170 = arith.index_cast %c1_i32_69 : i32 to index
    %c0_90 = arith.constant 0 : index
    %c0_91 = arith.constant 0 : index
    %171 = vector.load %arg6[%170, %c0_90, %c0_91] : memref<8x8x128xf32, #tpu.memory_space<vmem>>, vector<1x8x128xf32>
    %172 = vector.shape_cast %171 : vector<1x8x128xf32> to vector<8x128xf32>
    %173 = vector.shape_cast %167 : vector<8x128xf32> to vector<1x8x128xf32>
    tpu.vector_store %arg6[%170, %c0_90, %c0_91], %173 {strides = array<i32>} : memref<8x8x128xf32, #tpu.memory_space<vmem>>, vector<1x8x128xf32>,
    %c2_i32_92 = arith.constant 2 : i32
    %174 = arith.index_cast %c2_i32_92 : i32 to index
    %c0_93 = arith.constant 0 : index
    %c0_94 = arith.constant 0 : index
    %175 = vector.load %arg7[%174, %c0_93, %c0_94] : memref<8x8x512xf32, #tpu.memory_space<vmem>>, vector<1x8x512xf32>
    %176 = vector.shape_cast %175 : vector<1x8x512xf32> to vector<8x512xf32>
    %c0_95 = arith.constant 0 : index
    %c0_96 = arith.constant 0 : index
    %177 = vector.load %arg8[%c0_95, %c0_96] : memref<8x128xf32, #tpu.memory_space<vmem>>, vector<8x128xf32>
    %cst_97 = arith.constant dense<0.000000e+00> : vector<8x512xf32>
    %178 = tpu.matmul %177, %4, %cst_97 {dimension_numbers = #tpu.dot_dimension_numbers<[1], [0], [0], [1], [0, 0, 1, 1], [], []>} : vector<8x128xf32>, vector<128x512xf32>, vector<8x512xf32> -> vector<8x512xf32>
    %179 = arith.addf %176, %178 : vector<8x512xf32>
    %c0_98 = arith.constant 0 : index
    %c0_99 = arith.constant 0 : index
    %180 = vector.load %arg9[%c0_98, %c0_99] : memref<8x128xf32, #tpu.memory_space<vmem>>, vector<8x128xf32>
    %181 = vector.extract_strided_slice %179 {offsets = [0, 0], sizes = [8, 128], strides = [1, 1]} : vector<8x512xf32> to vector<8x128xf32>
    %cst_100 = arith.constant 5.000000e-01 : f32
    %182 = vector.broadcast %cst_100 : f32 to vector<8x128xf32>
    %183 = arith.mulf %182, %181 : vector<8x128xf32>
    %184 = math.tanh %183 : vector<8x128xf32>
    %cst_101 = arith.constant 5.000000e-01 : f32
    %185 = vector.broadcast %cst_101 : f32 to vector<8x128xf32>
    %186 = arith.mulf %185, %184 : vector<8x128xf32>
    %cst_102 = arith.constant 5.000000e-01 : f32
    %187 = vector.broadcast %cst_102 : f32 to vector<8x128xf32>
    %188 = arith.addf %186, %187 : vector<8x128xf32>
    %189 = vector.extract_strided_slice %179 {offsets = [0, 128], sizes = [8, 128], strides = [1, 1]} : vector<8x512xf32> to vector<8x128xf32>
    %cst_103 = arith.constant 5.000000e-01 : f32
    %190 = vector.broadcast %cst_103 : f32 to vector<8x128xf32>
    %191 = arith.mulf %190, %189 : vector<8x128xf32>
    %192 = math.tanh %191 : vector<8x128xf32>
    %cst_104 = arith.constant 5.000000e-01 : f32
    %193 = vector.broadcast %cst_104 : f32 to vector<8x128xf32>
    %194 = arith.mulf %193, %192 : vector<8x128xf32>
    %cst_105 = arith.constant 5.000000e-01 : f32
    %195 = vector.broadcast %cst_105 : f32 to vector<8x128xf32>
    %196 = arith.addf %194, %195 : vector<8x128xf32>
    %197 = vector.extract_strided_slice %179 {offsets = [0, 256], sizes = [8, 128], strides = [1, 1]} : vector<8x512xf32> to vector<8x128xf32>
    %198 = math.tanh %197 : vector<8x128xf32>
    %199 = vector.extract_strided_slice %179 {offsets = [0, 384], sizes = [8, 128], strides = [1, 1]} : vector<8x512xf32> to vector<8x128xf32>
    %cst_106 = arith.constant 5.000000e-01 : f32
    %200 = vector.broadcast %cst_106 : f32 to vector<8x128xf32>
    %201 = arith.mulf %200, %199 : vector<8x128xf32>
    %202 = math.tanh %201 : vector<8x128xf32>
    %cst_107 = arith.constant 5.000000e-01 : f32
    %203 = vector.broadcast %cst_107 : f32 to vector<8x128xf32>
    %204 = arith.mulf %203, %202 : vector<8x128xf32>
    %cst_108 = arith.constant 5.000000e-01 : f32
    %205 = vector.broadcast %cst_108 : f32 to vector<8x128xf32>
    %206 = arith.addf %204, %205 : vector<8x128xf32>
    %207 = arith.mulf %196, %180 : vector<8x128xf32>
    %208 = arith.mulf %188, %198 : vector<8x128xf32>
    %209 = arith.addf %207, %208 : vector<8x128xf32>
    %210 = math.tanh %209 : vector<8x128xf32>
    %211 = arith.mulf %206, %210 : vector<8x128xf32>
    %c0_109 = arith.constant 0 : index
    %c0_110 = arith.constant 0 : index
    %212 = vector.load %arg8[%c0_109, %c0_110] : memref<8x128xf32, #tpu.memory_space<vmem>>, vector<8x128xf32>
    tpu.vector_store %arg8[%c0_109, %c0_110], %211 {strides = array<i32>} : memref<8x128xf32, #tpu.memory_space<vmem>>, vector<8x128xf32>,
    %c0_111 = arith.constant 0 : index
    %c0_112 = arith.constant 0 : index
    %213 = vector.load %arg9[%c0_111, %c0_112] : memref<8x128xf32, #tpu.memory_space<vmem>>, vector<8x128xf32>
    tpu.vector_store %arg9[%c0_111, %c0_112], %209 {strides = array<i32>} : memref<8x128xf32, #tpu.memory_space<vmem>>, vector<8x128xf32>,
    %214 = arith.index_cast %c2_i32_92 : i32 to index
    %c0_113 = arith.constant 0 : index
    %c0_114 = arith.constant 0 : index
    %215 = vector.load %arg6[%214, %c0_113, %c0_114] : memref<8x8x128xf32, #tpu.memory_space<vmem>>, vector<1x8x128xf32>
    %216 = vector.shape_cast %215 : vector<1x8x128xf32> to vector<8x128xf32>
    %217 = vector.shape_cast %211 : vector<8x128xf32> to vector<1x8x128xf32>
    tpu.vector_store %arg6[%214, %c0_113, %c0_114], %217 {strides = array<i32>} : memref<8x8x128xf32, #tpu.memory_space<vmem>>, vector<1x8x128xf32>,
    %c3_i32_115 = arith.constant 3 : i32
    %218 = arith.index_cast %c3_i32_115 : i32 to index
    %c0_116 = arith.constant 0 : index
    %c0_117 = arith.constant 0 : index
    %219 = vector.load %arg7[%218, %c0_116, %c0_117] : memref<8x8x512xf32, #tpu.memory_space<vmem>>, vector<1x8x512xf32>
    %220 = vector.shape_cast %219 : vector<1x8x512xf32> to vector<8x512xf32>
    %c0_118 = arith.constant 0 : index
    %c0_119 = arith.constant 0 : index
    %221 = vector.load %arg8[%c0_118, %c0_119] : memref<8x128xf32, #tpu.memory_space<vmem>>, vector<8x128xf32>
    %cst_120 = arith.constant dense<0.000000e+00> : vector<8x512xf32>
    %222 = tpu.matmul %221, %4, %cst_120 {dimension_numbers = #tpu.dot_dimension_numbers<[1], [0], [0], [1], [0, 0, 1, 1], [], []>} : vector<8x128xf32>, vector<128x512xf32>, vector<8x512xf32> -> vector<8x512xf32>
    %223 = arith.addf %220, %222 : vector<8x512xf32>
    %c0_121 = arith.constant 0 : index
    %c0_122 = arith.constant 0 : index
    %224 = vector.load %arg9[%c0_121, %c0_122] : memref<8x128xf32, #tpu.memory_space<vmem>>, vector<8x128xf32>
    %225 = vector.extract_strided_slice %223 {offsets = [0, 0], sizes = [8, 128], strides = [1, 1]} : vector<8x512xf32> to vector<8x128xf32>
    %cst_123 = arith.constant 5.000000e-01 : f32
    %226 = vector.broadcast %cst_123 : f32 to vector<8x128xf32>
    %227 = arith.mulf %226, %225 : vector<8x128xf32>
    %228 = math.tanh %227 : vector<8x128xf32>
    %cst_124 = arith.constant 5.000000e-01 : f32
    %229 = vector.broadcast %cst_124 : f32 to vector<8x128xf32>
    %230 = arith.mulf %229, %228 : vector<8x128xf32>
    %cst_125 = arith.constant 5.000000e-01 : f32
    %231 = vector.broadcast %cst_125 : f32 to vector<8x128xf32>
    %232 = arith.addf %230, %231 : vector<8x128xf32>
    %233 = vector.extract_strided_slice %223 {offsets = [0, 128], sizes = [8, 128], strides = [1, 1]} : vector<8x512xf32> to vector<8x128xf32>
    %cst_126 = arith.constant 5.000000e-01 : f32
    %234 = vector.broadcast %cst_126 : f32 to vector<8x128xf32>
    %235 = arith.mulf %234, %233 : vector<8x128xf32>
    %236 = math.tanh %235 : vector<8x128xf32>
    %cst_127 = arith.constant 5.000000e-01 : f32
    %237 = vector.broadcast %cst_127 : f32 to vector<8x128xf32>
    %238 = arith.mulf %237, %236 : vector<8x128xf32>
    %cst_128 = arith.constant 5.000000e-01 : f32
    %239 = vector.broadcast %cst_128 : f32 to vector<8x128xf32>
    %240 = arith.addf %238, %239 : vector<8x128xf32>
    %241 = vector.extract_strided_slice %223 {offsets = [0, 256], sizes = [8, 128], strides = [1, 1]} : vector<8x512xf32> to vector<8x128xf32>
    %242 = math.tanh %241 : vector<8x128xf32>
    %243 = vector.extract_strided_slice %223 {offsets = [0, 384], sizes = [8, 128], strides = [1, 1]} : vector<8x512xf32> to vector<8x128xf32>
    %cst_129 = arith.constant 5.000000e-01 : f32
    %244 = vector.broadcast %cst_129 : f32 to vector<8x128xf32>
    %245 = arith.mulf %244, %243 : vector<8x128xf32>
    %246 = math.tanh %245 : vector<8x128xf32>
    %cst_130 = arith.constant 5.000000e-01 : f32
    %247 = vector.broadcast %cst_130 : f32 to vector<8x128xf32>
    %248 = arith.mulf %247, %246 : vector<8x128xf32>
    %cst_131 = arith.constant 5.000000e-01 : f32
    %249 = vector.broadcast %cst_131 : f32 to vector<8x128xf32>
    %250 = arith.addf %248, %249 : vector<8x128xf32>
    %251 = arith.mulf %240, %224 : vector<8x128xf32>
    %252 = arith.mulf %232, %242 : vector<8x128xf32>
    %253 = arith.addf %251, %252 : vector<8x128xf32>
    %254 = math.tanh %253 : vector<8x128xf32>
    %255 = arith.mulf %250, %254 : vector<8x128xf32>
    %c0_132 = arith.constant 0 : index
    %c0_133 = arith.constant 0 : index
    %256 = vector.load %arg8[%c0_132, %c0_133] : memref<8x128xf32, #tpu.memory_space<vmem>>, vector<8x128xf32>
    tpu.vector_store %arg8[%c0_132, %c0_133], %255 {strides = array<i32>} : memref<8x128xf32, #tpu.memory_space<vmem>>, vector<8x128xf32>,
    %c0_134 = arith.constant 0 : index
    %c0_135 = arith.constant 0 : index
    %257 = vector.load %arg9[%c0_134, %c0_135] : memref<8x128xf32, #tpu.memory_space<vmem>>, vector<8x128xf32>
    tpu.vector_store %arg9[%c0_134, %c0_135], %253 {strides = array<i32>} : memref<8x128xf32, #tpu.memory_space<vmem>>, vector<8x128xf32>,
    %258 = arith.index_cast %c3_i32_115 : i32 to index
    %c0_136 = arith.constant 0 : index
    %c0_137 = arith.constant 0 : index
    %259 = vector.load %arg6[%258, %c0_136, %c0_137] : memref<8x8x128xf32, #tpu.memory_space<vmem>>, vector<1x8x128xf32>
    %260 = vector.shape_cast %259 : vector<1x8x128xf32> to vector<8x128xf32>
    %261 = vector.shape_cast %255 : vector<8x128xf32> to vector<1x8x128xf32>
    tpu.vector_store %arg6[%258, %c0_136, %c0_137], %261 {strides = array<i32>} : memref<8x8x128xf32, #tpu.memory_space<vmem>>, vector<1x8x128xf32>,
    %c4_i32_138 = arith.constant 4 : i32
    %262 = arith.index_cast %c4_i32_138 : i32 to index
    %c0_139 = arith.constant 0 : index
    %c0_140 = arith.constant 0 : index
    %263 = vector.load %arg7[%262, %c0_139, %c0_140] : memref<8x8x512xf32, #tpu.memory_space<vmem>>, vector<1x8x512xf32>
    %264 = vector.shape_cast %263 : vector<1x8x512xf32> to vector<8x512xf32>
    %c0_141 = arith.constant 0 : index
    %c0_142 = arith.constant 0 : index
    %265 = vector.load %arg8[%c0_141, %c0_142] : memref<8x128xf32, #tpu.memory_space<vmem>>, vector<8x128xf32>
    %cst_143 = arith.constant dense<0.000000e+00> : vector<8x512xf32>
    %266 = tpu.matmul %265, %4, %cst_143 {dimension_numbers = #tpu.dot_dimension_numbers<[1], [0], [0], [1], [0, 0, 1, 1], [], []>} : vector<8x128xf32>, vector<128x512xf32>, vector<8x512xf32> -> vector<8x512xf32>
    %267 = arith.addf %264, %266 : vector<8x512xf32>
    %c0_144 = arith.constant 0 : index
    %c0_145 = arith.constant 0 : index
    %268 = vector.load %arg9[%c0_144, %c0_145] : memref<8x128xf32, #tpu.memory_space<vmem>>, vector<8x128xf32>
    %269 = vector.extract_strided_slice %267 {offsets = [0, 0], sizes = [8, 128], strides = [1, 1]} : vector<8x512xf32> to vector<8x128xf32>
    %cst_146 = arith.constant 5.000000e-01 : f32
    %270 = vector.broadcast %cst_146 : f32 to vector<8x128xf32>
    %271 = arith.mulf %270, %269 : vector<8x128xf32>
    %272 = math.tanh %271 : vector<8x128xf32>
    %cst_147 = arith.constant 5.000000e-01 : f32
    %273 = vector.broadcast %cst_147 : f32 to vector<8x128xf32>
    %274 = arith.mulf %273, %272 : vector<8x128xf32>
    %cst_148 = arith.constant 5.000000e-01 : f32
    %275 = vector.broadcast %cst_148 : f32 to vector<8x128xf32>
    %276 = arith.addf %274, %275 : vector<8x128xf32>
    %277 = vector.extract_strided_slice %267 {offsets = [0, 128], sizes = [8, 128], strides = [1, 1]} : vector<8x512xf32> to vector<8x128xf32>
    %cst_149 = arith.constant 5.000000e-01 : f32
    %278 = vector.broadcast %cst_149 : f32 to vector<8x128xf32>
    %279 = arith.mulf %278, %277 : vector<8x128xf32>
    %280 = math.tanh %279 : vector<8x128xf32>
    %cst_150 = arith.constant 5.000000e-01 : f32
    %281 = vector.broadcast %cst_150 : f32 to vector<8x128xf32>
    %282 = arith.mulf %281, %280 : vector<8x128xf32>
    %cst_151 = arith.constant 5.000000e-01 : f32
    %283 = vector.broadcast %cst_151 : f32 to vector<8x128xf32>
    %284 = arith.addf %282, %283 : vector<8x128xf32>
    %285 = vector.extract_strided_slice %267 {offsets = [0, 256], sizes = [8, 128], strides = [1, 1]} : vector<8x512xf32> to vector<8x128xf32>
    %286 = math.tanh %285 : vector<8x128xf32>
    %287 = vector.extract_strided_slice %267 {offsets = [0, 384], sizes = [8, 128], strides = [1, 1]} : vector<8x512xf32> to vector<8x128xf32>
    %cst_152 = arith.constant 5.000000e-01 : f32
    %288 = vector.broadcast %cst_152 : f32 to vector<8x128xf32>
    %289 = arith.mulf %288, %287 : vector<8x128xf32>
    %290 = math.tanh %289 : vector<8x128xf32>
    %cst_153 = arith.constant 5.000000e-01 : f32
    %291 = vector.broadcast %cst_153 : f32 to vector<8x128xf32>
    %292 = arith.mulf %291, %290 : vector<8x128xf32>
    %cst_154 = arith.constant 5.000000e-01 : f32
    %293 = vector.broadcast %cst_154 : f32 to vector<8x128xf32>
    %294 = arith.addf %292, %293 : vector<8x128xf32>
    %295 = arith.mulf %284, %268 : vector<8x128xf32>
    %296 = arith.mulf %276, %286 : vector<8x128xf32>
    %297 = arith.addf %295, %296 : vector<8x128xf32>
    %298 = math.tanh %297 : vector<8x128xf32>
    %299 = arith.mulf %294, %298 : vector<8x128xf32>
    %c0_155 = arith.constant 0 : index
    %c0_156 = arith.constant 0 : index
    %300 = vector.load %arg8[%c0_155, %c0_156] : memref<8x128xf32, #tpu.memory_space<vmem>>, vector<8x128xf32>
    tpu.vector_store %arg8[%c0_155, %c0_156], %299 {strides = array<i32>} : memref<8x128xf32, #tpu.memory_space<vmem>>, vector<8x128xf32>,
    %c0_157 = arith.constant 0 : index
    %c0_158 = arith.constant 0 : index
    %301 = vector.load %arg9[%c0_157, %c0_158] : memref<8x128xf32, #tpu.memory_space<vmem>>, vector<8x128xf32>
    tpu.vector_store %arg9[%c0_157, %c0_158], %297 {strides = array<i32>} : memref<8x128xf32, #tpu.memory_space<vmem>>, vector<8x128xf32>,
    %302 = arith.index_cast %c4_i32_138 : i32 to index
    %c0_159 = arith.constant 0 : index
    %c0_160 = arith.constant 0 : index
    %303 = vector.load %arg6[%302, %c0_159, %c0_160] : memref<8x8x128xf32, #tpu.memory_space<vmem>>, vector<1x8x128xf32>
    %304 = vector.shape_cast %303 : vector<1x8x128xf32> to vector<8x128xf32>
    %305 = vector.shape_cast %299 : vector<8x128xf32> to vector<1x8x128xf32>
    tpu.vector_store %arg6[%302, %c0_159, %c0_160], %305 {strides = array<i32>} : memref<8x8x128xf32, #tpu.memory_space<vmem>>, vector<1x8x128xf32>,
    %c5_i32_161 = arith.constant 5 : i32
    %306 = arith.index_cast %c5_i32_161 : i32 to index
    %c0_162 = arith.constant 0 : index
    %c0_163 = arith.constant 0 : index
    %307 = vector.load %arg7[%306, %c0_162, %c0_163] : memref<8x8x512xf32, #tpu.memory_space<vmem>>, vector<1x8x512xf32>
    %308 = vector.shape_cast %307 : vector<1x8x512xf32> to vector<8x512xf32>
    %c0_164 = arith.constant 0 : index
    %c0_165 = arith.constant 0 : index
    %309 = vector.load %arg8[%c0_164, %c0_165] : memref<8x128xf32, #tpu.memory_space<vmem>>, vector<8x128xf32>
    %cst_166 = arith.constant dense<0.000000e+00> : vector<8x512xf32>
    %310 = tpu.matmul %309, %4, %cst_166 {dimension_numbers = #tpu.dot_dimension_numbers<[1], [0], [0], [1], [0, 0, 1, 1], [], []>} : vector<8x128xf32>, vector<128x512xf32>, vector<8x512xf32> -> vector<8x512xf32>
    %311 = arith.addf %308, %310 : vector<8x512xf32>
    %c0_167 = arith.constant 0 : index
    %c0_168 = arith.constant 0 : index
    %312 = vector.load %arg9[%c0_167, %c0_168] : memref<8x128xf32, #tpu.memory_space<vmem>>, vector<8x128xf32>
    %313 = vector.extract_strided_slice %311 {offsets = [0, 0], sizes = [8, 128], strides = [1, 1]} : vector<8x512xf32> to vector<8x128xf32>
    %cst_169 = arith.constant 5.000000e-01 : f32
    %314 = vector.broadcast %cst_169 : f32 to vector<8x128xf32>
    %315 = arith.mulf %314, %313 : vector<8x128xf32>
    %316 = math.tanh %315 : vector<8x128xf32>
    %cst_170 = arith.constant 5.000000e-01 : f32
    %317 = vector.broadcast %cst_170 : f32 to vector<8x128xf32>
    %318 = arith.mulf %317, %316 : vector<8x128xf32>
    %cst_171 = arith.constant 5.000000e-01 : f32
    %319 = vector.broadcast %cst_171 : f32 to vector<8x128xf32>
    %320 = arith.addf %318, %319 : vector<8x128xf32>
    %321 = vector.extract_strided_slice %311 {offsets = [0, 128], sizes = [8, 128], strides = [1, 1]} : vector<8x512xf32> to vector<8x128xf32>
    %cst_172 = arith.constant 5.000000e-01 : f32
    %322 = vector.broadcast %cst_172 : f32 to vector<8x128xf32>
    %323 = arith.mulf %322, %321 : vector<8x128xf32>
    %324 = math.tanh %323 : vector<8x128xf32>
    %cst_173 = arith.constant 5.000000e-01 : f32
    %325 = vector.broadcast %cst_173 : f32 to vector<8x128xf32>
    %326 = arith.mulf %325, %324 : vector<8x128xf32>
    %cst_174 = arith.constant 5.000000e-01 : f32
    %327 = vector.broadcast %cst_174 : f32 to vector<8x128xf32>
    %328 = arith.addf %326, %327 : vector<8x128xf32>
    %329 = vector.extract_strided_slice %311 {offsets = [0, 256], sizes = [8, 128], strides = [1, 1]} : vector<8x512xf32> to vector<8x128xf32>
    %330 = math.tanh %329 : vector<8x128xf32>
    %331 = vector.extract_strided_slice %311 {offsets = [0, 384], sizes = [8, 128], strides = [1, 1]} : vector<8x512xf32> to vector<8x128xf32>
    %cst_175 = arith.constant 5.000000e-01 : f32
    %332 = vector.broadcast %cst_175 : f32 to vector<8x128xf32>
    %333 = arith.mulf %332, %331 : vector<8x128xf32>
    %334 = math.tanh %333 : vector<8x128xf32>
    %cst_176 = arith.constant 5.000000e-01 : f32
    %335 = vector.broadcast %cst_176 : f32 to vector<8x128xf32>
    %336 = arith.mulf %335, %334 : vector<8x128xf32>
    %cst_177 = arith.constant 5.000000e-01 : f32
    %337 = vector.broadcast %cst_177 : f32 to vector<8x128xf32>
    %338 = arith.addf %336, %337 : vector<8x128xf32>
    %339 = arith.mulf %328, %312 : vector<8x128xf32>
    %340 = arith.mulf %320, %330 : vector<8x128xf32>
    %341 = arith.addf %339, %340 : vector<8x128xf32>
    %342 = math.tanh %341 : vector<8x128xf32>
    %343 = arith.mulf %338, %342 : vector<8x128xf32>
    %c0_178 = arith.constant 0 : index
    %c0_179 = arith.constant 0 : index
    %344 = vector.load %arg8[%c0_178, %c0_179] : memref<8x128xf32, #tpu.memory_space<vmem>>, vector<8x128xf32>
    tpu.vector_store %arg8[%c0_178, %c0_179], %343 {strides = array<i32>} : memref<8x128xf32, #tpu.memory_space<vmem>>, vector<8x128xf32>,
    %c0_180 = arith.constant 0 : index
    %c0_181 = arith.constant 0 : index
    %345 = vector.load %arg9[%c0_180, %c0_181] : memref<8x128xf32, #tpu.memory_space<vmem>>, vector<8x128xf32>
    tpu.vector_store %arg9[%c0_180, %c0_181], %341 {strides = array<i32>} : memref<8x128xf32, #tpu.memory_space<vmem>>, vector<8x128xf32>,
    %346 = arith.index_cast %c5_i32_161 : i32 to index
    %c0_182 = arith.constant 0 : index
    %c0_183 = arith.constant 0 : index
    %347 = vector.load %arg6[%346, %c0_182, %c0_183] : memref<8x8x128xf32, #tpu.memory_space<vmem>>, vector<1x8x128xf32>
    %348 = vector.shape_cast %347 : vector<1x8x128xf32> to vector<8x128xf32>
    %349 = vector.shape_cast %343 : vector<8x128xf32> to vector<1x8x128xf32>
    tpu.vector_store %arg6[%346, %c0_182, %c0_183], %349 {strides = array<i32>} : memref<8x8x128xf32, #tpu.memory_space<vmem>>, vector<1x8x128xf32>,
    %c6_i32_184 = arith.constant 6 : i32
    %350 = arith.index_cast %c6_i32_184 : i32 to index
    %c0_185 = arith.constant 0 : index
    %c0_186 = arith.constant 0 : index
    %351 = vector.load %arg7[%350, %c0_185, %c0_186] : memref<8x8x512xf32, #tpu.memory_space<vmem>>, vector<1x8x512xf32>
    %352 = vector.shape_cast %351 : vector<1x8x512xf32> to vector<8x512xf32>
    %c0_187 = arith.constant 0 : index
    %c0_188 = arith.constant 0 : index
    %353 = vector.load %arg8[%c0_187, %c0_188] : memref<8x128xf32, #tpu.memory_space<vmem>>, vector<8x128xf32>
    %cst_189 = arith.constant dense<0.000000e+00> : vector<8x512xf32>
    %354 = tpu.matmul %353, %4, %cst_189 {dimension_numbers = #tpu.dot_dimension_numbers<[1], [0], [0], [1], [0, 0, 1, 1], [], []>} : vector<8x128xf32>, vector<128x512xf32>, vector<8x512xf32> -> vector<8x512xf32>
    %355 = arith.addf %352, %354 : vector<8x512xf32>
    %c0_190 = arith.constant 0 : index
    %c0_191 = arith.constant 0 : index
    %356 = vector.load %arg9[%c0_190, %c0_191] : memref<8x128xf32, #tpu.memory_space<vmem>>, vector<8x128xf32>
    %357 = vector.extract_strided_slice %355 {offsets = [0, 0], sizes = [8, 128], strides = [1, 1]} : vector<8x512xf32> to vector<8x128xf32>
    %cst_192 = arith.constant 5.000000e-01 : f32
    %358 = vector.broadcast %cst_192 : f32 to vector<8x128xf32>
    %359 = arith.mulf %358, %357 : vector<8x128xf32>
    %360 = math.tanh %359 : vector<8x128xf32>
    %cst_193 = arith.constant 5.000000e-01 : f32
    %361 = vector.broadcast %cst_193 : f32 to vector<8x128xf32>
    %362 = arith.mulf %361, %360 : vector<8x128xf32>
    %cst_194 = arith.constant 5.000000e-01 : f32
    %363 = vector.broadcast %cst_194 : f32 to vector<8x128xf32>
    %364 = arith.addf %362, %363 : vector<8x128xf32>
    %365 = vector.extract_strided_slice %355 {offsets = [0, 128], sizes = [8, 128], strides = [1, 1]} : vector<8x512xf32> to vector<8x128xf32>
    %cst_195 = arith.constant 5.000000e-01 : f32
    %366 = vector.broadcast %cst_195 : f32 to vector<8x128xf32>
    %367 = arith.mulf %366, %365 : vector<8x128xf32>
    %368 = math.tanh %367 : vector<8x128xf32>
    %cst_196 = arith.constant 5.000000e-01 : f32
    %369 = vector.broadcast %cst_196 : f32 to vector<8x128xf32>
    %370 = arith.mulf %369, %368 : vector<8x128xf32>
    %cst_197 = arith.constant 5.000000e-01 : f32
    %371 = vector.broadcast %cst_197 : f32 to vector<8x128xf32>
    %372 = arith.addf %370, %371 : vector<8x128xf32>
    %373 = vector.extract_strided_slice %355 {offsets = [0, 256], sizes = [8, 128], strides = [1, 1]} : vector<8x512xf32> to vector<8x128xf32>
    %374 = math.tanh %373 : vector<8x128xf32>
    %375 = vector.extract_strided_slice %355 {offsets = [0, 384], sizes = [8, 128], strides = [1, 1]} : vector<8x512xf32> to vector<8x128xf32>
    %cst_198 = arith.constant 5.000000e-01 : f32
    %376 = vector.broadcast %cst_198 : f32 to vector<8x128xf32>
    %377 = arith.mulf %376, %375 : vector<8x128xf32>
    %378 = math.tanh %377 : vector<8x128xf32>
    %cst_199 = arith.constant 5.000000e-01 : f32
    %379 = vector.broadcast %cst_199 : f32 to vector<8x128xf32>
    %380 = arith.mulf %379, %378 : vector<8x128xf32>
    %cst_200 = arith.constant 5.000000e-01 : f32
    %381 = vector.broadcast %cst_200 : f32 to vector<8x128xf32>
    %382 = arith.addf %380, %381 : vector<8x128xf32>
    %383 = arith.mulf %372, %356 : vector<8x128xf32>
    %384 = arith.mulf %364, %374 : vector<8x128xf32>
    %385 = arith.addf %383, %384 : vector<8x128xf32>
    %386 = math.tanh %385 : vector<8x128xf32>
    %387 = arith.mulf %382, %386 : vector<8x128xf32>
    %c0_201 = arith.constant 0 : index
    %c0_202 = arith.constant 0 : index
    %388 = vector.load %arg8[%c0_201, %c0_202] : memref<8x128xf32, #tpu.memory_space<vmem>>, vector<8x128xf32>
    tpu.vector_store %arg8[%c0_201, %c0_202], %387 {strides = array<i32>} : memref<8x128xf32, #tpu.memory_space<vmem>>, vector<8x128xf32>,
    %c0_203 = arith.constant 0 : index
    %c0_204 = arith.constant 0 : index
    %389 = vector.load %arg9[%c0_203, %c0_204] : memref<8x128xf32, #tpu.memory_space<vmem>>, vector<8x128xf32>
    tpu.vector_store %arg9[%c0_203, %c0_204], %385 {strides = array<i32>} : memref<8x128xf32, #tpu.memory_space<vmem>>, vector<8x128xf32>,
    %390 = arith.index_cast %c6_i32_184 : i32 to index
    %c0_205 = arith.constant 0 : index
    %c0_206 = arith.constant 0 : index
    %391 = vector.load %arg6[%390, %c0_205, %c0_206] : memref<8x8x128xf32, #tpu.memory_space<vmem>>, vector<1x8x128xf32>
    %392 = vector.shape_cast %391 : vector<1x8x128xf32> to vector<8x128xf32>
    %393 = vector.shape_cast %387 : vector<8x128xf32> to vector<1x8x128xf32>
    tpu.vector_store %arg6[%390, %c0_205, %c0_206], %393 {strides = array<i32>} : memref<8x8x128xf32, #tpu.memory_space<vmem>>, vector<1x8x128xf32>,
    %c7_i32_207 = arith.constant 7 : i32
    %394 = arith.index_cast %c7_i32_207 : i32 to index
    %c0_208 = arith.constant 0 : index
    %c0_209 = arith.constant 0 : index
    %395 = vector.load %arg7[%394, %c0_208, %c0_209] : memref<8x8x512xf32, #tpu.memory_space<vmem>>, vector<1x8x512xf32>
    %396 = vector.shape_cast %395 : vector<1x8x512xf32> to vector<8x512xf32>
    %c0_210 = arith.constant 0 : index
    %c0_211 = arith.constant 0 : index
    %397 = vector.load %arg8[%c0_210, %c0_211] : memref<8x128xf32, #tpu.memory_space<vmem>>, vector<8x128xf32>
    %cst_212 = arith.constant dense<0.000000e+00> : vector<8x512xf32>
    %398 = tpu.matmul %397, %4, %cst_212 {dimension_numbers = #tpu.dot_dimension_numbers<[1], [0], [0], [1], [0, 0, 1, 1], [], []>} : vector<8x128xf32>, vector<128x512xf32>, vector<8x512xf32> -> vector<8x512xf32>
    %399 = arith.addf %396, %398 : vector<8x512xf32>
    %c0_213 = arith.constant 0 : index
    %c0_214 = arith.constant 0 : index
    %400 = vector.load %arg9[%c0_213, %c0_214] : memref<8x128xf32, #tpu.memory_space<vmem>>, vector<8x128xf32>
    %401 = vector.extract_strided_slice %399 {offsets = [0, 0], sizes = [8, 128], strides = [1, 1]} : vector<8x512xf32> to vector<8x128xf32>
    %cst_215 = arith.constant 5.000000e-01 : f32
    %402 = vector.broadcast %cst_215 : f32 to vector<8x128xf32>
    %403 = arith.mulf %402, %401 : vector<8x128xf32>
    %404 = math.tanh %403 : vector<8x128xf32>
    %cst_216 = arith.constant 5.000000e-01 : f32
    %405 = vector.broadcast %cst_216 : f32 to vector<8x128xf32>
    %406 = arith.mulf %405, %404 : vector<8x128xf32>
    %cst_217 = arith.constant 5.000000e-01 : f32
    %407 = vector.broadcast %cst_217 : f32 to vector<8x128xf32>
    %408 = arith.addf %406, %407 : vector<8x128xf32>
    %409 = vector.extract_strided_slice %399 {offsets = [0, 128], sizes = [8, 128], strides = [1, 1]} : vector<8x512xf32> to vector<8x128xf32>
    %cst_218 = arith.constant 5.000000e-01 : f32
    %410 = vector.broadcast %cst_218 : f32 to vector<8x128xf32>
    %411 = arith.mulf %410, %409 : vector<8x128xf32>
    %412 = math.tanh %411 : vector<8x128xf32>
    %cst_219 = arith.constant 5.000000e-01 : f32
    %413 = vector.broadcast %cst_219 : f32 to vector<8x128xf32>
    %414 = arith.mulf %413, %412 : vector<8x128xf32>
    %cst_220 = arith.constant 5.000000e-01 : f32
    %415 = vector.broadcast %cst_220 : f32 to vector<8x128xf32>
    %416 = arith.addf %414, %415 : vector<8x128xf32>
    %417 = vector.extract_strided_slice %399 {offsets = [0, 256], sizes = [8, 128], strides = [1, 1]} : vector<8x512xf32> to vector<8x128xf32>
    %418 = math.tanh %417 : vector<8x128xf32>
    %419 = vector.extract_strided_slice %399 {offsets = [0, 384], sizes = [8, 128], strides = [1, 1]} : vector<8x512xf32> to vector<8x128xf32>
    %cst_221 = arith.constant 5.000000e-01 : f32
    %420 = vector.broadcast %cst_221 : f32 to vector<8x128xf32>
    %421 = arith.mulf %420, %419 : vector<8x128xf32>
    %422 = math.tanh %421 : vector<8x128xf32>
    %cst_222 = arith.constant 5.000000e-01 : f32
    %423 = vector.broadcast %cst_222 : f32 to vector<8x128xf32>
    %424 = arith.mulf %423, %422 : vector<8x128xf32>
    %cst_223 = arith.constant 5.000000e-01 : f32
    %425 = vector.broadcast %cst_223 : f32 to vector<8x128xf32>
    %426 = arith.addf %424, %425 : vector<8x128xf32>
    %427 = arith.mulf %416, %400 : vector<8x128xf32>
    %428 = arith.mulf %408, %418 : vector<8x128xf32>
    %429 = arith.addf %427, %428 : vector<8x128xf32>
    %430 = math.tanh %429 : vector<8x128xf32>
    %431 = arith.mulf %426, %430 : vector<8x128xf32>
    %c0_224 = arith.constant 0 : index
    %c0_225 = arith.constant 0 : index
    %432 = vector.load %arg8[%c0_224, %c0_225] : memref<8x128xf32, #tpu.memory_space<vmem>>, vector<8x128xf32>
    tpu.vector_store %arg8[%c0_224, %c0_225], %431 {strides = array<i32>} : memref<8x128xf32, #tpu.memory_space<vmem>>, vector<8x128xf32>,
    %c0_226 = arith.constant 0 : index
    %c0_227 = arith.constant 0 : index
    %433 = vector.load %arg9[%c0_226, %c0_227] : memref<8x128xf32, #tpu.memory_space<vmem>>, vector<8x128xf32>
    tpu.vector_store %arg9[%c0_226, %c0_227], %429 {strides = array<i32>} : memref<8x128xf32, #tpu.memory_space<vmem>>, vector<8x128xf32>,
    %434 = arith.index_cast %c7_i32_207 : i32 to index
    %c0_228 = arith.constant 0 : index
    %c0_229 = arith.constant 0 : index
    %435 = vector.load %arg6[%434, %c0_228, %c0_229] : memref<8x8x128xf32, #tpu.memory_space<vmem>>, vector<1x8x128xf32>
    %436 = vector.shape_cast %435 : vector<1x8x128xf32> to vector<8x128xf32>
    %437 = vector.shape_cast %431 : vector<8x128xf32> to vector<1x8x128xf32>
    tpu.vector_store %arg6[%434, %c0_228, %c0_229], %437 {strides = array<i32>} : memref<8x8x128xf32, #tpu.memory_space<vmem>>, vector<1x8x128xf32>,
    %c8_i32_230 = arith.constant 8 : i32
    return
  }
  func.func @transform_0(%arg0: i32, %arg1: i32) -> (i32, i32, i32) {
    %c0_i32 = arith.constant 0 : i32
    %c0_i32_0 = arith.constant 0 : i32
    return %arg1, %arg0, %c0_i32 : i32, i32, i32
  }
  func.func @transform_1(%arg0: i32, %arg1: i32) -> (i32, i32) {
    %c0_i32 = arith.constant 0 : i32
    %c0_i32_0 = arith.constant 0 : i32
    %c0_i32_1 = arith.constant 0 : i32
    return %c0_i32, %c0_i32_0 : i32, i32
  }
  func.func @transform_2(%arg0: i32, %arg1: i32) -> (i32, i32) {
    %c0_i32 = arith.constant 0 : i32
    %c0_i32_0 = arith.constant 0 : i32
    %c0_i32_1 = arith.constant 0 : i32
    return %c0_i32, %c0_i32_0 : i32, i32
  }
  func.func @transform_3(%arg0: i32, %arg1: i32) -> (i32, i32) {
    %c0_i32 = arith.constant 0 : i32
    %c0_i32_0 = arith.constant 0 : i32
    %c0_i32_1 = arith.constant 0 : i32
    return %c0_i32, %c0_i32_0 : i32, i32
  }
  func.func @transform_4(%arg0: i32, %arg1: i32) -> (i32, i32, i32) {
    %c0_i32 = arith.constant 0 : i32
    %c0_i32_0 = arith.constant 0 : i32
    return %arg1, %arg0, %c0_i32 : i32, i32, i32
  }
}

</mosaic_0001>

<llo_original>
// kernel: lstm_model_forward.2
$region0: #{lstm_model_forward.2}
  #allocation0 [shape = 'u32[]', space=smem, size = 0x4, offset = 0x4, fixed_abs, tag = 'smem constant byte address 0x4 - core index']
  #allocation1 [shape = 'u32[144,128]{1,0:T(1,128)}', space=vmem, size = 0x12000, scoped, tag = 'internal scratch']
  #allocation2 [shape = 'f32[8,8,512]{2,1,0:T(8,128)}', space=vmem, size = 0x20000, scoped, tag = 'scratch operand']
  #allocation3 [shape = 'f32[8,128]{1,0:T(8,128)}', space=vmem, size = 0x1000, scoped, tag = 'scratch operand']
  #allocation4 [shape = 'f32[8,128]{1,0:T(8,128)}', space=vmem, size = 0x1000, scoped, tag = 'scratch operand']
  %s0 = inlined_call_operand.vmem [shape: f32[8,8,16], index: 0, kind: input, shape index: {}]
  %s1 = inlined_call_operand.hbm [shape: f32[16,512], index: 1, kind: input, shape index: {}]
  %s2 = inlined_call_operand.hbm [shape: f32[128,512], index: 2, kind: input, shape index: {}]
  %s3 = inlined_call_operand.hbm [shape: f32[1,512], index: 3, kind: input, shape index: {}]
  %s4 = inlined_call_operand.vmem [shape: f32[8,8,128], index: 4, kind: output, shape index: {}]
  %s5 = sld [smem:[#allocation0]]
  $region42: #{lstm_model_forward.2} parent=0
    _
  %s7 = ssub.s32 1, %s5
  %s8 = scalar_select 0, %s7, %s5
  $region1: #{lstm_model_forward.2} parent=0
    #allocation5 [shape = 'u8[32768]{0}', space=vmem, size = 0x8000, scoped, tag = 'input window, operand 1, single buffered']
    #allocation6 [shape = 's32[1]{0}', space=sflag, size = 0x4, scoped, tag = 'scoped memory for lstm_model_forward.2']
    #allocation7 [shape = 'u8[262144]{0}', space=vmem, size = 0x40000, scoped, tag = 'input window, operand 2, single buffered']
    #allocation8 [shape = 's32[1]{0}', space=sflag, size = 0x4, scoped, tag = 'scoped memory for lstm_model_forward.2']
    #allocation9 [shape = 'u8[2048]{0}', space=vmem, size = 0x800, scoped, tag = 'input window, operand 3, single buffered']
    %9 = vsyncpa [#allocation6], 0
    %10 = vsyncpa [#allocation8], 0
    // Predicated region
    $region2: #{lstm_model_forward.2} parent=1 // pred_check
      _
    $region3: #{lstm_model_forward.2} parent=1 // pred_check_branch
      %12 = sbr.rel (0) target = $region5
    $region4: #{lstm_model_forward.2} parent=1 // pred_region
      _
    $region5: #{lstm_model_forward.2} parent=1 // pred_fallthru
      _
    // Predicated region
    $region6: #{lstm_model_forward.2} parent=1 // pred_check
      _
    $region7: #{lstm_model_forward.2} parent=1 // pred_check_branch
      %14 = sbr.rel (0) target = $region9
    $region8: #{lstm_model_forward.2} parent=1 // pred_region
      %s16 = ssub.s32 1024, 1024
      %17 = vsyncadd [#allocation6], %s16
      %s18 = sshll.u32 [#allocation5], 4
      %s19 = int_to_ptr.vmem [resolvable:$true] %s18
      %24 = dma.hbm_to_vmem [thread:$0]  %s1, 1024, %s19, [#allocation6], 512, 512, 32
    $region9: #{lstm_model_forward.2} parent=1 // pred_fallthru
      _
    // Predicated region
    $region10: #{lstm_model_forward.2} parent=1 // pred_check
      _
    $region11: #{lstm_model_forward.2} parent=1 // pred_check_branch
      %26 = sbr.rel (0) target = $region13
    $region12: #{lstm_model_forward.2} parent=1 // pred_region
      %s28 = ssub.s32 8192, 8192
      %29 = vsyncadd [#allocation8], %s28
      %s30 = sshll.u32 [#allocation7], 4
      %s31 = int_to_ptr.vmem [resolvable:$true] %s30
      %36 = dma.hbm_to_vmem [thread:$0]  %s2, 8192, %s31, [#allocation8], 512, 512, 32
    $region13: #{lstm_model_forward.2} parent=1 // pred_fallthru
      _
    // Predicated region
    $region14: #{lstm_model_forward.2} parent=1 // pred_check
      _
    $region15: #{lstm_model_forward.2} parent=1 // pred_check_branch
      %38 = sbr.rel (0) target = $region17
    $region16: #{lstm_model_forward.2} parent=1 // pred_region
      %s40 = ssub.s32 64, 64
      %41 = vsyncadd [#allocation8], %s40
      %s43 = sshll.u32 [#allocation9], 4
      %s44 = int_to_ptr.vmem [resolvable:$true] %s43
      %46 = dma.hbm_to_vmem [thread:$0]  %s3, 64, %s44, [#allocation8]
    $region17: #{lstm_model_forward.2} parent=1 // pred_fallthru
      _
    // Predicated region
    $region18: #{lstm_model_forward.2} parent=1 // pred_check
      _
    $region19: #{lstm_model_forward.2} parent=1 // pred_check_branch
      %48 = sbr.rel (0) target = $region21
    $region20: #{lstm_model_forward.2} parent=1 // pred_region
      %49 = dma.done [#allocation6], 1024
    $region21: #{lstm_model_forward.2} parent=1 // pred_fallthru
      _
    // Predicated region
    $region22: #{lstm_model_forward.2} parent=1 // pred_check
      _
    $region23: #{lstm_model_forward.2} parent=1 // pred_check_branch
      %51 = sbr.rel (0) target = $region25
    $region24: #{lstm_model_forward.2} parent=1 // pred_region
      %52 = dma.done [#allocation8], 8192
    $region25: #{lstm_model_forward.2} parent=1 // pred_fallthru
      _
    // Predicated region
    $region26: #{lstm_model_forward.2} parent=1 // pred_check
      _
    $region27: #{lstm_model_forward.2} parent=1 // pred_check_branch
      %54 = sbr.rel (0) target = $region29
    $region28: #{lstm_model_forward.2} parent=1 // pred_region
      %55 = dma.done [#allocation8], 64
    $region29: #{lstm_model_forward.2} parent=1 // pred_fallthru
      _
    %p56 = scmp.eq.s32.totalorder 0, 0
    // Predicated region
    $region30: #{lstm_model_forward.2} parent=1 // pred_check
      %p57 = pneg %p56
    $region31: #{lstm_model_forward.2} parent=1 // pred_check_branch
      %59 = sbr.rel (%p57) target = $region33
    $region32: #{lstm_model_forward.2} parent=1 // pred_region
      %60 = vst [vmem:[#allocation3] sm:$0xff] 0.0
      %61 = vst [vmem:[#allocation4] sm:$0xff] 0.0
    $region33: #{lstm_model_forward.2} parent=1 // pred_fallthru
      _
    %v62 = vld [vmem:[#allocation5] sm:$0xff]
    %v63 = vld [vmem:[#allocation5 + $0x8] sm:$0xff]
    %v64 = vld [vmem:[#allocation5 + $0x10] sm:$0xff]
    %v65 = vld [vmem:[#allocation5 + $0x18] sm:$0xff]
    %v66 = vld [vmem:[#allocation5 + $0x20] sm:$0xff]
    %v67 = vld [vmem:[#allocation5 + $0x28] sm:$0xff]
    %v68 = vld [vmem:[#allocation5 + $0x30] sm:$0xff]
    %v69 = vld [vmem:[#allocation5 + $0x38] sm:$0xff]
    %v70 = vld [vmem:[#allocation7] sm:$0xff]
    %v71 = vld [vmem:[#allocation7 + $0x8] sm:$0xff]
    %v72 = vld [vmem:[#allocation7 + $0x10] sm:$0xff]
    %v73 = vld [vmem:[#allocation7 + $0x18] sm:$0xff]
    %v74 = vld [vmem:[#allocation7 + $0x20] sm:$0xff]
    %v75 = vld [vmem:[#allocation7 + $0x28] sm:$0xff]
    %v76 = vld [vmem:[#allocation7 + $0x30] sm:$0xff]
    %v77 = vld [vmem:[#allocation7 + $0x38] sm:$0xff]
    %v78 = vld [vmem:[#allocation7 + $0x40] sm:$0xff]
    %v79 = vld [vmem:[#allocation7 + $0x48] sm:$0xff]
    %v80 = vld [vmem:[#allocation7 + $0x50] sm:$0xff]
    %v81 = vld [vmem:[#allocation7 + $0x58] sm:$0xff]
    %v82 = vld [vmem:[#allocation7 + $0x60] sm:$0xff]
    %v83 = vld [vmem:[#allocation7 + $0x68] sm:$0xff]
    %v84 = vld [vmem:[#allocation7 + $0x70] sm:$0xff]
    %v85 = vld [vmem:[#allocation7 + $0x78] sm:$0xff]
    %v86 = vld [vmem:[#allocation7 + $0x80] sm:$0xff]
    %v87 = vld [vmem:[#allocation7 + $0x88] sm:$0xff]
    %v88 = vld [vmem:[#allocation7 + $0x90] sm:$0xff]
    %v89 = vld [vmem:[#allocation7 + $0x98] sm:$0xff]
    %v90 = vld [vmem:[#allocation7 + $0xa0] sm:$0xff]
    %v91 = vld [vmem:[#allocation7 + $0xa8] sm:$0xff]
    %v92 = vld [vmem:[#allocation7 + $0xb0] sm:$0xff]
    %v93 = vld [vmem:[#allocation7 + $0xb8] sm:$0xff]
    %v94 = vld [vmem:[#allocation7 + $0xc0] sm:$0xff]
    %v95 = vld [vmem:[#allocation7 + $0xc8] sm:$0xff]
    %v96 = vld [vmem:[#allocation7 + $0xd0] sm:$0xff]
    %v97 = vld [vmem:[#allocation7 + $0xd8] sm:$0xff]
    %v98 = vld [vmem:[#allocation7 + $0xe0] sm:$0xff]
    %v99 = vld [vmem:[#allocation7 + $0xe8] sm:$0xff]
    %v100 = vld [vmem:[#allocation7 + $0xf0] sm:$0xff]
    %v101 = vld [vmem:[#allocation7 + $0xf8] sm:$0xff]
    %v102 = vld [vmem:[#allocation7 + $0x100] sm:$0xff]
    %v103 = vld [vmem:[#allocation7 + $0x108] sm:$0xff]
    %v104 = vld [vmem:[#allocation7 + $0x110] sm:$0xff]
    %v105 = vld [vmem:[#allocation7 + $0x118] sm:$0xff]
    %v106 = vld [vmem:[#allocation7 + $0x120] sm:$0xff]
    %v107 = vld [vmem:[#allocation7 + $0x128] sm:$0xff]
    %v108 = vld [vmem:[#allocation7 + $0x130] sm:$0xff]
    %v109 = vld [vmem:[#allocation7 + $0x138] sm:$0xff]
    %v110 = vld [vmem:[#allocation7 + $0x140] sm:$0xff]
    %v111 = vld [vmem:[#allocation7 + $0x148] sm:$0xff]
    %v112 = vld [vmem:[#allocation7 + $0x150] sm:$0xff]
    %v113 = vld [vmem:[#allocation7 + $0x158] sm:$0xff]
    %v114 = vld [vmem:[#allocation7 + $0x160] sm:$0xff]
    %v115 = vld [vmem:[#allocation7 + $0x168] sm:$0xff]
    %v116 = vld [vmem:[#allocation7 + $0x170] sm:$0xff]
    %v117 = vld [vmem:[#allocation7 + $0x178] sm:$0xff]
    %v118 = vld [vmem:[#allocation7 + $0x180] sm:$0xff]
    %v119 = vld [vmem:[#allocation7 + $0x188] sm:$0xff]
    %v120 = vld [vmem:[#allocation7 + $0x190] sm:$0xff]
    %v121 = vld [vmem:[#allocation7 + $0x198] sm:$0xff]
    %v122 = vld [vmem:[#allocation7 + $0x1a0] sm:$0xff]
    %v123 = vld [vmem:[#allocation7 + $0x1a8] sm:$0xff]
    %v124 = vld [vmem:[#allocation7 + $0x1b0] sm:$0xff]
    %v125 = vld [vmem:[#allocation7 + $0x1b8] sm:$0xff]
    %v126 = vld [vmem:[#allocation7 + $0x1c0] sm:$0xff]
    %v127 = vld [vmem:[#allocation7 + $0x1c8] sm:$0xff]
    %v128 = vld [vmem:[#allocation7 + $0x1d0] sm:$0xff]
    %v129 = vld [vmem:[#allocation7 + $0x1d8] sm:$0xff]
    %v130 = vld [vmem:[#allocation7 + $0x1e0] sm:$0xff]
    %v131 = vld [vmem:[#allocation7 + $0x1e8] sm:$0xff]
    %v132 = vld [vmem:[#allocation7 + $0x1f0] sm:$0xff]
    %v133 = vld [vmem:[#allocation7 + $0x1f8] sm:$0xff]
    %v134 = vld [vmem:[#allocation9] sm:$0xf]
    %v135 = vld [vmem:[%s0] sm:$0xff]
    %v137 = vlaneseq
    %v138 = vshrl.u32 %v137, 7
    %v139 = vsub.s32 0, %v138
    %v140 = vrot.slane %v134, %v139
    %v141 = vlaneseq
    %v142 = vshrl.u32 %v141, 7
    %v143 = vsub.s32 1, %v142
    %v144 = vrot.slane %v134, %v143
    %v145 = vlaneseq
    %v146 = vshrl.u32 %v145, 7
    %v147 = vsub.s32 2, %v146
    %v148 = vrot.slane %v134, %v147
    %v149 = vlaneseq
    %v150 = vshrl.u32 %v149, 7
    %v151 = vsub.s32 3, %v150
    %v152 = vrot.slane %v134, %v151
    %vm157 = vcmask 130048
    %v159 = vsel %vm157, %v135, 0
    %161 = vmatprep.subr.mxu0 %v63
    %162 = vmatpush1.msra.mxu0 %v62
    %163 = vmatprep.subr.mxu0 %v67
    %164 = vmatpush1.msra.mxu0 %v66
    %165 = vmatprep.subr.mxu0 0.0
    %166 = vmatpush1.msra.mxu0 0.0
    %167 = vmatprep.subr.mxu0 0.0
    %168 = vmatpush1.msra.mxu0 0.0
    %169 = vmatprep.subr.mxu0 0.0
    %170 = vmatpush1.msra.mxu0 0.0
    %171 = vmatprep.subr.mxu0 0.0
    %172 = vmatpush1.msra.mxu0 0.0
    %173 = vmatprep.subr.mxu0 0.0
    %174 = vmatpush1.msra.mxu0 0.0
    %175 = vmatprep.subr.mxu0 0.0
    %176 = vmatpush1.msra.mxu0 0.0
    %177 = vmatprep.subr.mxu0 0.0
    %178 = vmatpush1.msra.mxu0 0.0
    %179 = vmatprep.subr.mxu0 0.0
    %180 = vmatpush1.msra.mxu0 0.0
    %181 = vmatprep.subr.mxu0 0.0
    %182 = vmatpush1.msra.mxu0 0.0
    %183 = vmatprep.subr.mxu0 0.0
    %184 = vmatpush1.msra.mxu0 0.0
    %185 = vmatprep.subr.mxu0 0.0
    %186 = vmatpush1.msra.mxu0 0.0
    %187 = vmatprep.subr.mxu0 0.0
    %188 = vmatpush1.msra.mxu0 0.0
    %189 = vmatprep.subr.mxu0 0.0
    %190 = vmatpush1.msra.mxu0 0.0
    %191 = vmatprep.subr.mxu0 0.0
    %192 = vmatpush1.msra.mxu0 0.0
    %193 = vmatprep.subr.mxu0 0.0
    %194 = vmatpush1.msra.mxu0 0.0
    %195 = vmatprep.subr.mxu0 0.0
    %196 = vmatpush1.msra.mxu0 0.0
    %197 = vmatprep.subr.mxu0 0.0
    %198 = vmatpush1.msra.mxu0 0.0
    %199 = vmatprep.subr.mxu0 0.0
    %200 = vmatpush1.msra.mxu0 0.0
    %201 = vmatprep.subr.mxu0 0.0
    %202 = vmatpush1.msra.mxu0 0.0
    %203 = vmatprep.subr.mxu0 0.0
    %204 = vmatpush1.msra.mxu0 0.0
    %205 = vmatprep.subr.mxu0 0.0
    %206 = vmatpush1.msra.mxu0 0.0
    %207 = vmatprep.subr.mxu0 0.0
    %208 = vmatpush1.msra.mxu0 0.0
    %209 = vmatprep.subr.mxu0 0.0
    %210 = vmatpush1.msra.mxu0 0.0
    %211 = vmatprep.subr.mxu0 0.0
    %212 = vmatpush1.msra.mxu0 0.0
    %213 = vmatprep.subr.mxu0 0.0
    %214 = vmatpush1.msra.mxu0 0.0
    %215 = vmatprep.subr.mxu0 0.0
    %216 = vmatpush1.msra.mxu0 0.0
    %217 = vmatprep.subr.mxu0 0.0
    %218 = vmatpush1.msra.mxu0 0.0
    %219 = vmatprep.subr.mxu0 0.0
    %220 = vmatpush1.msra.mxu0 0.0
    %221 = vmatprep.subr.mxu0 0.0
    %222 = vmatpush1.msra.mxu0 0.0
    %223 = vmatprep.subr.mxu0 0.0
    %224 = vmatpush1.msra.mxu0 0.0
    %225 = vmatprep.mubr.f32.mxu0 0.0
    %226 = vmatmul.mubr.f32.gmra.mrb[0].mxu0 %v159
    %v227 = vpop.f32.mrb[0].mxu0
    %v228 = vadd.f32 %v140, %v227
    %v229 = vpop.f32.mrb[0].mxu0
    %v230 = vadd.f32 %v144, %v229
    %231 = vdwg.mxu0
    %232 = vmatprep.subr.mxu0 %v65
    %233 = vmatpush1.msra.mxu0 %v64
    %234 = vmatprep.subr.mxu0 %v69
    %235 = vmatpush1.msra.mxu0 %v68
    %236 = vmatprep.subr.mxu0 0.0
    %237 = vmatpush1.msra.mxu0 0.0
    %238 = vmatprep.subr.mxu0 0.0
    %239 = vmatpush1.msra.mxu0 0.0
    %240 = vmatprep.subr.mxu0 0.0
    %241 = vmatpush1.msra.mxu0 0.0
    %242 = vmatprep.subr.mxu0 0.0
    %243 = vmatpush1.msra.mxu0 0.0
    %244 = vmatprep.subr.mxu0 0.0
    %245 = vmatpush1.msra.mxu0 0.0
    %246 = vmatprep.subr.mxu0 0.0
    %247 = vmatpush1.msra.mxu0 0.0
    %248 = vmatprep.subr.mxu0 0.0
    %249 = vmatpush1.msra.mxu0 0.0
    %250 = vmatprep.subr.mxu0 0.0
    %251 = vmatpush1.msra.mxu0 0.0
    %252 = vmatprep.subr.mxu0 0.0
    %253 = vmatpush1.msra.mxu0 0.0
    %254 = vmatprep.subr.mxu0 0.0
    %255 = vmatpush1.msra.mxu0 0.0
    %256 = vmatprep.subr.mxu0 0.0
    %257 = vmatpush1.msra.mxu0 0.0
    %258 = vmatprep.subr.mxu0 0.0
    %259 = vmatpush1.msra.mxu0 0.0
    %260 = vmatprep.subr.mxu0 0.0
    %261 = vmatpush1.msra.mxu0 0.0
    %262 = vmatprep.subr.mxu0 0.0
    %263 = vmatpush1.msra.mxu0 0.0
    %264 = vmatprep.subr.mxu0 0.0
    %265 = vmatpush1.msra.mxu0 0.0
    %266 = vmatprep.subr.mxu0 0.0
    %267 = vmatpush1.msra.mxu0 0.0
    %268 = vmatprep.subr.mxu0 0.0
    %269 = vmatpush1.msra.mxu0 0.0
    %270 = vmatprep.subr.mxu0 0.0
    %271 = vmatpush1.msra.mxu0 0.0
    %272 = vmatprep.subr.mxu0 0.0
    %273 = vmatpush1.msra.mxu0 0.0
    %274 = vmatprep.subr.mxu0 0.0
    %275 = vmatpush1.msra.mxu0 0.0
    %276 = vmatprep.subr.mxu0 0.0
    %277 = vmatpush1.msra.mxu0 0.0
    %278 = vmatprep.subr.mxu0 0.0
    %279 = vmatpush1.msra.mxu0 0.0
    %280 = vmatprep.subr.mxu0 0.0
    %281 = vmatpush1.msra.mxu0 0.0
    %282 = vmatprep.subr.mxu0 0.0
    %283 = vmatpush1.msra.mxu0 0.0
    %284 = vmatprep.subr.mxu0 0.0
    %285 = vmatpush1.msra.mxu0 0.0
    %286 = vmatprep.subr.mxu0 0.0
    %287 = vmatpush1.msra.mxu0 0.0
    %288 = vmatprep.subr.mxu0 0.0
    %289 = vmatpush1.msra.mxu0 0.0
    %290 = vmatprep.subr.mxu0 0.0
    %291 = vmatpush1.msra.mxu0 0.0
    %292 = vmatprep.subr.mxu0 0.0
    %293 = vmatpush1.msra.mxu0 0.0
    %294 = vmatprep.subr.mxu0 0.0
    %295 = vmatpush1.msra.mxu0 0.0
    %296 = vmatprep.mubr.f32.mxu0 0.0
    %297 = vmatmul.mubr.f32.gmra.mrb[0].mxu0 %v159
    %v298 = vpop.f32.mrb[0].mxu0
    %v299 = vadd.f32 %v148, %v298
    %v300 = vpop.f32.mrb[0].mxu0
    %v301 = vadd.f32 %v152, %v300
    %302 = vdwg.mxu0
    %303 = vst [vmem:[#allocation2] sm:$0xff] %v228
    %304 = vst [vmem:[#allocation2 + $0x8] sm:$0xff] %v230
    %305 = vst [vmem:[#allocation2 + $0x10] sm:$0xff] %v299
    %306 = vst [vmem:[#allocation2 + $0x18] sm:$0xff] %v301
    %s307 = scalar_lea.vmem %s0, 8
    %v308 = vld [vmem:[%s307] sm:$0xff]
    %v310 = vsel %vm157, %v308, 0
    %312 = vmatprep.subr.mxu0 %v63
    %313 = vmatpush1.msra.mxu0 %v62
    %314 = vmatprep.subr.mxu0 %v67
    %315 = vmatpush1.msra.mxu0 %v66
    %316 = vmatprep.subr.mxu0 0.0
    %317 = vmatpush1.msra.mxu0 0.0
    %318 = vmatprep.subr.mxu0 0.0
    %319 = vmatpush1.msra.mxu0 0.0
    %320 = vmatprep.subr.mxu0 0.0
    %321 = vmatpush1.msra.mxu0 0.0
    %322 = vmatprep.subr.mxu0 0.0
    %323 = vmatpush1.msra.mxu0 0.0
    %324 = vmatprep.subr.mxu0 0.0
    %325 = vmatpush1.msra.mxu0 0.0
    %326 = vmatprep.subr.mxu0 0.0
    %327 = vmatpush1.msra.mxu0 0.0
    %328 = vmatprep.subr.mxu0 0.0
    %329 = vmatpush1.msra.mxu0 0.0
    %330 = vmatprep.subr.mxu0 0.0
    %331 = vmatpush1.msra.mxu0 0.0
    %332 = vmatprep.subr.mxu0 0.0
    %333 = vmatpush1.msra.mxu0 0.0
    %334 = vmatprep.subr.mxu0 0.0
    %335 = vmatpush1.msra.mxu0 0.0
    %336 = vmatprep.subr.mxu0 0.0
    %337 = vmatpush1.msra.mxu0 0.0
    %338 = vmatprep.subr.mxu0 0.0
    %339 = vmatpush1.msra.mxu0 0.0
    %340 = vmatprep.subr.mxu0 0.0
    %341 = vmatpush1.msra.mxu0 0.0
    %342 = vmatprep.subr.mxu0 0.0
    %343 = vmatpush1.msra.mxu0 0.0
    %344 = vmatprep.subr.mxu0 0.0
    %345 = vmatpush1.msra.mxu0 0.0
    %346 = vmatprep.subr.mxu0 0.0
    %347 = vmatpush1.msra.mxu0 0.0
    %348 = vmatprep.subr.mxu0 0.0
    %349 = vmatpush1.msra.mxu0 0.0
    %350 = vmatprep.subr.mxu0 0.0
    %351 = vmatpush1.msra.mxu0 0.0
    %352 = vmatprep.subr.mxu0 0.0
    %353 = vmatpush1.msra.mxu0 0.0
    %354 = vmatprep.subr.mxu0 0.0
    %355 = vmatpush1.msra.mxu0 0.0
    %356 = vmatprep.subr.mxu0 0.0
    %357 = vmatpush1.msra.mxu0 0.0
    %358 = vmatprep.subr.mxu0 0.0
    %359 = vmatpush1.msra.mxu0 0.0
    %360 = vmatprep.subr.mxu0 0.0
    %361 = vmatpush1.msra.mxu0 0.0
    %362 = vmatprep.subr.mxu0 0.0
    %363 = vmatpush1.msra.mxu0 0.0
    %364 = vmatprep.subr.mxu0 0.0
    %365 = vmatpush1.msra.mxu0 0.0
    %366 = vmatprep.subr.mxu0 0.0
    %367 = vmatpush1.msra.mxu0 0.0
    %368 = vmatprep.subr.mxu0 0.0
    %369 = vmatpush1.msra.mxu0 0.0
    %370 = vmatprep.subr.mxu0 0.0
    %371 = vmatpush1.msra.mxu0 0.0
    %372 = vmatprep.subr.mxu0 0.0
    %373 = vmatpush1.msra.mxu0 0.0
    %374 = vmatprep.subr.mxu0 0.0
    %375 = vmatpush1.msra.mxu0 0.0
    %376 = vmatprep.mubr.f32.mxu0 0.0
    %377 = vmatmul.mubr.f32.gmra.mrb[0].mxu0 %v310
    %v378 = vpop.f32.mrb[0].mxu0
    %v379 = vadd.f32 %v140, %v378
    %v380 = vpop.f32.mrb[0].mxu0
    %v381 = vadd.f32 %v144, %v380
    %382 = vdwg.mxu0
    %383 = vmatprep.subr.mxu0 %v65
    %384 = vmatpush1.msra.mxu0 %v64
    %385 = vmatprep.subr.mxu0 %v69
    %386 = vmatpush1.msra.mxu0 %v68
    %387 = vmatprep.subr.mxu0 0.0
    %388 = vmatpush1.msra.mxu0 0.0
    %389 = vmatprep.subr.mxu0 0.0
    %390 = vmatpush1.msra.mxu0 0.0
    %391 = vmatprep.subr.mxu0 0.0
    %392 = vmatpush1.msra.mxu0 0.0
    %393 = vmatprep.subr.mxu0 0.0
    %394 = vmatpush1.msra.mxu0 0.0
    %395 = vmatprep.subr.mxu0 0.0
    %396 = vmatpush1.msra.mxu0 0.0
    %397 = vmatprep.subr.mxu0 0.0
    %398 = vmatpush1.msra.mxu0 0.0
    %399 = vmatprep.subr.mxu0 0.0
    %400 = vmatpush1.msra.mxu0 0.0
    %401 = vmatprep.subr.mxu0 0.0
    %402 = vmatpush1.msra.mxu0 0.0
    %403 = vmatprep.subr.mxu0 0.0
    %404 = vmatpush1.msra.mxu0 0.0
    %405 = vmatprep.subr.mxu0 0.0
    %406 = vmatpush1.msra.mxu0 0.0
    %407 = vmatprep.subr.mxu0 0.0
    %408 = vmatpush1.msra.mxu0 0.0
    %409 = vmatprep.subr.mxu0 0.0
    %410 = vmatpush1.msra.mxu0 0.0
    %411 = vmatprep.subr.mxu0 0.0
    %412 = vmatpush1.msra.mxu0 0.0
    %413 = vmatprep.subr.mxu0 0.0
    %414 = vmatpush1.msra.mxu0 0.0
    %415 = vmatprep.subr.mxu0 0.0
    %416 = vmatpush1.msra.mxu0 0.0
    %417 = vmatprep.subr.mxu0 0.0
    %418 = vmatpush1.msra.mxu0 0.0
    %419 = vmatprep.subr.mxu0 0.0
    %420 = vmatpush1.msra.mxu0 0.0
    %421 = vmatprep.subr.mxu0 0.0
    %422 = vmatpush1.msra.mxu0 0.0
    %423 = vmatprep.subr.mxu0 0.0
    %424 = vmatpush1.msra.mxu0 0.0
    %425 = vmatprep.subr.mxu0 0.0
    %426 = vmatpush1.msra.mxu0 0.0
    %427 = vmatprep.subr.mxu0 0.0
    %428 = vmatpush1.msra.mxu0 0.0
    %429 = vmatprep.subr.mxu0 0.0
    %430 = vmatpush1.msra.mxu0 0.0
    %431 = vmatprep.subr.mxu0 0.0
    %432 = vmatpush1.msra.mxu0 0.0
    %433 = vmatprep.subr.mxu0 0.0
    %434 = vmatpush1.msra.mxu0 0.0
    %435 = vmatprep.subr.mxu0 0.0
    %436 = vmatpush1.msra.mxu0 0.0
    %437 = vmatprep.subr.mxu0 0.0
    %438 = vmatpush1.msra.mxu0 0.0
    %439 = vmatprep.subr.mxu0 0.0
    %440 = vmatpush1.msra.mxu0 0.0
    %441 = vmatprep.subr.mxu0 0.0
    %442 = vmatpush1.msra.mxu0 0.0
    %443 = vmatprep.subr.mxu0 0.0
    %444 = vmatpush1.msra.mxu0 0.0
    %445 = vmatprep.subr.mxu0 0.0
    %446 = vmatpush1.msra.mxu0 0.0
    %447 = vmatprep.mubr.f32.mxu0 0.0
    %448 = vmatmul.mubr.f32.gmra.mrb[0].mxu0 %v310
    %v449 = vpop.f32.mrb[0].mxu0
    %v450 = vadd.f32 %v148, %v449
    %v451 = vpop.f32.mrb[0].mxu0
    %v452 = vadd.f32 %v152, %v451
    %453 = vdwg.mxu0
    %s454 = scalar_lea.vmem [#allocation2], 32
    %455 = vst [vmem:[%s454] sm:$0xff] %v379
    %456 = vst [vmem:[%s454 + $0x8] sm:$0xff] %v381
    %457 = vst [vmem:[%s454 + $0x10] sm:$0xff] %v450
    %458 = vst [vmem:[%s454 + $0x18] sm:$0xff] %v452
    %s459 = scalar_lea.vmem %s0, 16
    %v460 = vld [vmem:[%s459] sm:$0xff]
    %v462 = vsel %vm157, %v460, 0
    %464 = vmatprep.subr.mxu0 %v63
    %465 = vmatpush1.msra.mxu0 %v62
    %466 = vmatprep.subr.mxu0 %v67
    %467 = vmatpush1.msra.mxu0 %v66
    %468 = vmatprep.subr.mxu0 0.0
    %469 = vmatpush1.msra.mxu0 0.0
    %470 = vmatprep.subr.mxu0 0.0
    %471 = vmatpush1.msra.mxu0 0.0
    %472 = vmatprep.subr.mxu0 0.0
    %473 = vmatpush1.msra.mxu0 0.0
    %474 = vmatprep.subr.mxu0 0.0
    %475 = vmatpush1.msra.mxu0 0.0
    %476 = vmatprep.subr.mxu0 0.0
    %477 = vmatpush1.msra.mxu0 0.0
    %478 = vmatprep.subr.mxu0 0.0
    %479 = vmatpush1.msra.mxu0 0.0
    %480 = vmatprep.subr.mxu0 0.0
    %481 = vmatpush1.msra.mxu0 0.0
    %482 = vmatprep.subr.mxu0 0.0
    %483 = vmatpush1.msra.mxu0 0.0
    %484 = vmatprep.subr.mxu0 0.0
    %485 = vmatpush1.msra.mxu0 0.0
    %486 = vmatprep.subr.mxu0 0.0
    %487 = vmatpush1.msra.mxu0 0.0
    %488 = vmatprep.subr.mxu0 0.0
    %489 = vmatpush1.msra.mxu0 0.0
    %490 = vmatprep.subr.mxu0 0.0
    %491 = vmatpush1.msra.mxu0 0.0
    %492 = vmatprep.subr.mxu0 0.0
    %493 = vmatpush1.msra.mxu0 0.0
    %494 = vmatprep.subr.mxu0 0.0
    %495 = vmatpush1.msra.mxu0 0.0
    %496 = vmatprep.subr.mxu0 0.0
    %497 = vmatpush1.msra.mxu0 0.0
    %498 = vmatprep.subr.mxu0 0.0
    %499 = vmatpush1.msra.mxu0 0.0
    %500 = vmatprep.subr.mxu0 0.0
    %501 = vmatpush1.msra.mxu0 0.0
    %502 = vmatprep.subr.mxu0 0.0
    %503 = vmatpush1.msra.mxu0 0.0
    %504 = vmatprep.subr.mxu0 0.0
    %505 = vmatpush1.msra.mxu0 0.0
    %506 = vmatprep.subr.mxu0 0.0
    %507 = vmatpush1.msra.mxu0 0.0
    %508 = vmatprep.subr.mxu0 0.0
    %509 = vmatpush1.msra.mxu0 0.0
    %510 = vmatprep.subr.mxu0 0.0
    %511 = vmatpush1.msra.mxu0 0.0
    %512 = vmatprep.subr.mxu0 0.0
    %513 = vmatpush1.msra.mxu0 0.0
    %514 = vmatprep.subr.mxu0 0.0
    %515 = vmatpush1.msra.mxu0 0.0
    %516 = vmatprep.subr.mxu0 0.0
    %517 = vmatpush1.msra.mxu0 0.0
    %518 = vmatprep.subr.mxu0 0.0
    %519 = vmatpush1.msra.mxu0 0.0
    %520 = vmatprep.subr.mxu0 0.0
    %521 = vmatpush1.msra.mxu0 0.0
    %522 = vmatprep.subr.mxu0 0.0
    %523 = vmatpush1.msra.mxu0 0.0
    %524 = vmatprep.subr.mxu0 0.0
    %525 = vmatpush1.msra.mxu0 0.0
    %526 = vmatprep.subr.mxu0 0.0
    %527 = vmatpush1.msra.mxu0 0.0
    %528 = vmatprep.mubr.f32.mxu0 0.0
    %529 = vmatmul.mubr.f32.gmra.mrb[0].mxu0 %v462
    %v530 = vpop.f32.mrb[0].mxu0
    %v531 = vadd.f32 %v140, %v530
    %v532 = vpop.f32.mrb[0].mxu0
    %v533 = vadd.f32 %v144, %v532
    %534 = vdwg.mxu0
    %535 = vmatprep.subr.mxu0 %v65
    %536 = vmatpush1.msra.mxu0 %v64
    %537 = vmatprep.subr.mxu0 %v69
    %538 = vmatpush1.msra.mxu0 %v68
    %539 = vmatprep.subr.mxu0 0.0
    %540 = vmatpush1.msra.mxu0 0.0
    %541 = vmatprep.subr.mxu0 0.0
    %542 = vmatpush1.msra.mxu0 0.0
    %543 = vmatprep.subr.mxu0 0.0
    %544 = vmatpush1.msra.mxu0 0.0
    %545 = vmatprep.subr.mxu0 0.0
    %546 = vmatpush1.msra.mxu0 0.0
    %547 = vmatprep.subr.mxu0 0.0
    %548 = vmatpush1.msra.mxu0 0.0
    %549 = vmatprep.subr.mxu0 0.0
    %550 = vmatpush1.msra.mxu0 0.0
    %551 = vmatprep.subr.mxu0 0.0
    %552 = vmatpush1.msra.mxu0 0.0
    %553 = vmatprep.subr.mxu0 0.0
    %554 = vmatpush1.msra.mxu0 0.0
    %555 = vmatprep.subr.mxu0 0.0
    %556 = vmatpush1.msra.mxu0 0.0
    %557 = vmatprep.subr.mxu0 0.0
    %558 = vmatpush1.msra.mxu0 0.0
    %559 = vmatprep.subr.mxu0 0.0
    %560 = vmatpush1.msra.mxu0 0.0
    %561 = vmatprep.subr.mxu0 0.0
    %562 = vmatpush1.msra.mxu0 0.0
    %563 = vmatprep.subr.mxu0 0.0
    %564 = vmatpush1.msra.mxu0 0.0
    %565 = vmatprep.subr.mxu0 0.0
    %566 = vmatpush1.msra.mxu0 0.0
    %567 = vmatprep.subr.mxu0 0.0
    %568 = vmatpush1.msra.mxu0 0.0
    %569 = vmatprep.subr.mxu0 0.0
    %570 = vmatpush1.msra.mxu0 0.0
    %571 = vmatprep.subr.mxu0 0.0
    %572 = vmatpush1.msra.mxu0 0.0
    %573 = vmatprep.subr.mxu0 0.0
    %574 = vmatpush1.msra.mxu0 0.0
    %575 = vmatprep.subr.mxu0 0.0
    %576 = vmatpush1.msra.mxu0 0.0
    %577 = vmatprep.subr.mxu0 0.0
    %578 = vmatpush1.msra.mxu0 0.0
    %579 = vmatprep.subr.mxu0 0.0
    %580 = vmatpush1.msra.mxu0 0.0
    %581 = vmatprep.subr.mxu0 0.0
    %582 = vmatpush1.msra.mxu0 0.0
    %583 = vmatprep.subr.mxu0 0.0
    %584 = vmatpush1.msra.mxu0 0.0
    %585 = vmatprep.subr.mxu0 0.0
    %586 = vmatpush1.msra.mxu0 0.0
    %587 = vmatprep.subr.mxu0 0.0
    %588 = vmatpush1.msra.mxu0 0.0
    %589 = vmatprep.subr.mxu0 0.0
    %590 = vmatpush1.msra.mxu0 0.0
    %591 = vmatprep.subr.mxu0 0.0
    %592 = vmatpush1.msra.mxu0 0.0
    %593 = vmatprep.subr.mxu0 0.0
    %594 = vmatpush1.msra.mxu0 0.0
    %595 = vmatprep.subr.mxu0 0.0
    %596 = vmatpush1.msra.mxu0 0.0
    %597 = vmatprep.subr.mxu0 0.0
    %598 = vmatpush1.msra.mxu0 0.0
    %599 = vmatprep.mubr.f32.mxu0 0.0
    %600 = vmatmul.mubr.f32.gmra.mrb[0].mxu0 %v462
    %v601 = vpop.f32.mrb[0].mxu0
    %v602 = vadd.f32 %v148, %v601
    %v603 = vpop.f32.mrb[0].mxu0
    %v604 = vadd.f32 %v152, %v603
    %605 = vdwg.mxu0
    %s606 = scalar_lea.vmem [#allocation2], 64
    %607 = vst [vmem:[%s606] sm:$0xff] %v531
    %608 = vst [vmem:[%s606 + $0x8] sm:$0xff] %v533
    %609 = vst [vmem:[%s606 + $0x10] sm:$0xff] %v602
    %610 = vst [vmem:[%s606 + $0x18] sm:$0xff] %v604
    %s611 = scalar_lea.vmem %s0, 24
    %v612 = vld [vmem:[%s611] sm:$0xff]
    %v614 = vsel %vm157, %v612, 0
    %616 = vmatprep.subr.mxu0 %v63
    %617 = vmatpush1.msra.mxu0 %v62
    %618 = vmatprep.subr.mxu0 %v67
    %619 = vmatpush1.msra.mxu0 %v66
    %620 = vmatprep.subr.mxu0 0.0
    %621 = vmatpush1.msra.mxu0 0.0
    %622 = vmatprep.subr.mxu0 0.0
    %623 = vmatpush1.msra.mxu0 0.0
    %624 = vmatprep.subr.mxu0 0.0
    %625 = vmatpush1.msra.mxu0 0.0
    %626 = vmatprep.subr.mxu0 0.0
    %627 = vmatpush1.msra.mxu0 0.0
    %628 = vmatprep.subr.mxu0 0.0
    %629 = vmatpush1.msra.mxu0 0.0
    %630 = vmatprep.subr.mxu0 0.0
    %631 = vmatpush1.msra.mxu0 0.0
    %632 = vmatprep.subr.mxu0 0.0
    %633 = vmatpush1.msra.mxu0 0.0
    %634 = vmatprep.subr.mxu0 0.0
    %635 = vmatpush1.msra.mxu0 0.0
    %636 = vmatprep.subr.mxu0 0.0
    %637 = vmatpush1.msra.mxu0 0.0
    %638 = vmatprep.subr.mxu0 0.0
    %639 = vmatpush1.msra.mxu0 0.0
    %640 = vmatprep.subr.mxu0 0.0
    %641 = vmatpush1.msra.mxu0 0.0
    %642 = vmatprep.subr.mxu0 0.0
    %643 = vmatpush1.msra.mxu0 0.0
    %644 = vmatprep.subr.mxu0 0.0
    %645 = vmatpush1.msra.mxu0 0.0
    %646 = vmatprep.subr.mxu0 0.0
    %647 = vmatpush1.msra.mxu0 0.0
    %648 = vmatprep.subr.mxu0 0.0
    %649 = vmatpush1.msra.mxu0 0.0
    %650 = vmatprep.subr.mxu0 0.0
    %651 = vmatpush1.msra.mxu0 0.0
    %652 = vmatprep.subr.mxu0 0.0
    %653 = vmatpush1.msra.mxu0 0.0
    %654 = vmatprep.subr.mxu0 0.0
    %655 = vmatpush1.msra.mxu0 0.0
    %656 = vmatprep.subr.mxu0 0.0
    %657 = vmatpush1.msra.mxu0 0.0
    %658 = vmatprep.subr.mxu0 0.0
    %659 = vmatpush1.msra.mxu0 0.0
    %660 = vmatprep.subr.mxu0 0.0
    %661 = vmatpush1.msra.mxu0 0.0
    %662 = vmatprep.subr.mxu0 0.0
    %663 = vmatpush1.msra.mxu0 0.0
    %664 = vmatprep.subr.mxu0 0.0
    %665 = vmatpush1.msra.mxu0 0.0
    %666 = vmatprep.subr.mxu0 0.0
    %667 = vmatpush1.msra.mxu0 0.0
    %668 = vmatprep.subr.mxu0 0.0
    %669 = vmatpush1.msra.mxu0 0.0
    %670 = vmatprep.subr.mxu0 0.0
    %671 = vmatpush1.msra.mxu0 0.0
    %672 = vmatprep.subr.mxu0 0.0
    %673 = vmatpush1.msra.mxu0 0.0
    %674 = vmatprep.subr.mxu0 0.0
    %675 = vmatpush1.msra.mxu0 0.0
    %676 = vmatprep.subr.mxu0 0.0
    %677 = vmatpush1.msra.mxu0 0.0
    %678 = vmatprep.subr.mxu0 0.0
    %679 = vmatpush1.msra.mxu0 0.0
    %680 = vmatprep.mubr.f32.mxu0 0.0
    %681 = vmatmul.mubr.f32.gmra.mrb[0].mxu0 %v614
    %v682 = vpop.f32.mrb[0].mxu0
    %v683 = vadd.f32 %v140, %v682
    %v684 = vpop.f32.mrb[0].mxu0
    %v685 = vadd.f32 %v144, %v684
    %686 = vdwg.mxu0
    %687 = vmatprep.subr.mxu0 %v65
    %688 = vmatpush1.msra.mxu0 %v64
    %689 = vmatprep.subr.mxu0 %v69
    %690 = vmatpush1.msra.mxu0 %v68
    %691 = vmatprep.subr.mxu0 0.0
    %692 = vmatpush1.msra.mxu0 0.0
    %693 = vmatprep.subr.mxu0 0.0
    %694 = vmatpush1.msra.mxu0 0.0
    %695 = vmatprep.subr.mxu0 0.0
    %696 = vmatpush1.msra.mxu0 0.0
    %697 = vmatprep.subr.mxu0 0.0
    %698 = vmatpush1.msra.mxu0 0.0
    %699 = vmatprep.subr.mxu0 0.0
    %700 = vmatpush1.msra.mxu0 0.0
    %701 = vmatprep.subr.mxu0 0.0
    %702 = vmatpush1.msra.mxu0 0.0
    %703 = vmatprep.subr.mxu0 0.0
    %704 = vmatpush1.msra.mxu0 0.0
    %705 = vmatprep.subr.mxu0 0.0
    %706 = vmatpush1.msra.mxu0 0.0
    %707 = vmatprep.subr.mxu0 0.0
    %708 = vmatpush1.msra.mxu0 0.0
    %709 = vmatprep.subr.mxu0 0.0
    %710 = vmatpush1.msra.mxu0 0.0
    %711 = vmatprep.subr.mxu0 0.0
    %712 = vmatpush1.msra.mxu0 0.0
    %713 = vmatprep.subr.mxu0 0.0
    %714 = vmatpush1.msra.mxu0 0.0
    %715 = vmatprep.subr.mxu0 0.0
    %716 = vmatpush1.msra.mxu0 0.0
    %717 = vmatprep.subr.mxu0 0.0
    %718 = vmatpush1.msra.mxu0 0.0
    %719 = vmatprep.subr.mxu0 0.0
    %720 = vmatpush1.msra.mxu0 0.0
    %721 = vmatprep.subr.mxu0 0.0
    %722 = vmatpush1.msra.mxu0 0.0
    %723 = vmatprep.subr.mxu0 0.0
    %724 = vmatpush1.msra.mxu0 0.0
    %725 = vmatprep.subr.mxu0 0.0
    %726 = vmatpush1.msra.mxu0 0.0
    %727 = vmatprep.subr.mxu0 0.0
    %728 = vmatpush1.msra.mxu0 0.0
    %729 = vmatprep.subr.mxu0 0.0
    %730 = vmatpush1.msra.mxu0 0.0
    %731 = vmatprep.subr.mxu0 0.0
    %732 = vmatpush1.msra.mxu0 0.0
    %733 = vmatprep.subr.mxu0 0.0
    %734 = vmatpush1.msra.mxu0 0.0
    %735 = vmatprep.subr.mxu0 0.0
    %736 = vmatpush1.msra.mxu0 0.0
    %737 = vmatprep.subr.mxu0 0.0
    %738 = vmatpush1.msra.mxu0 0.0
    %739 = vmatprep.subr.mxu0 0.0
    %740 = vmatpush1.msra.mxu0 0.0
    %741 = vmatprep.subr.mxu0 0.0
    %742 = vmatpush1.msra.mxu0 0.0
    %743 = vmatprep.subr.mxu0 0.0
    %744 = vmatpush1.msra.mxu0 0.0
    %745 = vmatprep.subr.mxu0 0.0
    %746 = vmatpush1.msra.mxu0 0.0
    %747 = vmatprep.subr.mxu0 0.0
    %748 = vmatpush1.msra.mxu0 0.0
    %749 = vmatprep.subr.mxu0 0.0
    %750 = vmatpush1.msra.mxu0 0.0
    %751 = vmatprep.mubr.f32.mxu0 0.0
    %752 = vmatmul.mubr.f32.gmra.mrb[0].mxu0 %v614
    %v753 = vpop.f32.mrb[0].mxu0
    %v754 = vadd.f32 %v148, %v753
    %v755 = vpop.f32.mrb[0].mxu0
    %v756 = vadd.f32 %v152, %v755
    %757 = vdwg.mxu0
    %s758 = scalar_lea.vmem [#allocation2], 96
    %759 = vst [vmem:[%s758] sm:$0xff] %v683
    %760 = vst [vmem:[%s758 + $0x8] sm:$0xff] %v685
    %761 = vst [vmem:[%s758 + $0x10] sm:$0xff] %v754
    %762 = vst [vmem:[%s758 + $0x18] sm:$0xff] %v756
    %s763 = scalar_lea.vmem %s0, 32
    %v764 = vld [vmem:[%s763] sm:$0xff]
    %v766 = vsel %vm157, %v764, 0
    %768 = vmatprep.subr.mxu0 %v63
    %769 = vmatpush1.msra.mxu0 %v62
    %770 = vmatprep.subr.mxu0 %v67
    %771 = vmatpush1.msra.mxu0 %v66
    %772 = vmatprep.subr.mxu0 0.0
    %773 = vmatpush1.msra.mxu0 0.0
    %774 = vmatprep.subr.mxu0 0.0
    %775 = vmatpush1.msra.mxu0 0.0
    %776 = vmatprep.subr.mxu0 0.0
    %777 = vmatpush1.msra.mxu0 0.0
    %778 = vmatprep.subr.mxu0 0.0
    %779 = vmatpush1.msra.mxu0 0.0
    %780 = vmatprep.subr.mxu0 0.0
    %781 = vmatpush1.msra.mxu0 0.0
    %782 = vmatprep.subr.mxu0 0.0
    %783 = vmatpush1.msra.mxu0 0.0
    %784 = vmatprep.subr.mxu0 0.0
    %785 = vmatpush1.msra.mxu0 0.0
    %786 = vmatprep.subr.mxu0 0.0
    %787 = vmatpush1.msra.mxu0 0.0
    %788 = vmatprep.subr.mxu0 0.0
    %789 = vmatpush1.msra.mxu0 0.0
    %790 = vmatprep.subr.mxu0 0.0
    %791 = vmatpush1.msra.mxu0 0.0
    %792 = vmatprep.subr.mxu0 0.0
    %793 = vmatpush1.msra.mxu0 0.0
    %794 = vmatprep.subr.mxu0 0.0
    %795 = vmatpush1.msra.mxu0 0.0
    %796 = vmatprep.subr.mxu0 0.0
    %797 = vmatpush1.msra.mxu0 0.0
    %798 = vmatprep.subr.mxu0 0.0
    %799 = vmatpush1.msra.mxu0 0.0
    %800 = vmatprep.subr.mxu0 0.0
    %801 = vmatpush1.msra.mxu0 0.0
    %802 = vmatprep.subr.mxu0 0.0
    %803 = vmatpush1.msra.mxu0 0.0
    %804 = vmatprep.subr.mxu0 0.0
    %805 = vmatpush1.msra.mxu0 0.0
    %806 = vmatprep.subr.mxu0 0.0
    %807 = vmatpush1.msra.mxu0 0.0
    %808 = vmatprep.subr.mxu0 0.0
    %809 = vmatpush1.msra.mxu0 0.0
    %810 = vmatprep.subr.mxu0 0.0
    %811 = vmatpush1.msra.mxu0 0.0
    %812 = vmatprep.subr.mxu0 0.0
    %813 = vmatpush1.msra.mxu0 0.0
    %814 = vmatprep.subr.mxu0 0.0
    %815 = vmatpush1.msra.mxu0 0.0
    %816 = vmatprep.subr.mxu0 0.0
    %817 = vmatpush1.msra.mxu0 0.0
    %818 = vmatprep.subr.mxu0 0.0
    %819 = vmatpush1.msra.mxu0 0.0
    %820 = vmatprep.subr.mxu0 0.0
    %821 = vmatpush1.msra.mxu0 0.0
    %822 = vmatprep.subr.mxu0 0.0
    %823 = vmatpush1.msra.mxu0 0.0
    %824 = vmatprep.subr.mxu0 0.0
    %825 = vmatpush1.msra.mxu0 0.0
    %826 = vmatprep.subr.mxu0 0.0
    %827 = vmatpush1.msra.mxu0 0.0
    %828 = vmatprep.subr.mxu0 0.0
    %829 = vmatpush1.msra.mxu0 0.0
    %830 = vmatprep.subr.mxu0 0.0
    %831 = vmatpush1.msra.mxu0 0.0
    %832 = vmatprep.mubr.f32.mxu0 0.0
    %833 = vmatmul.mubr.f32.gmra.mrb[0].mxu0 %v766
    %v834 = vpop.f32.mrb[0].mxu0
    %v835 = vadd.f32 %v140, %v834
    %v836 = vpop.f32.mrb[0].mxu0
    %v837 = vadd.f32 %v144, %v836
    %838 = vdwg.mxu0
    %839 = vmatprep.subr.mxu0 %v65
    %840 = vmatpush1.msra.mxu0 %v64
    %841 = vmatprep.subr.mxu0 %v69
    %842 = vmatpush1.msra.mxu0 %v68
    %843 = vmatprep.subr.mxu0 0.0
    %844 = vmatpush1.msra.mxu0 0.0
    %845 = vmatprep.subr.mxu0 0.0
    %846 = vmatpush1.msra.mxu0 0.0
    %847 = vmatprep.subr.mxu0 0.0
    %848 = vmatpush1.msra.mxu0 0.0
    %849 = vmatprep.subr.mxu0 0.0
    %850 = vmatpush1.msra.mxu0 0.0
    %851 = vmatprep.subr.mxu0 0.0
    %852 = vmatpush1.msra.mxu0 0.0
    %853 = vmatprep.subr.mxu0 0.0
    %854 = vmatpush1.msra.mxu0 0.0
    %855 = vmatprep.subr.mxu0 0.0
    %856 = vmatpush1.msra.mxu0 0.0
    %857 = vmatprep.subr.mxu0 0.0
    %858 = vmatpush1.msra.mxu0 0.0
    %859 = vmatprep.subr.mxu0 0.0
    %860 = vmatpush1.msra.mxu0 0.0
    %861 = vmatprep.subr.mxu0 0.0
    %862 = vmatpush1.msra.mxu0 0.0
    %863 = vmatprep.subr.mxu0 0.0
    %864 = vmatpush1.msra.mxu0 0.0
    %865 = vmatprep.subr.mxu0 0.0
    %866 = vmatpush1.msra.mxu0 0.0
    %867 = vmatprep.subr.mxu0 0.0
    %868 = vmatpush1.msra.mxu0 0.0
    %869 = vmatprep.subr.mxu0 0.0
    %870 = vmatpush1.msra.mxu0 0.0
    %871 = vmatprep.subr.mxu0 0.0
    %872 = vmatpush1.msra.mxu0 0.0
    %873 = vmatprep.subr.mxu0 0.0
    %874 = vmatpush1.msra.mxu0 0.0
    %875 = vmatprep.subr.mxu0 0.0
    %876 = vmatpush1.msra.mxu0 0.0
    %877 = vmatprep.subr.mxu0 0.0
    %878 = vmatpush1.msra.mxu0 0.0
    %879 = vmatprep.subr.mxu0 0.0
    %880 = vmatpush1.msra.mxu0 0.0
    %881 = vmatprep.subr.mxu0 0.0
    %882 = vmatpush1.msra.mxu0 0.0
    %883 = vmatprep.subr.mxu0 0.0
    %884 = vmatpush1.msra.mxu0 0.0
    %885 = vmatprep.subr.mxu0 0.0
    %886 = vmatpush1.msra.mxu0 0.0
    %887 = vmatprep.subr.mxu0 0.0
    %888 = vmatpush1.msra.mxu0 0.0
    %889 = vmatprep.subr.mxu0 0.0
    %890 = vmatpush1.msra.mxu0 0.0
    %891 = vmatprep.subr.mxu0 0.0
    %892 = vmatpush1.msra.mxu0 0.0
    %893 = vmatprep.subr.mxu0 0.0
    %894 = vmatpush1.msra.mxu0 0.0
    %895 = vmatprep.subr.mxu0 0.0
    %896 = vmatpush1.msra.mxu0 0.0
    %897 = vmatprep.subr.mxu0 0.0
    %898 = vmatpush1.msra.mxu0 0.0
    %899 = vmatprep.subr.mxu0 0.0
    %900 = vmatpush1.msra.mxu0 0.0
    %901 = vmatprep.subr.mxu0 0.0
    %902 = vmatpush1.msra.mxu0 0.0
    %903 = vmatprep.mubr.f32.mxu0 0.0
    %904 = vmatmul.mubr.f32.gmra.mrb[0].mxu0 %v766
    %v905 = vpop.f32.mrb[0].mxu0
    %v906 = vadd.f32 %v148, %v905
    %v907 = vpop.f32.mrb[0].mxu0
    %v908 = vadd.f32 %v152, %v907
    %909 = vdwg.mxu0
    %s910 = scalar_lea.vmem [#allocation2], 128
    %911 = vst [vmem:[%s910] sm:$0xff] %v835
    %912 = vst [vmem:[%s910 + $0x8] sm:$0xff] %v837
    %913 = vst [vmem:[%s910 + $0x10] sm:$0xff] %v906
    %914 = vst [vmem:[%s910 + $0x18] sm:$0xff] %v908
    %s915 = scalar_lea.vmem %s0, 40
    %v916 = vld [vmem:[%s915] sm:$0xff]
    %v918 = vsel %vm157, %v916, 0
    %920 = vmatprep.subr.mxu0 %v63
    %921 = vmatpush1.msra.mxu0 %v62
    %922 = vmatprep.subr.mxu0 %v67
    %923 = vmatpush1.msra.mxu0 %v66
    %924 = vmatprep.subr.mxu0 0.0
    %925 = vmatpush1.msra.mxu0 0.0
    %926 = vmatprep.subr.mxu0 0.0
    %927 = vmatpush1.msra.mxu0 0.0
    %928 = vmatprep.subr.mxu0 0.0
    %929 = vmatpush1.msra.mxu0 0.0
    %930 = vmatprep.subr.mxu0 0.0
    %931 = vmatpush1.msra.mxu0 0.0
    %932 = vmatprep.subr.mxu0 0.0
    %933 = vmatpush1.msra.mxu0 0.0
    %934 = vmatprep.subr.mxu0 0.0
    %935 = vmatpush1.msra.mxu0 0.0
    %936 = vmatprep.subr.mxu0 0.0
    %937 = vmatpush1.msra.mxu0 0.0
    %938 = vmatprep.subr.mxu0 0.0
    %939 = vmatpush1.msra.mxu0 0.0
    %940 = vmatprep.subr.mxu0 0.0
    %941 = vmatpush1.msra.mxu0 0.0
    %942 = vmatprep.subr.mxu0 0.0
    %943 = vmatpush1.msra.mxu0 0.0
    %944 = vmatprep.subr.mxu0 0.0
    %945 = vmatpush1.msra.mxu0 0.0
    %946 = vmatprep.subr.mxu0 0.0
    %947 = vmatpush1.msra.mxu0 0.0
    %948 = vmatprep.subr.mxu0 0.0
    %949 = vmatpush1.msra.mxu0 0.0
    %950 = vmatprep.subr.mxu0 0.0
    %951 = vmatpush1.msra.mxu0 0.0
    %952 = vmatprep.subr.mxu0 0.0
    %953 = vmatpush1.msra.mxu0 0.0
    %954 = vmatprep.subr.mxu0 0.0
    %955 = vmatpush1.msra.mxu0 0.0
    %956 = vmatprep.subr.mxu0 0.0
    %957 = vmatpush1.msra.mxu0 0.0
    %958 = vmatprep.subr.mxu0 0.0
    %959 = vmatpush1.msra.mxu0 0.0
    %960 = vmatprep.subr.mxu0 0.0
    %961 = vmatpush1.msra.mxu0 0.0
    %962 = vmatprep.subr.mxu0 0.0
    %963 = vmatpush1.msra.mxu0 0.0
    %964 = vmatprep.subr.mxu0 0.0
    %965 = vmatpush1.msra.mxu0 0.0
    %966 = vmatprep.subr.mxu0 0.0
    %967 = vmatpush1.msra.mxu0 0.0
    %968 = vmatprep.subr.mxu0 0.0
    %969 = vmatpush1.msra.mxu0 0.0
    %970 = vmatprep.subr.mxu0 0.0
    %971 = vmatpush1.msra.mxu0 0.0
    %972 = vmatprep.subr.mxu0 0.0
    %973 = vmatpush1.msra.mxu0 0.0
    %974 = vmatprep.subr.mxu0 0.0
    %975 = vmatpush1.msra.mxu0 0.0
    %976 = vmatprep.subr.mxu0 0.0
    %977 = vmatpush1.msra.mxu0 0.0
    %978 = vmatprep.subr.mxu0 0.0
    %979 = vmatpush1.msra.mxu0 0.0
    %980 = vmatprep.subr.mxu0 0.0
    %981 = vmatpush1.msra.mxu0 0.0
    %982 = vmatprep.subr.mxu0 0.0
    %983 = vmatpush1.msra.mxu0 0.0
    %984 = vmatprep.mubr.f32.mxu0 0.0
    %985 = vmatmul.mubr.f32.gmra.mrb[0].mxu0 %v918
    %v986 = vpop.f32.mrb[0].mxu0
    %v987 = vadd.f32 %v140, %v986
    %v988 = vpop.f32.mrb[0].mxu0
    %v989 = vadd.f32 %v144, %v988
    %990 = vdwg.mxu0
    %991 = vmatprep.subr.mxu0 %v65
    %992 = vmatpush1.msra.mxu0 %v64
    %993 = vmatprep.subr.mxu0 %v69
    %994 = vmatpush1.msra.mxu0 %v68
    %995 = vmatprep.subr.mxu0 0.0
    %996 = vmatpush1.msra.mxu0 0.0
    %997 = vmatprep.subr.mxu0 0.0
    %998 = vmatpush1.msra.mxu0 0.0
    %999 = vmatprep.subr.mxu0 0.0
    %1000 = vmatpush1.msra.mxu0 0.0
    %1001 = vmatprep.subr.mxu0 0.0
    %1002 = vmatpush1.msra.mxu0 0.0
    %1003 = vmatprep.subr.mxu0 0.0
    %1004 = vmatpush1.msra.mxu0 0.0
    %1005 = vmatprep.subr.mxu0 0.0
    %1006 = vmatpush1.msra.mxu0 0.0
    %1007 = vmatprep.subr.mxu0 0.0
    %1008 = vmatpush1.msra.mxu0 0.0
    %1009 = vmatprep.subr.mxu0 0.0
    %1010 = vmatpush1.msra.mxu0 0.0
    %1011 = vmatprep.subr.mxu0 0.0
    %1012 = vmatpush1.msra.mxu0 0.0
    %1013 = vmatprep.subr.mxu0 0.0
    %1014 = vmatpush1.msra.mxu0 0.0
    %1015 = vmatprep.subr.mxu0 0.0
    %1016 = vmatpush1.msra.mxu0 0.0
    %1017 = vmatprep.subr.mxu0 0.0
    %1018 = vmatpush1.msra.mxu0 0.0
    %1019 = vmatprep.subr.mxu0 0.0
    %1020 = vmatpush1.msra.mxu0 0.0
    %1021 = vmatprep.subr.mxu0 0.0
    %1022 = vmatpush1.msra.mxu0 0.0
    %1023 = vmatprep.subr.mxu0 0.0
    %1024 = vmatpush1.msra.mxu0 0.0
    %1025 = vmatprep.subr.mxu0 0.0
    %1026 = vmatpush1.msra.mxu0 0.0
    %1027 = vmatprep.subr.mxu0 0.0
    %1028 = vmatpush1.msra.mxu0 0.0
    %1029 = vmatprep.subr.mxu0 0.0
    %1030 = vmatpush1.msra.mxu0 0.0
    %1031 = vmatprep.subr.mxu0 0.0
    %1032 = vmatpush1.msra.mxu0 0.0
    %1033 = vmatprep.subr.mxu0 0.0
    %1034 = vmatpush1.msra.mxu0 0.0
    %1035 = vmatprep.subr.mxu0 0.0
    %1036 = vmatpush1.msra.mxu0 0.0
    %1037 = vmatprep.subr.mxu0 0.0
    %1038 = vmatpush1.msra.mxu0 0.0
    %1039 = vmatprep.subr.mxu0 0.0
    %1040 = vmatpush1.msra.mxu0 0.0
    %1041 = vmatprep.subr.mxu0 0.0
    %1042 = vmatpush1.msra.mxu0 0.0
    %1043 = vmatprep.subr.mxu0 0.0
    %1044 = vmatpush1.msra.mxu0 0.0
    %1045 = vmatprep.subr.mxu0 0.0
    %1046 = vmatpush1.msra.mxu0 0.0
    %1047 = vmatprep.subr.mxu0 0.0
    %1048 = vmatpush1.msra.mxu0 0.0
    %1049 = vmatprep.subr.mxu0 0.0
    %1050 = vmatpush1.msra.mxu0 0.0
    %1051 = vmatprep.subr.mxu0 0.0
    %1052 = vmatpush1.msra.mxu0 0.0
    %1053 = vmatprep.subr.mxu0 0.0
    %1054 = vmatpush1.msra.mxu0 0.0
    %1055 = vmatprep.mubr.f32.mxu0 0.0
    %1056 = vmatmul.mubr.f32.gmra.mrb[0].mxu0 %v918
    %v1057 = vpop.f32.mrb[0].mxu0
    %v1058 = vadd.f32 %v148, %v1057
    %v1059 = vpop.f32.mrb[0].mxu0
    %v1060 = vadd.f32 %v152, %v1059
    %1061 = vdwg.mxu0
    %s1062 = scalar_lea.vmem [#allocation2], 160
    %1063 = vst [vmem:[%s1062] sm:$0xff] %v987
    %1064 = vst [vmem:[%s1062 + $0x8] sm:$0xff] %v989
    %1065 = vst [vmem:[%s1062 + $0x10] sm:$0xff] %v1058
    %1066 = vst [vmem:[%s1062 + $0x18] sm:$0xff] %v1060
    %s1067 = scalar_lea.vmem %s0, 48
    %v1068 = vld [vmem:[%s1067] sm:$0xff]
    %v1070 = vsel %vm157, %v1068, 0
    %1072 = vmatprep.subr.mxu0 %v63
    %1073 = vmatpush1.msra.mxu0 %v62
    %1074 = vmatprep.subr.mxu0 %v67
    %1075 = vmatpush1.msra.mxu0 %v66
    %1076 = vmatprep.subr.mxu0 0.0
    %1077 = vmatpush1.msra.mxu0 0.0
    %1078 = vmatprep.subr.mxu0 0.0
    %1079 = vmatpush1.msra.mxu0 0.0
    %1080 = vmatprep.subr.mxu0 0.0
    %1081 = vmatpush1.msra.mxu0 0.0
    %1082 = vmatprep.subr.mxu0 0.0
    %1083 = vmatpush1.msra.mxu0 0.0
    %1084 = vmatprep.subr.mxu0 0.0
    %1085 = vmatpush1.msra.mxu0 0.0
    %1086 = vmatprep.subr.mxu0 0.0
    %1087 = vmatpush1.msra.mxu0 0.0
    %1088 = vmatprep.subr.mxu0 0.0
    %1089 = vmatpush1.msra.mxu0 0.0
    %1090 = vmatprep.subr.mxu0 0.0
    %1091 = vmatpush1.msra.mxu0 0.0
    %1092 = vmatprep.subr.mxu0 0.0
    %1093 = vmatpush1.msra.mxu0 0.0
    %1094 = vmatprep.subr.mxu0 0.0
    %1095 = vmatpush1.msra.mxu0 0.0
    %1096 = vmatprep.subr.mxu0 0.0
    %1097 = vmatpush1.msra.mxu0 0.0
    %1098 = vmatprep.subr.mxu0 0.0
    %1099 = vmatpush1.msra.mxu0 0.0
    %1100 = vmatprep.subr.mxu0 0.0
    %1101 = vmatpush1.msra.mxu0 0.0
    %1102 = vmatprep.subr.mxu0 0.0
    %1103 = vmatpush1.msra.mxu0 0.0
    %1104 = vmatprep.subr.mxu0 0.0
    %1105 = vmatpush1.msra.mxu0 0.0
    %1106 = vmatprep.subr.mxu0 0.0
    %1107 = vmatpush1.msra.mxu0 0.0
    %1108 = vmatprep.subr.mxu0 0.0
    %1109 = vmatpush1.msra.mxu0 0.0
    %1110 = vmatprep.subr.mxu0 0.0
    %1111 = vmatpush1.msra.mxu0 0.0
    %1112 = vmatprep.subr.mxu0 0.0
    %1113 = vmatpush1.msra.mxu0 0.0
    %1114 = vmatprep.subr.mxu0 0.0
    %1115 = vmatpush1.msra.mxu0 0.0
    %1116 = vmatprep.subr.mxu0 0.0
    %1117 = vmatpush1.msra.mxu0 0.0
    %1118 = vmatprep.subr.mxu0 0.0
    %1119 = vmatpush1.msra.mxu0 0.0
    %1120 = vmatprep.subr.mxu0 0.0
    %1121 = vmatpush1.msra.mxu0 0.0
    %1122 = vmatprep.subr.mxu0 0.0
    %1123 = vmatpush1.msra.mxu0 0.0
    %1124 = vmatprep.subr.mxu0 0.0
    %1125 = vmatpush1.msra.mxu0 0.0
    %1126 = vmatprep.subr.mxu0 0.0
    %1127 = vmatpush1.msra.mxu0 0.0
    %1128 = vmatprep.subr.mxu0 0.0
    %1129 = vmatpush1.msra.mxu0 0.0
    %1130 = vmatprep.subr.mxu0 0.0
    %1131 = vmatpush1.msra.mxu0 0.0
    %1132 = vmatprep.subr.mxu0 0.0
    %1133 = vmatpush1.msra.mxu0 0.0
    %1134 = vmatprep.subr.mxu0 0.0
    %1135 = vmatpush1.msra.mxu0 0.0
    %1136 = vmatprep.mubr.f32.mxu0 0.0
    %1137 = vmatmul.mubr.f32.gmra.mrb[0].mxu0 %v1070
    %v1138 = vpop.f32.mrb[0].mxu0
    %v1139 = vadd.f32 %v140, %v1138
    %v1140 = vpop.f32.mrb[0].mxu0
    %v1141 = vadd.f32 %v144, %v1140
    %1142 = vdwg.mxu0
    %1143 = vmatprep.subr.mxu0 %v65
    %1144 = vmatpush1.msra.mxu0 %v64
    %1145 = vmatprep.subr.mxu0 %v69
    %1146 = vmatpush1.msra.mxu0 %v68
    %1147 = vmatprep.subr.mxu0 0.0
    %1148 = vmatpush1.msra.mxu0 0.0
    %1149 = vmatprep.subr.mxu0 0.0
    %1150 = vmatpush1.msra.mxu0 0.0
    %1151 = vmatprep.subr.mxu0 0.0
    %1152 = vmatpush1.msra.mxu0 0.0
    %1153 = vmatprep.subr.mxu0 0.0
    %1154 = vmatpush1.msra.mxu0 0.0
    %1155 = vmatprep.subr.mxu0 0.0
    %1156 = vmatpush1.msra.mxu0 0.0
    %1157 = vmatprep.subr.mxu0 0.0
    %1158 = vmatpush1.msra.mxu0 0.0
    %1159 = vmatprep.subr.mxu0 0.0
    %1160 = vmatpush1.msra.mxu0 0.0
    %1161 = vmatprep.subr.mxu0 0.0
    %1162 = vmatpush1.msra.mxu0 0.0
    %1163 = vmatprep.subr.mxu0 0.0
    %1164 = vmatpush1.msra.mxu0 0.0
    %1165 = vmatprep.subr.mxu0 0.0
    %1166 = vmatpush1.msra.mxu0 0.0
    %1167 = vmatprep.subr.mxu0 0.0
    %1168 = vmatpush1.msra.mxu0 0.0
    %1169 = vmatprep.subr.mxu0 0.0
    %1170 = vmatpush1.msra.mxu0 0.0
    %1171 = vmatprep.subr.mxu0 0.0
    %1172 = vmatpush1.msra.mxu0 0.0
    %1173 = vmatprep.subr.mxu0 0.0
    %1174 = vmatpush1.msra.mxu0 0.0
    %1175 = vmatprep.subr.mxu0 0.0
    %1176 = vmatpush1.msra.mxu0 0.0
    %1177 = vmatprep.subr.mxu0 0.0
    %1178 = vmatpush1.msra.mxu0 0.0
    %1179 = vmatprep.subr.mxu0 0.0
    %1180 = vmatpush1.msra.mxu0 0.0
    %1181 = vmatprep.subr.mxu0 0.0
    %1182 = vmatpush1.msra.mxu0 0.0
    %1183 = vmatprep.subr.mxu0 0.0
    %1184 = vmatpush1.msra.mxu0 0.0
    %1185 = vmatprep.subr.mxu0 0.0
    %1186 = vmatpush1.msra.mxu0 0.0
    %1187 = vmatprep.subr.mxu0 0.0
    %1188 = vmatpush1.msra.mxu0 0.0
    %1189 = vmatprep.subr.mxu0 0.0
    %1190 = vmatpush1.msra.mxu0 0.0
    %1191 = vmatprep.subr.mxu0 0.0
    %1192 = vmatpush1.msra.mxu0 0.0
    %1193 = vmatprep.subr.mxu0 0.0
    %1194 = vmatpush1.msra.mxu0 0.0
    %1195 = vmatprep.subr.mxu0 0.0
    %1196 = vmatpush1.msra.mxu0 0.0
    %1197 = vmatprep.subr.mxu0 0.0
    %1198 = vmatpush1.msra.mxu0 0.0
    %1199 = vmatprep.subr.mxu0 0.0
    %1200 = vmatpush1.msra.mxu0 0.0
    %1201 = vmatprep.subr.mxu0 0.0
    %1202 = vmatpush1.msra.mxu0 0.0
    %1203 = vmatprep.subr.mxu0 0.0
    %1204 = vmatpush1.msra.mxu0 0.0
    %1205 = vmatprep.subr.mxu0 0.0
    %1206 = vmatpush1.msra.mxu0 0.0
    %1207 = vmatprep.mubr.f32.mxu0 0.0
    %1208 = vmatmul.mubr.f32.gmra.mrb[0].mxu0 %v1070
    %v1209 = vpop.f32.mrb[0].mxu0
    %v1210 = vadd.f32 %v148, %v1209
    %v1211 = vpop.f32.mrb[0].mxu0
    %v1212 = vadd.f32 %v152, %v1211
    %1213 = vdwg.mxu0
    %s1214 = scalar_lea.vmem [#allocation2], 192
    %1215 = vst [vmem:[%s1214] sm:$0xff] %v1139
    %1216 = vst [vmem:[%s1214 + $0x8] sm:$0xff] %v1141
    %1217 = vst [vmem:[%s1214 + $0x10] sm:$0xff] %v1210
    %1218 = vst [vmem:[%s1214 + $0x18] sm:$0xff] %v1212
    %s1219 = scalar_lea.vmem %s0, 56
    %v1220 = vld [vmem:[%s1219] sm:$0xff]
    %v1222 = vsel %vm157, %v1220, 0
    %1224 = vmatprep.subr.mxu0 %v63
    %1225 = vmatpush1.msra.mxu0 %v62
    %1226 = vmatprep.subr.mxu0 %v67
    %1227 = vmatpush1.msra.mxu0 %v66
    %1228 = vmatprep.subr.mxu0 0.0
    %1229 = vmatpush1.msra.mxu0 0.0
    %1230 = vmatprep.subr.mxu0 0.0
    %1231 = vmatpush1.msra.mxu0 0.0
    %1232 = vmatprep.subr.mxu0 0.0
    %1233 = vmatpush1.msra.mxu0 0.0
    %1234 = vmatprep.subr.mxu0 0.0
    %1235 = vmatpush1.msra.mxu0 0.0
    %1236 = vmatprep.subr.mxu0 0.0
    %1237 = vmatpush1.msra.mxu0 0.0
    %1238 = vmatprep.subr.mxu0 0.0
    %1239 = vmatpush1.msra.mxu0 0.0
    %1240 = vmatprep.subr.mxu0 0.0
    %1241 = vmatpush1.msra.mxu0 0.0
    %1242 = vmatprep.subr.mxu0 0.0
    %1243 = vmatpush1.msra.mxu0 0.0
    %1244 = vmatprep.subr.mxu0 0.0
    %1245 = vmatpush1.msra.mxu0 0.0
    %1246 = vmatprep.subr.mxu0 0.0
    %1247 = vmatpush1.msra.mxu0 0.0
    %1248 = vmatprep.subr.mxu0 0.0
    %1249 = vmatpush1.msra.mxu0 0.0
    %1250 = vmatprep.subr.mxu0 0.0
    %1251 = vmatpush1.msra.mxu0 0.0
    %1252 = vmatprep.subr.mxu0 0.0
    %1253 = vmatpush1.msra.mxu0 0.0
    %1254 = vmatprep.subr.mxu0 0.0
    %1255 = vmatpush1.msra.mxu0 0.0
    %1256 = vmatprep.subr.mxu0 0.0
    %1257 = vmatpush1.msra.mxu0 0.0
    %1258 = vmatprep.subr.mxu0 0.0
    %1259 = vmatpush1.msra.mxu0 0.0
    %1260 = vmatprep.subr.mxu0 0.0
    %1261 = vmatpush1.msra.mxu0 0.0
    %1262 = vmatprep.subr.mxu0 0.0
    %1263 = vmatpush1.msra.mxu0 0.0
    %1264 = vmatprep.subr.mxu0 0.0
    %1265 = vmatpush1.msra.mxu0 0.0
    %1266 = vmatprep.subr.mxu0 0.0
    %1267 = vmatpush1.msra.mxu0 0.0
    %1268 = vmatprep.subr.mxu0 0.0
    %1269 = vmatpush1.msra.mxu0 0.0
    %1270 = vmatprep.subr.mxu0 0.0
    %1271 = vmatpush1.msra.mxu0 0.0
    %1272 = vmatprep.subr.mxu0 0.0
    %1273 = vmatpush1.msra.mxu0 0.0
    %1274 = vmatprep.subr.mxu0 0.0
    %1275 = vmatpush1.msra.mxu0 0.0
    %1276 = vmatprep.subr.mxu0 0.0
    %1277 = vmatpush1.msra.mxu0 0.0
    %1278 = vmatprep.subr.mxu0 0.0
    %1279 = vmatpush1.msra.mxu0 0.0
    %1280 = vmatprep.subr.mxu0 0.0
    %1281 = vmatpush1.msra.mxu0 0.0
    %1282 = vmatprep.subr.mxu0 0.0
    %1283 = vmatpush1.msra.mxu0 0.0
    %1284 = vmatprep.subr.mxu0 0.0
    %1285 = vmatpush1.msra.mxu0 0.0
    %1286 = vmatprep.subr.mxu0 0.0
    %1287 = vmatpush1.msra.mxu0 0.0
    %1288 = vmatprep.mubr.f32.mxu0 0.0
    %1289 = vmatmul.mubr.f32.gmra.mrb[0].mxu0 %v1222
    %v1290 = vpop.f32.mrb[0].mxu0
    %v1291 = vadd.f32 %v140, %v1290
    %v1292 = vpop.f32.mrb[0].mxu0
    %v1293 = vadd.f32 %v144, %v1292
    %1294 = vdwg.mxu0
    %1295 = vmatprep.subr.mxu0 %v65
    %1296 = vmatpush1.msra.mxu0 %v64
    %1297 = vmatprep.subr.mxu0 %v69
    %1298 = vmatpush1.msra.mxu0 %v68
    %1299 = vmatprep.subr.mxu0 0.0
    %1300 = vmatpush1.msra.mxu0 0.0
    %1301 = vmatprep.subr.mxu0 0.0
    %1302 = vmatpush1.msra.mxu0 0.0
    %1303 = vmatprep.subr.mxu0 0.0
    %1304 = vmatpush1.msra.mxu0 0.0
    %1305 = vmatprep.subr.mxu0 0.0
    %1306 = vmatpush1.msra.mxu0 0.0
    %1307 = vmatprep.subr.mxu0 0.0
    %1308 = vmatpush1.msra.mxu0 0.0
    %1309 = vmatprep.subr.mxu0 0.0
    %1310 = vmatpush1.msra.mxu0 0.0
    %1311 = vmatprep.subr.mxu0 0.0
    %1312 = vmatpush1.msra.mxu0 0.0
    %1313 = vmatprep.subr.mxu0 0.0
    %1314 = vmatpush1.msra.mxu0 0.0
    %1315 = vmatprep.subr.mxu0 0.0
    %1316 = vmatpush1.msra.mxu0 0.0
    %1317 = vmatprep.subr.mxu0 0.0
    %1318 = vmatpush1.msra.mxu0 0.0
    %1319 = vmatprep.subr.mxu0 0.0
    %1320 = vmatpush1.msra.mxu0 0.0
    %1321 = vmatprep.subr.mxu0 0.0
    %1322 = vmatpush1.msra.mxu0 0.0
    %1323 = vmatprep.subr.mxu0 0.0
    %1324 = vmatpush1.msra.mxu0 0.0
    %1325 = vmatprep.subr.mxu0 0.0
    %1326 = vmatpush1.msra.mxu0 0.0
    %1327 = vmatprep.subr.mxu0 0.0
    %1328 = vmatpush1.msra.mxu0 0.0
    %1329 = vmatprep.subr.mxu0 0.0
    %1330 = vmatpush1.msra.mxu0 0.0
    %1331 = vmatprep.subr.mxu0 0.0
    %1332 = vmatpush1.msra.mxu0 0.0
    %1333 = vmatprep.subr.mxu0 0.0
    %1334 = vmatpush1.msra.mxu0 0.0
    %1335 = vmatprep.subr.mxu0 0.0
    %1336 = vmatpush1.msra.mxu0 0.0
    %1337 = vmatprep.subr.mxu0 0.0
    %1338 = vmatpush1.msra.mxu0 0.0
    %1339 = vmatprep.subr.mxu0 0.0
    %1340 = vmatpush1.msra.mxu0 0.0
    %1341 = vmatprep.subr.mxu0 0.0
    %1342 = vmatpush1.msra.mxu0 0.0
    %1343 = vmatprep.subr.mxu0 0.0
    %1344 = vmatpush1.msra.mxu0 0.0
    %1345 = vmatprep.subr.mxu0 0.0
    %1346 = vmatpush1.msra.mxu0 0.0
    %1347 = vmatprep.subr.mxu0 0.0
    %1348 = vmatpush1.msra.mxu0 0.0
    %1349 = vmatprep.subr.mxu0 0.0
    %1350 = vmatpush1.msra.mxu0 0.0
    %1351 = vmatprep.subr.mxu0 0.0
    %1352 = vmatpush1.msra.mxu0 0.0
    %1353 = vmatprep.subr.mxu0 0.0
    %1354 = vmatpush1.msra.mxu0 0.0
    %1355 = vmatprep.subr.mxu0 0.0
    %1356 = vmatpush1.msra.mxu0 0.0
    %1357 = vmatprep.subr.mxu0 0.0
    %1358 = vmatpush1.msra.mxu0 0.0
    %1359 = vmatprep.mubr.f32.mxu0 0.0
    %1360 = vmatmul.mubr.f32.gmra.mrb[0].mxu0 %v1222
    %v1361 = vpop.f32.mrb[0].mxu0
    %v1362 = vadd.f32 %v148, %v1361
    %v1363 = vpop.f32.mrb[0].mxu0
    %v1364 = vadd.f32 %v152, %v1363
    %1365 = vdwg.mxu0
    %s1366 = scalar_lea.vmem [#allocation2], 224
    %1367 = vst [vmem:[%s1366] sm:$0xff] %v1291
    %1368 = vst [vmem:[%s1366 + $0x8] sm:$0xff] %v1293
    %1369 = vst [vmem:[%s1366 + $0x10] sm:$0xff] %v1362
    %1370 = vst [vmem:[%s1366 + $0x18] sm:$0xff] %v1364
    %v1371 = vld [vmem:[#allocation2] sm:$0xff]
    %v1372 = vld [vmem:[#allocation2 + $0x8] sm:$0xff]
    %v1373 = vld [vmem:[#allocation2 + $0x10] sm:$0xff]
    %v1374 = vld [vmem:[#allocation2 + $0x18] sm:$0xff]
    %v1375 = vld [vmem:[#allocation3] sm:$0xff]
    %1376 = vmatprep.subr.mxu0 %v71
    %1377 = vmatpush1.msra.mxu0 %v70
    %1378 = vmatprep.subr.mxu0 %v75
    %1379 = vmatpush1.msra.mxu0 %v74
    %1380 = vmatprep.subr.mxu0 %v79
    %1381 = vmatpush1.msra.mxu0 %v78
    %1382 = vmatprep.subr.mxu0 %v83
    %1383 = vmatpush1.msra.mxu0 %v82
    %1384 = vmatprep.subr.mxu0 %v87
    %1385 = vmatpush1.msra.mxu0 %v86
    %1386 = vmatprep.subr.mxu0 %v91
    %1387 = vmatpush1.msra.mxu0 %v90
    %1388 = vmatprep.subr.mxu0 %v95
    %1389 = vmatpush1.msra.mxu0 %v94
    %1390 = vmatprep.subr.mxu0 %v99
    %1391 = vmatpush1.msra.mxu0 %v98
    %1392 = vmatprep.subr.mxu0 %v103
    %1393 = vmatpush1.msra.mxu0 %v102
    %1394 = vmatprep.subr.mxu0 %v107
    %1395 = vmatpush1.msra.mxu0 %v106
    %1396 = vmatprep.subr.mxu0 %v111
    %1397 = vmatpush1.msra.mxu0 %v110
    %1398 = vmatprep.subr.mxu0 %v115
    %1399 = vmatpush1.msra.mxu0 %v114
    %1400 = vmatprep.subr.mxu0 %v119
    %1401 = vmatpush1.msra.mxu0 %v118
    %1402 = vmatprep.subr.mxu0 %v123
    %1403 = vmatpush1.msra.mxu0 %v122
    %1404 = vmatprep.subr.mxu0 %v127
    %1405 = vmatpush1.msra.mxu0 %v126
    %1406 = vmatprep.subr.mxu0 %v131
    %1407 = vmatpush1.msra.mxu0 %v130
    %1408 = vmatprep.subr.mxu0 0.0
    %1409 = vmatpush1.msra.mxu0 0.0
    %1410 = vmatprep.subr.mxu0 0.0
    %1411 = vmatpush1.msra.mxu0 0.0
    %1412 = vmatprep.subr.mxu0 0.0
    %1413 = vmatpush1.msra.mxu0 0.0
    %1414 = vmatprep.subr.mxu0 0.0
    %1415 = vmatpush1.msra.mxu0 0.0
    %1416 = vmatprep.subr.mxu0 0.0
    %1417 = vmatpush1.msra.mxu0 0.0
    %1418 = vmatprep.subr.mxu0 0.0
    %1419 = vmatpush1.msra.mxu0 0.0
    %1420 = vmatprep.subr.mxu0 0.0
    %1421 = vmatpush1.msra.mxu0 0.0
    %1422 = vmatprep.subr.mxu0 0.0
    %1423 = vmatpush1.msra.mxu0 0.0
    %1424 = vmatprep.subr.mxu0 0.0
    %1425 = vmatpush1.msra.mxu0 0.0
    %1426 = vmatprep.subr.mxu0 0.0
    %1427 = vmatpush1.msra.mxu0 0.0
    %1428 = vmatprep.subr.mxu0 0.0
    %1429 = vmatpush1.msra.mxu0 0.0
    %1430 = vmatprep.subr.mxu0 0.0
    %1431 = vmatpush1.msra.mxu0 0.0
    %1432 = vmatprep.subr.mxu0 0.0
    %1433 = vmatpush1.msra.mxu0 0.0
    %1434 = vmatprep.subr.mxu0 0.0
    %1435 = vmatpush1.msra.mxu0 0.0
    %1436 = vmatprep.subr.mxu0 0.0
    %1437 = vmatpush1.msra.mxu0 0.0
    %1438 = vmatprep.subr.mxu0 0.0
    %1439 = vmatpush1.msra.mxu0 0.0
    %1440 = vmatprep.mubr.f32.mxu0 0.0
    %1441 = vmatmul.mubr.f32.gmra.mrb[0].mxu0 %v1375
    %v1442 = vpop.f32.mrb[0].mxu0
    %v1443 = vadd.f32 0.0, %v1442
    %v1444 = vpop.f32.mrb[0].mxu0
    %v1445 = vadd.f32 0.0, %v1444
    %1446 = vdwg.mxu0
    %1447 = vmatprep.subr.mxu0 %v73
    %1448 = vmatpush1.msra.mxu0 %v72
    %1449 = vmatprep.subr.mxu0 %v77
    %1450 = vmatpush1.msra.mxu0 %v76
    %1451 = vmatprep.subr.mxu0 %v81
    %1452 = vmatpush1.msra.mxu0 %v80
    %1453 = vmatprep.subr.mxu0 %v85
    %1454 = vmatpush1.msra.mxu0 %v84
    %1455 = vmatprep.subr.mxu0 %v89
    %1456 = vmatpush1.msra.mxu0 %v88
    %1457 = vmatprep.subr.mxu0 %v93
    %1458 = vmatpush1.msra.mxu0 %v92
    %1459 = vmatprep.subr.mxu0 %v97
    %1460 = vmatpush1.msra.mxu0 %v96
    %1461 = vmatprep.subr.mxu0 %v101
    %1462 = vmatpush1.msra.mxu0 %v100
    %1463 = vmatprep.subr.mxu0 %v105
    %1464 = vmatpush1.msra.mxu0 %v104
    %1465 = vmatprep.subr.mxu0 %v109
    %1466 = vmatpush1.msra.mxu0 %v108
    %1467 = vmatprep.subr.mxu0 %v113
    %1468 = vmatpush1.msra.mxu0 %v112
    %1469 = vmatprep.subr.mxu0 %v117
    %1470 = vmatpush1.msra.mxu0 %v116
    %1471 = vmatprep.subr.mxu0 %v121
    %1472 = vmatpush1.msra.mxu0 %v120
    %1473 = vmatprep.subr.mxu0 %v125
    %1474 = vmatpush1.msra.mxu0 %v124
    %1475 = vmatprep.subr.mxu0 %v129
    %1476 = vmatpush1.msra.mxu0 %v128
    %1477 = vmatprep.subr.mxu0 %v133
    %1478 = vmatpush1.msra.mxu0 %v132
    %1479 = vmatprep.subr.mxu0 0.0
    %1480 = vmatpush1.msra.mxu0 0.0
    %1481 = vmatprep.subr.mxu0 0.0
    %1482 = vmatpush1.msra.mxu0 0.0
    %1483 = vmatprep.subr.mxu0 0.0
    %1484 = vmatpush1.msra.mxu0 0.0
    %1485 = vmatprep.subr.mxu0 0.0
    %1486 = vmatpush1.msra.mxu0 0.0
    %1487 = vmatprep.subr.mxu0 0.0
    %1488 = vmatpush1.msra.mxu0 0.0
    %1489 = vmatprep.subr.mxu0 0.0
    %1490 = vmatpush1.msra.mxu0 0.0
    %1491 = vmatprep.subr.mxu0 0.0
    %1492 = vmatpush1.msra.mxu0 0.0
    %1493 = vmatprep.subr.mxu0 0.0
    %1494 = vmatpush1.msra.mxu0 0.0
    %1495 = vmatprep.subr.mxu0 0.0
    %1496 = vmatpush1.msra.mxu0 0.0
    %1497 = vmatprep.subr.mxu0 0.0
    %1498 = vmatpush1.msra.mxu0 0.0
    %1499 = vmatprep.subr.mxu0 0.0
    %1500 = vmatpush1.msra.mxu0 0.0
    %1501 = vmatprep.subr.mxu0 0.0
    %1502 = vmatpush1.msra.mxu0 0.0
    %1503 = vmatprep.subr.mxu0 0.0
    %1504 = vmatpush1.msra.mxu0 0.0
    %1505 = vmatprep.subr.mxu0 0.0
    %1506 = vmatpush1.msra.mxu0 0.0
    %1507 = vmatprep.subr.mxu0 0.0
    %1508 = vmatpush1.msra.mxu0 0.0
    %1509 = vmatprep.subr.mxu0 0.0
    %1510 = vmatpush1.msra.mxu0 0.0
    %1511 = vmatprep.mubr.f32.mxu0 0.0
    %1512 = vmatmul.mubr.f32.gmra.mrb[0].mxu0 %v1375
    %v1513 = vpop.f32.mrb[0].mxu0
    %v1514 = vadd.f32 0.0, %v1513
    %v1515 = vpop.f32.mrb[0].mxu0
    %v1516 = vadd.f32 0.0, %v1515
    %1517 = vdwg.mxu0
    %v1518 = vadd.f32 %v1371, %v1443
    %v1519 = vadd.f32 %v1372, %v1445
    %v1520 = vadd.f32 %v1373, %v1514
    %v1521 = vadd.f32 %v1374, %v1516
    %v1522 = vld [vmem:[#allocation4] sm:$0xff]
    %v1523 = vmul.f32 %v1518, 0.5
    %v1524 = vtanh.pop %v1523
    %v1525 = vmul.f32 %v1524, 0.5
    %v1526 = vadd.f32 %v1525, 0.5
    %v1527 = vmul.f32 %v1519, 0.5
    %v1528 = vtanh.pop %v1527
    %v1529 = vmul.f32 %v1528, 0.5
    %v1530 = vadd.f32 %v1529, 0.5
    %v1531 = vtanh.pop %v1520
    %v1532 = vmul.f32 %v1521, 0.5
    %v1533 = vtanh.pop %v1532
    %v1534 = vmul.f32 %v1533, 0.5
    %v1535 = vadd.f32 %v1534, 0.5
    %v1536 = vmul.f32 %v1530, %v1522
    %v1537 = vmul.f32 %v1526, %v1531
    %v1538 = vadd.f32 %v1536, %v1537
    %v1539 = vtanh.pop %v1538
    %v1540 = vmul.f32 %v1535, %v1539
    %1541 = vst [vmem:[#allocation3] sm:$0xff] %v1540
    %1542 = vst [vmem:[#allocation4] sm:$0xff] %v1538
    %1543 = vst [vmem:[%s4] sm:$0xff] %v1540
    %v1544 = vld [vmem:[%s454] sm:$0xff]
    %v1545 = vld [vmem:[%s454 + $0x8] sm:$0xff]
    %v1546 = vld [vmem:[%s454 + $0x10] sm:$0xff]
    %v1547 = vld [vmem:[%s454 + $0x18] sm:$0xff]
    %v1548 = vld [vmem:[#allocation3] sm:$0xff]
    %1549 = vmatprep.subr.mxu0 %v71
    %1550 = vmatpush1.msra.mxu0 %v70
    %1551 = vmatprep.subr.mxu0 %v75
    %1552 = vmatpush1.msra.mxu0 %v74
    %1553 = vmatprep.subr.mxu0 %v79
    %1554 = vmatpush1.msra.mxu0 %v78
    %1555 = vmatprep.subr.mxu0 %v83
    %1556 = vmatpush1.msra.mxu0 %v82
    %1557 = vmatprep.subr.mxu0 %v87
    %1558 = vmatpush1.msra.mxu0 %v86
    %1559 = vmatprep.subr.mxu0 %v91
    %1560 = vmatpush1.msra.mxu0 %v90
    %1561 = vmatprep.subr.mxu0 %v95
    %1562 = vmatpush1.msra.mxu0 %v94
    %1563 = vmatprep.subr.mxu0 %v99
    %1564 = vmatpush1.msra.mxu0 %v98
    %1565 = vmatprep.subr.mxu0 %v103
    %1566 = vmatpush1.msra.mxu0 %v102
    %1567 = vmatprep.subr.mxu0 %v107
    %1568 = vmatpush1.msra.mxu0 %v106
    %1569 = vmatprep.subr.mxu0 %v111
    %1570 = vmatpush1.msra.mxu0 %v110
    %1571 = vmatprep.subr.mxu0 %v115
    %1572 = vmatpush1.msra.mxu0 %v114
    %1573 = vmatprep.subr.mxu0 %v119
    %1574 = vmatpush1.msra.mxu0 %v118
    %1575 = vmatprep.subr.mxu0 %v123
    %1576 = vmatpush1.msra.mxu0 %v122
    %1577 = vmatprep.subr.mxu0 %v127
    %1578 = vmatpush1.msra.mxu0 %v126
    %1579 = vmatprep.subr.mxu0 %v131
    %1580 = vmatpush1.msra.mxu0 %v130
    %1581 = vmatprep.subr.mxu0 0.0
    %1582 = vmatpush1.msra.mxu0 0.0
    %1583 = vmatprep.subr.mxu0 0.0
    %1584 = vmatpush1.msra.mxu0 0.0
    %1585 = vmatprep.subr.mxu0 0.0
    %1586 = vmatpush1.msra.mxu0 0.0
    %1587 = vmatprep.subr.mxu0 0.0
    %1588 = vmatpush1.msra.mxu0 0.0
    %1589 = vmatprep.subr.mxu0 0.0
    %1590 = vmatpush1.msra.mxu0 0.0
    %1591 = vmatprep.subr.mxu0 0.0
    %1592 = vmatpush1.msra.mxu0 0.0
    %1593 = vmatprep.subr.mxu0 0.0
    %1594 = vmatpush1.msra.mxu0 0.0
    %1595 = vmatprep.subr.mxu0 0.0
    %1596 = vmatpush1.msra.mxu0 0.0
    %1597 = vmatprep.subr.mxu0 0.0
    %1598 = vmatpush1.msra.mxu0 0.0
    %1599 = vmatprep.subr.mxu0 0.0
    %1600 = vmatpush1.msra.mxu0 0.0
    %1601 = vmatprep.subr.mxu0 0.0
    %1602 = vmatpush1.msra.mxu0 0.0
    %1603 = vmatprep.subr.mxu0 0.0
    %1604 = vmatpush1.msra.mxu0 0.0
    %1605 = vmatprep.subr.mxu0 0.0
    %1606 = vmatpush1.msra.mxu0 0.0
    %1607 = vmatprep.subr.mxu0 0.0
    %1608 = vmatpush1.msra.mxu0 0.0
    %1609 = vmatprep.subr.mxu0 0.0
    %1610 = vmatpush1.msra.mxu0 0.0
    %1611 = vmatprep.subr.mxu0 0.0
    %1612 = vmatpush1.msra.mxu0 0.0
    %1613 = vmatprep.mubr.f32.mxu0 0.0
    %1614 = vmatmul.mubr.f32.gmra.mrb[0].mxu0 %v1548
    %v1615 = vpop.f32.mrb[0].mxu0
    %v1616 = vadd.f32 0.0, %v1615
    %v1617 = vpop.f32.mrb[0].mxu0
    %v1618 = vadd.f32 0.0, %v1617
    %1619 = vdwg.mxu0
    %1620 = vmatprep.subr.mxu0 %v73
    %1621 = vmatpush1.msra.mxu0 %v72
    %1622 = vmatprep.subr.mxu0 %v77
    %1623 = vmatpush1.msra.mxu0 %v76
    %1624 = vmatprep.subr.mxu0 %v81
    %1625 = vmatpush1.msra.mxu0 %v80
    %1626 = vmatprep.subr.mxu0 %v85
    %1627 = vmatpush1.msra.mxu0 %v84
    %1628 = vmatprep.subr.mxu0 %v89
    %1629 = vmatpush1.msra.mxu0 %v88
    %1630 = vmatprep.subr.mxu0 %v93
    %1631 = vmatpush1.msra.mxu0 %v92
    %1632 = vmatprep.subr.mxu0 %v97
    %1633 = vmatpush1.msra.mxu0 %v96
    %1634 = vmatprep.subr.mxu0 %v101
    %1635 = vmatpush1.msra.mxu0 %v100
    %1636 = vmatprep.subr.mxu0 %v105
    %1637 = vmatpush1.msra.mxu0 %v104
    %1638 = vmatprep.subr.mxu0 %v109
    %1639 = vmatpush1.msra.mxu0 %v108
    %1640 = vmatprep.subr.mxu0 %v113
    %1641 = vmatpush1.msra.mxu0 %v112
    %1642 = vmatprep.subr.mxu0 %v117
    %1643 = vmatpush1.msra.mxu0 %v116
    %1644 = vmatprep.subr.mxu0 %v121
    %1645 = vmatpush1.msra.mxu0 %v120
    %1646 = vmatprep.subr.mxu0 %v125
    %1647 = vmatpush1.msra.mxu0 %v124
    %1648 = vmatprep.subr.mxu0 %v129
    %1649 = vmatpush1.msra.mxu0 %v128
    %1650 = vmatprep.subr.mxu0 %v133
    %1651 = vmatpush1.msra.mxu0 %v132
    %1652 = vmatprep.subr.mxu0 0.0
    %1653 = vmatpush1.msra.mxu0 0.0
    %1654 = vmatprep.subr.mxu0 0.0
    %1655 = vmatpush1.msra.mxu0 0.0
    %1656 = vmatprep.subr.mxu0 0.0
    %1657 = vmatpush1.msra.mxu0 0.0
    %1658 = vmatprep.subr.mxu0 0.0
    %1659 = vmatpush1.msra.mxu0 0.0
    %1660 = vmatprep.subr.mxu0 0.0
    %1661 = vmatpush1.msra.mxu0 0.0
    %1662 = vmatprep.subr.mxu0 0.0
    %1663 = vmatpush1.msra.mxu0 0.0
    %1664 = vmatprep.subr.mxu0 0.0
    %1665 = vmatpush1.msra.mxu0 0.0
    %1666 = vmatprep.subr.mxu0 0.0
    %1667 = vmatpush1.msra.mxu0 0.0
    %1668 = vmatprep.subr.mxu0 0.0
    %1669 = vmatpush1.msra.mxu0 0.0
    %1670 = vmatprep.subr.mxu0 0.0
    %1671 = vmatpush1.msra.mxu0 0.0
    %1672 = vmatprep.subr.mxu0 0.0
    %1673 = vmatpush1.msra.mxu0 0.0
    %1674 = vmatprep.subr.mxu0 0.0
    %1675 = vmatpush1.msra.mxu0 0.0
    %1676 = vmatprep.subr.mxu0 0.0
    %1677 = vmatpush1.msra.mxu0 0.0
    %1678 = vmatprep.subr.mxu0 0.0
    %1679 = vmatpush1.msra.mxu0 0.0
    %1680 = vmatprep.subr.mxu0 0.0
    %1681 = vmatpush1.msra.mxu0 0.0
    %1682 = vmatprep.subr.mxu0 0.0
    %1683 = vmatpush1.msra.mxu0 0.0
    %1684 = vmatprep.mubr.f32.mxu0 0.0
    %1685 = vmatmul.mubr.f32.gmra.mrb[0].mxu0 %v1548
    %v1686 = vpop.f32.mrb[0].mxu0
    %v1687 = vadd.f32 0.0, %v1686
    %v1688 = vpop.f32.mrb[0].mxu0
    %v1689 = vadd.f32 0.0, %v1688
    %1690 = vdwg.mxu0
    %v1691 = vadd.f32 %v1544, %v1616
    %v1692 = vadd.f32 %v1545, %v1618
    %v1693 = vadd.f32 %v1546, %v1687
    %v1694 = vadd.f32 %v1547, %v1689
    %v1695 = vld [vmem:[#allocation4] sm:$0xff]
    %v1696 = vmul.f32 %v1691, 0.5
    %v1697 = vtanh.pop %v1696
    %v1698 = vmul.f32 %v1697, 0.5
    %v1699 = vadd.f32 %v1698, 0.5
    %v1700 = vmul.f32 %v1692, 0.5
    %v1701 = vtanh.pop %v1700
    %v1702 = vmul.f32 %v1701, 0.5
    %v1703 = vadd.f32 %v1702, 0.5
    %v1704 = vtanh.pop %v1693
    %v1705 = vmul.f32 %v1694, 0.5
    %v1706 = vtanh.pop %v1705
    %v1707 = vmul.f32 %v1706, 0.5
    %v1708 = vadd.f32 %v1707, 0.5
    %v1709 = vmul.f32 %v1703, %v1695
    %v1710 = vmul.f32 %v1699, %v1704
    %v1711 = vadd.f32 %v1709, %v1710
    %v1712 = vtanh.pop %v1711
    %v1713 = vmul.f32 %v1708, %v1712
    %1714 = vst [vmem:[#allocation3] sm:$0xff] %v1713
    %1715 = vst [vmem:[#allocation4] sm:$0xff] %v1711
    %s1716 = scalar_lea.vmem %s4, 8
    %1717 = vst [vmem:[%s1716] sm:$0xff] %v1713
    %v1718 = vld [vmem:[%s606] sm:$0xff]
    %v1719 = vld [vmem:[%s606 + $0x8] sm:$0xff]
    %v1720 = vld [vmem:[%s606 + $0x10] sm:$0xff]
    %v1721 = vld [vmem:[%s606 + $0x18] sm:$0xff]
    %v1722 = vld [vmem:[#allocation3] sm:$0xff]
    %1723 = vmatprep.subr.mxu0 %v71
    %1724 = vmatpush1.msra.mxu0 %v70
    %1725 = vmatprep.subr.mxu0 %v75
    %1726 = vmatpush1.msra.mxu0 %v74
    %1727 = vmatprep.subr.mxu0 %v79
    %1728 = vmatpush1.msra.mxu0 %v78
    %1729 = vmatprep.subr.mxu0 %v83
    %1730 = vmatpush1.msra.mxu0 %v82
    %1731 = vmatprep.subr.mxu0 %v87
    %1732 = vmatpush1.msra.mxu0 %v86
    %1733 = vmatprep.subr.mxu0 %v91
    %1734 = vmatpush1.msra.mxu0 %v90
    %1735 = vmatprep.subr.mxu0 %v95
    %1736 = vmatpush1.msra.mxu0 %v94
    %1737 = vmatprep.subr.mxu0 %v99
    %1738 = vmatpush1.msra.mxu0 %v98
    %1739 = vmatprep.subr.mxu0 %v103
    %1740 = vmatpush1.msra.mxu0 %v102
    %1741 = vmatprep.subr.mxu0 %v107
    %1742 = vmatpush1.msra.mxu0 %v106
    %1743 = vmatprep.subr.mxu0 %v111
    %1744 = vmatpush1.msra.mxu0 %v110
    %1745 = vmatprep.subr.mxu0 %v115
    %1746 = vmatpush1.msra.mxu0 %v114
    %1747 = vmatprep.subr.mxu0 %v119
    %1748 = vmatpush1.msra.mxu0 %v118
    %1749 = vmatprep.subr.mxu0 %v123
    %1750 = vmatpush1.msra.mxu0 %v122
    %1751 = vmatprep.subr.mxu0 %v127
    %1752 = vmatpush1.msra.mxu0 %v126
    %1753 = vmatprep.subr.mxu0 %v131
    %1754 = vmatpush1.msra.mxu0 %v130
    %1755 = vmatprep.subr.mxu0 0.0
    %1756 = vmatpush1.msra.mxu0 0.0
    %1757 = vmatprep.subr.mxu0 0.0
    %1758 = vmatpush1.msra.mxu0 0.0
    %1759 = vmatprep.subr.mxu0 0.0
    %1760 = vmatpush1.msra.mxu0 0.0
    %1761 = vmatprep.subr.mxu0 0.0
    %1762 = vmatpush1.msra.mxu0 0.0
    %1763 = vmatprep.subr.mxu0 0.0
    %1764 = vmatpush1.msra.mxu0 0.0
    %1765 = vmatprep.subr.mxu0 0.0
    %1766 = vmatpush1.msra.mxu0 0.0
    %1767 = vmatprep.subr.mxu0 0.0
    %1768 = vmatpush1.msra.mxu0 0.0
    %1769 = vmatprep.subr.mxu0 0.0
    %1770 = vmatpush1.msra.mxu0 0.0
    %1771 = vmatprep.subr.mxu0 0.0
    %1772 = vmatpush1.msra.mxu0 0.0
    %1773 = vmatprep.subr.mxu0 0.0
    %1774 = vmatpush1.msra.mxu0 0.0
    %1775 = vmatprep.subr.mxu0 0.0
    %1776 = vmatpush1.msra.mxu0 0.0
    %1777 = vmatprep.subr.mxu0 0.0
    %1778 = vmatpush1.msra.mxu0 0.0
    %1779 = vmatprep.subr.mxu0 0.0
    %1780 = vmatpush1.msra.mxu0 0.0
    %1781 = vmatprep.subr.mxu0 0.0
    %1782 = vmatpush1.msra.mxu0 0.0
    %1783 = vmatprep.subr.mxu0 0.0
    %1784 = vmatpush1.msra.mxu0 0.0
    %1785 = vmatprep.subr.mxu0 0.0
    %1786 = vmatpush1.msra.mxu0 0.0
    %1787 = vmatprep.mubr.f32.mxu0 0.0
    %1788 = vmatmul.mubr.f32.gmra.mrb[0].mxu0 %v1722
    %v1789 = vpop.f32.mrb[0].mxu0
    %v1790 = vadd.f32 0.0, %v1789
    %v1791 = vpop.f32.mrb[0].mxu0
    %v1792 = vadd.f32 0.0, %v1791
    %1793 = vdwg.mxu0
    %1794 = vmatprep.subr.mxu0 %v73
    %1795 = vmatpush1.msra.mxu0 %v72
    %1796 = vmatprep.subr.mxu0 %v77
    %1797 = vmatpush1.msra.mxu0 %v76
    %1798 = vmatprep.subr.mxu0 %v81
    %1799 = vmatpush1.msra.mxu0 %v80
    %1800 = vmatprep.subr.mxu0 %v85
    %1801 = vmatpush1.msra.mxu0 %v84
    %1802 = vmatprep.subr.mxu0 %v89
    %1803 = vmatpush1.msra.mxu0 %v88
    %1804 = vmatprep.subr.mxu0 %v93
    %1805 = vmatpush1.msra.mxu0 %v92
    %1806 = vmatprep.subr.mxu0 %v97
    %1807 = vmatpush1.msra.mxu0 %v96
    %1808 = vmatprep.subr.mxu0 %v101
    %1809 = vmatpush1.msra.mxu0 %v100
    %1810 = vmatprep.subr.mxu0 %v105
    %1811 = vmatpush1.msra.mxu0 %v104
    %1812 = vmatprep.subr.mxu0 %v109
    %1813 = vmatpush1.msra.mxu0 %v108
    %1814 = vmatprep.subr.mxu0 %v113
    %1815 = vmatpush1.msra.mxu0 %v112
    %1816 = vmatprep.subr.mxu0 %v117
    %1817 = vmatpush1.msra.mxu0 %v116
    %1818 = vmatprep.subr.mxu0 %v121
    %1819 = vmatpush1.msra.mxu0 %v120
    %1820 = vmatprep.subr.mxu0 %v125
    %1821 = vmatpush1.msra.mxu0 %v124
    %1822 = vmatprep.subr.mxu0 %v129
    %1823 = vmatpush1.msra.mxu0 %v128
    %1824 = vmatprep.subr.mxu0 %v133
    %1825 = vmatpush1.msra.mxu0 %v132
    %1826 = vmatprep.subr.mxu0 0.0
    %1827 = vmatpush1.msra.mxu0 0.0
    %1828 = vmatprep.subr.mxu0 0.0
    %1829 = vmatpush1.msra.mxu0 0.0
    %1830 = vmatprep.subr.mxu0 0.0
    %1831 = vmatpush1.msra.mxu0 0.0
    %1832 = vmatprep.subr.mxu0 0.0
    %1833 = vmatpush1.msra.mxu0 0.0
    %1834 = vmatprep.subr.mxu0 0.0
    %1835 = vmatpush1.msra.mxu0 0.0
    %1836 = vmatprep.subr.mxu0 0.0
    %1837 = vmatpush1.msra.mxu0 0.0
    %1838 = vmatprep.subr.mxu0 0.0
    %1839 = vmatpush1.msra.mxu0 0.0
    %1840 = vmatprep.subr.mxu0 0.0
    %1841 = vmatpush1.msra.mxu0 0.0
    %1842 = vmatprep.subr.mxu0 0.0
    %1843 = vmatpush1.msra.mxu0 0.0
    %1844 = vmatprep.subr.mxu0 0.0
    %1845 = vmatpush1.msra.mxu0 0.0
    %1846 = vmatprep.subr.mxu0 0.0
    %1847 = vmatpush1.msra.mxu0 0.0
    %1848 = vmatprep.subr.mxu0 0.0
    %1849 = vmatpush1.msra.mxu0 0.0
    %1850 = vmatprep.subr.mxu0 0.0
    %1851 = vmatpush1.msra.mxu0 0.0
    %1852 = vmatprep.subr.mxu0 0.0
    %1853 = vmatpush1.msra.mxu0 0.0
    %1854 = vmatprep.subr.mxu0 0.0
    %1855 = vmatpush1.msra.mxu0 0.0
    %1856 = vmatprep.subr.mxu0 0.0
    %1857 = vmatpush1.msra.mxu0 0.0
    %1858 = vmatprep.mubr.f32.mxu0 0.0
    %1859 = vmatmul.mubr.f32.gmra.mrb[0].mxu0 %v1722
    %v1860 = vpop.f32.mrb[0].mxu0
    %v1861 = vadd.f32 0.0, %v1860
    %v1862 = vpop.f32.mrb[0].mxu0
    %v1863 = vadd.f32 0.0, %v1862
    %1864 = vdwg.mxu0
    %v1865 = vadd.f32 %v1718, %v1790
    %v1866 = vadd.f32 %v1719, %v1792
    %v1867 = vadd.f32 %v1720, %v1861
    %v1868 = vadd.f32 %v1721, %v1863
    %v1869 = vld [vmem:[#allocation4] sm:$0xff]
    %v1870 = vmul.f32 %v1865, 0.5
    %v1871 = vtanh.pop %v1870
    %v1872 = vmul.f32 %v1871, 0.5
    %v1873 = vadd.f32 %v1872, 0.5
    %v1874 = vmul.f32 %v1866, 0.5
    %v1875 = vtanh.pop %v1874
    %v1876 = vmul.f32 %v1875, 0.5
    %v1877 = vadd.f32 %v1876, 0.5
    %v1878 = vtanh.pop %v1867
    %v1879 = vmul.f32 %v1868, 0.5
    %v1880 = vtanh.pop %v1879
    %v1881 = vmul.f32 %v1880, 0.5
    %v1882 = vadd.f32 %v1881, 0.5
    %v1883 = vmul.f32 %v1877, %v1869
    %v1884 = vmul.f32 %v1873, %v1878
    %v1885 = vadd.f32 %v1883, %v1884
    %v1886 = vtanh.pop %v1885
    %v1887 = vmul.f32 %v1882, %v1886
    %1888 = vst [vmem:[#allocation3] sm:$0xff] %v1887
    %1889 = vst [vmem:[#allocation4] sm:$0xff] %v1885
    %s1890 = scalar_lea.vmem %s4, 16
    %1891 = vst [vmem:[%s1890] sm:$0xff] %v1887
    %v1892 = vld [vmem:[%s758] sm:$0xff]
    %v1893 = vld [vmem:[%s758 + $0x8] sm:$0xff]
    %v1894 = vld [vmem:[%s758 + $0x10] sm:$0xff]
    %v1895 = vld [vmem:[%s758 + $0x18] sm:$0xff]
    %v1896 = vld [vmem:[#allocation3] sm:$0xff]
    %1897 = vmatprep.subr.mxu0 %v71
    %1898 = vmatpush1.msra.mxu0 %v70
    %1899 = vmatprep.subr.mxu0 %v75
    %1900 = vmatpush1.msra.mxu0 %v74
    %1901 = vmatprep.subr.mxu0 %v79
    %1902 = vmatpush1.msra.mxu0 %v78
    %1903 = vmatprep.subr.mxu0 %v83
    %1904 = vmatpush1.msra.mxu0 %v82
    %1905 = vmatprep.subr.mxu0 %v87
    %1906 = vmatpush1.msra.mxu0 %v86
    %1907 = vmatprep.subr.mxu0 %v91
    %1908 = vmatpush1.msra.mxu0 %v90
    %1909 = vmatprep.subr.mxu0 %v95
    %1910 = vmatpush1.msra.mxu0 %v94
    %1911 = vmatprep.subr.mxu0 %v99
    %1912 = vmatpush1.msra.mxu0 %v98
    %1913 = vmatprep.subr.mxu0 %v103
    %1914 = vmatpush1.msra.mxu0 %v102
    %1915 = vmatprep.subr.mxu0 %v107
    %1916 = vmatpush1.msra.mxu0 %v106
    %1917 = vmatprep.subr.mxu0 %v111
    %1918 = vmatpush1.msra.mxu0 %v110
    %1919 = vmatprep.subr.mxu0 %v115
    %1920 = vmatpush1.msra.mxu0 %v114
    %1921 = vmatprep.subr.mxu0 %v119
    %1922 = vmatpush1.msra.mxu0 %v118
    %1923 = vmatprep.subr.mxu0 %v123
    %1924 = vmatpush1.msra.mxu0 %v122
    %1925 = vmatprep.subr.mxu0 %v127
    %1926 = vmatpush1.msra.mxu0 %v126
    %1927 = vmatprep.subr.mxu0 %v131
    %1928 = vmatpush1.msra.mxu0 %v130
    %1929 = vmatprep.subr.mxu0 0.0
    %1930 = vmatpush1.msra.mxu0 0.0
    %1931 = vmatprep.subr.mxu0 0.0
    %1932 = vmatpush1.msra.mxu0 0.0
    %1933 = vmatprep.subr.mxu0 0.0
    %1934 = vmatpush1.msra.mxu0 0.0
    %1935 = vmatprep.subr.mxu0 0.0
    %1936 = vmatpush1.msra.mxu0 0.0
    %1937 = vmatprep.subr.mxu0 0.0
    %1938 = vmatpush1.msra.mxu0 0.0
    %1939 = vmatprep.subr.mxu0 0.0
    %1940 = vmatpush1.msra.mxu0 0.0
    %1941 = vmatprep.subr.mxu0 0.0
    %1942 = vmatpush1.msra.mxu0 0.0
    %1943 = vmatprep.subr.mxu0 0.0
    %1944 = vmatpush1.msra.mxu0 0.0
    %1945 = vmatprep.subr.mxu0 0.0
    %1946 = vmatpush1.msra.mxu0 0.0
    %1947 = vmatprep.subr.mxu0 0.0
    %1948 = vmatpush1.msra.mxu0 0.0
    %1949 = vmatprep.subr.mxu0 0.0
    %1950 = vmatpush1.msra.mxu0 0.0
    %1951 = vmatprep.subr.mxu0 0.0
    %1952 = vmatpush1.msra.mxu0 0.0
    %1953 = vmatprep.subr.mxu0 0.0
    %1954 = vmatpush1.msra.mxu0 0.0
    %1955 = vmatprep.subr.mxu0 0.0
    %1956 = vmatpush1.msra.mxu0 0.0
    %1957 = vmatprep.subr.mxu0 0.0
    %1958 = vmatpush1.msra.mxu0 0.0
    %1959 = vmatprep.subr.mxu0 0.0
    %1960 = vmatpush1.msra.mxu0 0.0
    %1961 = vmatprep.mubr.f32.mxu0 0.0
    %1962 = vmatmul.mubr.f32.gmra.mrb[0].mxu0 %v1896
    %v1963 = vpop.f32.mrb[0].mxu0
    %v1964 = vadd.f32 0.0, %v1963
    %v1965 = vpop.f32.mrb[0].mxu0
    %v1966 = vadd.f32 0.0, %v1965
    %1967 = vdwg.mxu0
    %1968 = vmatprep.subr.mxu0 %v73
    %1969 = vmatpush1.msra.mxu0 %v72
    %1970 = vmatprep.subr.mxu0 %v77
    %1971 = vmatpush1.msra.mxu0 %v76
    %1972 = vmatprep.subr.mxu0 %v81
    %1973 = vmatpush1.msra.mxu0 %v80
    %1974 = vmatprep.subr.mxu0 %v85
    %1975 = vmatpush1.msra.mxu0 %v84
    %1976 = vmatprep.subr.mxu0 %v89
    %1977 = vmatpush1.msra.mxu0 %v88
    %1978 = vmatprep.subr.mxu0 %v93
    %1979 = vmatpush1.msra.mxu0 %v92
    %1980 = vmatprep.subr.mxu0 %v97
    %1981 = vmatpush1.msra.mxu0 %v96
    %1982 = vmatprep.subr.mxu0 %v101
    %1983 = vmatpush1.msra.mxu0 %v100
    %1984 = vmatprep.subr.mxu0 %v105
    %1985 = vmatpush1.msra.mxu0 %v104
    %1986 = vmatprep.subr.mxu0 %v109
    %1987 = vmatpush1.msra.mxu0 %v108
    %1988 = vmatprep.subr.mxu0 %v113
    %1989 = vmatpush1.msra.mxu0 %v112
    %1990 = vmatprep.subr.mxu0 %v117
    %1991 = vmatpush1.msra.mxu0 %v116
    %1992 = vmatprep.subr.mxu0 %v121
    %1993 = vmatpush1.msra.mxu0 %v120
    %1994 = vmatprep.subr.mxu0 %v125
    %1995 = vmatpush1.msra.mxu0 %v124
    %1996 = vmatprep.subr.mxu0 %v129
    %1997 = vmatpush1.msra.mxu0 %v128
    %1998 = vmatprep.subr.mxu0 %v133
    %1999 = vmatpush1.msra.mxu0 %v132
    %2000 = vmatprep.subr.mxu0 0.0
    %2001 = vmatpush1.msra.mxu0 0.0
    %2002 = vmatprep.subr.mxu0 0.0
    %2003 = vmatpush1.msra.mxu0 0.0
    %2004 = vmatprep.subr.mxu0 0.0
    %2005 = vmatpush1.msra.mxu0 0.0
    %2006 = vmatprep.subr.mxu0 0.0
    %2007 = vmatpush1.msra.mxu0 0.0
    %2008 = vmatprep.subr.mxu0 0.0
    %2009 = vmatpush1.msra.mxu0 0.0
    %2010 = vmatprep.subr.mxu0 0.0
    %2011 = vmatpush1.msra.mxu0 0.0
    %2012 = vmatprep.subr.mxu0 0.0
    %2013 = vmatpush1.msra.mxu0 0.0
    %2014 = vmatprep.subr.mxu0 0.0
    %2015 = vmatpush1.msra.mxu0 0.0
    %2016 = vmatprep.subr.mxu0 0.0
    %2017 = vmatpush1.msra.mxu0 0.0
    %2018 = vmatprep.subr.mxu0 0.0
    %2019 = vmatpush1.msra.mxu0 0.0
    %2020 = vmatprep.subr.mxu0 0.0
    %2021 = vmatpush1.msra.mxu0 0.0
    %2022 = vmatprep.subr.mxu0 0.0
    %2023 = vmatpush1.msra.mxu0 0.0
    %2024 = vmatprep.subr.mxu0 0.0
    %2025 = vmatpush1.msra.mxu0 0.0
    %2026 = vmatprep.subr.mxu0 0.0
    %2027 = vmatpush1.msra.mxu0 0.0
    %2028 = vmatprep.subr.mxu0 0.0
    %2029 = vmatpush1.msra.mxu0 0.0
    %2030 = vmatprep.subr.mxu0 0.0
    %2031 = vmatpush1.msra.mxu0 0.0
    %2032 = vmatprep.mubr.f32.mxu0 0.0
    %2033 = vmatmul.mubr.f32.gmra.mrb[0].mxu0 %v1896
    %v2034 = vpop.f32.mrb[0].mxu0
    %v2035 = vadd.f32 0.0, %v2034
    %v2036 = vpop.f32.mrb[0].mxu0
    %v2037 = vadd.f32 0.0, %v2036
    %2038 = vdwg.mxu0
    %v2039 = vadd.f32 %v1892, %v1964
    %v2040 = vadd.f32 %v1893, %v1966
    %v2041 = vadd.f32 %v1894, %v2035
    %v2042 = vadd.f32 %v1895, %v2037
    %v2043 = vld [vmem:[#allocation4] sm:$0xff]
    %v2044 = vmul.f32 %v2039, 0.5
    %v2045 = vtanh.pop %v2044
    %v2046 = vmul.f32 %v2045, 0.5
    %v2047 = vadd.f32 %v2046, 0.5
    %v2048 = vmul.f32 %v2040, 0.5
    %v2049 = vtanh.pop %v2048
    %v2050 = vmul.f32 %v2049, 0.5
    %v2051 = vadd.f32 %v2050, 0.5
    %v2052 = vtanh.pop %v2041
    %v2053 = vmul.f32 %v2042, 0.5
    %v2054 = vtanh.pop %v2053
    %v2055 = vmul.f32 %v2054, 0.5
    %v2056 = vadd.f32 %v2055, 0.5
    %v2057 = vmul.f32 %v2051, %v2043
    %v2058 = vmul.f32 %v2047, %v2052
    %v2059 = vadd.f32 %v2057, %v2058
    %v2060 = vtanh.pop %v2059
    %v2061 = vmul.f32 %v2056, %v2060
    %2062 = vst [vmem:[#allocation3] sm:$0xff] %v2061
    %2063 = vst [vmem:[#allocation4] sm:$0xff] %v2059
    %s2064 = scalar_lea.vmem %s4, 24
    %2065 = vst [vmem:[%s2064] sm:$0xff] %v2061
    %v2066 = vld [vmem:[%s910] sm:$0xff]
    %v2067 = vld [vmem:[%s910 + $0x8] sm:$0xff]
    %v2068 = vld [vmem:[%s910 + $0x10] sm:$0xff]
    %v2069 = vld [vmem:[%s910 + $0x18] sm:$0xff]
    %v2070 = vld [vmem:[#allocation3] sm:$0xff]
    %2071 = vmatprep.subr.mxu0 %v71
    %2072 = vmatpush1.msra.mxu0 %v70
    %2073 = vmatprep.subr.mxu0 %v75
    %2074 = vmatpush1.msra.mxu0 %v74
    %2075 = vmatprep.subr.mxu0 %v79
    %2076 = vmatpush1.msra.mxu0 %v78
    %2077 = vmatprep.subr.mxu0 %v83
    %2078 = vmatpush1.msra.mxu0 %v82
    %2079 = vmatprep.subr.mxu0 %v87
    %2080 = vmatpush1.msra.mxu0 %v86
    %2081 = vmatprep.subr.mxu0 %v91
    %2082 = vmatpush1.msra.mxu0 %v90
    %2083 = vmatprep.subr.mxu0 %v95
    %2084 = vmatpush1.msra.mxu0 %v94
    %2085 = vmatprep.subr.mxu0 %v99
    %2086 = vmatpush1.msra.mxu0 %v98
    %2087 = vmatprep.subr.mxu0 %v103
    %2088 = vmatpush1.msra.mxu0 %v102
    %2089 = vmatprep.subr.mxu0 %v107
    %2090 = vmatpush1.msra.mxu0 %v106
    %2091 = vmatprep.subr.mxu0 %v111
    %2092 = vmatpush1.msra.mxu0 %v110
    %2093 = vmatprep.subr.mxu0 %v115
    %2094 = vmatpush1.msra.mxu0 %v114
    %2095 = vmatprep.subr.mxu0 %v119
    %2096 = vmatpush1.msra.mxu0 %v118
    %2097 = vmatprep.subr.mxu0 %v123
    %2098 = vmatpush1.msra.mxu0 %v122
    %2099 = vmatprep.subr.mxu0 %v127
    %2100 = vmatpush1.msra.mxu0 %v126
    %2101 = vmatprep.subr.mxu0 %v131
    %2102 = vmatpush1.msra.mxu0 %v130
    %2103 = vmatprep.subr.mxu0 0.0
    %2104 = vmatpush1.msra.mxu0 0.0
    %2105 = vmatprep.subr.mxu0 0.0
    %2106 = vmatpush1.msra.mxu0 0.0
    %2107 = vmatprep.subr.mxu0 0.0
    %2108 = vmatpush1.msra.mxu0 0.0
    %2109 = vmatprep.subr.mxu0 0.0
    %2110 = vmatpush1.msra.mxu0 0.0
    %2111 = vmatprep.subr.mxu0 0.0
    %2112 = vmatpush1.msra.mxu0 0.0
    %2113 = vmatprep.subr.mxu0 0.0
    %2114 = vmatpush1.msra.mxu0 0.0
    %2115 = vmatprep.subr.mxu0 0.0
    %2116 = vmatpush1.msra.mxu0 0.0
    %2117 = vmatprep.subr.mxu0 0.0
    %2118 = vmatpush1.msra.mxu0 0.0
    %2119 = vmatprep.subr.mxu0 0.0
    %2120 = vmatpush1.msra.mxu0 0.0
    %2121 = vmatprep.subr.mxu0 0.0
    %2122 = vmatpush1.msra.mxu0 0.0
    %2123 = vmatprep.subr.mxu0 0.0
    %2124 = vmatpush1.msra.mxu0 0.0
    %2125 = vmatprep.subr.mxu0 0.0
    %2126 = vmatpush1.msra.mxu0 0.0
    %2127 = vmatprep.subr.mxu0 0.0
    %2128 = vmatpush1.msra.mxu0 0.0
    %2129 = vmatprep.subr.mxu0 0.0
    %2130 = vmatpush1.msra.mxu0 0.0
    %2131 = vmatprep.subr.mxu0 0.0
    %2132 = vmatpush1.msra.mxu0 0.0
    %2133 = vmatprep.subr.mxu0 0.0
    %2134 = vmatpush1.msra.mxu0 0.0
    %2135 = vmatprep.mubr.f32.mxu0 0.0
    %2136 = vmatmul.mubr.f32.gmra.mrb[0].mxu0 %v2070
    %v2137 = vpop.f32.mrb[0].mxu0
    %v2138 = vadd.f32 0.0, %v2137
    %v2139 = vpop.f32.mrb[0].mxu0
    %v2140 = vadd.f32 0.0, %v2139
    %2141 = vdwg.mxu0
    %2142 = vmatprep.subr.mxu0 %v73
    %2143 = vmatpush1.msra.mxu0 %v72
    %2144 = vmatprep.subr.mxu0 %v77
    %2145 = vmatpush1.msra.mxu0 %v76
    %2146 = vmatprep.subr.mxu0 %v81
    %2147 = vmatpush1.msra.mxu0 %v80
    %2148 = vmatprep.subr.mxu0 %v85
    %2149 = vmatpush1.msra.mxu0 %v84
    %2150 = vmatprep.subr.mxu0 %v89
    %2151 = vmatpush1.msra.mxu0 %v88
    %2152 = vmatprep.subr.mxu0 %v93
    %2153 = vmatpush1.msra.mxu0 %v92
    %2154 = vmatprep.subr.mxu0 %v97
    %2155 = vmatpush1.msra.mxu0 %v96
    %2156 = vmatprep.subr.mxu0 %v101
    %2157 = vmatpush1.msra.mxu0 %v100
    %2158 = vmatprep.subr.mxu0 %v105
    %2159 = vmatpush1.msra.mxu0 %v104
    %2160 = vmatprep.subr.mxu0 %v109
    %2161 = vmatpush1.msra.mxu0 %v108
    %2162 = vmatprep.subr.mxu0 %v113
    %2163 = vmatpush1.msra.mxu0 %v112
    %2164 = vmatprep.subr.mxu0 %v117
    %2165 = vmatpush1.msra.mxu0 %v116
    %2166 = vmatprep.subr.mxu0 %v121
    %2167 = vmatpush1.msra.mxu0 %v120
    %2168 = vmatprep.subr.mxu0 %v125
    %2169 = vmatpush1.msra.mxu0 %v124
    %2170 = vmatprep.subr.mxu0 %v129
    %2171 = vmatpush1.msra.mxu0 %v128
    %2172 = vmatprep.subr.mxu0 %v133
    %2173 = vmatpush1.msra.mxu0 %v132
    %2174 = vmatprep.subr.mxu0 0.0
    %2175 = vmatpush1.msra.mxu0 0.0
    %2176 = vmatprep.subr.mxu0 0.0
    %2177 = vmatpush1.msra.mxu0 0.0
    %2178 = vmatprep.subr.mxu0 0.0
    %2179 = vmatpush1.msra.mxu0 0.0
    %2180 = vmatprep.subr.mxu0 0.0
    %2181 = vmatpush1.msra.mxu0 0.0
    %2182 = vmatprep.subr.mxu0 0.0
    %2183 = vmatpush1.msra.mxu0 0.0
    %2184 = vmatprep.subr.mxu0 0.0
    %2185 = vmatpush1.msra.mxu0 0.0
    %2186 = vmatprep.subr.mxu0 0.0
    %2187 = vmatpush1.msra.mxu0 0.0
    %2188 = vmatprep.subr.mxu0 0.0
    %2189 = vmatpush1.msra.mxu0 0.0
    %2190 = vmatprep.subr.mxu0 0.0
    %2191 = vmatpush1.msra.mxu0 0.0
    %2192 = vmatprep.subr.mxu0 0.0
    %2193 = vmatpush1.msra.mxu0 0.0
    %2194 = vmatprep.subr.mxu0 0.0
    %2195 = vmatpush1.msra.mxu0 0.0
    %2196 = vmatprep.subr.mxu0 0.0
    %2197 = vmatpush1.msra.mxu0 0.0
    %2198 = vmatprep.subr.mxu0 0.0
    %2199 = vmatpush1.msra.mxu0 0.0
    %2200 = vmatprep.subr.mxu0 0.0
    %2201 = vmatpush1.msra.mxu0 0.0
    %2202 = vmatprep.subr.mxu0 0.0
    %2203 = vmatpush1.msra.mxu0 0.0
    %2204 = vmatprep.subr.mxu0 0.0
    %2205 = vmatpush1.msra.mxu0 0.0
    %2206 = vmatprep.mubr.f32.mxu0 0.0
    %2207 = vmatmul.mubr.f32.gmra.mrb[0].mxu0 %v2070
    %v2208 = vpop.f32.mrb[0].mxu0
    %v2209 = vadd.f32 0.0, %v2208
    %v2210 = vpop.f32.mrb[0].mxu0
    %v2211 = vadd.f32 0.0, %v2210
    %2212 = vdwg.mxu0
    %v2213 = vadd.f32 %v2066, %v2138
    %v2214 = vadd.f32 %v2067, %v2140
    %v2215 = vadd.f32 %v2068, %v2209
    %v2216 = vadd.f32 %v2069, %v2211
    %v2217 = vld [vmem:[#allocation4] sm:$0xff]
    %v2218 = vmul.f32 %v2213, 0.5
    %v2219 = vtanh.pop %v2218
    %v2220 = vmul.f32 %v2219, 0.5
    %v2221 = vadd.f32 %v2220, 0.5
    %v2222 = vmul.f32 %v2214, 0.5
    %v2223 = vtanh.pop %v2222
    %v2224 = vmul.f32 %v2223, 0.5
    %v2225 = vadd.f32 %v2224, 0.5
    %v2226 = vtanh.pop %v2215
    %v2227 = vmul.f32 %v2216, 0.5
    %v2228 = vtanh.pop %v2227
    %v2229 = vmul.f32 %v2228, 0.5
    %v2230 = vadd.f32 %v2229, 0.5
    %v2231 = vmul.f32 %v2225, %v2217
    %v2232 = vmul.f32 %v2221, %v2226
    %v2233 = vadd.f32 %v2231, %v2232
    %v2234 = vtanh.pop %v2233
    %v2235 = vmul.f32 %v2230, %v2234
    %2236 = vst [vmem:[#allocation3] sm:$0xff] %v2235
    %2237 = vst [vmem:[#allocation4] sm:$0xff] %v2233
    %s2238 = scalar_lea.vmem %s4, 32
    %2239 = vst [vmem:[%s2238] sm:$0xff] %v2235
    %v2240 = vld [vmem:[%s1062] sm:$0xff]
    %v2241 = vld [vmem:[%s1062 + $0x8] sm:$0xff]
    %v2242 = vld [vmem:[%s1062 + $0x10] sm:$0xff]
    %v2243 = vld [vmem:[%s1062 + $0x18] sm:$0xff]
    %v2244 = vld [vmem:[#allocation3] sm:$0xff]
    %2245 = vmatprep.subr.mxu0 %v71
    %2246 = vmatpush1.msra.mxu0 %v70
    %2247 = vmatprep.subr.mxu0 %v75
    %2248 = vmatpush1.msra.mxu0 %v74
    %2249 = vmatprep.subr.mxu0 %v79
    %2250 = vmatpush1.msra.mxu0 %v78
    %2251 = vmatprep.subr.mxu0 %v83
    %2252 = vmatpush1.msra.mxu0 %v82
    %2253 = vmatprep.subr.mxu0 %v87
    %2254 = vmatpush1.msra.mxu0 %v86
    %2255 = vmatprep.subr.mxu0 %v91
    %2256 = vmatpush1.msra.mxu0 %v90
    %2257 = vmatprep.subr.mxu0 %v95
    %2258 = vmatpush1.msra.mxu0 %v94
    %2259 = vmatprep.subr.mxu0 %v99
    %2260 = vmatpush1.msra.mxu0 %v98
    %2261 = vmatprep.subr.mxu0 %v103
    %2262 = vmatpush1.msra.mxu0 %v102
    %2263 = vmatprep.subr.mxu0 %v107
    %2264 = vmatpush1.msra.mxu0 %v106
    %2265 = vmatprep.subr.mxu0 %v111
    %2266 = vmatpush1.msra.mxu0 %v110
    %2267 = vmatprep.subr.mxu0 %v115
    %2268 = vmatpush1.msra.mxu0 %v114
    %2269 = vmatprep.subr.mxu0 %v119
    %2270 = vmatpush1.msra.mxu0 %v118
    %2271 = vmatprep.subr.mxu0 %v123
    %2272 = vmatpush1.msra.mxu0 %v122
    %2273 = vmatprep.subr.mxu0 %v127
    %2274 = vmatpush1.msra.mxu0 %v126
    %2275 = vmatprep.subr.mxu0 %v131
    %2276 = vmatpush1.msra.mxu0 %v130
    %2277 = vmatprep.subr.mxu0 0.0
    %2278 = vmatpush1.msra.mxu0 0.0
    %2279 = vmatprep.subr.mxu0 0.0
    %2280 = vmatpush1.msra.mxu0 0.0
    %2281 = vmatprep.subr.mxu0 0.0
    %2282 = vmatpush1.msra.mxu0 0.0
    %2283 = vmatprep.subr.mxu0 0.0
    %2284 = vmatpush1.msra.mxu0 0.0
    %2285 = vmatprep.subr.mxu0 0.0
    %2286 = vmatpush1.msra.mxu0 0.0
    %2287 = vmatprep.subr.mxu0 0.0
    %2288 = vmatpush1.msra.mxu0 0.0
    %2289 = vmatprep.subr.mxu0 0.0
    %2290 = vmatpush1.msra.mxu0 0.0
    %2291 = vmatprep.subr.mxu0 0.0
    %2292 = vmatpush1.msra.mxu0 0.0
    %2293 = vmatprep.subr.mxu0 0.0
    %2294 = vmatpush1.msra.mxu0 0.0
    %2295 = vmatprep.subr.mxu0 0.0
    %2296 = vmatpush1.msra.mxu0 0.0
    %2297 = vmatprep.subr.mxu0 0.0
    %2298 = vmatpush1.msra.mxu0 0.0
    %2299 = vmatprep.subr.mxu0 0.0
    %2300 = vmatpush1.msra.mxu0 0.0
    %2301 = vmatprep.subr.mxu0 0.0
    %2302 = vmatpush1.msra.mxu0 0.0
    %2303 = vmatprep.subr.mxu0 0.0
    %2304 = vmatpush1.msra.mxu0 0.0
    %2305 = vmatprep.subr.mxu0 0.0
    %2306 = vmatpush1.msra.mxu0 0.0
    %2307 = vmatprep.subr.mxu0 0.0
    %2308 = vmatpush1.msra.mxu0 0.0
    %2309 = vmatprep.mubr.f32.mxu0 0.0
    %2310 = vmatmul.mubr.f32.gmra.mrb[0].mxu0 %v2244
    %v2311 = vpop.f32.mrb[0].mxu0
    %v2312 = vadd.f32 0.0, %v2311
    %v2313 = vpop.f32.mrb[0].mxu0
    %v2314 = vadd.f32 0.0, %v2313
    %2315 = vdwg.mxu0
    %2316 = vmatprep.subr.mxu0 %v73
    %2317 = vmatpush1.msra.mxu0 %v72
    %2318 = vmatprep.subr.mxu0 %v77
    %2319 = vmatpush1.msra.mxu0 %v76
    %2320 = vmatprep.subr.mxu0 %v81
    %2321 = vmatpush1.msra.mxu0 %v80
    %2322 = vmatprep.subr.mxu0 %v85
    %2323 = vmatpush1.msra.mxu0 %v84
    %2324 = vmatprep.subr.mxu0 %v89
    %2325 = vmatpush1.msra.mxu0 %v88
    %2326 = vmatprep.subr.mxu0 %v93
    %2327 = vmatpush1.msra.mxu0 %v92
    %2328 = vmatprep.subr.mxu0 %v97
    %2329 = vmatpush1.msra.mxu0 %v96
    %2330 = vmatprep.subr.mxu0 %v101
    %2331 = vmatpush1.msra.mxu0 %v100
    %2332 = vmatprep.subr.mxu0 %v105
    %2333 = vmatpush1.msra.mxu0 %v104
    %2334 = vmatprep.subr.mxu0 %v109
    %2335 = vmatpush1.msra.mxu0 %v108
    %2336 = vmatprep.subr.mxu0 %v113
    %2337 = vmatpush1.msra.mxu0 %v112
    %2338 = vmatprep.subr.mxu0 %v117
    %2339 = vmatpush1.msra.mxu0 %v116
    %2340 = vmatprep.subr.mxu0 %v121
    %2341 = vmatpush1.msra.mxu0 %v120
    %2342 = vmatprep.subr.mxu0 %v125
    %2343 = vmatpush1.msra.mxu0 %v124
    %2344 = vmatprep.subr.mxu0 %v129
    %2345 = vmatpush1.msra.mxu0 %v128
    %2346 = vmatprep.subr.mxu0 %v133
    %2347 = vmatpush1.msra.mxu0 %v132
    %2348 = vmatprep.subr.mxu0 0.0
    %2349 = vmatpush1.msra.mxu0 0.0
    %2350 = vmatprep.subr.mxu0 0.0
    %2351 = vmatpush1.msra.mxu0 0.0
    %2352 = vmatprep.subr.mxu0 0.0
    %2353 = vmatpush1.msra.mxu0 0.0
    %2354 = vmatprep.subr.mxu0 0.0
    %2355 = vmatpush1.msra.mxu0 0.0
    %2356 = vmatprep.subr.mxu0 0.0
    %2357 = vmatpush1.msra.mxu0 0.0
    %2358 = vmatprep.subr.mxu0 0.0
    %2359 = vmatpush1.msra.mxu0 0.0
    %2360 = vmatprep.subr.mxu0 0.0
    %2361 = vmatpush1.msra.mxu0 0.0
    %2362 = vmatprep.subr.mxu0 0.0
    %2363 = vmatpush1.msra.mxu0 0.0
    %2364 = vmatprep.subr.mxu0 0.0
    %2365 = vmatpush1.msra.mxu0 0.0
    %2366 = vmatprep.subr.mxu0 0.0
    %2367 = vmatpush1.msra.mxu0 0.0
    %2368 = vmatprep.subr.mxu0 0.0
    %2369 = vmatpush1.msra.mxu0 0.0
    %2370 = vmatprep.subr.mxu0 0.0
    %2371 = vmatpush1.msra.mxu0 0.0
    %2372 = vmatprep.subr.mxu0 0.0
    %2373 = vmatpush1.msra.mxu0 0.0
    %2374 = vmatprep.subr.mxu0 0.0
    %2375 = vmatpush1.msra.mxu0 0.0
    %2376 = vmatprep.subr.mxu0 0.0
    %2377 = vmatpush1.msra.mxu0 0.0
    %2378 = vmatprep.subr.mxu0 0.0
    %2379 = vmatpush1.msra.mxu0 0.0
    %2380 = vmatprep.mubr.f32.mxu0 0.0
    %2381 = vmatmul.mubr.f32.gmra.mrb[0].mxu0 %v2244
    %v2382 = vpop.f32.mrb[0].mxu0
    %v2383 = vadd.f32 0.0, %v2382
    %v2384 = vpop.f32.mrb[0].mxu0
    %v2385 = vadd.f32 0.0, %v2384
    %2386 = vdwg.mxu0
    %v2387 = vadd.f32 %v2240, %v2312
    %v2388 = vadd.f32 %v2241, %v2314
    %v2389 = vadd.f32 %v2242, %v2383
    %v2390 = vadd.f32 %v2243, %v2385
    %v2391 = vld [vmem:[#allocation4] sm:$0xff]
    %v2392 = vmul.f32 %v2387, 0.5
    %v2393 = vtanh.pop %v2392
    %v2394 = vmul.f32 %v2393, 0.5
    %v2395 = vadd.f32 %v2394, 0.5
    %v2396 = vmul.f32 %v2388, 0.5
    %v2397 = vtanh.pop %v2396
    %v2398 = vmul.f32 %v2397, 0.5
    %v2399 = vadd.f32 %v2398, 0.5
    %v2400 = vtanh.pop %v2389
    %v2401 = vmul.f32 %v2390, 0.5
    %v2402 = vtanh.pop %v2401
    %v2403 = vmul.f32 %v2402, 0.5
    %v2404 = vadd.f32 %v2403, 0.5
    %v2405 = vmul.f32 %v2399, %v2391
    %v2406 = vmul.f32 %v2395, %v2400
    %v2407 = vadd.f32 %v2405, %v2406
    %v2408 = vtanh.pop %v2407
    %v2409 = vmul.f32 %v2404, %v2408
    %2410 = vst [vmem:[#allocation3] sm:$0xff] %v2409
    %2411 = vst [vmem:[#allocation4] sm:$0xff] %v2407
    %s2412 = scalar_lea.vmem %s4, 40
    %2413 = vst [vmem:[%s2412] sm:$0xff] %v2409
    %v2414 = vld [vmem:[%s1214] sm:$0xff]
    %v2415 = vld [vmem:[%s1214 + $0x8] sm:$0xff]
    %v2416 = vld [vmem:[%s1214 + $0x10] sm:$0xff]
    %v2417 = vld [vmem:[%s1214 + $0x18] sm:$0xff]
    %v2418 = vld [vmem:[#allocation3] sm:$0xff]
    %2419 = vmatprep.subr.mxu0 %v71
    %2420 = vmatpush1.msra.mxu0 %v70
    %2421 = vmatprep.subr.mxu0 %v75
    %2422 = vmatpush1.msra.mxu0 %v74
    %2423 = vmatprep.subr.mxu0 %v79
    %2424 = vmatpush1.msra.mxu0 %v78
    %2425 = vmatprep.subr.mxu0 %v83
    %2426 = vmatpush1.msra.mxu0 %v82
    %2427 = vmatprep.subr.mxu0 %v87
    %2428 = vmatpush1.msra.mxu0 %v86
    %2429 = vmatprep.subr.mxu0 %v91
    %2430 = vmatpush1.msra.mxu0 %v90
    %2431 = vmatprep.subr.mxu0 %v95
    %2432 = vmatpush1.msra.mxu0 %v94
    %2433 = vmatprep.subr.mxu0 %v99
    %2434 = vmatpush1.msra.mxu0 %v98
    %2435 = vmatprep.subr.mxu0 %v103
    %2436 = vmatpush1.msra.mxu0 %v102
    %2437 = vmatprep.subr.mxu0 %v107
    %2438 = vmatpush1.msra.mxu0 %v106
    %2439 = vmatprep.subr.mxu0 %v111
    %2440 = vmatpush1.msra.mxu0 %v110
    %2441 = vmatprep.subr.mxu0 %v115
    %2442 = vmatpush1.msra.mxu0 %v114
    %2443 = vmatprep.subr.mxu0 %v119
    %2444 = vmatpush1.msra.mxu0 %v118
    %2445 = vmatprep.subr.mxu0 %v123
    %2446 = vmatpush1.msra.mxu0 %v122
    %2447 = vmatprep.subr.mxu0 %v127
    %2448 = vmatpush1.msra.mxu0 %v126
    %2449 = vmatprep.subr.mxu0 %v131
    %2450 = vmatpush1.msra.mxu0 %v130
    %2451 = vmatprep.subr.mxu0 0.0
    %2452 = vmatpush1.msra.mxu0 0.0
    %2453 = vmatprep.subr.mxu0 0.0
    %2454 = vmatpush1.msra.mxu0 0.0
    %2455 = vmatprep.subr.mxu0 0.0
    %2456 = vmatpush1.msra.mxu0 0.0
    %2457 = vmatprep.subr.mxu0 0.0
    %2458 = vmatpush1.msra.mxu0 0.0
    %2459 = vmatprep.subr.mxu0 0.0
    %2460 = vmatpush1.msra.mxu0 0.0
    %2461 = vmatprep.subr.mxu0 0.0
    %2462 = vmatpush1.msra.mxu0 0.0
    %2463 = vmatprep.subr.mxu0 0.0
    %2464 = vmatpush1.msra.mxu0 0.0
    %2465 = vmatprep.subr.mxu0 0.0
    %2466 = vmatpush1.msra.mxu0 0.0
    %2467 = vmatprep.subr.mxu0 0.0
    %2468 = vmatpush1.msra.mxu0 0.0
    %2469 = vmatprep.subr.mxu0 0.0
    %2470 = vmatpush1.msra.mxu0 0.0
    %2471 = vmatprep.subr.mxu0 0.0
    %2472 = vmatpush1.msra.mxu0 0.0
    %2473 = vmatprep.subr.mxu0 0.0
    %2474 = vmatpush1.msra.mxu0 0.0
    %2475 = vmatprep.subr.mxu0 0.0
    %2476 = vmatpush1.msra.mxu0 0.0
    %2477 = vmatprep.subr.mxu0 0.0
    %2478 = vmatpush1.msra.mxu0 0.0
    %2479 = vmatprep.subr.mxu0 0.0
    %2480 = vmatpush1.msra.mxu0 0.0
    %2481 = vmatprep.subr.mxu0 0.0
    %2482 = vmatpush1.msra.mxu0 0.0
    %2483 = vmatprep.mubr.f32.mxu0 0.0
    %2484 = vmatmul.mubr.f32.gmra.mrb[0].mxu0 %v2418
    %v2485 = vpop.f32.mrb[0].mxu0
    %v2486 = vadd.f32 0.0, %v2485
    %v2487 = vpop.f32.mrb[0].mxu0
    %v2488 = vadd.f32 0.0, %v2487
    %2489 = vdwg.mxu0
    %2490 = vmatprep.subr.mxu0 %v73
    %2491 = vmatpush1.msra.mxu0 %v72
    %2492 = vmatprep.subr.mxu0 %v77
    %2493 = vmatpush1.msra.mxu0 %v76
    %2494 = vmatprep.subr.mxu0 %v81
    %2495 = vmatpush1.msra.mxu0 %v80
    %2496 = vmatprep.subr.mxu0 %v85
    %2497 = vmatpush1.msra.mxu0 %v84
    %2498 = vmatprep.subr.mxu0 %v89
    %2499 = vmatpush1.msra.mxu0 %v88
    %2500 = vmatprep.subr.mxu0 %v93
    %2501 = vmatpush1.msra.mxu0 %v92
    %2502 = vmatprep.subr.mxu0 %v97
    %2503 = vmatpush1.msra.mxu0 %v96
    %2504 = vmatprep.subr.mxu0 %v101
    %2505 = vmatpush1.msra.mxu0 %v100
    %2506 = vmatprep.subr.mxu0 %v105
    %2507 = vmatpush1.msra.mxu0 %v104
    %2508 = vmatprep.subr.mxu0 %v109
    %2509 = vmatpush1.msra.mxu0 %v108
    %2510 = vmatprep.subr.mxu0 %v113
    %2511 = vmatpush1.msra.mxu0 %v112
    %2512 = vmatprep.subr.mxu0 %v117
    %2513 = vmatpush1.msra.mxu0 %v116
    %2514 = vmatprep.subr.mxu0 %v121
    %2515 = vmatpush1.msra.mxu0 %v120
    %2516 = vmatprep.subr.mxu0 %v125
    %2517 = vmatpush1.msra.mxu0 %v124
    %2518 = vmatprep.subr.mxu0 %v129
    %2519 = vmatpush1.msra.mxu0 %v128
    %2520 = vmatprep.subr.mxu0 %v133
    %2521 = vmatpush1.msra.mxu0 %v132
    %2522 = vmatprep.subr.mxu0 0.0
    %2523 = vmatpush1.msra.mxu0 0.0
    %2524 = vmatprep.subr.mxu0 0.0
    %2525 = vmatpush1.msra.mxu0 0.0
    %2526 = vmatprep.subr.mxu0 0.0
    %2527 = vmatpush1.msra.mxu0 0.0
    %2528 = vmatprep.subr.mxu0 0.0
    %2529 = vmatpush1.msra.mxu0 0.0
    %2530 = vmatprep.subr.mxu0 0.0
    %2531 = vmatpush1.msra.mxu0 0.0
    %2532 = vmatprep.subr.mxu0 0.0
    %2533 = vmatpush1.msra.mxu0 0.0
    %2534 = vmatprep.subr.mxu0 0.0
    %2535 = vmatpush1.msra.mxu0 0.0
    %2536 = vmatprep.subr.mxu0 0.0
    %2537 = vmatpush1.msra.mxu0 0.0
    %2538 = vmatprep.subr.mxu0 0.0
    %2539 = vmatpush1.msra.mxu0 0.0
    %2540 = vmatprep.subr.mxu0 0.0
    %2541 = vmatpush1.msra.mxu0 0.0
    %2542 = vmatprep.subr.mxu0 0.0
    %2543 = vmatpush1.msra.mxu0 0.0
    %2544 = vmatprep.subr.mxu0 0.0
    %2545 = vmatpush1.msra.mxu0 0.0
    %2546 = vmatprep.subr.mxu0 0.0
    %2547 = vmatpush1.msra.mxu0 0.0
    %2548 = vmatprep.subr.mxu0 0.0
    %2549 = vmatpush1.msra.mxu0 0.0
    %2550 = vmatprep.subr.mxu0 0.0
    %2551 = vmatpush1.msra.mxu0 0.0
    %2552 = vmatprep.subr.mxu0 0.0
    %2553 = vmatpush1.msra.mxu0 0.0
    %2554 = vmatprep.mubr.f32.mxu0 0.0
    %2555 = vmatmul.mubr.f32.gmra.mrb[0].mxu0 %v2418
    %v2556 = vpop.f32.mrb[0].mxu0
    %v2557 = vadd.f32 0.0, %v2556
    %v2558 = vpop.f32.mrb[0].mxu0
    %v2559 = vadd.f32 0.0, %v2558
    %2560 = vdwg.mxu0
    %v2561 = vadd.f32 %v2414, %v2486
    %v2562 = vadd.f32 %v2415, %v2488
    %v2563 = vadd.f32 %v2416, %v2557
    %v2564 = vadd.f32 %v2417, %v2559
    %v2565 = vld [vmem:[#allocation4] sm:$0xff]
    %v2566 = vmul.f32 %v2561, 0.5
    %v2567 = vtanh.pop %v2566
    %v2568 = vmul.f32 %v2567, 0.5
    %v2569 = vadd.f32 %v2568, 0.5
    %v2570 = vmul.f32 %v2562, 0.5
    %v2571 = vtanh.pop %v2570
    %v2572 = vmul.f32 %v2571, 0.5
    %v2573 = vadd.f32 %v2572, 0.5
    %v2574 = vtanh.pop %v2563
    %v2575 = vmul.f32 %v2564, 0.5
    %v2576 = vtanh.pop %v2575
    %v2577 = vmul.f32 %v2576, 0.5
    %v2578 = vadd.f32 %v2577, 0.5
    %v2579 = vmul.f32 %v2573, %v2565
    %v2580 = vmul.f32 %v2569, %v2574
    %v2581 = vadd.f32 %v2579, %v2580
    %v2582 = vtanh.pop %v2581
    %v2583 = vmul.f32 %v2578, %v2582
    %2584 = vst [vmem:[#allocation3] sm:$0xff] %v2583
    %2585 = vst [vmem:[#allocation4] sm:$0xff] %v2581
    %s2586 = scalar_lea.vmem %s4, 48
    %2587 = vst [vmem:[%s2586] sm:$0xff] %v2583
    %v2588 = vld [vmem:[%s1366] sm:$0xff]
    %v2589 = vld [vmem:[%s1366 + $0x8] sm:$0xff]
    %v2590 = vld [vmem:[%s1366 + $0x10] sm:$0xff]
    %v2591 = vld [vmem:[%s1366 + $0x18] sm:$0xff]
    %v2592 = vld [vmem:[#allocation3] sm:$0xff]
    %2593 = vmatprep.subr.mxu0 %v71
    %2594 = vmatpush1.msra.mxu0 %v70
    %2595 = vmatprep.subr.mxu0 %v75
    %2596 = vmatpush1.msra.mxu0 %v74
    %2597 = vmatprep.subr.mxu0 %v79
    %2598 = vmatpush1.msra.mxu0 %v78
    %2599 = vmatprep.subr.mxu0 %v83
    %2600 = vmatpush1.msra.mxu0 %v82
    %2601 = vmatprep.subr.mxu0 %v87
    %2602 = vmatpush1.msra.mxu0 %v86
    %2603 = vmatprep.subr.mxu0 %v91
    %2604 = vmatpush1.msra.mxu0 %v90
    %2605 = vmatprep.subr.mxu0 %v95
    %2606 = vmatpush1.msra.mxu0 %v94
    %2607 = vmatprep.subr.mxu0 %v99
    %2608 = vmatpush1.msra.mxu0 %v98
    %2609 = vmatprep.subr.mxu0 %v103
    %2610 = vmatpush1.msra.mxu0 %v102
    %2611 = vmatprep.subr.mxu0 %v107
    %2612 = vmatpush1.msra.mxu0 %v106
    %2613 = vmatprep.subr.mxu0 %v111
    %2614 = vmatpush1.msra.mxu0 %v110
    %2615 = vmatprep.subr.mxu0 %v115
    %2616 = vmatpush1.msra.mxu0 %v114
    %2617 = vmatprep.subr.mxu0 %v119
    %2618 = vmatpush1.msra.mxu0 %v118
    %2619 = vmatprep.subr.mxu0 %v123
    %2620 = vmatpush1.msra.mxu0 %v122
    %2621 = vmatprep.subr.mxu0 %v127
    %2622 = vmatpush1.msra.mxu0 %v126
    %2623 = vmatprep.subr.mxu0 %v131
    %2624 = vmatpush1.msra.mxu0 %v130
    %2625 = vmatprep.subr.mxu0 0.0
    %2626 = vmatpush1.msra.mxu0 0.0
    %2627 = vmatprep.subr.mxu0 0.0
    %2628 = vmatpush1.msra.mxu0 0.0
    %2629 = vmatprep.subr.mxu0 0.0
    %2630 = vmatpush1.msra.mxu0 0.0
    %2631 = vmatprep.subr.mxu0 0.0
    %2632 = vmatpush1.msra.mxu0 0.0
    %2633 = vmatprep.subr.mxu0 0.0
    %2634 = vmatpush1.msra.mxu0 0.0
    %2635 = vmatprep.subr.mxu0 0.0
    %2636 = vmatpush1.msra.mxu0 0.0
    %2637 = vmatprep.subr.mxu0 0.0
    %2638 = vmatpush1.msra.mxu0 0.0
    %2639 = vmatprep.subr.mxu0 0.0
    %2640 = vmatpush1.msra.mxu0 0.0
    %2641 = vmatprep.subr.mxu0 0.0
    %2642 = vmatpush1.msra.mxu0 0.0
    %2643 = vmatprep.subr.mxu0 0.0
    %2644 = vmatpush1.msra.mxu0 0.0
    %2645 = vmatprep.subr.mxu0 0.0
    %2646 = vmatpush1.msra.mxu0 0.0
    %2647 = vmatprep.subr.mxu0 0.0
    %2648 = vmatpush1.msra.mxu0 0.0
    %2649 = vmatprep.subr.mxu0 0.0
    %2650 = vmatpush1.msra.mxu0 0.0
    %2651 = vmatprep.subr.mxu0 0.0
    %2652 = vmatpush1.msra.mxu0 0.0
    %2653 = vmatprep.subr.mxu0 0.0
    %2654 = vmatpush1.msra.mxu0 0.0
    %2655 = vmatprep.subr.mxu0 0.0
    %2656 = vmatpush1.msra.mxu0 0.0
    %2657 = vmatprep.mubr.f32.mxu0 0.0
    %2658 = vmatmul.mubr.f32.gmra.mrb[0].mxu0 %v2592
    %v2659 = vpop.f32.mrb[0].mxu0
    %v2660 = vadd.f32 0.0, %v2659
    %v2661 = vpop.f32.mrb[0].mxu0
    %v2662 = vadd.f32 0.0, %v2661
    %2663 = vdwg.mxu0
    %2664 = vmatprep.subr.mxu0 %v73
    %2665 = vmatpush1.msra.mxu0 %v72
    %2666 = vmatprep.subr.mxu0 %v77
    %2667 = vmatpush1.msra.mxu0 %v76
    %2668 = vmatprep.subr.mxu0 %v81
    %2669 = vmatpush1.msra.mxu0 %v80
    %2670 = vmatprep.subr.mxu0 %v85
    %2671 = vmatpush1.msra.mxu0 %v84
    %2672 = vmatprep.subr.mxu0 %v89
    %2673 = vmatpush1.msra.mxu0 %v88
    %2674 = vmatprep.subr.mxu0 %v93
    %2675 = vmatpush1.msra.mxu0 %v92
    %2676 = vmatprep.subr.mxu0 %v97
    %2677 = vmatpush1.msra.mxu0 %v96
    %2678 = vmatprep.subr.mxu0 %v101
    %2679 = vmatpush1.msra.mxu0 %v100
    %2680 = vmatprep.subr.mxu0 %v105
    %2681 = vmatpush1.msra.mxu0 %v104
    %2682 = vmatprep.subr.mxu0 %v109
    %2683 = vmatpush1.msra.mxu0 %v108
    %2684 = vmatprep.subr.mxu0 %v113
    %2685 = vmatpush1.msra.mxu0 %v112
    %2686 = vmatprep.subr.mxu0 %v117
    %2687 = vmatpush1.msra.mxu0 %v116
    %2688 = vmatprep.subr.mxu0 %v121
    %2689 = vmatpush1.msra.mxu0 %v120
    %2690 = vmatprep.subr.mxu0 %v125
    %2691 = vmatpush1.msra.mxu0 %v124
    %2692 = vmatprep.subr.mxu0 %v129
    %2693 = vmatpush1.msra.mxu0 %v128
    %2694 = vmatprep.subr.mxu0 %v133
    %2695 = vmatpush1.msra.mxu0 %v132
    %2696 = vmatprep.subr.mxu0 0.0
    %2697 = vmatpush1.msra.mxu0 0.0
    %2698 = vmatprep.subr.mxu0 0.0
    %2699 = vmatpush1.msra.mxu0 0.0
    %2700 = vmatprep.subr.mxu0 0.0
    %2701 = vmatpush1.msra.mxu0 0.0
    %2702 = vmatprep.subr.mxu0 0.0
    %2703 = vmatpush1.msra.mxu0 0.0
    %2704 = vmatprep.subr.mxu0 0.0
    %2705 = vmatpush1.msra.mxu0 0.0
    %2706 = vmatprep.subr.mxu0 0.0
    %2707 = vmatpush1.msra.mxu0 0.0
    %2708 = vmatprep.subr.mxu0 0.0
    %2709 = vmatpush1.msra.mxu0 0.0
    %2710 = vmatprep.subr.mxu0 0.0
    %2711 = vmatpush1.msra.mxu0 0.0
    %2712 = vmatprep.subr.mxu0 0.0
    %2713 = vmatpush1.msra.mxu0 0.0
    %2714 = vmatprep.subr.mxu0 0.0
    %2715 = vmatpush1.msra.mxu0 0.0
    %2716 = vmatprep.subr.mxu0 0.0
    %2717 = vmatpush1.msra.mxu0 0.0
    %2718 = vmatprep.subr.mxu0 0.0
    %2719 = vmatpush1.msra.mxu0 0.0
    %2720 = vmatprep.subr.mxu0 0.0
    %2721 = vmatpush1.msra.mxu0 0.0
    %2722 = vmatprep.subr.mxu0 0.0
    %2723 = vmatpush1.msra.mxu0 0.0
    %2724 = vmatprep.subr.mxu0 0.0
    %2725 = vmatpush1.msra.mxu0 0.0
    %2726 = vmatprep.subr.mxu0 0.0
    %2727 = vmatpush1.msra.mxu0 0.0
    %2728 = vmatprep.mubr.f32.mxu0 0.0
    %2729 = vmatmul.mubr.f32.gmra.mrb[0].mxu0 %v2592
    %v2730 = vpop.f32.mrb[0].mxu0
    %v2731 = vadd.f32 0.0, %v2730
    %v2732 = vpop.f32.mrb[0].mxu0
    %v2733 = vadd.f32 0.0, %v2732
    %2734 = vdwg.mxu0
    %v2735 = vadd.f32 %v2588, %v2660
    %v2736 = vadd.f32 %v2589, %v2662
    %v2737 = vadd.f32 %v2590, %v2731
    %v2738 = vadd.f32 %v2591, %v2733
    %v2739 = vld [vmem:[#allocation4] sm:$0xff]
    %v2740 = vmul.f32 %v2735, 0.5
    %v2741 = vtanh.pop %v2740
    %v2742 = vmul.f32 %v2741, 0.5
    %v2743 = vadd.f32 %v2742, 0.5
    %v2744 = vmul.f32 %v2736, 0.5
    %v2745 = vtanh.pop %v2744
    %v2746 = vmul.f32 %v2745, 0.5
    %v2747 = vadd.f32 %v2746, 0.5
    %v2748 = vtanh.pop %v2737
    %v2749 = vmul.f32 %v2738, 0.5
    %v2750 = vtanh.pop %v2749
    %v2751 = vmul.f32 %v2750, 0.5
    %v2752 = vadd.f32 %v2751, 0.5
    %v2753 = vmul.f32 %v2747, %v2739
    %v2754 = vmul.f32 %v2743, %v2748
    %v2755 = vadd.f32 %v2753, %v2754
    %v2756 = vtanh.pop %v2755
    %v2757 = vmul.f32 %v2752, %v2756
    %2758 = vst [vmem:[#allocation3] sm:$0xff] %v2757
    %2759 = vst [vmem:[#allocation4] sm:$0xff] %v2755
    %s2760 = scalar_lea.vmem %s4, 56
    %2761 = vst [vmem:[%s2760] sm:$0xff] %v2757
    // Predicated region
    $region34: #{lstm_model_forward.2} parent=1 // pred_check
      _
    $region35: #{lstm_model_forward.2} parent=1 // pred_check_branch
      %2763 = sbr.rel (0) target = $region37
    $region36: #{lstm_model_forward.2} parent=1 // pred_region
      _
    $region37: #{lstm_model_forward.2} parent=1 // pred_fallthru
      _
    // Predicated region
    $region38: #{lstm_model_forward.2} parent=1 // pred_check
      _
    $region39: #{lstm_model_forward.2} parent=1 // pred_check_branch
      %2765 = sbr.rel (0) target = $region41
    $region40: #{lstm_model_forward.2} parent=1 // pred_region
      _
    $region41: #{lstm_model_forward.2} parent=1 // pred_fallthru
      _
    %2766 = vsyncpa [#allocation6], 1
    %2767 = vsyncpa [#allocation8], 1

// kernel: lstm_model_forward.3
$region0: #{lstm_model_forward.3}
  #allocation0 [shape = 'u32[]', space=smem, size = 0x4, offset = 0x4, fixed_abs, tag = 'smem constant byte address 0x4 - core index']
  #allocation1 [shape = 'u32[144,128]{1,0:T(1,128)}', space=vmem, size = 0x12000, scoped, tag = 'internal scratch']
  #allocation2 [shape = 'f32[8,8,512]{2,1,0:T(8,128)}', space=vmem, size = 0x20000, scoped, tag = 'scratch operand']
  #allocation3 [shape = 'f32[8,128]{1,0:T(8,128)}', space=vmem, size = 0x1000, scoped, tag = 'scratch operand']
  #allocation4 [shape = 'f32[8,128]{1,0:T(8,128)}', space=vmem, size = 0x1000, scoped, tag = 'scratch operand']
  %s0 = inlined_call_operand.vmem [shape: f32[8,8,128], index: 0, kind: input, shape index: {}]
  %s1 = inlined_call_operand.vmem [shape: f32[128,512], index: 1, kind: input, shape index: {}]
  %s2 = inlined_call_operand.hbm [shape: f32[128,512], index: 2, kind: input, shape index: {}]
  %s3 = inlined_call_operand.vmem [shape: f32[1,512], index: 3, kind: input, shape index: {}]
  %s4 = inlined_call_operand.vmem [shape: f32[128,128], index: 4, kind: input, shape index: {}]
  %s5 = inlined_call_operand.vmem [shape: f32[1,128], index: 5, kind: input, shape index: {}]
  %s6 = inlined_call_operand.vmem [shape: f32[8,128], index: 6, kind: output, shape index: {}]
  %s7 = sld [smem:[#allocation0]]
  $region78: #{lstm_model_forward.3} parent=0
    _
  %s9 = ssub.s32 1, %s7
  %s10 = scalar_select 0, %s9, %s7
  $region1: #{lstm_model_forward.3} parent=0
    #allocation5 [shape = 'u8[262144]{0}', space=vmem, size = 0x40000, scoped, tag = 'input window, operand 2, single buffered']
    #allocation6 [shape = 's32[1]{0}', space=sflag, size = 0x4, scoped, tag = 'scoped memory for lstm_model_forward.3']
    %11 = vsyncpa [#allocation6], 0
    // Predicated region
    $region2: #{lstm_model_forward.3} parent=1 // pred_check
      _
    $region3: #{lstm_model_forward.3} parent=1 // pred_check_branch
      %13 = sbr.rel (0) target = $region5
    $region4: #{lstm_model_forward.3} parent=1 // pred_region
      _
    $region5: #{lstm_model_forward.3} parent=1 // pred_fallthru
      _
    // Predicated region
    $region6: #{lstm_model_forward.3} parent=1 // pred_check
      _
    $region7: #{lstm_model_forward.3} parent=1 // pred_check_branch
      %15 = sbr.rel (0) target = $region9
    $region8: #{lstm_model_forward.3} parent=1 // pred_region
      _
    $region9: #{lstm_model_forward.3} parent=1 // pred_fallthru
      _
    // Predicated region
    $region10: #{lstm_model_forward.3} parent=1 // pred_check
      _
    $region11: #{lstm_model_forward.3} parent=1 // pred_check_branch
      %17 = sbr.rel (0) target = $region13
    $region12: #{lstm_model_forward.3} parent=1 // pred_region
      %s19 = ssub.s32 8192, 8192
      %20 = vsyncadd [#allocation6], %s19
      %s21 = sshll.u32 [#allocation5], 4
      %s22 = int_to_ptr.vmem [resolvable:$true] %s21
      %27 = dma.hbm_to_vmem [thread:$0]  %s2, 8192, %s22, [#allocation6], 512, 512, 32
    $region13: #{lstm_model_forward.3} parent=1 // pred_fallthru
      _
    // Predicated region
    $region14: #{lstm_model_forward.3} parent=1 // pred_check
      _
    $region15: #{lstm_model_forward.3} parent=1 // pred_check_branch
      %29 = sbr.rel (0) target = $region17
    $region16: #{lstm_model_forward.3} parent=1 // pred_region
      _
    $region17: #{lstm_model_forward.3} parent=1 // pred_fallthru
      _
    // Predicated region
    $region18: #{lstm_model_forward.3} parent=1 // pred_check
      _
    $region19: #{lstm_model_forward.3} parent=1 // pred_check_branch
      %31 = sbr.rel (0) target = $region21
    $region20: #{lstm_model_forward.3} parent=1 // pred_region
      _
    $region21: #{lstm_model_forward.3} parent=1 // pred_fallthru
      _
    // Predicated region
    $region22: #{lstm_model_forward.3} parent=1 // pred_check
      _
    $region23: #{lstm_model_forward.3} parent=1 // pred_check_branch
      %33 = sbr.rel (0) target = $region25
    $region24: #{lstm_model_forward.3} parent=1 // pred_region
      _
    $region25: #{lstm_model_forward.3} parent=1 // pred_fallthru
      _
    // Predicated region
    $region26: #{lstm_model_forward.3} parent=1 // pred_check
      _
    $region27: #{lstm_model_forward.3} parent=1 // pred_check_branch
      %35 = sbr.rel (0) target = $region29
    $region28: #{lstm_model_forward.3} parent=1 // pred_region
      %36 = dma.done [#allocation6], 8192
    $region29: #{lstm_model_forward.3} parent=1 // pred_fallthru
      _
    %p37 = scmp.eq.s32.totalorder 0, 0
    // Predicated region
    $region30: #{lstm_model_forward.3} parent=1 // pred_check
      %p38 = pneg %p37
    $region31: #{lstm_model_forward.3} parent=1 // pred_check_branch
      %40 = sbr.rel (%p38) target = $region33
    $region32: #{lstm_model_forward.3} parent=1 // pred_region
      %41 = vst [vmem:[#allocation3] sm:$0xff] 0.0
      %42 = vst [vmem:[#allocation4] sm:$0xff] 0.0
    $region33: #{lstm_model_forward.3} parent=1 // pred_fallthru
      _
    %v43 = vld [vmem:[%s1] sm:$0xff]
    %v44 = vld [vmem:[%s1 + $0x8] sm:$0xff]
    %v45 = vld [vmem:[%s1 + $0x10] sm:$0xff]
    %v46 = vld [vmem:[%s1 + $0x18] sm:$0xff]
    %v47 = vld [vmem:[%s1 + $0x20] sm:$0xff]
    %v48 = vld [vmem:[%s1 + $0x28] sm:$0xff]
    %v49 = vld [vmem:[%s1 + $0x30] sm:$0xff]
    %v50 = vld [vmem:[%s1 + $0x38] sm:$0xff]
    %v51 = vld [vmem:[%s1 + $0x40] sm:$0xff]
    %v52 = vld [vmem:[%s1 + $0x48] sm:$0xff]
    %v53 = vld [vmem:[%s1 + $0x50] sm:$0xff]
    %v54 = vld [vmem:[%s1 + $0x58] sm:$0xff]
    %v55 = vld [vmem:[%s1 + $0x60] sm:$0xff]
    %v56 = vld [vmem:[%s1 + $0x68] sm:$0xff]
    %v57 = vld [vmem:[%s1 + $0x70] sm:$0xff]
    %v58 = vld [vmem:[%s1 + $0x78] sm:$0xff]
    %v59 = vld [vmem:[%s1 + $0x80] sm:$0xff]
    %v60 = vld [vmem:[%s1 + $0x88] sm:$0xff]
    %v61 = vld [vmem:[%s1 + $0x90] sm:$0xff]
    %v62 = vld [vmem:[%s1 + $0x98] sm:$0xff]
    %v63 = vld [vmem:[%s1 + $0xa0] sm:$0xff]
    %v64 = vld [vmem:[%s1 + $0xa8] sm:$0xff]
    %v65 = vld [vmem:[%s1 + $0xb0] sm:$0xff]
    %v66 = vld [vmem:[%s1 + $0xb8] sm:$0xff]
    %v67 = vld [vmem:[%s1 + $0xc0] sm:$0xff]
    %v68 = vld [vmem:[%s1 + $0xc8] sm:$0xff]
    %v69 = vld [vmem:[%s1 + $0xd0] sm:$0xff]
    %v70 = vld [vmem:[%s1 + $0xd8] sm:$0xff]
    %v71 = vld [vmem:[%s1 + $0xe0] sm:$0xff]
    %v72 = vld [vmem:[%s1 + $0xe8] sm:$0xff]
    %v73 = vld [vmem:[%s1 + $0xf0] sm:$0xff]
    %v74 = vld [vmem:[%s1 + $0xf8] sm:$0xff]
    %v75 = vld [vmem:[%s1 + $0x100] sm:$0xff]
    %v76 = vld [vmem:[%s1 + $0x108] sm:$0xff]
    %v77 = vld [vmem:[%s1 + $0x110] sm:$0xff]
    %v78 = vld [vmem:[%s1 + $0x118] sm:$0xff]
    %v79 = vld [vmem:[%s1 + $0x120] sm:$0xff]
    %v80 = vld [vmem:[%s1 + $0x128] sm:$0xff]
    %v81 = vld [vmem:[%s1 + $0x130] sm:$0xff]
    %v82 = vld [vmem:[%s1 + $0x138] sm:$0xff]
    %v83 = vld [vmem:[%s1 + $0x140] sm:$0xff]
    %v84 = vld [vmem:[%s1 + $0x148] sm:$0xff]
    %v85 = vld [vmem:[%s1 + $0x150] sm:$0xff]
    %v86 = vld [vmem:[%s1 + $0x158] sm:$0xff]
    %v87 = vld [vmem:[%s1 + $0x160] sm:$0xff]
    %v88 = vld [vmem:[%s1 + $0x168] sm:$0xff]
    %v89 = vld [vmem:[%s1 + $0x170] sm:$0xff]
    %v90 = vld [vmem:[%s1 + $0x178] sm:$0xff]
    %v91 = vld [vmem:[%s1 + $0x180] sm:$0xff]
    %v92 = vld [vmem:[%s1 + $0x188] sm:$0xff]
    %v93 = vld [vmem:[%s1 + $0x190] sm:$0xff]
    %v94 = vld [vmem:[%s1 + $0x198] sm:$0xff]
    %v95 = vld [vmem:[%s1 + $0x1a0] sm:$0xff]
    %v96 = vld [vmem:[%s1 + $0x1a8] sm:$0xff]
    %v97 = vld [vmem:[%s1 + $0x1b0] sm:$0xff]
    %v98 = vld [vmem:[%s1 + $0x1b8] sm:$0xff]
    %v99 = vld [vmem:[%s1 + $0x1c0] sm:$0xff]
    %v100 = vld [vmem:[%s1 + $0x1c8] sm:$0xff]
    %v101 = vld [vmem:[%s1 + $0x1d0] sm:$0xff]
    %v102 = vld [vmem:[%s1 + $0x1d8] sm:$0xff]
    %v103 = vld [vmem:[%s1 + $0x1e0] sm:$0xff]
    %v104 = vld [vmem:[%s1 + $0x1e8] sm:$0xff]
    %v105 = vld [vmem:[%s1 + $0x1f0] sm:$0xff]
    %v106 = vld [vmem:[%s1 + $0x1f8] sm:$0xff]
    %v107 = vld [vmem:[#allocation5] sm:$0xff]
    %v108 = vld [vmem:[#allocation5 + $0x8] sm:$0xff]
    %v109 = vld [vmem:[#allocation5 + $0x10] sm:$0xff]
    %v110 = vld [vmem:[#allocation5 + $0x18] sm:$0xff]
    %v111 = vld [vmem:[#allocation5 + $0x20] sm:$0xff]
    %v112 = vld [vmem:[#allocation5 + $0x28] sm:$0xff]
    %v113 = vld [vmem:[#allocation5 + $0x30] sm:$0xff]
    %v114 = vld [vmem:[#allocation5 + $0x38] sm:$0xff]
    %v115 = vld [vmem:[#allocation5 + $0x40] sm:$0xff]
    %v116 = vld [vmem:[#allocation5 + $0x48] sm:$0xff]
    %v117 = vld [vmem:[#allocation5 + $0x50] sm:$0xff]
    %v118 = vld [vmem:[#allocation5 + $0x58] sm:$0xff]
    %v119 = vld [vmem:[#allocation5 + $0x60] sm:$0xff]
    %v120 = vld [vmem:[#allocation5 + $0x68] sm:$0xff]
    %v121 = vld [vmem:[#allocation5 + $0x70] sm:$0xff]
    %v122 = vld [vmem:[#allocation5 + $0x78] sm:$0xff]
    %v123 = vld [vmem:[#allocation5 + $0x80] sm:$0xff]
    %v124 = vld [vmem:[#allocation5 + $0x88] sm:$0xff]
    %v125 = vld [vmem:[#allocation5 + $0x90] sm:$0xff]
    %v126 = vld [vmem:[#allocation5 + $0x98] sm:$0xff]
    %v127 = vld [vmem:[#allocation5 + $0xa0] sm:$0xff]
    %v128 = vld [vmem:[#allocation5 + $0xa8] sm:$0xff]
    %v129 = vld [vmem:[#allocation5 + $0xb0] sm:$0xff]
    %v130 = vld [vmem:[#allocation5 + $0xb8] sm:$0xff]
    %v131 = vld [vmem:[#allocation5 + $0xc0] sm:$0xff]
    %v132 = vld [vmem:[#allocation5 + $0xc8] sm:$0xff]
    %v133 = vld [vmem:[#allocation5 + $0xd0] sm:$0xff]
    %v134 = vld [vmem:[#allocation5 + $0xd8] sm:$0xff]
    %v135 = vld [vmem:[#allocation5 + $0xe0] sm:$0xff]
    %v136 = vld [vmem:[#allocation5 + $0xe8] sm:$0xff]
    %v137 = vld [vmem:[#allocation5 + $0xf0] sm:$0xff]
    %v138 = vld [vmem:[#allocation5 + $0xf8] sm:$0xff]
    %v139 = vld [vmem:[#allocation5 + $0x100] sm:$0xff]
    %v140 = vld [vmem:[#allocation5 + $0x108] sm:$0xff]
    %v141 = vld [vmem:[#allocation5 + $0x110] sm:$0xff]
    %v142 = vld [vmem:[#allocation5 + $0x118] sm:$0xff]
    %v143 = vld [vmem:[#allocation5 + $0x120] sm:$0xff]
    %v144 = vld [vmem:[#allocation5 + $0x128] sm:$0xff]
    %v145 = vld [vmem:[#allocation5 + $0x130] sm:$0xff]
    %v146 = vld [vmem:[#allocation5 + $0x138] sm:$0xff]
    %v147 = vld [vmem:[#allocation5 + $0x140] sm:$0xff]
    %v148 = vld [vmem:[#allocation5 + $0x148] sm:$0xff]
    %v149 = vld [vmem:[#allocation5 + $0x150] sm:$0xff]
    %v150 = vld [vmem:[#allocation5 + $0x158] sm:$0xff]
    %v151 = vld [vmem:[#allocation5 + $0x160] sm:$0xff]
    %v152 = vld [vmem:[#allocation5 + $0x168] sm:$0xff]
    %v153 = vld [vmem:[#allocation5 + $0x170] sm:$0xff]
    %v154 = vld [vmem:[#allocation5 + $0x178] sm:$0xff]
    %v155 = vld [vmem:[#allocation5 + $0x180] sm:$0xff]
    %v156 = vld [vmem:[#allocation5 + $0x188] sm:$0xff]
    %v157 = vld [vmem:[#allocation5 + $0x190] sm:$0xff]
    %v158 = vld [vmem:[#allocation5 + $0x198] sm:$0xff]
    %v159 = vld [vmem:[#allocation5 + $0x1a0] sm:$0xff]
    %v160 = vld [vmem:[#allocation5 + $0x1a8] sm:$0xff]
    %v161 = vld [vmem:[#allocation5 + $0x1b0] sm:$0xff]
    %v162 = vld [vmem:[#allocation5 + $0x1b8] sm:$0xff]
    %v163 = vld [vmem:[#allocation5 + $0x1c0] sm:$0xff]
    %v164 = vld [vmem:[#allocation5 + $0x1c8] sm:$0xff]
    %v165 = vld [vmem:[#allocation5 + $0x1d0] sm:$0xff]
    %v166 = vld [vmem:[#allocation5 + $0x1d8] sm:$0xff]
    %v167 = vld [vmem:[#allocation5 + $0x1e0] sm:$0xff]
    %v168 = vld [vmem:[#allocation5 + $0x1e8] sm:$0xff]
    %v169 = vld [vmem:[#allocation5 + $0x1f0] sm:$0xff]
    %v170 = vld [vmem:[#allocation5 + $0x1f8] sm:$0xff]
    %v171 = vld [vmem:[%s3] sm:$0xf]
    %v172 = vld [vmem:[%s0] sm:$0xff]
    %v174 = vlaneseq
    %v175 = vshrl.u32 %v174, 7
    %v176 = vsub.s32 0, %v175
    %v177 = vrot.slane %v171, %v176
    %v178 = vlaneseq
    %v179 = vshrl.u32 %v178, 7
    %v180 = vsub.s32 1, %v179
    %v181 = vrot.slane %v171, %v180
    %v182 = vlaneseq
    %v183 = vshrl.u32 %v182, 7
    %v184 = vsub.s32 2, %v183
    %v185 = vrot.slane %v171, %v184
    %v186 = vlaneseq
    %v187 = vshrl.u32 %v186, 7
    %v188 = vsub.s32 3, %v187
    %v189 = vrot.slane %v171, %v188
    %194 = vmatprep.subr.mxu0 %v44
    %195 = vmatpush1.msra.mxu0 %v43
    %196 = vmatprep.subr.mxu0 %v48
    %197 = vmatpush1.msra.mxu0 %v47
    %198 = vmatprep.subr.mxu0 %v52
    %199 = vmatpush1.msra.mxu0 %v51
    %200 = vmatprep.subr.mxu0 %v56
    %201 = vmatpush1.msra.mxu0 %v55
    %202 = vmatprep.subr.mxu0 %v60
    %203 = vmatpush1.msra.mxu0 %v59
    %204 = vmatprep.subr.mxu0 %v64
    %205 = vmatpush1.msra.mxu0 %v63
    %206 = vmatprep.subr.mxu0 %v68
    %207 = vmatpush1.msra.mxu0 %v67
    %208 = vmatprep.subr.mxu0 %v72
    %209 = vmatpush1.msra.mxu0 %v71
    %210 = vmatprep.subr.mxu0 %v76
    %211 = vmatpush1.msra.mxu0 %v75
    %212 = vmatprep.subr.mxu0 %v80
    %213 = vmatpush1.msra.mxu0 %v79
    %214 = vmatprep.subr.mxu0 %v84
    %215 = vmatpush1.msra.mxu0 %v83
    %216 = vmatprep.subr.mxu0 %v88
    %217 = vmatpush1.msra.mxu0 %v87
    %218 = vmatprep.subr.mxu0 %v92
    %219 = vmatpush1.msra.mxu0 %v91
    %220 = vmatprep.subr.mxu0 %v96
    %221 = vmatpush1.msra.mxu0 %v95
    %222 = vmatprep.subr.mxu0 %v100
    %223 = vmatpush1.msra.mxu0 %v99
    %224 = vmatprep.subr.mxu0 %v104
    %225 = vmatpush1.msra.mxu0 %v103
    %226 = vmatprep.subr.mxu0 0.0
    %227 = vmatpush1.msra.mxu0 0.0
    %228 = vmatprep.subr.mxu0 0.0
    %229 = vmatpush1.msra.mxu0 0.0
    %230 = vmatprep.subr.mxu0 0.0
    %231 = vmatpush1.msra.mxu0 0.0
    %232 = vmatprep.subr.mxu0 0.0
    %233 = vmatpush1.msra.mxu0 0.0
    %234 = vmatprep.subr.mxu0 0.0
    %235 = vmatpush1.msra.mxu0 0.0
    %236 = vmatprep.subr.mxu0 0.0
    %237 = vmatpush1.msra.mxu0 0.0
    %238 = vmatprep.subr.mxu0 0.0
    %239 = vmatpush1.msra.mxu0 0.0
    %240 = vmatprep.subr.mxu0 0.0
    %241 = vmatpush1.msra.mxu0 0.0
    %242 = vmatprep.subr.mxu0 0.0
    %243 = vmatpush1.msra.mxu0 0.0
    %244 = vmatprep.subr.mxu0 0.0
    %245 = vmatpush1.msra.mxu0 0.0
    %246 = vmatprep.subr.mxu0 0.0
    %247 = vmatpush1.msra.mxu0 0.0
    %248 = vmatprep.subr.mxu0 0.0
    %249 = vmatpush1.msra.mxu0 0.0
    %250 = vmatprep.subr.mxu0 0.0
    %251 = vmatpush1.msra.mxu0 0.0
    %252 = vmatprep.subr.mxu0 0.0
    %253 = vmatpush1.msra.mxu0 0.0
    %254 = vmatprep.subr.mxu0 0.0
    %255 = vmatpush1.msra.mxu0 0.0
    %256 = vmatprep.subr.mxu0 0.0
    %257 = vmatpush1.msra.mxu0 0.0
    %258 = vmatprep.mubr.f32.mxu0 0.0
    %259 = vmatmul.mubr.f32.gmra.mrb[0].mxu0 %v172
    %v260 = vpop.f32.mrb[0].mxu0
    %v261 = vadd.f32 %v177, %v260
    %v262 = vpop.f32.mrb[0].mxu0
    %v263 = vadd.f32 %v181, %v262
    %264 = vdwg.mxu0
    %265 = vmatprep.subr.mxu0 %v46
    %266 = vmatpush1.msra.mxu0 %v45
    %267 = vmatprep.subr.mxu0 %v50
    %268 = vmatpush1.msra.mxu0 %v49
    %269 = vmatprep.subr.mxu0 %v54
    %270 = vmatpush1.msra.mxu0 %v53
    %271 = vmatprep.subr.mxu0 %v58
    %272 = vmatpush1.msra.mxu0 %v57
    %273 = vmatprep.subr.mxu0 %v62
    %274 = vmatpush1.msra.mxu0 %v61
    %275 = vmatprep.subr.mxu0 %v66
    %276 = vmatpush1.msra.mxu0 %v65
    %277 = vmatprep.subr.mxu0 %v70
    %278 = vmatpush1.msra.mxu0 %v69
    %279 = vmatprep.subr.mxu0 %v74
    %280 = vmatpush1.msra.mxu0 %v73
    %281 = vmatprep.subr.mxu0 %v78
    %282 = vmatpush1.msra.mxu0 %v77
    %283 = vmatprep.subr.mxu0 %v82
    %284 = vmatpush1.msra.mxu0 %v81
    %285 = vmatprep.subr.mxu0 %v86
    %286 = vmatpush1.msra.mxu0 %v85
    %287 = vmatprep.subr.mxu0 %v90
    %288 = vmatpush1.msra.mxu0 %v89
    %289 = vmatprep.subr.mxu0 %v94
    %290 = vmatpush1.msra.mxu0 %v93
    %291 = vmatprep.subr.mxu0 %v98
    %292 = vmatpush1.msra.mxu0 %v97
    %293 = vmatprep.subr.mxu0 %v102
    %294 = vmatpush1.msra.mxu0 %v101
    %295 = vmatprep.subr.mxu0 %v106
    %296 = vmatpush1.msra.mxu0 %v105
    %297 = vmatprep.subr.mxu0 0.0
    %298 = vmatpush1.msra.mxu0 0.0
    %299 = vmatprep.subr.mxu0 0.0
    %300 = vmatpush1.msra.mxu0 0.0
    %301 = vmatprep.subr.mxu0 0.0
    %302 = vmatpush1.msra.mxu0 0.0
    %303 = vmatprep.subr.mxu0 0.0
    %304 = vmatpush1.msra.mxu0 0.0
    %305 = vmatprep.subr.mxu0 0.0
    %306 = vmatpush1.msra.mxu0 0.0
    %307 = vmatprep.subr.mxu0 0.0
    %308 = vmatpush1.msra.mxu0 0.0
    %309 = vmatprep.subr.mxu0 0.0
    %310 = vmatpush1.msra.mxu0 0.0
    %311 = vmatprep.subr.mxu0 0.0
    %312 = vmatpush1.msra.mxu0 0.0
    %313 = vmatprep.subr.mxu0 0.0
    %314 = vmatpush1.msra.mxu0 0.0
    %315 = vmatprep.subr.mxu0 0.0
    %316 = vmatpush1.msra.mxu0 0.0
    %317 = vmatprep.subr.mxu0 0.0
    %318 = vmatpush1.msra.mxu0 0.0
    %319 = vmatprep.subr.mxu0 0.0
    %320 = vmatpush1.msra.mxu0 0.0
    %321 = vmatprep.subr.mxu0 0.0
    %322 = vmatpush1.msra.mxu0 0.0
    %323 = vmatprep.subr.mxu0 0.0
    %324 = vmatpush1.msra.mxu0 0.0
    %325 = vmatprep.subr.mxu0 0.0
    %326 = vmatpush1.msra.mxu0 0.0
    %327 = vmatprep.subr.mxu0 0.0
    %328 = vmatpush1.msra.mxu0 0.0
    %329 = vmatprep.mubr.f32.mxu0 0.0
    %330 = vmatmul.mubr.f32.gmra.mrb[0].mxu0 %v172
    %v331 = vpop.f32.mrb[0].mxu0
    %v332 = vadd.f32 %v185, %v331
    %v333 = vpop.f32.mrb[0].mxu0
    %v334 = vadd.f32 %v189, %v333
    %335 = vdwg.mxu0
    %336 = vst [vmem:[#allocation2] sm:$0xff] %v261
    %337 = vst [vmem:[#allocation2 + $0x8] sm:$0xff] %v263
    %338 = vst [vmem:[#allocation2 + $0x10] sm:$0xff] %v332
    %339 = vst [vmem:[#allocation2 + $0x18] sm:$0xff] %v334
    %s340 = scalar_lea.vmem %s0, 8
    %v341 = vld [vmem:[%s340] sm:$0xff]
    %342 = vmatprep.subr.mxu0 %v44
    %343 = vmatpush1.msra.mxu0 %v43
    %344 = vmatprep.subr.mxu0 %v48
    %345 = vmatpush1.msra.mxu0 %v47
    %346 = vmatprep.subr.mxu0 %v52
    %347 = vmatpush1.msra.mxu0 %v51
    %348 = vmatprep.subr.mxu0 %v56
    %349 = vmatpush1.msra.mxu0 %v55
    %350 = vmatprep.subr.mxu0 %v60
    %351 = vmatpush1.msra.mxu0 %v59
    %352 = vmatprep.subr.mxu0 %v64
    %353 = vmatpush1.msra.mxu0 %v63
    %354 = vmatprep.subr.mxu0 %v68
    %355 = vmatpush1.msra.mxu0 %v67
    %356 = vmatprep.subr.mxu0 %v72
    %357 = vmatpush1.msra.mxu0 %v71
    %358 = vmatprep.subr.mxu0 %v76
    %359 = vmatpush1.msra.mxu0 %v75
    %360 = vmatprep.subr.mxu0 %v80
    %361 = vmatpush1.msra.mxu0 %v79
    %362 = vmatprep.subr.mxu0 %v84
    %363 = vmatpush1.msra.mxu0 %v83
    %364 = vmatprep.subr.mxu0 %v88
    %365 = vmatpush1.msra.mxu0 %v87
    %366 = vmatprep.subr.mxu0 %v92
    %367 = vmatpush1.msra.mxu0 %v91
    %368 = vmatprep.subr.mxu0 %v96
    %369 = vmatpush1.msra.mxu0 %v95
    %370 = vmatprep.subr.mxu0 %v100
    %371 = vmatpush1.msra.mxu0 %v99
    %372 = vmatprep.subr.mxu0 %v104
    %373 = vmatpush1.msra.mxu0 %v103
    %374 = vmatprep.subr.mxu0 0.0
    %375 = vmatpush1.msra.mxu0 0.0
    %376 = vmatprep.subr.mxu0 0.0
    %377 = vmatpush1.msra.mxu0 0.0
    %378 = vmatprep.subr.mxu0 0.0
    %379 = vmatpush1.msra.mxu0 0.0
    %380 = vmatprep.subr.mxu0 0.0
    %381 = vmatpush1.msra.mxu0 0.0
    %382 = vmatprep.subr.mxu0 0.0
    %383 = vmatpush1.msra.mxu0 0.0
    %384 = vmatprep.subr.mxu0 0.0
    %385 = vmatpush1.msra.mxu0 0.0
    %386 = vmatprep.subr.mxu0 0.0
    %387 = vmatpush1.msra.mxu0 0.0
    %388 = vmatprep.subr.mxu0 0.0
    %389 = vmatpush1.msra.mxu0 0.0
    %390 = vmatprep.subr.mxu0 0.0
    %391 = vmatpush1.msra.mxu0 0.0
    %392 = vmatprep.subr.mxu0 0.0
    %393 = vmatpush1.msra.mxu0 0.0
    %394 = vmatprep.subr.mxu0 0.0
    %395 = vmatpush1.msra.mxu0 0.0
    %396 = vmatprep.subr.mxu0 0.0
    %397 = vmatpush1.msra.mxu0 0.0
    %398 = vmatprep.subr.mxu0 0.0
    %399 = vmatpush1.msra.mxu0 0.0
    %400 = vmatprep.subr.mxu0 0.0
    %401 = vmatpush1.msra.mxu0 0.0
    %402 = vmatprep.subr.mxu0 0.0
    %403 = vmatpush1.msra.mxu0 0.0
    %404 = vmatprep.subr.mxu0 0.0
    %405 = vmatpush1.msra.mxu0 0.0
    %406 = vmatprep.mubr.f32.mxu0 0.0
    %407 = vmatmul.mubr.f32.gmra.mrb[0].mxu0 %v341
    %v408 = vpop.f32.mrb[0].mxu0
    %v409 = vadd.f32 %v177, %v408
    %v410 = vpop.f32.mrb[0].mxu0
    %v411 = vadd.f32 %v181, %v410
    %412 = vdwg.mxu0
    %413 = vmatprep.subr.mxu0 %v46
    %414 = vmatpush1.msra.mxu0 %v45
    %415 = vmatprep.subr.mxu0 %v50
    %416 = vmatpush1.msra.mxu0 %v49
    %417 = vmatprep.subr.mxu0 %v54
    %418 = vmatpush1.msra.mxu0 %v53
    %419 = vmatprep.subr.mxu0 %v58
    %420 = vmatpush1.msra.mxu0 %v57
    %421 = vmatprep.subr.mxu0 %v62
    %422 = vmatpush1.msra.mxu0 %v61
    %423 = vmatprep.subr.mxu0 %v66
    %424 = vmatpush1.msra.mxu0 %v65
    %425 = vmatprep.subr.mxu0 %v70
    %426 = vmatpush1.msra.mxu0 %v69
    %427 = vmatprep.subr.mxu0 %v74
    %428 = vmatpush1.msra.mxu0 %v73
    %429 = vmatprep.subr.mxu0 %v78
    %430 = vmatpush1.msra.mxu0 %v77
    %431 = vmatprep.subr.mxu0 %v82
    %432 = vmatpush1.msra.mxu0 %v81
    %433 = vmatprep.subr.mxu0 %v86
    %434 = vmatpush1.msra.mxu0 %v85
    %435 = vmatprep.subr.mxu0 %v90
    %436 = vmatpush1.msra.mxu0 %v89
    %437 = vmatprep.subr.mxu0 %v94
    %438 = vmatpush1.msra.mxu0 %v93
    %439 = vmatprep.subr.mxu0 %v98
    %440 = vmatpush1.msra.mxu0 %v97
    %441 = vmatprep.subr.mxu0 %v102
    %442 = vmatpush1.msra.mxu0 %v101
    %443 = vmatprep.subr.mxu0 %v106
    %444 = vmatpush1.msra.mxu0 %v105
    %445 = vmatprep.subr.mxu0 0.0
    %446 = vmatpush1.msra.mxu0 0.0
    %447 = vmatprep.subr.mxu0 0.0
    %448 = vmatpush1.msra.mxu0 0.0
    %449 = vmatprep.subr.mxu0 0.0
    %450 = vmatpush1.msra.mxu0 0.0
    %451 = vmatprep.subr.mxu0 0.0
    %452 = vmatpush1.msra.mxu0 0.0
    %453 = vmatprep.subr.mxu0 0.0
    %454 = vmatpush1.msra.mxu0 0.0
    %455 = vmatprep.subr.mxu0 0.0
    %456 = vmatpush1.msra.mxu0 0.0
    %457 = vmatprep.subr.mxu0 0.0
    %458 = vmatpush1.msra.mxu0 0.0
    %459 = vmatprep.subr.mxu0 0.0
    %460 = vmatpush1.msra.mxu0 0.0
    %461 = vmatprep.subr.mxu0 0.0
    %462 = vmatpush1.msra.mxu0 0.0
    %463 = vmatprep.subr.mxu0 0.0
    %464 = vmatpush1.msra.mxu0 0.0
    %465 = vmatprep.subr.mxu0 0.0
    %466 = vmatpush1.msra.mxu0 0.0
    %467 = vmatprep.subr.mxu0 0.0
    %468 = vmatpush1.msra.mxu0 0.0
    %469 = vmatprep.subr.mxu0 0.0
    %470 = vmatpush1.msra.mxu0 0.0
    %471 = vmatprep.subr.mxu0 0.0
    %472 = vmatpush1.msra.mxu0 0.0
    %473 = vmatprep.subr.mxu0 0.0
    %474 = vmatpush1.msra.mxu0 0.0
    %475 = vmatprep.subr.mxu0 0.0
    %476 = vmatpush1.msra.mxu0 0.0
    %477 = vmatprep.mubr.f32.mxu0 0.0
    %478 = vmatmul.mubr.f32.gmra.mrb[0].mxu0 %v341
    %v479 = vpop.f32.mrb[0].mxu0
    %v480 = vadd.f32 %v185, %v479
    %v481 = vpop.f32.mrb[0].mxu0
    %v482 = vadd.f32 %v189, %v481
    %483 = vdwg.mxu0
    %s484 = scalar_lea.vmem [#allocation2], 32
    %485 = vst [vmem:[%s484] sm:$0xff] %v409
    %486 = vst [vmem:[%s484 + $0x8] sm:$0xff] %v411
    %487 = vst [vmem:[%s484 + $0x10] sm:$0xff] %v480
    %488 = vst [vmem:[%s484 + $0x18] sm:$0xff] %v482
    %s489 = scalar_lea.vmem %s0, 16
    %v490 = vld [vmem:[%s489] sm:$0xff]
    %491 = vmatprep.subr.mxu0 %v44
    %492 = vmatpush1.msra.mxu0 %v43
    %493 = vmatprep.subr.mxu0 %v48
    %494 = vmatpush1.msra.mxu0 %v47
    %495 = vmatprep.subr.mxu0 %v52
    %496 = vmatpush1.msra.mxu0 %v51
    %497 = vmatprep.subr.mxu0 %v56
    %498 = vmatpush1.msra.mxu0 %v55
    %499 = vmatprep.subr.mxu0 %v60
    %500 = vmatpush1.msra.mxu0 %v59
    %501 = vmatprep.subr.mxu0 %v64
    %502 = vmatpush1.msra.mxu0 %v63
    %503 = vmatprep.subr.mxu0 %v68
    %504 = vmatpush1.msra.mxu0 %v67
    %505 = vmatprep.subr.mxu0 %v72
    %506 = vmatpush1.msra.mxu0 %v71
    %507 = vmatprep.subr.mxu0 %v76
    %508 = vmatpush1.msra.mxu0 %v75
    %509 = vmatprep.subr.mxu0 %v80
    %510 = vmatpush1.msra.mxu0 %v79
    %511 = vmatprep.subr.mxu0 %v84
    %512 = vmatpush1.msra.mxu0 %v83
    %513 = vmatprep.subr.mxu0 %v88
    %514 = vmatpush1.msra.mxu0 %v87
    %515 = vmatprep.subr.mxu0 %v92
    %516 = vmatpush1.msra.mxu0 %v91
    %517 = vmatprep.subr.mxu0 %v96
    %518 = vmatpush1.msra.mxu0 %v95
    %519 = vmatprep.subr.mxu0 %v100
    %520 = vmatpush1.msra.mxu0 %v99
    %521 = vmatprep.subr.mxu0 %v104
    %522 = vmatpush1.msra.mxu0 %v103
    %523 = vmatprep.subr.mxu0 0.0
    %524 = vmatpush1.msra.mxu0 0.0
    %525 = vmatprep.subr.mxu0 0.0
    %526 = vmatpush1.msra.mxu0 0.0
    %527 = vmatprep.subr.mxu0 0.0
    %528 = vmatpush1.msra.mxu0 0.0
    %529 = vmatprep.subr.mxu0 0.0
    %530 = vmatpush1.msra.mxu0 0.0
    %531 = vmatprep.subr.mxu0 0.0
    %532 = vmatpush1.msra.mxu0 0.0
    %533 = vmatprep.subr.mxu0 0.0
    %534 = vmatpush1.msra.mxu0 0.0
    %535 = vmatprep.subr.mxu0 0.0
    %536 = vmatpush1.msra.mxu0 0.0
    %537 = vmatprep.subr.mxu0 0.0
    %538 = vmatpush1.msra.mxu0 0.0
    %539 = vmatprep.subr.mxu0 0.0
    %540 = vmatpush1.msra.mxu0 0.0
    %541 = vmatprep.subr.mxu0 0.0
    %542 = vmatpush1.msra.mxu0 0.0
    %543 = vmatprep.subr.mxu0 0.0
    %544 = vmatpush1.msra.mxu0 0.0
    %545 = vmatprep.subr.mxu0 0.0
    %546 = vmatpush1.msra.mxu0 0.0
    %547 = vmatprep.subr.mxu0 0.0
    %548 = vmatpush1.msra.mxu0 0.0
    %549 = vmatprep.subr.mxu0 0.0
    %550 = vmatpush1.msra.mxu0 0.0
    %551 = vmatprep.subr.mxu0 0.0
    %552 = vmatpush1.msra.mxu0 0.0
    %553 = vmatprep.subr.mxu0 0.0
    %554 = vmatpush1.msra.mxu0 0.0
    %555 = vmatprep.mubr.f32.mxu0 0.0
    %556 = vmatmul.mubr.f32.gmra.mrb[0].mxu0 %v490
    %v557 = vpop.f32.mrb[0].mxu0
    %v558 = vadd.f32 %v177, %v557
    %v559 = vpop.f32.mrb[0].mxu0
    %v560 = vadd.f32 %v181, %v559
    %561 = vdwg.mxu0
    %562 = vmatprep.subr.mxu0 %v46
    %563 = vmatpush1.msra.mxu0 %v45
    %564 = vmatprep.subr.mxu0 %v50
    %565 = vmatpush1.msra.mxu0 %v49
    %566 = vmatprep.subr.mxu0 %v54
    %567 = vmatpush1.msra.mxu0 %v53
    %568 = vmatprep.subr.mxu0 %v58
    %569 = vmatpush1.msra.mxu0 %v57
    %570 = vmatprep.subr.mxu0 %v62
    %571 = vmatpush1.msra.mxu0 %v61
    %572 = vmatprep.subr.mxu0 %v66
    %573 = vmatpush1.msra.mxu0 %v65
    %574 = vmatprep.subr.mxu0 %v70
    %575 = vmatpush1.msra.mxu0 %v69
    %576 = vmatprep.subr.mxu0 %v74
    %577 = vmatpush1.msra.mxu0 %v73
    %578 = vmatprep.subr.mxu0 %v78
    %579 = vmatpush1.msra.mxu0 %v77
    %580 = vmatprep.subr.mxu0 %v82
    %581 = vmatpush1.msra.mxu0 %v81
    %582 = vmatprep.subr.mxu0 %v86
    %583 = vmatpush1.msra.mxu0 %v85
    %584 = vmatprep.subr.mxu0 %v90
    %585 = vmatpush1.msra.mxu0 %v89
    %586 = vmatprep.subr.mxu0 %v94
    %587 = vmatpush1.msra.mxu0 %v93
    %588 = vmatprep.subr.mxu0 %v98
    %589 = vmatpush1.msra.mxu0 %v97
    %590 = vmatprep.subr.mxu0 %v102
    %591 = vmatpush1.msra.mxu0 %v101
    %592 = vmatprep.subr.mxu0 %v106
    %593 = vmatpush1.msra.mxu0 %v105
    %594 = vmatprep.subr.mxu0 0.0
    %595 = vmatpush1.msra.mxu0 0.0
    %596 = vmatprep.subr.mxu0 0.0
    %597 = vmatpush1.msra.mxu0 0.0
    %598 = vmatprep.subr.mxu0 0.0
    %599 = vmatpush1.msra.mxu0 0.0
    %600 = vmatprep.subr.mxu0 0.0
    %601 = vmatpush1.msra.mxu0 0.0
    %602 = vmatprep.subr.mxu0 0.0
    %603 = vmatpush1.msra.mxu0 0.0
    %604 = vmatprep.subr.mxu0 0.0
    %605 = vmatpush1.msra.mxu0 0.0
    %606 = vmatprep.subr.mxu0 0.0
    %607 = vmatpush1.msra.mxu0 0.0
    %608 = vmatprep.subr.mxu0 0.0
    %609 = vmatpush1.msra.mxu0 0.0
    %610 = vmatprep.subr.mxu0 0.0
    %611 = vmatpush1.msra.mxu0 0.0
    %612 = vmatprep.subr.mxu0 0.0
    %613 = vmatpush1.msra.mxu0 0.0
    %614 = vmatprep.subr.mxu0 0.0
    %615 = vmatpush1.msra.mxu0 0.0
    %616 = vmatprep.subr.mxu0 0.0
    %617 = vmatpush1.msra.mxu0 0.0
    %618 = vmatprep.subr.mxu0 0.0
    %619 = vmatpush1.msra.mxu0 0.0
    %620 = vmatprep.subr.mxu0 0.0
    %621 = vmatpush1.msra.mxu0 0.0
    %622 = vmatprep.subr.mxu0 0.0
    %623 = vmatpush1.msra.mxu0 0.0
    %624 = vmatprep.subr.mxu0 0.0
    %625 = vmatpush1.msra.mxu0 0.0
    %626 = vmatprep.mubr.f32.mxu0 0.0
    %627 = vmatmul.mubr.f32.gmra.mrb[0].mxu0 %v490
    %v628 = vpop.f32.mrb[0].mxu0
    %v629 = vadd.f32 %v185, %v628
    %v630 = vpop.f32.mrb[0].mxu0
    %v631 = vadd.f32 %v189, %v630
    %632 = vdwg.mxu0
    %s633 = scalar_lea.vmem [#allocation2], 64
    %634 = vst [vmem:[%s633] sm:$0xff] %v558
    %635 = vst [vmem:[%s633 + $0x8] sm:$0xff] %v560
    %636 = vst [vmem:[%s633 + $0x10] sm:$0xff] %v629
    %637 = vst [vmem:[%s633 + $0x18] sm:$0xff] %v631
    %s638 = scalar_lea.vmem %s0, 24
    %v639 = vld [vmem:[%s638] sm:$0xff]
    %640 = vmatprep.subr.mxu0 %v44
    %641 = vmatpush1.msra.mxu0 %v43
    %642 = vmatprep.subr.mxu0 %v48
    %643 = vmatpush1.msra.mxu0 %v47
    %644 = vmatprep.subr.mxu0 %v52
    %645 = vmatpush1.msra.mxu0 %v51
    %646 = vmatprep.subr.mxu0 %v56
    %647 = vmatpush1.msra.mxu0 %v55
    %648 = vmatprep.subr.mxu0 %v60
    %649 = vmatpush1.msra.mxu0 %v59
    %650 = vmatprep.subr.mxu0 %v64
    %651 = vmatpush1.msra.mxu0 %v63
    %652 = vmatprep.subr.mxu0 %v68
    %653 = vmatpush1.msra.mxu0 %v67
    %654 = vmatprep.subr.mxu0 %v72
    %655 = vmatpush1.msra.mxu0 %v71
    %656 = vmatprep.subr.mxu0 %v76
    %657 = vmatpush1.msra.mxu0 %v75
    %658 = vmatprep.subr.mxu0 %v80
    %659 = vmatpush1.msra.mxu0 %v79
    %660 = vmatprep.subr.mxu0 %v84
    %661 = vmatpush1.msra.mxu0 %v83
    %662 = vmatprep.subr.mxu0 %v88
    %663 = vmatpush1.msra.mxu0 %v87
    %664 = vmatprep.subr.mxu0 %v92
    %665 = vmatpush1.msra.mxu0 %v91
    %666 = vmatprep.subr.mxu0 %v96
    %667 = vmatpush1.msra.mxu0 %v95
    %668 = vmatprep.subr.mxu0 %v100
    %669 = vmatpush1.msra.mxu0 %v99
    %670 = vmatprep.subr.mxu0 %v104
    %671 = vmatpush1.msra.mxu0 %v103
    %672 = vmatprep.subr.mxu0 0.0
    %673 = vmatpush1.msra.mxu0 0.0
    %674 = vmatprep.subr.mxu0 0.0
    %675 = vmatpush1.msra.mxu0 0.0
    %676 = vmatprep.subr.mxu0 0.0
    %677 = vmatpush1.msra.mxu0 0.0
    %678 = vmatprep.subr.mxu0 0.0
    %679 = vmatpush1.msra.mxu0 0.0
    %680 = vmatprep.subr.mxu0 0.0
    %681 = vmatpush1.msra.mxu0 0.0
    %682 = vmatprep.subr.mxu0 0.0
    %683 = vmatpush1.msra.mxu0 0.0
    %684 = vmatprep.subr.mxu0 0.0
    %685 = vmatpush1.msra.mxu0 0.0
    %686 = vmatprep.subr.mxu0 0.0
    %687 = vmatpush1.msra.mxu0 0.0
    %688 = vmatprep.subr.mxu0 0.0
    %689 = vmatpush1.msra.mxu0 0.0
    %690 = vmatprep.subr.mxu0 0.0
    %691 = vmatpush1.msra.mxu0 0.0
    %692 = vmatprep.subr.mxu0 0.0
    %693 = vmatpush1.msra.mxu0 0.0
    %694 = vmatprep.subr.mxu0 0.0
    %695 = vmatpush1.msra.mxu0 0.0
    %696 = vmatprep.subr.mxu0 0.0
    %697 = vmatpush1.msra.mxu0 0.0
    %698 = vmatprep.subr.mxu0 0.0
    %699 = vmatpush1.msra.mxu0 0.0
    %700 = vmatprep.subr.mxu0 0.0
    %701 = vmatpush1.msra.mxu0 0.0
    %702 = vmatprep.subr.mxu0 0.0
    %703 = vmatpush1.msra.mxu0 0.0
    %704 = vmatprep.mubr.f32.mxu0 0.0
    %705 = vmatmul.mubr.f32.gmra.mrb[0].mxu0 %v639
    %v706 = vpop.f32.mrb[0].mxu0
    %v707 = vadd.f32 %v177, %v706
    %v708 = vpop.f32.mrb[0].mxu0
    %v709 = vadd.f32 %v181, %v708
    %710 = vdwg.mxu0
    %711 = vmatprep.subr.mxu0 %v46
    %712 = vmatpush1.msra.mxu0 %v45
    %713 = vmatprep.subr.mxu0 %v50
    %714 = vmatpush1.msra.mxu0 %v49
    %715 = vmatprep.subr.mxu0 %v54
    %716 = vmatpush1.msra.mxu0 %v53
    %717 = vmatprep.subr.mxu0 %v58
    %718 = vmatpush1.msra.mxu0 %v57
    %719 = vmatprep.subr.mxu0 %v62
    %720 = vmatpush1.msra.mxu0 %v61
    %721 = vmatprep.subr.mxu0 %v66
    %722 = vmatpush1.msra.mxu0 %v65
    %723 = vmatprep.subr.mxu0 %v70
    %724 = vmatpush1.msra.mxu0 %v69
    %725 = vmatprep.subr.mxu0 %v74
    %726 = vmatpush1.msra.mxu0 %v73
    %727 = vmatprep.subr.mxu0 %v78
    %728 = vmatpush1.msra.mxu0 %v77
    %729 = vmatprep.subr.mxu0 %v82
    %730 = vmatpush1.msra.mxu0 %v81
    %731 = vmatprep.subr.mxu0 %v86
    %732 = vmatpush1.msra.mxu0 %v85
    %733 = vmatprep.subr.mxu0 %v90
    %734 = vmatpush1.msra.mxu0 %v89
    %735 = vmatprep.subr.mxu0 %v94
    %736 = vmatpush1.msra.mxu0 %v93
    %737 = vmatprep.subr.mxu0 %v98
    %738 = vmatpush1.msra.mxu0 %v97
    %739 = vmatprep.subr.mxu0 %v102
    %740 = vmatpush1.msra.mxu0 %v101
    %741 = vmatprep.subr.mxu0 %v106
    %742 = vmatpush1.msra.mxu0 %v105
    %743 = vmatprep.subr.mxu0 0.0
    %744 = vmatpush1.msra.mxu0 0.0
    %745 = vmatprep.subr.mxu0 0.0
    %746 = vmatpush1.msra.mxu0 0.0
    %747 = vmatprep.subr.mxu0 0.0
    %748 = vmatpush1.msra.mxu0 0.0
    %749 = vmatprep.subr.mxu0 0.0
    %750 = vmatpush1.msra.mxu0 0.0
    %751 = vmatprep.subr.mxu0 0.0
    %752 = vmatpush1.msra.mxu0 0.0
    %753 = vmatprep.subr.mxu0 0.0
    %754 = vmatpush1.msra.mxu0 0.0
    %755 = vmatprep.subr.mxu0 0.0
    %756 = vmatpush1.msra.mxu0 0.0
    %757 = vmatprep.subr.mxu0 0.0
    %758 = vmatpush1.msra.mxu0 0.0
    %759 = vmatprep.subr.mxu0 0.0
    %760 = vmatpush1.msra.mxu0 0.0
    %761 = vmatprep.subr.mxu0 0.0
    %762 = vmatpush1.msra.mxu0 0.0
    %763 = vmatprep.subr.mxu0 0.0
    %764 = vmatpush1.msra.mxu0 0.0
    %765 = vmatprep.subr.mxu0 0.0
    %766 = vmatpush1.msra.mxu0 0.0
    %767 = vmatprep.subr.mxu0 0.0
    %768 = vmatpush1.msra.mxu0 0.0
    %769 = vmatprep.subr.mxu0 0.0
    %770 = vmatpush1.msra.mxu0 0.0
    %771 = vmatprep.subr.mxu0 0.0
    %772 = vmatpush1.msra.mxu0 0.0
    %773 = vmatprep.subr.mxu0 0.0
    %774 = vmatpush1.msra.mxu0 0.0
    %775 = vmatprep.mubr.f32.mxu0 0.0
    %776 = vmatmul.mubr.f32.gmra.mrb[0].mxu0 %v639
    %v777 = vpop.f32.mrb[0].mxu0
    %v778 = vadd.f32 %v185, %v777
    %v779 = vpop.f32.mrb[0].mxu0
    %v780 = vadd.f32 %v189, %v779
    %781 = vdwg.mxu0
    %s782 = scalar_lea.vmem [#allocation2], 96
    %783 = vst [vmem:[%s782] sm:$0xff] %v707
    %784 = vst [vmem:[%s782 + $0x8] sm:$0xff] %v709
    %785 = vst [vmem:[%s782 + $0x10] sm:$0xff] %v778
    %786 = vst [vmem:[%s782 + $0x18] sm:$0xff] %v780
    %s787 = scalar_lea.vmem %s0, 32
    %v788 = vld [vmem:[%s787] sm:$0xff]
    %789 = vmatprep.subr.mxu0 %v44
    %790 = vmatpush1.msra.mxu0 %v43
    %791 = vmatprep.subr.mxu0 %v48
    %792 = vmatpush1.msra.mxu0 %v47
    %793 = vmatprep.subr.mxu0 %v52
    %794 = vmatpush1.msra.mxu0 %v51
    %795 = vmatprep.subr.mxu0 %v56
    %796 = vmatpush1.msra.mxu0 %v55
    %797 = vmatprep.subr.mxu0 %v60
    %798 = vmatpush1.msra.mxu0 %v59
    %799 = vmatprep.subr.mxu0 %v64
    %800 = vmatpush1.msra.mxu0 %v63
    %801 = vmatprep.subr.mxu0 %v68
    %802 = vmatpush1.msra.mxu0 %v67
    %803 = vmatprep.subr.mxu0 %v72
    %804 = vmatpush1.msra.mxu0 %v71
    %805 = vmatprep.subr.mxu0 %v76
    %806 = vmatpush1.msra.mxu0 %v75
    %807 = vmatprep.subr.mxu0 %v80
    %808 = vmatpush1.msra.mxu0 %v79
    %809 = vmatprep.subr.mxu0 %v84
    %810 = vmatpush1.msra.mxu0 %v83
    %811 = vmatprep.subr.mxu0 %v88
    %812 = vmatpush1.msra.mxu0 %v87
    %813 = vmatprep.subr.mxu0 %v92
    %814 = vmatpush1.msra.mxu0 %v91
    %815 = vmatprep.subr.mxu0 %v96
    %816 = vmatpush1.msra.mxu0 %v95
    %817 = vmatprep.subr.mxu0 %v100
    %818 = vmatpush1.msra.mxu0 %v99
    %819 = vmatprep.subr.mxu0 %v104
    %820 = vmatpush1.msra.mxu0 %v103
    %821 = vmatprep.subr.mxu0 0.0
    %822 = vmatpush1.msra.mxu0 0.0
    %823 = vmatprep.subr.mxu0 0.0
    %824 = vmatpush1.msra.mxu0 0.0
    %825 = vmatprep.subr.mxu0 0.0
    %826 = vmatpush1.msra.mxu0 0.0
    %827 = vmatprep.subr.mxu0 0.0
    %828 = vmatpush1.msra.mxu0 0.0
    %829 = vmatprep.subr.mxu0 0.0
    %830 = vmatpush1.msra.mxu0 0.0
    %831 = vmatprep.subr.mxu0 0.0
    %832 = vmatpush1.msra.mxu0 0.0
    %833 = vmatprep.subr.mxu0 0.0
    %834 = vmatpush1.msra.mxu0 0.0
    %835 = vmatprep.subr.mxu0 0.0
    %836 = vmatpush1.msra.mxu0 0.0
    %837 = vmatprep.subr.mxu0 0.0
    %838 = vmatpush1.msra.mxu0 0.0
    %839 = vmatprep.subr.mxu0 0.0
    %840 = vmatpush1.msra.mxu0 0.0
    %841 = vmatprep.subr.mxu0 0.0
    %842 = vmatpush1.msra.mxu0 0.0
    %843 = vmatprep.subr.mxu0 0.0
    %844 = vmatpush1.msra.mxu0 0.0
    %845 = vmatprep.subr.mxu0 0.0
    %846 = vmatpush1.msra.mxu0 0.0
    %847 = vmatprep.subr.mxu0 0.0
    %848 = vmatpush1.msra.mxu0 0.0
    %849 = vmatprep.subr.mxu0 0.0
    %850 = vmatpush1.msra.mxu0 0.0
    %851 = vmatprep.subr.mxu0 0.0
    %852 = vmatpush1.msra.mxu0 0.0
    %853 = vmatprep.mubr.f32.mxu0 0.0
    %854 = vmatmul.mubr.f32.gmra.mrb[0].mxu0 %v788
    %v855 = vpop.f32.mrb[0].mxu0
    %v856 = vadd.f32 %v177, %v855
    %v857 = vpop.f32.mrb[0].mxu0
    %v858 = vadd.f32 %v181, %v857
    %859 = vdwg.mxu0
    %860 = vmatprep.subr.mxu0 %v46
    %861 = vmatpush1.msra.mxu0 %v45
    %862 = vmatprep.subr.mxu0 %v50
    %863 = vmatpush1.msra.mxu0 %v49
    %864 = vmatprep.subr.mxu0 %v54
    %865 = vmatpush1.msra.mxu0 %v53
    %866 = vmatprep.subr.mxu0 %v58
    %867 = vmatpush1.msra.mxu0 %v57
    %868 = vmatprep.subr.mxu0 %v62
    %869 = vmatpush1.msra.mxu0 %v61
    %870 = vmatprep.subr.mxu0 %v66
    %871 = vmatpush1.msra.mxu0 %v65
    %872 = vmatprep.subr.mxu0 %v70
    %873 = vmatpush1.msra.mxu0 %v69
    %874 = vmatprep.subr.mxu0 %v74
    %875 = vmatpush1.msra.mxu0 %v73
    %876 = vmatprep.subr.mxu0 %v78
    %877 = vmatpush1.msra.mxu0 %v77
    %878 = vmatprep.subr.mxu0 %v82
    %879 = vmatpush1.msra.mxu0 %v81
    %880 = vmatprep.subr.mxu0 %v86
    %881 = vmatpush1.msra.mxu0 %v85
    %882 = vmatprep.subr.mxu0 %v90
    %883 = vmatpush1.msra.mxu0 %v89
    %884 = vmatprep.subr.mxu0 %v94
    %885 = vmatpush1.msra.mxu0 %v93
    %886 = vmatprep.subr.mxu0 %v98
    %887 = vmatpush1.msra.mxu0 %v97
    %888 = vmatprep.subr.mxu0 %v102
    %889 = vmatpush1.msra.mxu0 %v101
    %890 = vmatprep.subr.mxu0 %v106
    %891 = vmatpush1.msra.mxu0 %v105
    %892 = vmatprep.subr.mxu0 0.0
    %893 = vmatpush1.msra.mxu0 0.0
    %894 = vmatprep.subr.mxu0 0.0
    %895 = vmatpush1.msra.mxu0 0.0
    %896 = vmatprep.subr.mxu0 0.0
    %897 = vmatpush1.msra.mxu0 0.0
    %898 = vmatprep.subr.mxu0 0.0
    %899 = vmatpush1.msra.mxu0 0.0
    %900 = vmatprep.subr.mxu0 0.0
    %901 = vmatpush1.msra.mxu0 0.0
    %902 = vmatprep.subr.mxu0 0.0
    %903 = vmatpush1.msra.mxu0 0.0
    %904 = vmatprep.subr.mxu0 0.0
    %905 = vmatpush1.msra.mxu0 0.0
    %906 = vmatprep.subr.mxu0 0.0
    %907 = vmatpush1.msra.mxu0 0.0
    %908 = vmatprep.subr.mxu0 0.0
    %909 = vmatpush1.msra.mxu0 0.0
    %910 = vmatprep.subr.mxu0 0.0
    %911 = vmatpush1.msra.mxu0 0.0
    %912 = vmatprep.subr.mxu0 0.0
    %913 = vmatpush1.msra.mxu0 0.0
    %914 = vmatprep.subr.mxu0 0.0
    %915 = vmatpush1.msra.mxu0 0.0
    %916 = vmatprep.subr.mxu0 0.0
    %917 = vmatpush1.msra.mxu0 0.0
    %918 = vmatprep.subr.mxu0 0.0
    %919 = vmatpush1.msra.mxu0 0.0
    %920 = vmatprep.subr.mxu0 0.0
    %921 = vmatpush1.msra.mxu0 0.0
    %922 = vmatprep.subr.mxu0 0.0
    %923 = vmatpush1.msra.mxu0 0.0
    %924 = vmatprep.mubr.f32.mxu0 0.0
    %925 = vmatmul.mubr.f32.gmra.mrb[0].mxu0 %v788
    %v926 = vpop.f32.mrb[0].mxu0
    %v927 = vadd.f32 %v185, %v926
    %v928 = vpop.f32.mrb[0].mxu0
    %v929 = vadd.f32 %v189, %v928
    %930 = vdwg.mxu0
    %s931 = scalar_lea.vmem [#allocation2], 128
    %932 = vst [vmem:[%s931] sm:$0xff] %v856
    %933 = vst [vmem:[%s931 + $0x8] sm:$0xff] %v858
    %934 = vst [vmem:[%s931 + $0x10] sm:$0xff] %v927
    %935 = vst [vmem:[%s931 + $0x18] sm:$0xff] %v929
    %s936 = scalar_lea.vmem %s0, 40
    %v937 = vld [vmem:[%s936] sm:$0xff]
    %938 = vmatprep.subr.mxu0 %v44
    %939 = vmatpush1.msra.mxu0 %v43
    %940 = vmatprep.subr.mxu0 %v48
    %941 = vmatpush1.msra.mxu0 %v47
    %942 = vmatprep.subr.mxu0 %v52
    %943 = vmatpush1.msra.mxu0 %v51
    %944 = vmatprep.subr.mxu0 %v56
    %945 = vmatpush1.msra.mxu0 %v55
    %946 = vmatprep.subr.mxu0 %v60
    %947 = vmatpush1.msra.mxu0 %v59
    %948 = vmatprep.subr.mxu0 %v64
    %949 = vmatpush1.msra.mxu0 %v63
    %950 = vmatprep.subr.mxu0 %v68
    %951 = vmatpush1.msra.mxu0 %v67
    %952 = vmatprep.subr.mxu0 %v72
    %953 = vmatpush1.msra.mxu0 %v71
    %954 = vmatprep.subr.mxu0 %v76
    %955 = vmatpush1.msra.mxu0 %v75
    %956 = vmatprep.subr.mxu0 %v80
    %957 = vmatpush1.msra.mxu0 %v79
    %958 = vmatprep.subr.mxu0 %v84
    %959 = vmatpush1.msra.mxu0 %v83
    %960 = vmatprep.subr.mxu0 %v88
    %961 = vmatpush1.msra.mxu0 %v87
    %962 = vmatprep.subr.mxu0 %v92
    %963 = vmatpush1.msra.mxu0 %v91
    %964 = vmatprep.subr.mxu0 %v96
    %965 = vmatpush1.msra.mxu0 %v95
    %966 = vmatprep.subr.mxu0 %v100
    %967 = vmatpush1.msra.mxu0 %v99
    %968 = vmatprep.subr.mxu0 %v104
    %969 = vmatpush1.msra.mxu0 %v103
    %970 = vmatprep.subr.mxu0 0.0
    %971 = vmatpush1.msra.mxu0 0.0
    %972 = vmatprep.subr.mxu0 0.0
    %973 = vmatpush1.msra.mxu0 0.0
    %974 = vmatprep.subr.mxu0 0.0
    %975 = vmatpush1.msra.mxu0 0.0
    %976 = vmatprep.subr.mxu0 0.0
    %977 = vmatpush1.msra.mxu0 0.0
    %978 = vmatprep.subr.mxu0 0.0
    %979 = vmatpush1.msra.mxu0 0.0
    %980 = vmatprep.subr.mxu0 0.0
    %981 = vmatpush1.msra.mxu0 0.0
    %982 = vmatprep.subr.mxu0 0.0
    %983 = vmatpush1.msra.mxu0 0.0
    %984 = vmatprep.subr.mxu0 0.0
    %985 = vmatpush1.msra.mxu0 0.0
    %986 = vmatprep.subr.mxu0 0.0
    %987 = vmatpush1.msra.mxu0 0.0
    %988 = vmatprep.subr.mxu0 0.0
    %989 = vmatpush1.msra.mxu0 0.0
    %990 = vmatprep.subr.mxu0 0.0
    %991 = vmatpush1.msra.mxu0 0.0
    %992 = vmatprep.subr.mxu0 0.0
    %993 = vmatpush1.msra.mxu0 0.0
    %994 = vmatprep.subr.mxu0 0.0
    %995 = vmatpush1.msra.mxu0 0.0
    %996 = vmatprep.subr.mxu0 0.0
    %997 = vmatpush1.msra.mxu0 0.0
    %998 = vmatprep.subr.mxu0 0.0
    %999 = vmatpush1.msra.mxu0 0.0
    %1000 = vmatprep.subr.mxu0 0.0
    %1001 = vmatpush1.msra.mxu0 0.0
    %1002 = vmatprep.mubr.f32.mxu0 0.0
    %1003 = vmatmul.mubr.f32.gmra.mrb[0].mxu0 %v937
    %v1004 = vpop.f32.mrb[0].mxu0
    %v1005 = vadd.f32 %v177, %v1004
    %v1006 = vpop.f32.mrb[0].mxu0
    %v1007 = vadd.f32 %v181, %v1006
    %1008 = vdwg.mxu0
    %1009 = vmatprep.subr.mxu0 %v46
    %1010 = vmatpush1.msra.mxu0 %v45
    %1011 = vmatprep.subr.mxu0 %v50
    %1012 = vmatpush1.msra.mxu0 %v49
    %1013 = vmatprep.subr.mxu0 %v54
    %1014 = vmatpush1.msra.mxu0 %v53
    %1015 = vmatprep.subr.mxu0 %v58
    %1016 = vmatpush1.msra.mxu0 %v57
    %1017 = vmatprep.subr.mxu0 %v62
    %1018 = vmatpush1.msra.mxu0 %v61
    %1019 = vmatprep.subr.mxu0 %v66
    %1020 = vmatpush1.msra.mxu0 %v65
    %1021 = vmatprep.subr.mxu0 %v70
    %1022 = vmatpush1.msra.mxu0 %v69
    %1023 = vmatprep.subr.mxu0 %v74
    %1024 = vmatpush1.msra.mxu0 %v73
    %1025 = vmatprep.subr.mxu0 %v78
    %1026 = vmatpush1.msra.mxu0 %v77
    %1027 = vmatprep.subr.mxu0 %v82
    %1028 = vmatpush1.msra.mxu0 %v81
    %1029 = vmatprep.subr.mxu0 %v86
    %1030 = vmatpush1.msra.mxu0 %v85
    %1031 = vmatprep.subr.mxu0 %v90
    %1032 = vmatpush1.msra.mxu0 %v89
    %1033 = vmatprep.subr.mxu0 %v94
    %1034 = vmatpush1.msra.mxu0 %v93
    %1035 = vmatprep.subr.mxu0 %v98
    %1036 = vmatpush1.msra.mxu0 %v97
    %1037 = vmatprep.subr.mxu0 %v102
    %1038 = vmatpush1.msra.mxu0 %v101
    %1039 = vmatprep.subr.mxu0 %v106
    %1040 = vmatpush1.msra.mxu0 %v105
    %1041 = vmatprep.subr.mxu0 0.0
    %1042 = vmatpush1.msra.mxu0 0.0
    %1043 = vmatprep.subr.mxu0 0.0
    %1044 = vmatpush1.msra.mxu0 0.0
    %1045 = vmatprep.subr.mxu0 0.0
    %1046 = vmatpush1.msra.mxu0 0.0
    %1047 = vmatprep.subr.mxu0 0.0
    %1048 = vmatpush1.msra.mxu0 0.0
    %1049 = vmatprep.subr.mxu0 0.0
    %1050 = vmatpush1.msra.mxu0 0.0
    %1051 = vmatprep.subr.mxu0 0.0
    %1052 = vmatpush1.msra.mxu0 0.0
    %1053 = vmatprep.subr.mxu0 0.0
    %1054 = vmatpush1.msra.mxu0 0.0
    %1055 = vmatprep.subr.mxu0 0.0
    %1056 = vmatpush1.msra.mxu0 0.0
    %1057 = vmatprep.subr.mxu0 0.0
    %1058 = vmatpush1.msra.mxu0 0.0
    %1059 = vmatprep.subr.mxu0 0.0
    %1060 = vmatpush1.msra.mxu0 0.0
    %1061 = vmatprep.subr.mxu0 0.0
    %1062 = vmatpush1.msra.mxu0 0.0
    %1063 = vmatprep.subr.mxu0 0.0
    %1064 = vmatpush1.msra.mxu0 0.0
    %1065 = vmatprep.subr.mxu0 0.0
    %1066 = vmatpush1.msra.mxu0 0.0
    %1067 = vmatprep.subr.mxu0 0.0
    %1068 = vmatpush1.msra.mxu0 0.0
    %1069 = vmatprep.subr.mxu0 0.0
    %1070 = vmatpush1.msra.mxu0 0.0
    %1071 = vmatprep.subr.mxu0 0.0
    %1072 = vmatpush1.msra.mxu0 0.0
    %1073 = vmatprep.mubr.f32.mxu0 0.0
    %1074 = vmatmul.mubr.f32.gmra.mrb[0].mxu0 %v937
    %v1075 = vpop.f32.mrb[0].mxu0
    %v1076 = vadd.f32 %v185, %v1075
    %v1077 = vpop.f32.mrb[0].mxu0
    %v1078 = vadd.f32 %v189, %v1077
    %1079 = vdwg.mxu0
    %s1080 = scalar_lea.vmem [#allocation2], 160
    %1081 = vst [vmem:[%s1080] sm:$0xff] %v1005
    %1082 = vst [vmem:[%s1080 + $0x8] sm:$0xff] %v1007
    %1083 = vst [vmem:[%s1080 + $0x10] sm:$0xff] %v1076
    %1084 = vst [vmem:[%s1080 + $0x18] sm:$0xff] %v1078
    %s1085 = scalar_lea.vmem %s0, 48
    %v1086 = vld [vmem:[%s1085] sm:$0xff]
    %1087 = vmatprep.subr.mxu0 %v44
    %1088 = vmatpush1.msra.mxu0 %v43
    %1089 = vmatprep.subr.mxu0 %v48
    %1090 = vmatpush1.msra.mxu0 %v47
    %1091 = vmatprep.subr.mxu0 %v52
    %1092 = vmatpush1.msra.mxu0 %v51
    %1093 = vmatprep.subr.mxu0 %v56
    %1094 = vmatpush1.msra.mxu0 %v55
    %1095 = vmatprep.subr.mxu0 %v60
    %1096 = vmatpush1.msra.mxu0 %v59
    %1097 = vmatprep.subr.mxu0 %v64
    %1098 = vmatpush1.msra.mxu0 %v63
    %1099 = vmatprep.subr.mxu0 %v68
    %1100 = vmatpush1.msra.mxu0 %v67
    %1101 = vmatprep.subr.mxu0 %v72
    %1102 = vmatpush1.msra.mxu0 %v71
    %1103 = vmatprep.subr.mxu0 %v76
    %1104 = vmatpush1.msra.mxu0 %v75
    %1105 = vmatprep.subr.mxu0 %v80
    %1106 = vmatpush1.msra.mxu0 %v79
    %1107 = vmatprep.subr.mxu0 %v84
    %1108 = vmatpush1.msra.mxu0 %v83
    %1109 = vmatprep.subr.mxu0 %v88
    %1110 = vmatpush1.msra.mxu0 %v87
    %1111 = vmatprep.subr.mxu0 %v92
    %1112 = vmatpush1.msra.mxu0 %v91
    %1113 = vmatprep.subr.mxu0 %v96
    %1114 = vmatpush1.msra.mxu0 %v95
    %1115 = vmatprep.subr.mxu0 %v100
    %1116 = vmatpush1.msra.mxu0 %v99
    %1117 = vmatprep.subr.mxu0 %v104
    %1118 = vmatpush1.msra.mxu0 %v103
    %1119 = vmatprep.subr.mxu0 0.0
    %1120 = vmatpush1.msra.mxu0 0.0
    %1121 = vmatprep.subr.mxu0 0.0
    %1122 = vmatpush1.msra.mxu0 0.0
    %1123 = vmatprep.subr.mxu0 0.0
    %1124 = vmatpush1.msra.mxu0 0.0
    %1125 = vmatprep.subr.mxu0 0.0
    %1126 = vmatpush1.msra.mxu0 0.0
    %1127 = vmatprep.subr.mxu0 0.0
    %1128 = vmatpush1.msra.mxu0 0.0
    %1129 = vmatprep.subr.mxu0 0.0
    %1130 = vmatpush1.msra.mxu0 0.0
    %1131 = vmatprep.subr.mxu0 0.0
    %1132 = vmatpush1.msra.mxu0 0.0
    %1133 = vmatprep.subr.mxu0 0.0
    %1134 = vmatpush1.msra.mxu0 0.0
    %1135 = vmatprep.subr.mxu0 0.0
    %1136 = vmatpush1.msra.mxu0 0.0
    %1137 = vmatprep.subr.mxu0 0.0
    %1138 = vmatpush1.msra.mxu0 0.0
    %1139 = vmatprep.subr.mxu0 0.0
    %1140 = vmatpush1.msra.mxu0 0.0
    %1141 = vmatprep.subr.mxu0 0.0
    %1142 = vmatpush1.msra.mxu0 0.0
    %1143 = vmatprep.subr.mxu0 0.0
    %1144 = vmatpush1.msra.mxu0 0.0
    %1145 = vmatprep.subr.mxu0 0.0
    %1146 = vmatpush1.msra.mxu0 0.0
    %1147 = vmatprep.subr.mxu0 0.0
    %1148 = vmatpush1.msra.mxu0 0.0
    %1149 = vmatprep.subr.mxu0 0.0
    %1150 = vmatpush1.msra.mxu0 0.0
    %1151 = vmatprep.mubr.f32.mxu0 0.0
    %1152 = vmatmul.mubr.f32.gmra.mrb[0].mxu0 %v1086
    %v1153 = vpop.f32.mrb[0].mxu0
    %v1154 = vadd.f32 %v177, %v1153
    %v1155 = vpop.f32.mrb[0].mxu0
    %v1156 = vadd.f32 %v181, %v1155
    %1157 = vdwg.mxu0
    %1158 = vmatprep.subr.mxu0 %v46
    %1159 = vmatpush1.msra.mxu0 %v45
    %1160 = vmatprep.subr.mxu0 %v50
    %1161 = vmatpush1.msra.mxu0 %v49
    %1162 = vmatprep.subr.mxu0 %v54
    %1163 = vmatpush1.msra.mxu0 %v53
    %1164 = vmatprep.subr.mxu0 %v58
    %1165 = vmatpush1.msra.mxu0 %v57
    %1166 = vmatprep.subr.mxu0 %v62
    %1167 = vmatpush1.msra.mxu0 %v61
    %1168 = vmatprep.subr.mxu0 %v66
    %1169 = vmatpush1.msra.mxu0 %v65
    %1170 = vmatprep.subr.mxu0 %v70
    %1171 = vmatpush1.msra.mxu0 %v69
    %1172 = vmatprep.subr.mxu0 %v74
    %1173 = vmatpush1.msra.mxu0 %v73
    %1174 = vmatprep.subr.mxu0 %v78
    %1175 = vmatpush1.msra.mxu0 %v77
    %1176 = vmatprep.subr.mxu0 %v82
    %1177 = vmatpush1.msra.mxu0 %v81
    %1178 = vmatprep.subr.mxu0 %v86
    %1179 = vmatpush1.msra.mxu0 %v85
    %1180 = vmatprep.subr.mxu0 %v90
    %1181 = vmatpush1.msra.mxu0 %v89
    %1182 = vmatprep.subr.mxu0 %v94
    %1183 = vmatpush1.msra.mxu0 %v93
    %1184 = vmatprep.subr.mxu0 %v98
    %1185 = vmatpush1.msra.mxu0 %v97
    %1186 = vmatprep.subr.mxu0 %v102
    %1187 = vmatpush1.msra.mxu0 %v101
    %1188 = vmatprep.subr.mxu0 %v106
    %1189 = vmatpush1.msra.mxu0 %v105
    %1190 = vmatprep.subr.mxu0 0.0
    %1191 = vmatpush1.msra.mxu0 0.0
    %1192 = vmatprep.subr.mxu0 0.0
    %1193 = vmatpush1.msra.mxu0 0.0
    %1194 = vmatprep.subr.mxu0 0.0
    %1195 = vmatpush1.msra.mxu0 0.0
    %1196 = vmatprep.subr.mxu0 0.0
    %1197 = vmatpush1.msra.mxu0 0.0
    %1198 = vmatprep.subr.mxu0 0.0
    %1199 = vmatpush1.msra.mxu0 0.0
    %1200 = vmatprep.subr.mxu0 0.0
    %1201 = vmatpush1.msra.mxu0 0.0
    %1202 = vmatprep.subr.mxu0 0.0
    %1203 = vmatpush1.msra.mxu0 0.0
    %1204 = vmatprep.subr.mxu0 0.0
    %1205 = vmatpush1.msra.mxu0 0.0
    %1206 = vmatprep.subr.mxu0 0.0
    %1207 = vmatpush1.msra.mxu0 0.0
    %1208 = vmatprep.subr.mxu0 0.0
    %1209 = vmatpush1.msra.mxu0 0.0
    %1210 = vmatprep.subr.mxu0 0.0
    %1211 = vmatpush1.msra.mxu0 0.0
    %1212 = vmatprep.subr.mxu0 0.0
    %1213 = vmatpush1.msra.mxu0 0.0
    %1214 = vmatprep.subr.mxu0 0.0
    %1215 = vmatpush1.msra.mxu0 0.0
    %1216 = vmatprep.subr.mxu0 0.0
    %1217 = vmatpush1.msra.mxu0 0.0
    %1218 = vmatprep.subr.mxu0 0.0
    %1219 = vmatpush1.msra.mxu0 0.0
    %1220 = vmatprep.subr.mxu0 0.0
    %1221 = vmatpush1.msra.mxu0 0.0
    %1222 = vmatprep.mubr.f32.mxu0 0.0
    %1223 = vmatmul.mubr.f32.gmra.mrb[0].mxu0 %v1086
    %v1224 = vpop.f32.mrb[0].mxu0
    %v1225 = vadd.f32 %v185, %v1224
    %v1226 = vpop.f32.mrb[0].mxu0
    %v1227 = vadd.f32 %v189, %v1226
    %1228 = vdwg.mxu0
    %s1229 = scalar_lea.vmem [#allocation2], 192
    %1230 = vst [vmem:[%s1229] sm:$0xff] %v1154
    %1231 = vst [vmem:[%s1229 + $0x8] sm:$0xff] %v1156
    %1232 = vst [vmem:[%s1229 + $0x10] sm:$0xff] %v1225
    %1233 = vst [vmem:[%s1229 + $0x18] sm:$0xff] %v1227
    %s1234 = scalar_lea.vmem %s0, 56
    %v1235 = vld [vmem:[%s1234] sm:$0xff]
    %1236 = vmatprep.subr.mxu0 %v44
    %1237 = vmatpush1.msra.mxu0 %v43
    %1238 = vmatprep.subr.mxu0 %v48
    %1239 = vmatpush1.msra.mxu0 %v47
    %1240 = vmatprep.subr.mxu0 %v52
    %1241 = vmatpush1.msra.mxu0 %v51
    %1242 = vmatprep.subr.mxu0 %v56
    %1243 = vmatpush1.msra.mxu0 %v55
    %1244 = vmatprep.subr.mxu0 %v60
    %1245 = vmatpush1.msra.mxu0 %v59
    %1246 = vmatprep.subr.mxu0 %v64
    %1247 = vmatpush1.msra.mxu0 %v63
    %1248 = vmatprep.subr.mxu0 %v68
    %1249 = vmatpush1.msra.mxu0 %v67
    %1250 = vmatprep.subr.mxu0 %v72
    %1251 = vmatpush1.msra.mxu0 %v71
    %1252 = vmatprep.subr.mxu0 %v76
    %1253 = vmatpush1.msra.mxu0 %v75
    %1254 = vmatprep.subr.mxu0 %v80
    %1255 = vmatpush1.msra.mxu0 %v79
    %1256 = vmatprep.subr.mxu0 %v84
    %1257 = vmatpush1.msra.mxu0 %v83
    %1258 = vmatprep.subr.mxu0 %v88
    %1259 = vmatpush1.msra.mxu0 %v87
    %1260 = vmatprep.subr.mxu0 %v92
    %1261 = vmatpush1.msra.mxu0 %v91
    %1262 = vmatprep.subr.mxu0 %v96
    %1263 = vmatpush1.msra.mxu0 %v95
    %1264 = vmatprep.subr.mxu0 %v100
    %1265 = vmatpush1.msra.mxu0 %v99
    %1266 = vmatprep.subr.mxu0 %v104
    %1267 = vmatpush1.msra.mxu0 %v103
    %1268 = vmatprep.subr.mxu0 0.0
    %1269 = vmatpush1.msra.mxu0 0.0
    %1270 = vmatprep.subr.mxu0 0.0
    %1271 = vmatpush1.msra.mxu0 0.0
    %1272 = vmatprep.subr.mxu0 0.0
    %1273 = vmatpush1.msra.mxu0 0.0
    %1274 = vmatprep.subr.mxu0 0.0
    %1275 = vmatpush1.msra.mxu0 0.0
    %1276 = vmatprep.subr.mxu0 0.0
    %1277 = vmatpush1.msra.mxu0 0.0
    %1278 = vmatprep.subr.mxu0 0.0
    %1279 = vmatpush1.msra.mxu0 0.0
    %1280 = vmatprep.subr.mxu0 0.0
    %1281 = vmatpush1.msra.mxu0 0.0
    %1282 = vmatprep.subr.mxu0 0.0
    %1283 = vmatpush1.msra.mxu0 0.0
    %1284 = vmatprep.subr.mxu0 0.0
    %1285 = vmatpush1.msra.mxu0 0.0
    %1286 = vmatprep.subr.mxu0 0.0
    %1287 = vmatpush1.msra.mxu0 0.0
    %1288 = vmatprep.subr.mxu0 0.0
    %1289 = vmatpush1.msra.mxu0 0.0
    %1290 = vmatprep.subr.mxu0 0.0
    %1291 = vmatpush1.msra.mxu0 0.0
    %1292 = vmatprep.subr.mxu0 0.0
    %1293 = vmatpush1.msra.mxu0 0.0
    %1294 = vmatprep.subr.mxu0 0.0
    %1295 = vmatpush1.msra.mxu0 0.0
    %1296 = vmatprep.subr.mxu0 0.0
    %1297 = vmatpush1.msra.mxu0 0.0
    %1298 = vmatprep.subr.mxu0 0.0
    %1299 = vmatpush1.msra.mxu0 0.0
    %1300 = vmatprep.mubr.f32.mxu0 0.0
    %1301 = vmatmul.mubr.f32.gmra.mrb[0].mxu0 %v1235
    %v1302 = vpop.f32.mrb[0].mxu0
    %v1303 = vadd.f32 %v177, %v1302
    %v1304 = vpop.f32.mrb[0].mxu0
    %v1305 = vadd.f32 %v181, %v1304
    %1306 = vdwg.mxu0
    %1307 = vmatprep.subr.mxu0 %v46
    %1308 = vmatpush1.msra.mxu0 %v45
    %1309 = vmatprep.subr.mxu0 %v50
    %1310 = vmatpush1.msra.mxu0 %v49
    %1311 = vmatprep.subr.mxu0 %v54
    %1312 = vmatpush1.msra.mxu0 %v53
    %1313 = vmatprep.subr.mxu0 %v58
    %1314 = vmatpush1.msra.mxu0 %v57
    %1315 = vmatprep.subr.mxu0 %v62
    %1316 = vmatpush1.msra.mxu0 %v61
    %1317 = vmatprep.subr.mxu0 %v66
    %1318 = vmatpush1.msra.mxu0 %v65
    %1319 = vmatprep.subr.mxu0 %v70
    %1320 = vmatpush1.msra.mxu0 %v69
    %1321 = vmatprep.subr.mxu0 %v74
    %1322 = vmatpush1.msra.mxu0 %v73
    %1323 = vmatprep.subr.mxu0 %v78
    %1324 = vmatpush1.msra.mxu0 %v77
    %1325 = vmatprep.subr.mxu0 %v82
    %1326 = vmatpush1.msra.mxu0 %v81
    %1327 = vmatprep.subr.mxu0 %v86
    %1328 = vmatpush1.msra.mxu0 %v85
    %1329 = vmatprep.subr.mxu0 %v90
    %1330 = vmatpush1.msra.mxu0 %v89
    %1331 = vmatprep.subr.mxu0 %v94
    %1332 = vmatpush1.msra.mxu0 %v93
    %1333 = vmatprep.subr.mxu0 %v98
    %1334 = vmatpush1.msra.mxu0 %v97
    %1335 = vmatprep.subr.mxu0 %v102
    %1336 = vmatpush1.msra.mxu0 %v101
    %1337 = vmatprep.subr.mxu0 %v106
    %1338 = vmatpush1.msra.mxu0 %v105
    %1339 = vmatprep.subr.mxu0 0.0
    %1340 = vmatpush1.msra.mxu0 0.0
    %1341 = vmatprep.subr.mxu0 0.0
    %1342 = vmatpush1.msra.mxu0 0.0
    %1343 = vmatprep.subr.mxu0 0.0
    %1344 = vmatpush1.msra.mxu0 0.0
    %1345 = vmatprep.subr.mxu0 0.0
    %1346 = vmatpush1.msra.mxu0 0.0
    %1347 = vmatprep.subr.mxu0 0.0
    %1348 = vmatpush1.msra.mxu0 0.0
    %1349 = vmatprep.subr.mxu0 0.0
    %1350 = vmatpush1.msra.mxu0 0.0
    %1351 = vmatprep.subr.mxu0 0.0
    %1352 = vmatpush1.msra.mxu0 0.0
    %1353 = vmatprep.subr.mxu0 0.0
    %1354 = vmatpush1.msra.mxu0 0.0
    %1355 = vmatprep.subr.mxu0 0.0
    %1356 = vmatpush1.msra.mxu0 0.0
    %1357 = vmatprep.subr.mxu0 0.0
    %1358 = vmatpush1.msra.mxu0 0.0
    %1359 = vmatprep.subr.mxu0 0.0
    %1360 = vmatpush1.msra.mxu0 0.0
    %1361 = vmatprep.subr.mxu0 0.0
    %1362 = vmatpush1.msra.mxu0 0.0
    %1363 = vmatprep.subr.mxu0 0.0
    %1364 = vmatpush1.msra.mxu0 0.0
    %1365 = vmatprep.subr.mxu0 0.0
    %1366 = vmatpush1.msra.mxu0 0.0
    %1367 = vmatprep.subr.mxu0 0.0
    %1368 = vmatpush1.msra.mxu0 0.0
    %1369 = vmatprep.subr.mxu0 0.0
    %1370 = vmatpush1.msra.mxu0 0.0
    %1371 = vmatprep.mubr.f32.mxu0 0.0
    %1372 = vmatmul.mubr.f32.gmra.mrb[0].mxu0 %v1235
    %v1373 = vpop.f32.mrb[0].mxu0
    %v1374 = vadd.f32 %v185, %v1373
    %v1375 = vpop.f32.mrb[0].mxu0
    %v1376 = vadd.f32 %v189, %v1375
    %1377 = vdwg.mxu0
    %s1378 = scalar_lea.vmem [#allocation2], 224
    %1379 = vst [vmem:[%s1378] sm:$0xff] %v1303
    %1380 = vst [vmem:[%s1378 + $0x8] sm:$0xff] %v1305
    %1381 = vst [vmem:[%s1378 + $0x10] sm:$0xff] %v1374
    %1382 = vst [vmem:[%s1378 + $0x18] sm:$0xff] %v1376
    %s1383 = smul.u32 0, 8
    %p1384 = scmp.lt.s32.totalorder %s1383, 8
    // Predicated region
    $region34: #{lstm_model_forward.3} parent=1 // pred_check
      %p1385 = pneg %p1384
    $region35: #{lstm_model_forward.3} parent=1 // pred_check_branch
      %1387 = sbr.rel (%p1385) target = $region37
    $region36: #{lstm_model_forward.3} parent=1 // pred_region
      %v1388 = vld [vmem:[#allocation2] sm:$0xff]
      %v1389 = vld [vmem:[#allocation2 + $0x8] sm:$0xff]
      %v1390 = vld [vmem:[#allocation2 + $0x10] sm:$0xff]
      %v1391 = vld [vmem:[#allocation2 + $0x18] sm:$0xff]
      %v1392 = vld [vmem:[#allocation3] sm:$0xff]
      %1393 = vmatprep.subr.mxu0 %v108
      %1394 = vmatpush1.msra.mxu0 %v107
      %1395 = vmatprep.subr.mxu0 %v112
      %1396 = vmatpush1.msra.mxu0 %v111
      %1397 = vmatprep.subr.mxu0 %v116
      %1398 = vmatpush1.msra.mxu0 %v115
      %1399 = vmatprep.subr.mxu0 %v120
      %1400 = vmatpush1.msra.mxu0 %v119
      %1401 = vmatprep.subr.mxu0 %v124
      %1402 = vmatpush1.msra.mxu0 %v123
      %1403 = vmatprep.subr.mxu0 %v128
      %1404 = vmatpush1.msra.mxu0 %v127
      %1405 = vmatprep.subr.mxu0 %v132
      %1406 = vmatpush1.msra.mxu0 %v131
      %1407 = vmatprep.subr.mxu0 %v136
      %1408 = vmatpush1.msra.mxu0 %v135
      %1409 = vmatprep.subr.mxu0 %v140
      %1410 = vmatpush1.msra.mxu0 %v139
      %1411 = vmatprep.subr.mxu0 %v144
      %1412 = vmatpush1.msra.mxu0 %v143
      %1413 = vmatprep.subr.mxu0 %v148
      %1414 = vmatpush1.msra.mxu0 %v147
      %1415 = vmatprep.subr.mxu0 %v152
      %1416 = vmatpush1.msra.mxu0 %v151
      %1417 = vmatprep.subr.mxu0 %v156
      %1418 = vmatpush1.msra.mxu0 %v155
      %1419 = vmatprep.subr.mxu0 %v160
      %1420 = vmatpush1.msra.mxu0 %v159
      %1421 = vmatprep.subr.mxu0 %v164
      %1422 = vmatpush1.msra.mxu0 %v163
      %1423 = vmatprep.subr.mxu0 %v168
      %1424 = vmatpush1.msra.mxu0 %v167
      %1425 = vmatprep.subr.mxu0 0.0
      %1426 = vmatpush1.msra.mxu0 0.0
      %1427 = vmatprep.subr.mxu0 0.0
      %1428 = vmatpush1.msra.mxu0 0.0
      %1429 = vmatprep.subr.mxu0 0.0
      %1430 = vmatpush1.msra.mxu0 0.0
      %1431 = vmatprep.subr.mxu0 0.0
      %1432 = vmatpush1.msra.mxu0 0.0
      %1433 = vmatprep.subr.mxu0 0.0
      %1434 = vmatpush1.msra.mxu0 0.0
      %1435 = vmatprep.subr.mxu0 0.0
      %1436 = vmatpush1.msra.mxu0 0.0
      %1437 = vmatprep.subr.mxu0 0.0
      %1438 = vmatpush1.msra.mxu0 0.0
      %1439 = vmatprep.subr.mxu0 0.0
      %1440 = vmatpush1.msra.mxu0 0.0
      %1441 = vmatprep.subr.mxu0 0.0
      %1442 = vmatpush1.msra.mxu0 0.0
      %1443 = vmatprep.subr.mxu0 0.0
      %1444 = vmatpush1.msra.mxu0 0.0
      %1445 = vmatprep.subr.mxu0 0.0
      %1446 = vmatpush1.msra.mxu0 0.0
      %1447 = vmatprep.subr.mxu0 0.0
      %1448 = vmatpush1.msra.mxu0 0.0
      %1449 = vmatprep.subr.mxu0 0.0
      %1450 = vmatpush1.msra.mxu0 0.0
      %1451 = vmatprep.subr.mxu0 0.0
      %1452 = vmatpush1.msra.mxu0 0.0
      %1453 = vmatprep.subr.mxu0 0.0
      %1454 = vmatpush1.msra.mxu0 0.0
      %1455 = vmatprep.subr.mxu0 0.0
      %1456 = vmatpush1.msra.mxu0 0.0
      %1457 = vmatprep.mubr.f32.mxu0 0.0
      %1458 = vmatmul.mubr.f32.gmra.mrb[0].mxu0 %v1392
      %v1459 = vpop.f32.mrb[0].mxu0
      %v1460 = vadd.f32 0.0, %v1459
      %v1461 = vpop.f32.mrb[0].mxu0
      %v1462 = vadd.f32 0.0, %v1461
      %1463 = vdwg.mxu0
      %1464 = vmatprep.subr.mxu0 %v110
      %1465 = vmatpush1.msra.mxu0 %v109
      %1466 = vmatprep.subr.mxu0 %v114
      %1467 = vmatpush1.msra.mxu0 %v113
      %1468 = vmatprep.subr.mxu0 %v118
      %1469 = vmatpush1.msra.mxu0 %v117
      %1470 = vmatprep.subr.mxu0 %v122
      %1471 = vmatpush1.msra.mxu0 %v121
      %1472 = vmatprep.subr.mxu0 %v126
      %1473 = vmatpush1.msra.mxu0 %v125
      %1474 = vmatprep.subr.mxu0 %v130
      %1475 = vmatpush1.msra.mxu0 %v129
      %1476 = vmatprep.subr.mxu0 %v134
      %1477 = vmatpush1.msra.mxu0 %v133
      %1478 = vmatprep.subr.mxu0 %v138
      %1479 = vmatpush1.msra.mxu0 %v137
      %1480 = vmatprep.subr.mxu0 %v142
      %1481 = vmatpush1.msra.mxu0 %v141
      %1482 = vmatprep.subr.mxu0 %v146
      %1483 = vmatpush1.msra.mxu0 %v145
      %1484 = vmatprep.subr.mxu0 %v150
      %1485 = vmatpush1.msra.mxu0 %v149
      %1486 = vmatprep.subr.mxu0 %v154
      %1487 = vmatpush1.msra.mxu0 %v153
      %1488 = vmatprep.subr.mxu0 %v158
      %1489 = vmatpush1.msra.mxu0 %v157
      %1490 = vmatprep.subr.mxu0 %v162
      %1491 = vmatpush1.msra.mxu0 %v161
      %1492 = vmatprep.subr.mxu0 %v166
      %1493 = vmatpush1.msra.mxu0 %v165
      %1494 = vmatprep.subr.mxu0 %v170
      %1495 = vmatpush1.msra.mxu0 %v169
      %1496 = vmatprep.subr.mxu0 0.0
      %1497 = vmatpush1.msra.mxu0 0.0
      %1498 = vmatprep.subr.mxu0 0.0
      %1499 = vmatpush1.msra.mxu0 0.0
      %1500 = vmatprep.subr.mxu0 0.0
      %1501 = vmatpush1.msra.mxu0 0.0
      %1502 = vmatprep.subr.mxu0 0.0
      %1503 = vmatpush1.msra.mxu0 0.0
      %1504 = vmatprep.subr.mxu0 0.0
      %1505 = vmatpush1.msra.mxu0 0.0
      %1506 = vmatprep.subr.mxu0 0.0
      %1507 = vmatpush1.msra.mxu0 0.0
      %1508 = vmatprep.subr.mxu0 0.0
      %1509 = vmatpush1.msra.mxu0 0.0
      %1510 = vmatprep.subr.mxu0 0.0
      %1511 = vmatpush1.msra.mxu0 0.0
      %1512 = vmatprep.subr.mxu0 0.0
      %1513 = vmatpush1.msra.mxu0 0.0
      %1514 = vmatprep.subr.mxu0 0.0
      %1515 = vmatpush1.msra.mxu0 0.0
      %1516 = vmatprep.subr.mxu0 0.0
      %1517 = vmatpush1.msra.mxu0 0.0
      %1518 = vmatprep.subr.mxu0 0.0
      %1519 = vmatpush1.msra.mxu0 0.0
      %1520 = vmatprep.subr.mxu0 0.0
      %1521 = vmatpush1.msra.mxu0 0.0
      %1522 = vmatprep.subr.mxu0 0.0
      %1523 = vmatpush1.msra.mxu0 0.0
      %1524 = vmatprep.subr.mxu0 0.0
      %1525 = vmatpush1.msra.mxu0 0.0
      %1526 = vmatprep.subr.mxu0 0.0
      %1527 = vmatpush1.msra.mxu0 0.0
      %1528 = vmatprep.mubr.f32.mxu0 0.0
      %1529 = vmatmul.mubr.f32.gmra.mrb[0].mxu0 %v1392
      %v1530 = vpop.f32.mrb[0].mxu0
      %v1531 = vadd.f32 0.0, %v1530
      %v1532 = vpop.f32.mrb[0].mxu0
      %v1533 = vadd.f32 0.0, %v1532
      %1534 = vdwg.mxu0
      %v1535 = vadd.f32 %v1388, %v1460
      %v1536 = vadd.f32 %v1389, %v1462
      %v1537 = vadd.f32 %v1390, %v1531
      %v1538 = vadd.f32 %v1391, %v1533
      %v1539 = vld [vmem:[#allocation4] sm:$0xff]
      %v1540 = vmul.f32 %v1535, 0.5
      %v1541 = vtanh.pop %v1540
      %v1542 = vmul.f32 %v1541, 0.5
      %v1543 = vadd.f32 %v1542, 0.5
      %v1544 = vmul.f32 %v1536, 0.5
      %v1545 = vtanh.pop %v1544
      %v1546 = vmul.f32 %v1545, 0.5
      %v1547 = vadd.f32 %v1546, 0.5
      %v1548 = vtanh.pop %v1537
      %v1549 = vmul.f32 %v1538, 0.5
      %v1550 = vtanh.pop %v1549
      %v1551 = vmul.f32 %v1550, 0.5
      %v1552 = vadd.f32 %v1551, 0.5
      %v1553 = vmul.f32 %v1547, %v1539
      %v1554 = vmul.f32 %v1543, %v1548
      %v1555 = vadd.f32 %v1553, %v1554
      %v1556 = vtanh.pop %v1555
      %v1557 = vmul.f32 %v1552, %v1556
      %1558 = vst [vmem:[#allocation3] sm:$0xff] %v1557
      %1559 = vst [vmem:[#allocation4] sm:$0xff] %v1555
    $region37: #{lstm_model_forward.3} parent=1 // pred_fallthru
      _
    %s1560 = sadd.s32 %s1383, 1
    %p1561 = scmp.lt.s32.totalorder %s1560, 8
    // Predicated region
    $region38: #{lstm_model_forward.3} parent=1 // pred_check
      %p1562 = pneg %p1561
    $region39: #{lstm_model_forward.3} parent=1 // pred_check_branch
      %1564 = sbr.rel (%p1562) target = $region41
    $region40: #{lstm_model_forward.3} parent=1 // pred_region
      %v1565 = vld [vmem:[%s484] sm:$0xff]
      %v1566 = vld [vmem:[%s484 + $0x8] sm:$0xff]
      %v1567 = vld [vmem:[%s484 + $0x10] sm:$0xff]
      %v1568 = vld [vmem:[%s484 + $0x18] sm:$0xff]
      %v1569 = vld [vmem:[#allocation3] sm:$0xff]
      %1570 = vmatprep.subr.mxu0 %v108
      %1571 = vmatpush1.msra.mxu0 %v107
      %1572 = vmatprep.subr.mxu0 %v112
      %1573 = vmatpush1.msra.mxu0 %v111
      %1574 = vmatprep.subr.mxu0 %v116
      %1575 = vmatpush1.msra.mxu0 %v115
      %1576 = vmatprep.subr.mxu0 %v120
      %1577 = vmatpush1.msra.mxu0 %v119
      %1578 = vmatprep.subr.mxu0 %v124
      %1579 = vmatpush1.msra.mxu0 %v123
      %1580 = vmatprep.subr.mxu0 %v128
      %1581 = vmatpush1.msra.mxu0 %v127
      %1582 = vmatprep.subr.mxu0 %v132
      %1583 = vmatpush1.msra.mxu0 %v131
      %1584 = vmatprep.subr.mxu0 %v136
      %1585 = vmatpush1.msra.mxu0 %v135
      %1586 = vmatprep.subr.mxu0 %v140
      %1587 = vmatpush1.msra.mxu0 %v139
      %1588 = vmatprep.subr.mxu0 %v144
      %1589 = vmatpush1.msra.mxu0 %v143
      %1590 = vmatprep.subr.mxu0 %v148
      %1591 = vmatpush1.msra.mxu0 %v147
      %1592 = vmatprep.subr.mxu0 %v152
      %1593 = vmatpush1.msra.mxu0 %v151
      %1594 = vmatprep.subr.mxu0 %v156
      %1595 = vmatpush1.msra.mxu0 %v155
      %1596 = vmatprep.subr.mxu0 %v160
      %1597 = vmatpush1.msra.mxu0 %v159
      %1598 = vmatprep.subr.mxu0 %v164
      %1599 = vmatpush1.msra.mxu0 %v163
      %1600 = vmatprep.subr.mxu0 %v168
      %1601 = vmatpush1.msra.mxu0 %v167
      %1602 = vmatprep.subr.mxu0 0.0
      %1603 = vmatpush1.msra.mxu0 0.0
      %1604 = vmatprep.subr.mxu0 0.0
      %1605 = vmatpush1.msra.mxu0 0.0
      %1606 = vmatprep.subr.mxu0 0.0
      %1607 = vmatpush1.msra.mxu0 0.0
      %1608 = vmatprep.subr.mxu0 0.0
      %1609 = vmatpush1.msra.mxu0 0.0
      %1610 = vmatprep.subr.mxu0 0.0
      %1611 = vmatpush1.msra.mxu0 0.0
      %1612 = vmatprep.subr.mxu0 0.0
      %1613 = vmatpush1.msra.mxu0 0.0
      %1614 = vmatprep.subr.mxu0 0.0
      %1615 = vmatpush1.msra.mxu0 0.0
      %1616 = vmatprep.subr.mxu0 0.0
      %1617 = vmatpush1.msra.mxu0 0.0
      %1618 = vmatprep.subr.mxu0 0.0
      %1619 = vmatpush1.msra.mxu0 0.0
      %1620 = vmatprep.subr.mxu0 0.0
      %1621 = vmatpush1.msra.mxu0 0.0
      %1622 = vmatprep.subr.mxu0 0.0
      %1623 = vmatpush1.msra.mxu0 0.0
      %1624 = vmatprep.subr.mxu0 0.0
      %1625 = vmatpush1.msra.mxu0 0.0
      %1626 = vmatprep.subr.mxu0 0.0
      %1627 = vmatpush1.msra.mxu0 0.0
      %1628 = vmatprep.subr.mxu0 0.0
      %1629 = vmatpush1.msra.mxu0 0.0
      %1630 = vmatprep.subr.mxu0 0.0
      %1631 = vmatpush1.msra.mxu0 0.0
      %1632 = vmatprep.subr.mxu0 0.0
      %1633 = vmatpush1.msra.mxu0 0.0
      %1634 = vmatprep.mubr.f32.mxu0 0.0
      %1635 = vmatmul.mubr.f32.gmra.mrb[0].mxu0 %v1569
      %v1636 = vpop.f32.mrb[0].mxu0
      %v1637 = vadd.f32 0.0, %v1636
      %v1638 = vpop.f32.mrb[0].mxu0
      %v1639 = vadd.f32 0.0, %v1638
      %1640 = vdwg.mxu0
      %1641 = vmatprep.subr.mxu0 %v110
      %1642 = vmatpush1.msra.mxu0 %v109
      %1643 = vmatprep.subr.mxu0 %v114
      %1644 = vmatpush1.msra.mxu0 %v113
      %1645 = vmatprep.subr.mxu0 %v118
      %1646 = vmatpush1.msra.mxu0 %v117
      %1647 = vmatprep.subr.mxu0 %v122
      %1648 = vmatpush1.msra.mxu0 %v121
      %1649 = vmatprep.subr.mxu0 %v126
      %1650 = vmatpush1.msra.mxu0 %v125
      %1651 = vmatprep.subr.mxu0 %v130
      %1652 = vmatpush1.msra.mxu0 %v129
      %1653 = vmatprep.subr.mxu0 %v134
      %1654 = vmatpush1.msra.mxu0 %v133
      %1655 = vmatprep.subr.mxu0 %v138
      %1656 = vmatpush1.msra.mxu0 %v137
      %1657 = vmatprep.subr.mxu0 %v142
      %1658 = vmatpush1.msra.mxu0 %v141
      %1659 = vmatprep.subr.mxu0 %v146
      %1660 = vmatpush1.msra.mxu0 %v145
      %1661 = vmatprep.subr.mxu0 %v150
      %1662 = vmatpush1.msra.mxu0 %v149
      %1663 = vmatprep.subr.mxu0 %v154
      %1664 = vmatpush1.msra.mxu0 %v153
      %1665 = vmatprep.subr.mxu0 %v158
      %1666 = vmatpush1.msra.mxu0 %v157
      %1667 = vmatprep.subr.mxu0 %v162
      %1668 = vmatpush1.msra.mxu0 %v161
      %1669 = vmatprep.subr.mxu0 %v166
      %1670 = vmatpush1.msra.mxu0 %v165
      %1671 = vmatprep.subr.mxu0 %v170
      %1672 = vmatpush1.msra.mxu0 %v169
      %1673 = vmatprep.subr.mxu0 0.0
      %1674 = vmatpush1.msra.mxu0 0.0
      %1675 = vmatprep.subr.mxu0 0.0
      %1676 = vmatpush1.msra.mxu0 0.0
      %1677 = vmatprep.subr.mxu0 0.0
      %1678 = vmatpush1.msra.mxu0 0.0
      %1679 = vmatprep.subr.mxu0 0.0
      %1680 = vmatpush1.msra.mxu0 0.0
      %1681 = vmatprep.subr.mxu0 0.0
      %1682 = vmatpush1.msra.mxu0 0.0
      %1683 = vmatprep.subr.mxu0 0.0
      %1684 = vmatpush1.msra.mxu0 0.0
      %1685 = vmatprep.subr.mxu0 0.0
      %1686 = vmatpush1.msra.mxu0 0.0
      %1687 = vmatprep.subr.mxu0 0.0
      %1688 = vmatpush1.msra.mxu0 0.0
      %1689 = vmatprep.subr.mxu0 0.0
      %1690 = vmatpush1.msra.mxu0 0.0
      %1691 = vmatprep.subr.mxu0 0.0
      %1692 = vmatpush1.msra.mxu0 0.0
      %1693 = vmatprep.subr.mxu0 0.0
      %1694 = vmatpush1.msra.mxu0 0.0
      %1695 = vmatprep.subr.mxu0 0.0
      %1696 = vmatpush1.msra.mxu0 0.0
      %1697 = vmatprep.subr.mxu0 0.0
      %1698 = vmatpush1.msra.mxu0 0.0
      %1699 = vmatprep.subr.mxu0 0.0
      %1700 = vmatpush1.msra.mxu0 0.0
      %1701 = vmatprep.subr.mxu0 0.0
      %1702 = vmatpush1.msra.mxu0 0.0
      %1703 = vmatprep.subr.mxu0 0.0
      %1704 = vmatpush1.msra.mxu0 0.0
      %1705 = vmatprep.mubr.f32.mxu0 0.0
      %1706 = vmatmul.mubr.f32.gmra.mrb[0].mxu0 %v1569
      %v1707 = vpop.f32.mrb[0].mxu0
      %v1708 = vadd.f32 0.0, %v1707
      %v1709 = vpop.f32.mrb[0].mxu0
      %v1710 = vadd.f32 0.0, %v1709
      %1711 = vdwg.mxu0
      %v1712 = vadd.f32 %v1565, %v1637
      %v1713 = vadd.f32 %v1566, %v1639
      %v1714 = vadd.f32 %v1567, %v1708
      %v1715 = vadd.f32 %v1568, %v1710
      %v1716 = vld [vmem:[#allocation4] sm:$0xff]
      %v1717 = vmul.f32 %v1712, 0.5
      %v1718 = vtanh.pop %v1717
      %v1719 = vmul.f32 %v1718, 0.5
      %v1720 = vadd.f32 %v1719, 0.5
      %v1721 = vmul.f32 %v1713, 0.5
      %v1722 = vtanh.pop %v1721
      %v1723 = vmul.f32 %v1722, 0.5
      %v1724 = vadd.f32 %v1723, 0.5
      %v1725 = vtanh.pop %v1714
      %v1726 = vmul.f32 %v1715, 0.5
      %v1727 = vtanh.pop %v1726
      %v1728 = vmul.f32 %v1727, 0.5
      %v1729 = vadd.f32 %v1728, 0.5
      %v1730 = vmul.f32 %v1724, %v1716
      %v1731 = vmul.f32 %v1720, %v1725
      %v1732 = vadd.f32 %v1730, %v1731
      %v1733 = vtanh.pop %v1732
      %v1734 = vmul.f32 %v1729, %v1733
      %1735 = vst [vmem:[#allocation3] sm:$0xff] %v1734
      %1736 = vst [vmem:[#allocation4] sm:$0xff] %v1732
    $region41: #{lstm_model_forward.3} parent=1 // pred_fallthru
      _
    %s1737 = sadd.s32 %s1383, 2
    %p1738 = scmp.lt.s32.totalorder %s1737, 8
    // Predicated region
    $region42: #{lstm_model_forward.3} parent=1 // pred_check
      %p1739 = pneg %p1738
    $region43: #{lstm_model_forward.3} parent=1 // pred_check_branch
      %1741 = sbr.rel (%p1739) target = $region45
    $region44: #{lstm_model_forward.3} parent=1 // pred_region
      %v1742 = vld [vmem:[%s633] sm:$0xff]
      %v1743 = vld [vmem:[%s633 + $0x8] sm:$0xff]
      %v1744 = vld [vmem:[%s633 + $0x10] sm:$0xff]
      %v1745 = vld [vmem:[%s633 + $0x18] sm:$0xff]
      %v1746 = vld [vmem:[#allocation3] sm:$0xff]
      %1747 = vmatprep.subr.mxu0 %v108
      %1748 = vmatpush1.msra.mxu0 %v107
      %1749 = vmatprep.subr.mxu0 %v112
      %1750 = vmatpush1.msra.mxu0 %v111
      %1751 = vmatprep.subr.mxu0 %v116
      %1752 = vmatpush1.msra.mxu0 %v115
      %1753 = vmatprep.subr.mxu0 %v120
      %1754 = vmatpush1.msra.mxu0 %v119
      %1755 = vmatprep.subr.mxu0 %v124
      %1756 = vmatpush1.msra.mxu0 %v123
      %1757 = vmatprep.subr.mxu0 %v128
      %1758 = vmatpush1.msra.mxu0 %v127
      %1759 = vmatprep.subr.mxu0 %v132
      %1760 = vmatpush1.msra.mxu0 %v131
      %1761 = vmatprep.subr.mxu0 %v136
      %1762 = vmatpush1.msra.mxu0 %v135
      %1763 = vmatprep.subr.mxu0 %v140
      %1764 = vmatpush1.msra.mxu0 %v139
      %1765 = vmatprep.subr.mxu0 %v144
      %1766 = vmatpush1.msra.mxu0 %v143
      %1767 = vmatprep.subr.mxu0 %v148
      %1768 = vmatpush1.msra.mxu0 %v147
      %1769 = vmatprep.subr.mxu0 %v152
      %1770 = vmatpush1.msra.mxu0 %v151
      %1771 = vmatprep.subr.mxu0 %v156
      %1772 = vmatpush1.msra.mxu0 %v155
      %1773 = vmatprep.subr.mxu0 %v160
      %1774 = vmatpush1.msra.mxu0 %v159
      %1775 = vmatprep.subr.mxu0 %v164
      %1776 = vmatpush1.msra.mxu0 %v163
      %1777 = vmatprep.subr.mxu0 %v168
      %1778 = vmatpush1.msra.mxu0 %v167
      %1779 = vmatprep.subr.mxu0 0.0
      %1780 = vmatpush1.msra.mxu0 0.0
      %1781 = vmatprep.subr.mxu0 0.0
      %1782 = vmatpush1.msra.mxu0 0.0
      %1783 = vmatprep.subr.mxu0 0.0
      %1784 = vmatpush1.msra.mxu0 0.0
      %1785 = vmatprep.subr.mxu0 0.0
      %1786 = vmatpush1.msra.mxu0 0.0
      %1787 = vmatprep.subr.mxu0 0.0
      %1788 = vmatpush1.msra.mxu0 0.0
      %1789 = vmatprep.subr.mxu0 0.0
      %1790 = vmatpush1.msra.mxu0 0.0
      %1791 = vmatprep.subr.mxu0 0.0
      %1792 = vmatpush1.msra.mxu0 0.0
      %1793 = vmatprep.subr.mxu0 0.0
      %1794 = vmatpush1.msra.mxu0 0.0
      %1795 = vmatprep.subr.mxu0 0.0
      %1796 = vmatpush1.msra.mxu0 0.0
      %1797 = vmatprep.subr.mxu0 0.0
      %1798 = vmatpush1.msra.mxu0 0.0
      %1799 = vmatprep.subr.mxu0 0.0
      %1800 = vmatpush1.msra.mxu0 0.0
      %1801 = vmatprep.subr.mxu0 0.0
      %1802 = vmatpush1.msra.mxu0 0.0
      %1803 = vmatprep.subr.mxu0 0.0
      %1804 = vmatpush1.msra.mxu0 0.0
      %1805 = vmatprep.subr.mxu0 0.0
      %1806 = vmatpush1.msra.mxu0 0.0
      %1807 = vmatprep.subr.mxu0 0.0
      %1808 = vmatpush1.msra.mxu0 0.0
      %1809 = vmatprep.subr.mxu0 0.0
      %1810 = vmatpush1.msra.mxu0 0.0
      %1811 = vmatprep.mubr.f32.mxu0 0.0
      %1812 = vmatmul.mubr.f32.gmra.mrb[0].mxu0 %v1746
      %v1813 = vpop.f32.mrb[0].mxu0
      %v1814 = vadd.f32 0.0, %v1813
      %v1815 = vpop.f32.mrb[0].mxu0
      %v1816 = vadd.f32 0.0, %v1815
      %1817 = vdwg.mxu0
      %1818 = vmatprep.subr.mxu0 %v110
      %1819 = vmatpush1.msra.mxu0 %v109
      %1820 = vmatprep.subr.mxu0 %v114
      %1821 = vmatpush1.msra.mxu0 %v113
      %1822 = vmatprep.subr.mxu0 %v118
      %1823 = vmatpush1.msra.mxu0 %v117
      %1824 = vmatprep.subr.mxu0 %v122
      %1825 = vmatpush1.msra.mxu0 %v121
      %1826 = vmatprep.subr.mxu0 %v126
      %1827 = vmatpush1.msra.mxu0 %v125
      %1828 = vmatprep.subr.mxu0 %v130
      %1829 = vmatpush1.msra.mxu0 %v129
      %1830 = vmatprep.subr.mxu0 %v134
      %1831 = vmatpush1.msra.mxu0 %v133
      %1832 = vmatprep.subr.mxu0 %v138
      %1833 = vmatpush1.msra.mxu0 %v137
      %1834 = vmatprep.subr.mxu0 %v142
      %1835 = vmatpush1.msra.mxu0 %v141
      %1836 = vmatprep.subr.mxu0 %v146
      %1837 = vmatpush1.msra.mxu0 %v145
      %1838 = vmatprep.subr.mxu0 %v150
      %1839 = vmatpush1.msra.mxu0 %v149
      %1840 = vmatprep.subr.mxu0 %v154
      %1841 = vmatpush1.msra.mxu0 %v153
      %1842 = vmatprep.subr.mxu0 %v158
      %1843 = vmatpush1.msra.mxu0 %v157
      %1844 = vmatprep.subr.mxu0 %v162
      %1845 = vmatpush1.msra.mxu0 %v161
      %1846 = vmatprep.subr.mxu0 %v166
      %1847 = vmatpush1.msra.mxu0 %v165
      %1848 = vmatprep.subr.mxu0 %v170
      %1849 = vmatpush1.msra.mxu0 %v169
      %1850 = vmatprep.subr.mxu0 0.0
      %1851 = vmatpush1.msra.mxu0 0.0
      %1852 = vmatprep.subr.mxu0 0.0
      %1853 = vmatpush1.msra.mxu0 0.0
      %1854 = vmatprep.subr.mxu0 0.0
      %1855 = vmatpush1.msra.mxu0 0.0
      %1856 = vmatprep.subr.mxu0 0.0
      %1857 = vmatpush1.msra.mxu0 0.0
      %1858 = vmatprep.subr.mxu0 0.0
      %1859 = vmatpush1.msra.mxu0 0.0
      %1860 = vmatprep.subr.mxu0 0.0
      %1861 = vmatpush1.msra.mxu0 0.0
      %1862 = vmatprep.subr.mxu0 0.0
      %1863 = vmatpush1.msra.mxu0 0.0
      %1864 = vmatprep.subr.mxu0 0.0
      %1865 = vmatpush1.msra.mxu0 0.0
      %1866 = vmatprep.subr.mxu0 0.0
      %1867 = vmatpush1.msra.mxu0 0.0
      %1868 = vmatprep.subr.mxu0 0.0
      %1869 = vmatpush1.msra.mxu0 0.0
      %1870 = vmatprep.subr.mxu0 0.0
      %1871 = vmatpush1.msra.mxu0 0.0
      %1872 = vmatprep.subr.mxu0 0.0
      %1873 = vmatpush1.msra.mxu0 0.0
      %1874 = vmatprep.subr.mxu0 0.0
      %1875 = vmatpush1.msra.mxu0 0.0
      %1876 = vmatprep.subr.mxu0 0.0
      %1877 = vmatpush1.msra.mxu0 0.0
      %1878 = vmatprep.subr.mxu0 0.0
      %1879 = vmatpush1.msra.mxu0 0.0
      %1880 = vmatprep.subr.mxu0 0.0
      %1881 = vmatpush1.msra.mxu0 0.0
      %1882 = vmatprep.mubr.f32.mxu0 0.0
      %1883 = vmatmul.mubr.f32.gmra.mrb[0].mxu0 %v1746
      %v1884 = vpop.f32.mrb[0].mxu0
      %v1885 = vadd.f32 0.0, %v1884
      %v1886 = vpop.f32.mrb[0].mxu0
      %v1887 = vadd.f32 0.0, %v1886
      %1888 = vdwg.mxu0
      %v1889 = vadd.f32 %v1742, %v1814
      %v1890 = vadd.f32 %v1743, %v1816
      %v1891 = vadd.f32 %v1744, %v1885
      %v1892 = vadd.f32 %v1745, %v1887
      %v1893 = vld [vmem:[#allocation4] sm:$0xff]
      %v1894 = vmul.f32 %v1889, 0.5
      %v1895 = vtanh.pop %v1894
      %v1896 = vmul.f32 %v1895, 0.5
      %v1897 = vadd.f32 %v1896, 0.5
      %v1898 = vmul.f32 %v1890, 0.5
      %v1899 = vtanh.pop %v1898
      %v1900 = vmul.f32 %v1899, 0.5
      %v1901 = vadd.f32 %v1900, 0.5
      %v1902 = vtanh.pop %v1891
      %v1903 = vmul.f32 %v1892, 0.5
      %v1904 = vtanh.pop %v1903
      %v1905 = vmul.f32 %v1904, 0.5
      %v1906 = vadd.f32 %v1905, 0.5
      %v1907 = vmul.f32 %v1901, %v1893
      %v1908 = vmul.f32 %v1897, %v1902
      %v1909 = vadd.f32 %v1907, %v1908
      %v1910 = vtanh.pop %v1909
      %v1911 = vmul.f32 %v1906, %v1910
      %1912 = vst [vmem:[#allocation3] sm:$0xff] %v1911
      %1913 = vst [vmem:[#allocation4] sm:$0xff] %v1909
    $region45: #{lstm_model_forward.3} parent=1 // pred_fallthru
      _
    %s1914 = sadd.s32 %s1383, 3
    %p1915 = scmp.lt.s32.totalorder %s1914, 8
    // Predicated region
    $region46: #{lstm_model_forward.3} parent=1 // pred_check
      %p1916 = pneg %p1915
    $region47: #{lstm_model_forward.3} parent=1 // pred_check_branch
      %1918 = sbr.rel (%p1916) target = $region49
    $region48: #{lstm_model_forward.3} parent=1 // pred_region
      %v1919 = vld [vmem:[%s782] sm:$0xff]
      %v1920 = vld [vmem:[%s782 + $0x8] sm:$0xff]
      %v1921 = vld [vmem:[%s782 + $0x10] sm:$0xff]
      %v1922 = vld [vmem:[%s782 + $0x18] sm:$0xff]
      %v1923 = vld [vmem:[#allocation3] sm:$0xff]
      %1924 = vmatprep.subr.mxu0 %v108
      %1925 = vmatpush1.msra.mxu0 %v107
      %1926 = vmatprep.subr.mxu0 %v112
      %1927 = vmatpush1.msra.mxu0 %v111
      %1928 = vmatprep.subr.mxu0 %v116
      %1929 = vmatpush1.msra.mxu0 %v115
      %1930 = vmatprep.subr.mxu0 %v120
      %1931 = vmatpush1.msra.mxu0 %v119
      %1932 = vmatprep.subr.mxu0 %v124
      %1933 = vmatpush1.msra.mxu0 %v123
      %1934 = vmatprep.subr.mxu0 %v128
      %1935 = vmatpush1.msra.mxu0 %v127
      %1936 = vmatprep.subr.mxu0 %v132
      %1937 = vmatpush1.msra.mxu0 %v131
      %1938 = vmatprep.subr.mxu0 %v136
      %1939 = vmatpush1.msra.mxu0 %v135
      %1940 = vmatprep.subr.mxu0 %v140
      %1941 = vmatpush1.msra.mxu0 %v139
      %1942 = vmatprep.subr.mxu0 %v144
      %1943 = vmatpush1.msra.mxu0 %v143
      %1944 = vmatprep.subr.mxu0 %v148
      %1945 = vmatpush1.msra.mxu0 %v147
      %1946 = vmatprep.subr.mxu0 %v152
      %1947 = vmatpush1.msra.mxu0 %v151
      %1948 = vmatprep.subr.mxu0 %v156
      %1949 = vmatpush1.msra.mxu0 %v155
      %1950 = vmatprep.subr.mxu0 %v160
      %1951 = vmatpush1.msra.mxu0 %v159
      %1952 = vmatprep.subr.mxu0 %v164
      %1953 = vmatpush1.msra.mxu0 %v163
      %1954 = vmatprep.subr.mxu0 %v168
      %1955 = vmatpush1.msra.mxu0 %v167
      %1956 = vmatprep.subr.mxu0 0.0
      %1957 = vmatpush1.msra.mxu0 0.0
      %1958 = vmatprep.subr.mxu0 0.0
      %1959 = vmatpush1.msra.mxu0 0.0
      %1960 = vmatprep.subr.mxu0 0.0
      %1961 = vmatpush1.msra.mxu0 0.0
      %1962 = vmatprep.subr.mxu0 0.0
      %1963 = vmatpush1.msra.mxu0 0.0
      %1964 = vmatprep.subr.mxu0 0.0
      %1965 = vmatpush1.msra.mxu0 0.0
      %1966 = vmatprep.subr.mxu0 0.0
      %1967 = vmatpush1.msra.mxu0 0.0
      %1968 = vmatprep.subr.mxu0 0.0
      %1969 = vmatpush1.msra.mxu0 0.0
      %1970 = vmatprep.subr.mxu0 0.0
      %1971 = vmatpush1.msra.mxu0 0.0
      %1972 = vmatprep.subr.mxu0 0.0
      %1973 = vmatpush1.msra.mxu0 0.0
      %1974 = vmatprep.subr.mxu0 0.0
      %1975 = vmatpush1.msra.mxu0 0.0
      %1976 = vmatprep.subr.mxu0 0.0
      %1977 = vmatpush1.msra.mxu0 0.0
      %1978 = vmatprep.subr.mxu0 0.0
      %1979 = vmatpush1.msra.mxu0 0.0
      %1980 = vmatprep.subr.mxu0 0.0
      %1981 = vmatpush1.msra.mxu0 0.0
      %1982 = vmatprep.subr.mxu0 0.0
      %1983 = vmatpush1.msra.mxu0 0.0
      %1984 = vmatprep.subr.mxu0 0.0
      %1985 = vmatpush1.msra.mxu0 0.0
      %1986 = vmatprep.subr.mxu0 0.0
      %1987 = vmatpush1.msra.mxu0 0.0
      %1988 = vmatprep.mubr.f32.mxu0 0.0
      %1989 = vmatmul.mubr.f32.gmra.mrb[0].mxu0 %v1923
      %v1990 = vpop.f32.mrb[0].mxu0
      %v1991 = vadd.f32 0.0, %v1990
      %v1992 = vpop.f32.mrb[0].mxu0
      %v1993 = vadd.f32 0.0, %v1992
      %1994 = vdwg.mxu0
      %1995 = vmatprep.subr.mxu0 %v110
      %1996 = vmatpush1.msra.mxu0 %v109
      %1997 = vmatprep.subr.mxu0 %v114
      %1998 = vmatpush1.msra.mxu0 %v113
      %1999 = vmatprep.subr.mxu0 %v118
      %2000 = vmatpush1.msra.mxu0 %v117
      %2001 = vmatprep.subr.mxu0 %v122
      %2002 = vmatpush1.msra.mxu0 %v121
      %2003 = vmatprep.subr.mxu0 %v126
      %2004 = vmatpush1.msra.mxu0 %v125
      %2005 = vmatprep.subr.mxu0 %v130
      %2006 = vmatpush1.msra.mxu0 %v129
      %2007 = vmatprep.subr.mxu0 %v134
      %2008 = vmatpush1.msra.mxu0 %v133
      %2009 = vmatprep.subr.mxu0 %v138
      %2010 = vmatpush1.msra.mxu0 %v137
      %2011 = vmatprep.subr.mxu0 %v142
      %2012 = vmatpush1.msra.mxu0 %v141
      %2013 = vmatprep.subr.mxu0 %v146
      %2014 = vmatpush1.msra.mxu0 %v145
      %2015 = vmatprep.subr.mxu0 %v150
      %2016 = vmatpush1.msra.mxu0 %v149
      %2017 = vmatprep.subr.mxu0 %v154
      %2018 = vmatpush1.msra.mxu0 %v153
      %2019 = vmatprep.subr.mxu0 %v158
      %2020 = vmatpush1.msra.mxu0 %v157
      %2021 = vmatprep.subr.mxu0 %v162
      %2022 = vmatpush1.msra.mxu0 %v161
      %2023 = vmatprep.subr.mxu0 %v166
      %2024 = vmatpush1.msra.mxu0 %v165
      %2025 = vmatprep.subr.mxu0 %v170
      %2026 = vmatpush1.msra.mxu0 %v169
      %2027 = vmatprep.subr.mxu0 0.0
      %2028 = vmatpush1.msra.mxu0 0.0
      %2029 = vmatprep.subr.mxu0 0.0
      %2030 = vmatpush1.msra.mxu0 0.0
      %2031 = vmatprep.subr.mxu0 0.0
      %2032 = vmatpush1.msra.mxu0 0.0
      %2033 = vmatprep.subr.mxu0 0.0
      %2034 = vmatpush1.msra.mxu0 0.0
      %2035 = vmatprep.subr.mxu0 0.0
      %2036 = vmatpush1.msra.mxu0 0.0
      %2037 = vmatprep.subr.mxu0 0.0
      %2038 = vmatpush1.msra.mxu0 0.0
      %2039 = vmatprep.subr.mxu0 0.0
      %2040 = vmatpush1.msra.mxu0 0.0
      %2041 = vmatprep.subr.mxu0 0.0
      %2042 = vmatpush1.msra.mxu0 0.0
      %2043 = vmatprep.subr.mxu0 0.0
      %2044 = vmatpush1.msra.mxu0 0.0
      %2045 = vmatprep.subr.mxu0 0.0
      %2046 = vmatpush1.msra.mxu0 0.0
      %2047 = vmatprep.subr.mxu0 0.0
      %2048 = vmatpush1.msra.mxu0 0.0
      %2049 = vmatprep.subr.mxu0 0.0
      %2050 = vmatpush1.msra.mxu0 0.0
      %2051 = vmatprep.subr.mxu0 0.0
      %2052 = vmatpush1.msra.mxu0 0.0
      %2053 = vmatprep.subr.mxu0 0.0
      %2054 = vmatpush1.msra.mxu0 0.0
      %2055 = vmatprep.subr.mxu0 0.0
      %2056 = vmatpush1.msra.mxu0 0.0
      %2057 = vmatprep.subr.mxu0 0.0
      %2058 = vmatpush1.msra.mxu0 0.0
      %2059 = vmatprep.mubr.f32.mxu0 0.0
      %2060 = vmatmul.mubr.f32.gmra.mrb[0].mxu0 %v1923
      %v2061 = vpop.f32.mrb[0].mxu0
      %v2062 = vadd.f32 0.0, %v2061
      %v2063 = vpop.f32.mrb[0].mxu0
      %v2064 = vadd.f32 0.0, %v2063
      %2065 = vdwg.mxu0
      %v2066 = vadd.f32 %v1919, %v1991
      %v2067 = vadd.f32 %v1920, %v1993
      %v2068 = vadd.f32 %v1921, %v2062
      %v2069 = vadd.f32 %v1922, %v2064
      %v2070 = vld [vmem:[#allocation4] sm:$0xff]
      %v2071 = vmul.f32 %v2066, 0.5
      %v2072 = vtanh.pop %v2071
      %v2073 = vmul.f32 %v2072, 0.5
      %v2074 = vadd.f32 %v2073, 0.5
      %v2075 = vmul.f32 %v2067, 0.5
      %v2076 = vtanh.pop %v2075
      %v2077 = vmul.f32 %v2076, 0.5
      %v2078 = vadd.f32 %v2077, 0.5
      %v2079 = vtanh.pop %v2068
      %v2080 = vmul.f32 %v2069, 0.5
      %v2081 = vtanh.pop %v2080
      %v2082 = vmul.f32 %v2081, 0.5
      %v2083 = vadd.f32 %v2082, 0.5
      %v2084 = vmul.f32 %v2078, %v2070
      %v2085 = vmul.f32 %v2074, %v2079
      %v2086 = vadd.f32 %v2084, %v2085
      %v2087 = vtanh.pop %v2086
      %v2088 = vmul.f32 %v2083, %v2087
      %2089 = vst [vmem:[#allocation3] sm:$0xff] %v2088
      %2090 = vst [vmem:[#allocation4] sm:$0xff] %v2086
    $region49: #{lstm_model_forward.3} parent=1 // pred_fallthru
      _
    %s2091 = sadd.s32 %s1383, 4
    %p2092 = scmp.lt.s32.totalorder %s2091, 8
    // Predicated region
    $region50: #{lstm_model_forward.3} parent=1 // pred_check
      %p2093 = pneg %p2092
    $region51: #{lstm_model_forward.3} parent=1 // pred_check_branch
      %2095 = sbr.rel (%p2093) target = $region53
    $region52: #{lstm_model_forward.3} parent=1 // pred_region
      %v2096 = vld [vmem:[%s931] sm:$0xff]
      %v2097 = vld [vmem:[%s931 + $0x8] sm:$0xff]
      %v2098 = vld [vmem:[%s931 + $0x10] sm:$0xff]
      %v2099 = vld [vmem:[%s931 + $0x18] sm:$0xff]
      %v2100 = vld [vmem:[#allocation3] sm:$0xff]
      %2101 = vmatprep.subr.mxu0 %v108
      %2102 = vmatpush1.msra.mxu0 %v107
      %2103 = vmatprep.subr.mxu0 %v112
      %2104 = vmatpush1.msra.mxu0 %v111
      %2105 = vmatprep.subr.mxu0 %v116
      %2106 = vmatpush1.msra.mxu0 %v115
      %2107 = vmatprep.subr.mxu0 %v120
      %2108 = vmatpush1.msra.mxu0 %v119
      %2109 = vmatprep.subr.mxu0 %v124
      %2110 = vmatpush1.msra.mxu0 %v123
      %2111 = vmatprep.subr.mxu0 %v128
      %2112 = vmatpush1.msra.mxu0 %v127
      %2113 = vmatprep.subr.mxu0 %v132
      %2114 = vmatpush1.msra.mxu0 %v131
      %2115 = vmatprep.subr.mxu0 %v136
      %2116 = vmatpush1.msra.mxu0 %v135
      %2117 = vmatprep.subr.mxu0 %v140
      %2118 = vmatpush1.msra.mxu0 %v139
      %2119 = vmatprep.subr.mxu0 %v144
      %2120 = vmatpush1.msra.mxu0 %v143
      %2121 = vmatprep.subr.mxu0 %v148
      %2122 = vmatpush1.msra.mxu0 %v147
      %2123 = vmatprep.subr.mxu0 %v152
      %2124 = vmatpush1.msra.mxu0 %v151
      %2125 = vmatprep.subr.mxu0 %v156
      %2126 = vmatpush1.msra.mxu0 %v155
      %2127 = vmatprep.subr.mxu0 %v160
      %2128 = vmatpush1.msra.mxu0 %v159
      %2129 = vmatprep.subr.mxu0 %v164
      %2130 = vmatpush1.msra.mxu0 %v163
      %2131 = vmatprep.subr.mxu0 %v168
      %2132 = vmatpush1.msra.mxu0 %v167
      %2133 = vmatprep.subr.mxu0 0.0
      %2134 = vmatpush1.msra.mxu0 0.0
      %2135 = vmatprep.subr.mxu0 0.0
      %2136 = vmatpush1.msra.mxu0 0.0
      %2137 = vmatprep.subr.mxu0 0.0
      %2138 = vmatpush1.msra.mxu0 0.0
      %2139 = vmatprep.subr.mxu0 0.0
      %2140 = vmatpush1.msra.mxu0 0.0
      %2141 = vmatprep.subr.mxu0 0.0
      %2142 = vmatpush1.msra.mxu0 0.0
      %2143 = vmatprep.subr.mxu0 0.0
      %2144 = vmatpush1.msra.mxu0 0.0
      %2145 = vmatprep.subr.mxu0 0.0
      %2146 = vmatpush1.msra.mxu0 0.0
      %2147 = vmatprep.subr.mxu0 0.0
      %2148 = vmatpush1.msra.mxu0 0.0
      %2149 = vmatprep.subr.mxu0 0.0
      %2150 = vmatpush1.msra.mxu0 0.0
      %2151 = vmatprep.subr.mxu0 0.0
      %2152 = vmatpush1.msra.mxu0 0.0
      %2153 = vmatprep.subr.mxu0 0.0
      %2154 = vmatpush1.msra.mxu0 0.0
      %2155 = vmatprep.subr.mxu0 0.0
      %2156 = vmatpush1.msra.mxu0 0.0
      %2157 = vmatprep.subr.mxu0 0.0
      %2158 = vmatpush1.msra.mxu0 0.0
      %2159 = vmatprep.subr.mxu0 0.0
      %2160 = vmatpush1.msra.mxu0 0.0
      %2161 = vmatprep.subr.mxu0 0.0
      %2162 = vmatpush1.msra.mxu0 0.0
      %2163 = vmatprep.subr.mxu0 0.0
      %2164 = vmatpush1.msra.mxu0 0.0
      %2165 = vmatprep.mubr.f32.mxu0 0.0
      %2166 = vmatmul.mubr.f32.gmra.mrb[0].mxu0 %v2100
      %v2167 = vpop.f32.mrb[0].mxu0
      %v2168 = vadd.f32 0.0, %v2167
      %v2169 = vpop.f32.mrb[0].mxu0
      %v2170 = vadd.f32 0.0, %v2169
      %2171 = vdwg.mxu0
      %2172 = vmatprep.subr.mxu0 %v110
      %2173 = vmatpush1.msra.mxu0 %v109
      %2174 = vmatprep.subr.mxu0 %v114
      %2175 = vmatpush1.msra.mxu0 %v113
      %2176 = vmatprep.subr.mxu0 %v118
      %2177 = vmatpush1.msra.mxu0 %v117
      %2178 = vmatprep.subr.mxu0 %v122
      %2179 = vmatpush1.msra.mxu0 %v121
      %2180 = vmatprep.subr.mxu0 %v126
      %2181 = vmatpush1.msra.mxu0 %v125
      %2182 = vmatprep.subr.mxu0 %v130
      %2183 = vmatpush1.msra.mxu0 %v129
      %2184 = vmatprep.subr.mxu0 %v134
      %2185 = vmatpush1.msra.mxu0 %v133
      %2186 = vmatprep.subr.mxu0 %v138
      %2187 = vmatpush1.msra.mxu0 %v137
      %2188 = vmatprep.subr.mxu0 %v142
      %2189 = vmatpush1.msra.mxu0 %v141
      %2190 = vmatprep.subr.mxu0 %v146
      %2191 = vmatpush1.msra.mxu0 %v145
      %2192 = vmatprep.subr.mxu0 %v150
      %2193 = vmatpush1.msra.mxu0 %v149
      %2194 = vmatprep.subr.mxu0 %v154
      %2195 = vmatpush1.msra.mxu0 %v153
      %2196 = vmatprep.subr.mxu0 %v158
      %2197 = vmatpush1.msra.mxu0 %v157
      %2198 = vmatprep.subr.mxu0 %v162
      %2199 = vmatpush1.msra.mxu0 %v161
      %2200 = vmatprep.subr.mxu0 %v166
      %2201 = vmatpush1.msra.mxu0 %v165
      %2202 = vmatprep.subr.mxu0 %v170
      %2203 = vmatpush1.msra.mxu0 %v169
      %2204 = vmatprep.subr.mxu0 0.0
      %2205 = vmatpush1.msra.mxu0 0.0
      %2206 = vmatprep.subr.mxu0 0.0
      %2207 = vmatpush1.msra.mxu0 0.0
      %2208 = vmatprep.subr.mxu0 0.0
      %2209 = vmatpush1.msra.mxu0 0.0
      %2210 = vmatprep.subr.mxu0 0.0
      %2211 = vmatpush1.msra.mxu0 0.0
      %2212 = vmatprep.subr.mxu0 0.0
      %2213 = vmatpush1.msra.mxu0 0.0
      %2214 = vmatprep.subr.mxu0 0.0
      %2215 = vmatpush1.msra.mxu0 0.0
      %2216 = vmatprep.subr.mxu0 0.0
      %2217 = vmatpush1.msra.mxu0 0.0
      %2218 = vmatprep.subr.mxu0 0.0
      %2219 = vmatpush1.msra.mxu0 0.0
      %2220 = vmatprep.subr.mxu0 0.0
      %2221 = vmatpush1.msra.mxu0 0.0
      %2222 = vmatprep.subr.mxu0 0.0
      %2223 = vmatpush1.msra.mxu0 0.0
      %2224 = vmatprep.subr.mxu0 0.0
      %2225 = vmatpush1.msra.mxu0 0.0
      %2226 = vmatprep.subr.mxu0 0.0
      %2227 = vmatpush1.msra.mxu0 0.0
      %2228 = vmatprep.subr.mxu0 0.0
      %2229 = vmatpush1.msra.mxu0 0.0
      %2230 = vmatprep.subr.mxu0 0.0
      %2231 = vmatpush1.msra.mxu0 0.0
      %2232 = vmatprep.subr.mxu0 0.0
      %2233 = vmatpush1.msra.mxu0 0.0
      %2234 = vmatprep.subr.mxu0 0.0
      %2235 = vmatpush1.msra.mxu0 0.0
      %2236 = vmatprep.mubr.f32.mxu0 0.0
      %2237 = vmatmul.mubr.f32.gmra.mrb[0].mxu0 %v2100
      %v2238 = vpop.f32.mrb[0].mxu0
      %v2239 = vadd.f32 0.0, %v2238
      %v2240 = vpop.f32.mrb[0].mxu0
      %v2241 = vadd.f32 0.0, %v2240
      %2242 = vdwg.mxu0
      %v2243 = vadd.f32 %v2096, %v2168
      %v2244 = vadd.f32 %v2097, %v2170
      %v2245 = vadd.f32 %v2098, %v2239
      %v2246 = vadd.f32 %v2099, %v2241
      %v2247 = vld [vmem:[#allocation4] sm:$0xff]
      %v2248 = vmul.f32 %v2243, 0.5
      %v2249 = vtanh.pop %v2248
      %v2250 = vmul.f32 %v2249, 0.5
      %v2251 = vadd.f32 %v2250, 0.5
      %v2252 = vmul.f32 %v2244, 0.5
      %v2253 = vtanh.pop %v2252
      %v2254 = vmul.f32 %v2253, 0.5
      %v2255 = vadd.f32 %v2254, 0.5
      %v2256 = vtanh.pop %v2245
      %v2257 = vmul.f32 %v2246, 0.5
      %v2258 = vtanh.pop %v2257
      %v2259 = vmul.f32 %v2258, 0.5
      %v2260 = vadd.f32 %v2259, 0.5
      %v2261 = vmul.f32 %v2255, %v2247
      %v2262 = vmul.f32 %v2251, %v2256
      %v2263 = vadd.f32 %v2261, %v2262
      %v2264 = vtanh.pop %v2263
      %v2265 = vmul.f32 %v2260, %v2264
      %2266 = vst [vmem:[#allocation3] sm:$0xff] %v2265
      %2267 = vst [vmem:[#allocation4] sm:$0xff] %v2263
    $region53: #{lstm_model_forward.3} parent=1 // pred_fallthru
      _
    %s2268 = sadd.s32 %s1383, 5
    %p2269 = scmp.lt.s32.totalorder %s2268, 8
    // Predicated region
    $region54: #{lstm_model_forward.3} parent=1 // pred_check
      %p2270 = pneg %p2269
    $region55: #{lstm_model_forward.3} parent=1 // pred_check_branch
      %2272 = sbr.rel (%p2270) target = $region57
    $region56: #{lstm_model_forward.3} parent=1 // pred_region
      %v2273 = vld [vmem:[%s1080] sm:$0xff]
      %v2274 = vld [vmem:[%s1080 + $0x8] sm:$0xff]
      %v2275 = vld [vmem:[%s1080 + $0x10] sm:$0xff]
      %v2276 = vld [vmem:[%s1080 + $0x18] sm:$0xff]
      %v2277 = vld [vmem:[#allocation3] sm:$0xff]
      %2278 = vmatprep.subr.mxu0 %v108
      %2279 = vmatpush1.msra.mxu0 %v107
      %2280 = vmatprep.subr.mxu0 %v112
      %2281 = vmatpush1.msra.mxu0 %v111
      %2282 = vmatprep.subr.mxu0 %v116
      %2283 = vmatpush1.msra.mxu0 %v115
      %2284 = vmatprep.subr.mxu0 %v120
      %2285 = vmatpush1.msra.mxu0 %v119
      %2286 = vmatprep.subr.mxu0 %v124
      %2287 = vmatpush1.msra.mxu0 %v123
      %2288 = vmatprep.subr.mxu0 %v128
      %2289 = vmatpush1.msra.mxu0 %v127
      %2290 = vmatprep.subr.mxu0 %v132
      %2291 = vmatpush1.msra.mxu0 %v131
      %2292 = vmatprep.subr.mxu0 %v136
      %2293 = vmatpush1.msra.mxu0 %v135
      %2294 = vmatprep.subr.mxu0 %v140
      %2295 = vmatpush1.msra.mxu0 %v139
      %2296 = vmatprep.subr.mxu0 %v144
      %2297 = vmatpush1.msra.mxu0 %v143
      %2298 = vmatprep.subr.mxu0 %v148
      %2299 = vmatpush1.msra.mxu0 %v147
      %2300 = vmatprep.subr.mxu0 %v152
      %2301 = vmatpush1.msra.mxu0 %v151
      %2302 = vmatprep.subr.mxu0 %v156
      %2303 = vmatpush1.msra.mxu0 %v155
      %2304 = vmatprep.subr.mxu0 %v160
      %2305 = vmatpush1.msra.mxu0 %v159
      %2306 = vmatprep.subr.mxu0 %v164
      %2307 = vmatpush1.msra.mxu0 %v163
      %2308 = vmatprep.subr.mxu0 %v168
      %2309 = vmatpush1.msra.mxu0 %v167
      %2310 = vmatprep.subr.mxu0 0.0
      %2311 = vmatpush1.msra.mxu0 0.0
      %2312 = vmatprep.subr.mxu0 0.0
      %2313 = vmatpush1.msra.mxu0 0.0
      %2314 = vmatprep.subr.mxu0 0.0
      %2315 = vmatpush1.msra.mxu0 0.0
      %2316 = vmatprep.subr.mxu0 0.0
      %2317 = vmatpush1.msra.mxu0 0.0
      %2318 = vmatprep.subr.mxu0 0.0
      %2319 = vmatpush1.msra.mxu0 0.0
      %2320 = vmatprep.subr.mxu0 0.0
      %2321 = vmatpush1.msra.mxu0 0.0
      %2322 = vmatprep.subr.mxu0 0.0
      %2323 = vmatpush1.msra.mxu0 0.0
      %2324 = vmatprep.subr.mxu0 0.0
      %2325 = vmatpush1.msra.mxu0 0.0
      %2326 = vmatprep.subr.mxu0 0.0
      %2327 = vmatpush1.msra.mxu0 0.0
      %2328 = vmatprep.subr.mxu0 0.0
      %2329 = vmatpush1.msra.mxu0 0.0
      %2330 = vmatprep.subr.mxu0 0.0
      %2331 = vmatpush1.msra.mxu0 0.0
      %2332 = vmatprep.subr.mxu0 0.0
      %2333 = vmatpush1.msra.mxu0 0.0
      %2334 = vmatprep.subr.mxu0 0.0
      %2335 = vmatpush1.msra.mxu0 0.0
      %2336 = vmatprep.subr.mxu0 0.0
      %2337 = vmatpush1.msra.mxu0 0.0
      %2338 = vmatprep.subr.mxu0 0.0
      %2339 = vmatpush1.msra.mxu0 0.0
      %2340 = vmatprep.subr.mxu0 0.0
      %2341 = vmatpush1.msra.mxu0 0.0
      %2342 = vmatprep.mubr.f32.mxu0 0.0
      %2343 = vmatmul.mubr.f32.gmra.mrb[0].mxu0 %v2277
      %v2344 = vpop.f32.mrb[0].mxu0
      %v2345 = vadd.f32 0.0, %v2344
      %v2346 = vpop.f32.mrb[0].mxu0
      %v2347 = vadd.f32 0.0, %v2346
      %2348 = vdwg.mxu0
      %2349 = vmatprep.subr.mxu0 %v110
      %2350 = vmatpush1.msra.mxu0 %v109
      %2351 = vmatprep.subr.mxu0 %v114
      %2352 = vmatpush1.msra.mxu0 %v113
      %2353 = vmatprep.subr.mxu0 %v118
      %2354 = vmatpush1.msra.mxu0 %v117
      %2355 = vmatprep.subr.mxu0 %v122
      %2356 = vmatpush1.msra.mxu0 %v121
      %2357 = vmatprep.subr.mxu0 %v126
      %2358 = vmatpush1.msra.mxu0 %v125
      %2359 = vmatprep.subr.mxu0 %v130
      %2360 = vmatpush1.msra.mxu0 %v129
      %2361 = vmatprep.subr.mxu0 %v134
      %2362 = vmatpush1.msra.mxu0 %v133
      %2363 = vmatprep.subr.mxu0 %v138
      %2364 = vmatpush1.msra.mxu0 %v137
      %2365 = vmatprep.subr.mxu0 %v142
      %2366 = vmatpush1.msra.mxu0 %v141
      %2367 = vmatprep.subr.mxu0 %v146
      %2368 = vmatpush1.msra.mxu0 %v145
      %2369 = vmatprep.subr.mxu0 %v150
      %2370 = vmatpush1.msra.mxu0 %v149
      %2371 = vmatprep.subr.mxu0 %v154
      %2372 = vmatpush1.msra.mxu0 %v153
      %2373 = vmatprep.subr.mxu0 %v158
      %2374 = vmatpush1.msra.mxu0 %v157
      %2375 = vmatprep.subr.mxu0 %v162
      %2376 = vmatpush1.msra.mxu0 %v161
      %2377 = vmatprep.subr.mxu0 %v166
      %2378 = vmatpush1.msra.mxu0 %v165
      %2379 = vmatprep.subr.mxu0 %v170
      %2380 = vmatpush1.msra.mxu0 %v169
      %2381 = vmatprep.subr.mxu0 0.0
      %2382 = vmatpush1.msra.mxu0 0.0
      %2383 = vmatprep.subr.mxu0 0.0
      %2384 = vmatpush1.msra.mxu0 0.0
      %2385 = vmatprep.subr.mxu0 0.0
      %2386 = vmatpush1.msra.mxu0 0.0
      %2387 = vmatprep.subr.mxu0 0.0
      %2388 = vmatpush1.msra.mxu0 0.0
      %2389 = vmatprep.subr.mxu0 0.0
      %2390 = vmatpush1.msra.mxu0 0.0
      %2391 = vmatprep.subr.mxu0 0.0
      %2392 = vmatpush1.msra.mxu0 0.0
      %2393 = vmatprep.subr.mxu0 0.0
      %2394 = vmatpush1.msra.mxu0 0.0
      %2395 = vmatprep.subr.mxu0 0.0
      %2396 = vmatpush1.msra.mxu0 0.0
      %2397 = vmatprep.subr.mxu0 0.0
      %2398 = vmatpush1.msra.mxu0 0.0
      %2399 = vmatprep.subr.mxu0 0.0
      %2400 = vmatpush1.msra.mxu0 0.0
      %2401 = vmatprep.subr.mxu0 0.0
      %2402 = vmatpush1.msra.mxu0 0.0
      %2403 = vmatprep.subr.mxu0 0.0
      %2404 = vmatpush1.msra.mxu0 0.0
      %2405 = vmatprep.subr.mxu0 0.0
      %2406 = vmatpush1.msra.mxu0 0.0
      %2407 = vmatprep.subr.mxu0 0.0
      %2408 = vmatpush1.msra.mxu0 0.0
      %2409 = vmatprep.subr.mxu0 0.0
      %2410 = vmatpush1.msra.mxu0 0.0
      %2411 = vmatprep.subr.mxu0 0.0
      %2412 = vmatpush1.msra.mxu0 0.0
      %2413 = vmatprep.mubr.f32.mxu0 0.0
      %2414 = vmatmul.mubr.f32.gmra.mrb[0].mxu0 %v2277
      %v2415 = vpop.f32.mrb[0].mxu0
      %v2416 = vadd.f32 0.0, %v2415
      %v2417 = vpop.f32.mrb[0].mxu0
      %v2418 = vadd.f32 0.0, %v2417
      %2419 = vdwg.mxu0
      %v2420 = vadd.f32 %v2273, %v2345
      %v2421 = vadd.f32 %v2274, %v2347
      %v2422 = vadd.f32 %v2275, %v2416
      %v2423 = vadd.f32 %v2276, %v2418
      %v2424 = vld [vmem:[#allocation4] sm:$0xff]
      %v2425 = vmul.f32 %v2420, 0.5
      %v2426 = vtanh.pop %v2425
      %v2427 = vmul.f32 %v2426, 0.5
      %v2428 = vadd.f32 %v2427, 0.5
      %v2429 = vmul.f32 %v2421, 0.5
      %v2430 = vtanh.pop %v2429
      %v2431 = vmul.f32 %v2430, 0.5
      %v2432 = vadd.f32 %v2431, 0.5
      %v2433 = vtanh.pop %v2422
      %v2434 = vmul.f32 %v2423, 0.5
      %v2435 = vtanh.pop %v2434
      %v2436 = vmul.f32 %v2435, 0.5
      %v2437 = vadd.f32 %v2436, 0.5
      %v2438 = vmul.f32 %v2432, %v2424
      %v2439 = vmul.f32 %v2428, %v2433
      %v2440 = vadd.f32 %v2438, %v2439
      %v2441 = vtanh.pop %v2440
      %v2442 = vmul.f32 %v2437, %v2441
      %2443 = vst [vmem:[#allocation3] sm:$0xff] %v2442
      %2444 = vst [vmem:[#allocation4] sm:$0xff] %v2440
    $region57: #{lstm_model_forward.3} parent=1 // pred_fallthru
      _
    %s2445 = sadd.s32 %s1383, 6
    %p2446 = scmp.lt.s32.totalorder %s2445, 8
    // Predicated region
    $region58: #{lstm_model_forward.3} parent=1 // pred_check
      %p2447 = pneg %p2446
    $region59: #{lstm_model_forward.3} parent=1 // pred_check_branch
      %2449 = sbr.rel (%p2447) target = $region61
    $region60: #{lstm_model_forward.3} parent=1 // pred_region
      %v2450 = vld [vmem:[%s1229] sm:$0xff]
      %v2451 = vld [vmem:[%s1229 + $0x8] sm:$0xff]
      %v2452 = vld [vmem:[%s1229 + $0x10] sm:$0xff]
      %v2453 = vld [vmem:[%s1229 + $0x18] sm:$0xff]
      %v2454 = vld [vmem:[#allocation3] sm:$0xff]
      %2455 = vmatprep.subr.mxu0 %v108
      %2456 = vmatpush1.msra.mxu0 %v107
      %2457 = vmatprep.subr.mxu0 %v112
      %2458 = vmatpush1.msra.mxu0 %v111
      %2459 = vmatprep.subr.mxu0 %v116
      %2460 = vmatpush1.msra.mxu0 %v115
      %2461 = vmatprep.subr.mxu0 %v120
      %2462 = vmatpush1.msra.mxu0 %v119
      %2463 = vmatprep.subr.mxu0 %v124
      %2464 = vmatpush1.msra.mxu0 %v123
      %2465 = vmatprep.subr.mxu0 %v128
      %2466 = vmatpush1.msra.mxu0 %v127
      %2467 = vmatprep.subr.mxu0 %v132
      %2468 = vmatpush1.msra.mxu0 %v131
      %2469 = vmatprep.subr.mxu0 %v136
      %2470 = vmatpush1.msra.mxu0 %v135
      %2471 = vmatprep.subr.mxu0 %v140
      %2472 = vmatpush1.msra.mxu0 %v139
      %2473 = vmatprep.subr.mxu0 %v144
      %2474 = vmatpush1.msra.mxu0 %v143
      %2475 = vmatprep.subr.mxu0 %v148
      %2476 = vmatpush1.msra.mxu0 %v147
      %2477 = vmatprep.subr.mxu0 %v152
      %2478 = vmatpush1.msra.mxu0 %v151
      %2479 = vmatprep.subr.mxu0 %v156
      %2480 = vmatpush1.msra.mxu0 %v155
      %2481 = vmatprep.subr.mxu0 %v160
      %2482 = vmatpush1.msra.mxu0 %v159
      %2483 = vmatprep.subr.mxu0 %v164
      %2484 = vmatpush1.msra.mxu0 %v163
      %2485 = vmatprep.subr.mxu0 %v168
      %2486 = vmatpush1.msra.mxu0 %v167
      %2487 = vmatprep.subr.mxu0 0.0
      %2488 = vmatpush1.msra.mxu0 0.0
      %2489 = vmatprep.subr.mxu0 0.0
      %2490 = vmatpush1.msra.mxu0 0.0
      %2491 = vmatprep.subr.mxu0 0.0
      %2492 = vmatpush1.msra.mxu0 0.0
      %2493 = vmatprep.subr.mxu0 0.0
      %2494 = vmatpush1.msra.mxu0 0.0
      %2495 = vmatprep.subr.mxu0 0.0
      %2496 = vmatpush1.msra.mxu0 0.0
      %2497 = vmatprep.subr.mxu0 0.0
      %2498 = vmatpush1.msra.mxu0 0.0
      %2499 = vmatprep.subr.mxu0 0.0
      %2500 = vmatpush1.msra.mxu0 0.0
      %2501 = vmatprep.subr.mxu0 0.0
      %2502 = vmatpush1.msra.mxu0 0.0
      %2503 = vmatprep.subr.mxu0 0.0
      %2504 = vmatpush1.msra.mxu0 0.0
      %2505 = vmatprep.subr.mxu0 0.0
      %2506 = vmatpush1.msra.mxu0 0.0
      %2507 = vmatprep.subr.mxu0 0.0
      %2508 = vmatpush1.msra.mxu0 0.0
      %2509 = vmatprep.subr.mxu0 0.0
      %2510 = vmatpush1.msra.mxu0 0.0
      %2511 = vmatprep.subr.mxu0 0.0
      %2512 = vmatpush1.msra.mxu0 0.0
      %2513 = vmatprep.subr.mxu0 0.0
      %2514 = vmatpush1.msra.mxu0 0.0
      %2515 = vmatprep.subr.mxu0 0.0
      %2516 = vmatpush1.msra.mxu0 0.0
      %2517 = vmatprep.subr.mxu0 0.0
      %2518 = vmatpush1.msra.mxu0 0.0
      %2519 = vmatprep.mubr.f32.mxu0 0.0
      %2520 = vmatmul.mubr.f32.gmra.mrb[0].mxu0 %v2454
      %v2521 = vpop.f32.mrb[0].mxu0
      %v2522 = vadd.f32 0.0, %v2521
      %v2523 = vpop.f32.mrb[0].mxu0
      %v2524 = vadd.f32 0.0, %v2523
      %2525 = vdwg.mxu0
      %2526 = vmatprep.subr.mxu0 %v110
      %2527 = vmatpush1.msra.mxu0 %v109
      %2528 = vmatprep.subr.mxu0 %v114
      %2529 = vmatpush1.msra.mxu0 %v113
      %2530 = vmatprep.subr.mxu0 %v118
      %2531 = vmatpush1.msra.mxu0 %v117
      %2532 = vmatprep.subr.mxu0 %v122
      %2533 = vmatpush1.msra.mxu0 %v121
      %2534 = vmatprep.subr.mxu0 %v126
      %2535 = vmatpush1.msra.mxu0 %v125
      %2536 = vmatprep.subr.mxu0 %v130
      %2537 = vmatpush1.msra.mxu0 %v129
      %2538 = vmatprep.subr.mxu0 %v134
      %2539 = vmatpush1.msra.mxu0 %v133
      %2540 = vmatprep.subr.mxu0 %v138
      %2541 = vmatpush1.msra.mxu0 %v137
      %2542 = vmatprep.subr.mxu0 %v142
      %2543 = vmatpush1.msra.mxu0 %v141
      %2544 = vmatprep.subr.mxu0 %v146
      %2545 = vmatpush1.msra.mxu0 %v145
      %2546 = vmatprep.subr.mxu0 %v150
      %2547 = vmatpush1.msra.mxu0 %v149
      %2548 = vmatprep.subr.mxu0 %v154
      %2549 = vmatpush1.msra.mxu0 %v153
      %2550 = vmatprep.subr.mxu0 %v158
      %2551 = vmatpush1.msra.mxu0 %v157
      %2552 = vmatprep.subr.mxu0 %v162
      %2553 = vmatpush1.msra.mxu0 %v161
      %2554 = vmatprep.subr.mxu0 %v166
      %2555 = vmatpush1.msra.mxu0 %v165
      %2556 = vmatprep.subr.mxu0 %v170
      %2557 = vmatpush1.msra.mxu0 %v169
      %2558 = vmatprep.subr.mxu0 0.0
      %2559 = vmatpush1.msra.mxu0 0.0
      %2560 = vmatprep.subr.mxu0 0.0
      %2561 = vmatpush1.msra.mxu0 0.0
      %2562 = vmatprep.subr.mxu0 0.0
      %2563 = vmatpush1.msra.mxu0 0.0
      %2564 = vmatprep.subr.mxu0 0.0
      %2565 = vmatpush1.msra.mxu0 0.0
      %2566 = vmatprep.subr.mxu0 0.0
      %2567 = vmatpush1.msra.mxu0 0.0
      %2568 = vmatprep.subr.mxu0 0.0
      %2569 = vmatpush1.msra.mxu0 0.0
      %2570 = vmatprep.subr.mxu0 0.0
      %2571 = vmatpush1.msra.mxu0 0.0
      %2572 = vmatprep.subr.mxu0 0.0
      %2573 = vmatpush1.msra.mxu0 0.0
      %2574 = vmatprep.subr.mxu0 0.0
      %2575 = vmatpush1.msra.mxu0 0.0
      %2576 = vmatprep.subr.mxu0 0.0
      %2577 = vmatpush1.msra.mxu0 0.0
      %2578 = vmatprep.subr.mxu0 0.0
      %2579 = vmatpush1.msra.mxu0 0.0
      %2580 = vmatprep.subr.mxu0 0.0
      %2581 = vmatpush1.msra.mxu0 0.0
      %2582 = vmatprep.subr.mxu0 0.0
      %2583 = vmatpush1.msra.mxu0 0.0
      %2584 = vmatprep.subr.mxu0 0.0
      %2585 = vmatpush1.msra.mxu0 0.0
      %2586 = vmatprep.subr.mxu0 0.0
      %2587 = vmatpush1.msra.mxu0 0.0
      %2588 = vmatprep.subr.mxu0 0.0
      %2589 = vmatpush1.msra.mxu0 0.0
      %2590 = vmatprep.mubr.f32.mxu0 0.0
      %2591 = vmatmul.mubr.f32.gmra.mrb[0].mxu0 %v2454
      %v2592 = vpop.f32.mrb[0].mxu0
      %v2593 = vadd.f32 0.0, %v2592
      %v2594 = vpop.f32.mrb[0].mxu0
      %v2595 = vadd.f32 0.0, %v2594
      %2596 = vdwg.mxu0
      %v2597 = vadd.f32 %v2450, %v2522
      %v2598 = vadd.f32 %v2451, %v2524
      %v2599 = vadd.f32 %v2452, %v2593
      %v2600 = vadd.f32 %v2453, %v2595
      %v2601 = vld [vmem:[#allocation4] sm:$0xff]
      %v2602 = vmul.f32 %v2597, 0.5
      %v2603 = vtanh.pop %v2602
      %v2604 = vmul.f32 %v2603, 0.5
      %v2605 = vadd.f32 %v2604, 0.5
      %v2606 = vmul.f32 %v2598, 0.5
      %v2607 = vtanh.pop %v2606
      %v2608 = vmul.f32 %v2607, 0.5
      %v2609 = vadd.f32 %v2608, 0.5
      %v2610 = vtanh.pop %v2599
      %v2611 = vmul.f32 %v2600, 0.5
      %v2612 = vtanh.pop %v2611
      %v2613 = vmul.f32 %v2612, 0.5
      %v2614 = vadd.f32 %v2613, 0.5
      %v2615 = vmul.f32 %v2609, %v2601
      %v2616 = vmul.f32 %v2605, %v2610
      %v2617 = vadd.f32 %v2615, %v2616
      %v2618 = vtanh.pop %v2617
      %v2619 = vmul.f32 %v2614, %v2618
      %2620 = vst [vmem:[#allocation3] sm:$0xff] %v2619
      %2621 = vst [vmem:[#allocation4] sm:$0xff] %v2617
    $region61: #{lstm_model_forward.3} parent=1 // pred_fallthru
      _
    %s2622 = sadd.s32 %s1383, 7
    %p2623 = scmp.lt.s32.totalorder %s2622, 8
    // Predicated region
    $region62: #{lstm_model_forward.3} parent=1 // pred_check
      %p2624 = pneg %p2623
    $region63: #{lstm_model_forward.3} parent=1 // pred_check_branch
      %2626 = sbr.rel (%p2624) target = $region65
    $region64: #{lstm_model_forward.3} parent=1 // pred_region
      %v2627 = vld [vmem:[%s1378] sm:$0xff]
      %v2628 = vld [vmem:[%s1378 + $0x8] sm:$0xff]
      %v2629 = vld [vmem:[%s1378 + $0x10] sm:$0xff]
      %v2630 = vld [vmem:[%s1378 + $0x18] sm:$0xff]
      %v2631 = vld [vmem:[#allocation3] sm:$0xff]
      %2632 = vmatprep.subr.mxu0 %v108
      %2633 = vmatpush1.msra.mxu0 %v107
      %2634 = vmatprep.subr.mxu0 %v112
      %2635 = vmatpush1.msra.mxu0 %v111
      %2636 = vmatprep.subr.mxu0 %v116
      %2637 = vmatpush1.msra.mxu0 %v115
      %2638 = vmatprep.subr.mxu0 %v120
      %2639 = vmatpush1.msra.mxu0 %v119
      %2640 = vmatprep.subr.mxu0 %v124
      %2641 = vmatpush1.msra.mxu0 %v123
      %2642 = vmatprep.subr.mxu0 %v128
      %2643 = vmatpush1.msra.mxu0 %v127
      %2644 = vmatprep.subr.mxu0 %v132
      %2645 = vmatpush1.msra.mxu0 %v131
      %2646 = vmatprep.subr.mxu0 %v136
      %2647 = vmatpush1.msra.mxu0 %v135
      %2648 = vmatprep.subr.mxu0 %v140
      %2649 = vmatpush1.msra.mxu0 %v139
      %2650 = vmatprep.subr.mxu0 %v144
      %2651 = vmatpush1.msra.mxu0 %v143
      %2652 = vmatprep.subr.mxu0 %v148
      %2653 = vmatpush1.msra.mxu0 %v147
      %2654 = vmatprep.subr.mxu0 %v152
      %2655 = vmatpush1.msra.mxu0 %v151
      %2656 = vmatprep.subr.mxu0 %v156
      %2657 = vmatpush1.msra.mxu0 %v155
      %2658 = vmatprep.subr.mxu0 %v160
      %2659 = vmatpush1.msra.mxu0 %v159
      %2660 = vmatprep.subr.mxu0 %v164
      %2661 = vmatpush1.msra.mxu0 %v163
      %2662 = vmatprep.subr.mxu0 %v168
      %2663 = vmatpush1.msra.mxu0 %v167
      %2664 = vmatprep.subr.mxu0 0.0
      %2665 = vmatpush1.msra.mxu0 0.0
      %2666 = vmatprep.subr.mxu0 0.0
      %2667 = vmatpush1.msra.mxu0 0.0
      %2668 = vmatprep.subr.mxu0 0.0
      %2669 = vmatpush1.msra.mxu0 0.0
      %2670 = vmatprep.subr.mxu0 0.0
      %2671 = vmatpush1.msra.mxu0 0.0
      %2672 = vmatprep.subr.mxu0 0.0
      %2673 = vmatpush1.msra.mxu0 0.0
      %2674 = vmatprep.subr.mxu0 0.0
      %2675 = vmatpush1.msra.mxu0 0.0
      %2676 = vmatprep.subr.mxu0 0.0
      %2677 = vmatpush1.msra.mxu0 0.0
      %2678 = vmatprep.subr.mxu0 0.0
      %2679 = vmatpush1.msra.mxu0 0.0
      %2680 = vmatprep.subr.mxu0 0.0
      %2681 = vmatpush1.msra.mxu0 0.0
      %2682 = vmatprep.subr.mxu0 0.0
      %2683 = vmatpush1.msra.mxu0 0.0
      %2684 = vmatprep.subr.mxu0 0.0
      %2685 = vmatpush1.msra.mxu0 0.0
      %2686 = vmatprep.subr.mxu0 0.0
      %2687 = vmatpush1.msra.mxu0 0.0
      %2688 = vmatprep.subr.mxu0 0.0
      %2689 = vmatpush1.msra.mxu0 0.0
      %2690 = vmatprep.subr.mxu0 0.0
      %2691 = vmatpush1.msra.mxu0 0.0
      %2692 = vmatprep.subr.mxu0 0.0
      %2693 = vmatpush1.msra.mxu0 0.0
      %2694 = vmatprep.subr.mxu0 0.0
      %2695 = vmatpush1.msra.mxu0 0.0
      %2696 = vmatprep.mubr.f32.mxu0 0.0
      %2697 = vmatmul.mubr.f32.gmra.mrb[0].mxu0 %v2631
      %v2698 = vpop.f32.mrb[0].mxu0
      %v2699 = vadd.f32 0.0, %v2698
      %v2700 = vpop.f32.mrb[0].mxu0
      %v2701 = vadd.f32 0.0, %v2700
      %2702 = vdwg.mxu0
      %2703 = vmatprep.subr.mxu0 %v110
      %2704 = vmatpush1.msra.mxu0 %v109
      %2705 = vmatprep.subr.mxu0 %v114
      %2706 = vmatpush1.msra.mxu0 %v113
      %2707 = vmatprep.subr.mxu0 %v118
      %2708 = vmatpush1.msra.mxu0 %v117
      %2709 = vmatprep.subr.mxu0 %v122
      %2710 = vmatpush1.msra.mxu0 %v121
      %2711 = vmatprep.subr.mxu0 %v126
      %2712 = vmatpush1.msra.mxu0 %v125
      %2713 = vmatprep.subr.mxu0 %v130
      %2714 = vmatpush1.msra.mxu0 %v129
      %2715 = vmatprep.subr.mxu0 %v134
      %2716 = vmatpush1.msra.mxu0 %v133
      %2717 = vmatprep.subr.mxu0 %v138
      %2718 = vmatpush1.msra.mxu0 %v137
      %2719 = vmatprep.subr.mxu0 %v142
      %2720 = vmatpush1.msra.mxu0 %v141
      %2721 = vmatprep.subr.mxu0 %v146
      %2722 = vmatpush1.msra.mxu0 %v145
      %2723 = vmatprep.subr.mxu0 %v150
      %2724 = vmatpush1.msra.mxu0 %v149
      %2725 = vmatprep.subr.mxu0 %v154
      %2726 = vmatpush1.msra.mxu0 %v153
      %2727 = vmatprep.subr.mxu0 %v158
      %2728 = vmatpush1.msra.mxu0 %v157
      %2729 = vmatprep.subr.mxu0 %v162
      %2730 = vmatpush1.msra.mxu0 %v161
      %2731 = vmatprep.subr.mxu0 %v166
      %2732 = vmatpush1.msra.mxu0 %v165
      %2733 = vmatprep.subr.mxu0 %v170
      %2734 = vmatpush1.msra.mxu0 %v169
      %2735 = vmatprep.subr.mxu0 0.0
      %2736 = vmatpush1.msra.mxu0 0.0
      %2737 = vmatprep.subr.mxu0 0.0
      %2738 = vmatpush1.msra.mxu0 0.0
      %2739 = vmatprep.subr.mxu0 0.0
      %2740 = vmatpush1.msra.mxu0 0.0
      %2741 = vmatprep.subr.mxu0 0.0
      %2742 = vmatpush1.msra.mxu0 0.0
      %2743 = vmatprep.subr.mxu0 0.0
      %2744 = vmatpush1.msra.mxu0 0.0
      %2745 = vmatprep.subr.mxu0 0.0
      %2746 = vmatpush1.msra.mxu0 0.0
      %2747 = vmatprep.subr.mxu0 0.0
      %2748 = vmatpush1.msra.mxu0 0.0
      %2749 = vmatprep.subr.mxu0 0.0
      %2750 = vmatpush1.msra.mxu0 0.0
      %2751 = vmatprep.subr.mxu0 0.0
      %2752 = vmatpush1.msra.mxu0 0.0
      %2753 = vmatprep.subr.mxu0 0.0
      %2754 = vmatpush1.msra.mxu0 0.0
      %2755 = vmatprep.subr.mxu0 0.0
      %2756 = vmatpush1.msra.mxu0 0.0
      %2757 = vmatprep.subr.mxu0 0.0
      %2758 = vmatpush1.msra.mxu0 0.0
      %2759 = vmatprep.subr.mxu0 0.0
      %2760 = vmatpush1.msra.mxu0 0.0
      %2761 = vmatprep.subr.mxu0 0.0
      %2762 = vmatpush1.msra.mxu0 0.0
      %2763 = vmatprep.subr.mxu0 0.0
      %2764 = vmatpush1.msra.mxu0 0.0
      %2765 = vmatprep.subr.mxu0 0.0
      %2766 = vmatpush1.msra.mxu0 0.0
      %2767 = vmatprep.mubr.f32.mxu0 0.0
      %2768 = vmatmul.mubr.f32.gmra.mrb[0].mxu0 %v2631
      %v2769 = vpop.f32.mrb[0].mxu0
      %v2770 = vadd.f32 0.0, %v2769
      %v2771 = vpop.f32.mrb[0].mxu0
      %v2772 = vadd.f32 0.0, %v2771
      %2773 = vdwg.mxu0
      %v2774 = vadd.f32 %v2627, %v2699
      %v2775 = vadd.f32 %v2628, %v2701
      %v2776 = vadd.f32 %v2629, %v2770
      %v2777 = vadd.f32 %v2630, %v2772
      %v2778 = vld [vmem:[#allocation4] sm:$0xff]
      %v2779 = vmul.f32 %v2774, 0.5
      %v2780 = vtanh.pop %v2779
      %v2781 = vmul.f32 %v2780, 0.5
      %v2782 = vadd.f32 %v2781, 0.5
      %v2783 = vmul.f32 %v2775, 0.5
      %v2784 = vtanh.pop %v2783
      %v2785 = vmul.f32 %v2784, 0.5
      %v2786 = vadd.f32 %v2785, 0.5
      %v2787 = vtanh.pop %v2776
      %v2788 = vmul.f32 %v2777, 0.5
      %v2789 = vtanh.pop %v2788
      %v2790 = vmul.f32 %v2789, 0.5
      %v2791 = vadd.f32 %v2790, 0.5
      %v2792 = vmul.f32 %v2786, %v2778
      %v2793 = vmul.f32 %v2782, %v2787
      %v2794 = vadd.f32 %v2792, %v2793
      %v2795 = vtanh.pop %v2794
      %v2796 = vmul.f32 %v2791, %v2795
      %2797 = vst [vmem:[#allocation3] sm:$0xff] %v2796
      %2798 = vst [vmem:[#allocation4] sm:$0xff] %v2794
    $region65: #{lstm_model_forward.3} parent=1 // pred_fallthru
      _
    // Predicated region
    $region66: #{lstm_model_forward.3} parent=1 // pred_check
      %p2799 = pneg %p37
    $region67: #{lstm_model_forward.3} parent=1 // pred_check_branch
      %2801 = sbr.rel (%p2799) target = $region69
    $region68: #{lstm_model_forward.3} parent=1 // pred_region
      %v2802 = vld [vmem:[#allocation3] sm:$0xff]
      %v2803 = vld [vmem:[%s4] sm:$0xff]
      %v2804 = vld [vmem:[%s4 + $0x8] sm:$0xff]
      %v2805 = vld [vmem:[%s4 + $0x10] sm:$0xff]
      %v2806 = vld [vmem:[%s4 + $0x18] sm:$0xff]
      %v2807 = vld [vmem:[%s4 + $0x20] sm:$0xff]
      %v2808 = vld [vmem:[%s4 + $0x28] sm:$0xff]
      %v2809 = vld [vmem:[%s4 + $0x30] sm:$0xff]
      %v2810 = vld [vmem:[%s4 + $0x38] sm:$0xff]
      %v2811 = vld [vmem:[%s4 + $0x40] sm:$0xff]
      %v2812 = vld [vmem:[%s4 + $0x48] sm:$0xff]
      %v2813 = vld [vmem:[%s4 + $0x50] sm:$0xff]
      %v2814 = vld [vmem:[%s4 + $0x58] sm:$0xff]
      %v2815 = vld [vmem:[%s4 + $0x60] sm:$0xff]
      %v2816 = vld [vmem:[%s4 + $0x68] sm:$0xff]
      %v2817 = vld [vmem:[%s4 + $0x70] sm:$0xff]
      %v2818 = vld [vmem:[%s4 + $0x78] sm:$0xff]
      %v2819 = vld [vmem:[%s5] sm:$0x1]
      %v2821 = vlaneseq
      %v2822 = vshrl.u32 %v2821, 7
      %v2823 = vsub.s32 0, %v2822
      %v2824 = vrot.slane %v2819, %v2823
      %2826 = vmatprep.subr.mxu0 0.0
      %2827 = vmatpush1.msra.mxu0 %v2803
      %2828 = vmatprep.subr.mxu0 0.0
      %2829 = vmatpush1.msra.mxu0 %v2804
      %2830 = vmatprep.subr.mxu0 0.0
      %2831 = vmatpush1.msra.mxu0 %v2805
      %2832 = vmatprep.subr.mxu0 0.0
      %2833 = vmatpush1.msra.mxu0 %v2806
      %2834 = vmatprep.subr.mxu0 0.0
      %2835 = vmatpush1.msra.mxu0 %v2807
      %2836 = vmatprep.subr.mxu0 0.0
      %2837 = vmatpush1.msra.mxu0 %v2808
      %2838 = vmatprep.subr.mxu0 0.0
      %2839 = vmatpush1.msra.mxu0 %v2809
      %2840 = vmatprep.subr.mxu0 0.0
      %2841 = vmatpush1.msra.mxu0 %v2810
      %2842 = vmatprep.subr.mxu0 0.0
      %2843 = vmatpush1.msra.mxu0 %v2811
      %2844 = vmatprep.subr.mxu0 0.0
      %2845 = vmatpush1.msra.mxu0 %v2812
      %2846 = vmatprep.subr.mxu0 0.0
      %2847 = vmatpush1.msra.mxu0 %v2813
      %2848 = vmatprep.subr.mxu0 0.0
      %2849 = vmatpush1.msra.mxu0 %v2814
      %2850 = vmatprep.subr.mxu0 0.0
      %2851 = vmatpush1.msra.mxu0 %v2815
      %2852 = vmatprep.subr.mxu0 0.0
      %2853 = vmatpush1.msra.mxu0 %v2816
      %2854 = vmatprep.subr.mxu0 0.0
      %2855 = vmatpush1.msra.mxu0 %v2817
      %2856 = vmatprep.subr.mxu0 0.0
      %2857 = vmatpush1.msra.mxu0 %v2818
      %2858 = vmatprep.subr.mxu0 0.0
      %2859 = vmatpush1.msra.mxu0 0.0
      %2860 = vmatprep.subr.mxu0 0.0
      %2861 = vmatpush1.msra.mxu0 0.0
      %2862 = vmatprep.subr.mxu0 0.0
      %2863 = vmatpush1.msra.mxu0 0.0
      %2864 = vmatprep.subr.mxu0 0.0
      %2865 = vmatpush1.msra.mxu0 0.0
      %2866 = vmatprep.subr.mxu0 0.0
      %2867 = vmatpush1.msra.mxu0 0.0
      %2868 = vmatprep.subr.mxu0 0.0
      %2869 = vmatpush1.msra.mxu0 0.0
      %2870 = vmatprep.subr.mxu0 0.0
      %2871 = vmatpush1.msra.mxu0 0.0
      %2872 = vmatprep.subr.mxu0 0.0
      %2873 = vmatpush1.msra.mxu0 0.0
      %2874 = vmatprep.subr.mxu0 0.0
      %2875 = vmatpush1.msra.mxu0 0.0
      %2876 = vmatprep.subr.mxu0 0.0
      %2877 = vmatpush1.msra.mxu0 0.0
      %2878 = vmatprep.subr.mxu0 0.0
      %2879 = vmatpush1.msra.mxu0 0.0
      %2880 = vmatprep.subr.mxu0 0.0
      %2881 = vmatpush1.msra.mxu0 0.0
      %2882 = vmatprep.subr.mxu0 0.0
      %2883 = vmatpush1.msra.mxu0 0.0
      %2884 = vmatprep.subr.mxu0 0.0
      %2885 = vmatpush1.msra.mxu0 0.0
      %2886 = vmatprep.subr.mxu0 0.0
      %2887 = vmatpush1.msra.mxu0 0.0
      %2888 = vmatprep.subr.mxu0 0.0
      %2889 = vmatpush1.msra.mxu0 0.0
      %2890 = vmatprep.mubr.f32.mxu0 0.0
      %2891 = vmatmul.mubr.f32.gmra.mrb[0].mxu0 %v2802
      %v2892 = vpop.f32.mrb[0].mxu0
      %v2893 = vadd.f32 %v2824, %v2892
      %v2894 = vpop.f32.mrb[0].mxu0
      %2895 = vdwg.mxu0
      %2896 = vst [vmem:[%s6] sm:$0xff] %v2893
    $region69: #{lstm_model_forward.3} parent=1 // pred_fallthru
      _
    // Predicated region
    $region70: #{lstm_model_forward.3} parent=1 // pred_check
      _
    $region71: #{lstm_model_forward.3} parent=1 // pred_check_branch
      %2898 = sbr.rel (0) target = $region73
    $region72: #{lstm_model_forward.3} parent=1 // pred_region
      _
    $region73: #{lstm_model_forward.3} parent=1 // pred_fallthru
      _
    // Predicated region
    $region74: #{lstm_model_forward.3} parent=1 // pred_check
      _
    $region75: #{lstm_model_forward.3} parent=1 // pred_check_branch
      %2900 = sbr.rel (0) target = $region77
    $region76: #{lstm_model_forward.3} parent=1 // pred_region
      _
    $region77: #{lstm_model_forward.3} parent=1 // pred_fallthru
      _
    %2901 = vsyncpa [#allocation6], 1

</llo_original>
